<compile_context>
chip_gen: v6e
topology: v6e:2x2x1
jax: 0.10.0
libtpu: 0.0.40
codegen_flags: <defaults>
</compile_context>

<pallas_src>
import jax
import jax.numpy as jnp
from jax.experimental import pallas as pl
from jax.experimental.pallas import tpu as pltpu

EPS = 1e-5


def _vmem_spec():
    return pl.BlockSpec(memory_space=pltpu.MemorySpace.VMEM)


def _group_sum(row_vec, groups, width):
    """(1, groups*width) -> (1, width): sum the lane groups (tiny, unrolled)."""
    acc = row_vec[:, 0:width]
    for i in range(1, groups):
        acc = acc + row_vec[:, i * width:(i + 1) * width]
    return acc


def _tile_lanes(v, reps):
    """(1, W) -> (1, reps*W) by lane concatenation (safe jnp.tile substitute)."""
    return jnp.concatenate([v] * reps, axis=1)


# ------------------------------ Pallas kernel ------------------------------ #

def fused_cnn_kernel(img_ref, w1b_ref, g1_ref, bt1_ref,
                     w2b_ref, g2_ref, bt2_ref,
                     fw1_ref, fb1_ref, fw2_ref, fb2_ref,
                     out_ref, a1p_ref):
    """Whole forward pass, canonical layout rows=(h, b), lanes=(w, c).

    img_ref : (30*B, 32)   bf16  h-padded (+1 top/bottom) image, w padded 28->32
    w1b_ref : (3, 32, 896) bf16  banded conv1 weights (per ky)
    w2b_ref : (3, 512, 896)bf16  banded conv2 weights (per ky)
    g*/bt*  : (1, C)       f32   BN affine params
    fw1_ref : (7, 448, 128)bf16  fc1 weights, rows reordered to (h,(w,c))
    fb1_ref : (1, 128)     f32
    fw2_ref : (128, 128)   bf16  zero-padded from 47 outputs
    fb2_ref : (1, 128)     f32
    out_ref : (B, 128)     f32   lane-dense; sliced to 47 outside
    a1p_ref : (16*B, 512)  bf16  scratch: zero-padded pooled conv1 activation
    """
    B = out_ref.shape[0]

    # ---------------- conv1: 3 accumulating banded MXU dots -----------------
    # y1[(oh,b), (ow,c)] = sum_ky img[(oh+ky, b), :] @ w1b[ky]
    y1 = jnp.dot(img_ref[0:28 * B, :], w1b_ref[0],
                 preferred_element_type=jnp.float32)
    for ky in range(1, 3):
        y1 = y1 + jnp.dot(img_ref[ky * B:(ky + 28) * B, :], w1b_ref[ky],
                          preferred_element_type=jnp.float32)      # (28B, 896)

    # ---------------- BN1 (training batch stats, f32) + ReLU ----------------
    n1 = float(B * 28 * 28)
    mean1 = _group_sum(jnp.sum(y1, axis=0, keepdims=True), 28, 32) / n1  # (1,32)
    d1 = y1 - _tile_lanes(mean1, 28)
    var1 = _group_sum(jnp.sum(d1 * d1, axis=0, keepdims=True), 28, 32) / n1
    scale1 = g1_ref[...] * jax.lax.rsqrt(var1 + EPS)
    z1 = jnp.maximum(d1 * _tile_lanes(scale1, 28)
                     + _tile_lanes(bt1_ref[...], 28), 0.0)          # (28B, 896)

    # ------------- 2x2 max-pool #1 + padded bf16 stash for conv2 ------------
    z1r = z1.reshape(14, 2 * B, 28 * 32)
    hm1 = jnp.maximum(z1r[:, :B, :], z1r[:, B:, :])                 # (14,B,896)
    p1 = jnp.concatenate(
        [jnp.maximum(hm1[:, :, (2 * i) * 32:(2 * i + 1) * 32],
                     hm1[:, :, (2 * i + 1) * 32:(2 * i + 2) * 32])
         for i in range(14)], axis=2)                               # (14,B,448)
    a1p_ref[...] = jnp.zeros(a1p_ref.shape, a1p_ref.dtype)
    a1p_ref[B:15 * B, 0:448] = p1.reshape(14 * B, 448).astype(jnp.bfloat16)

    # ---------------- conv2: 3 accumulating banded MXU dots -----------------
    y2 = jnp.dot(a1p_ref[0:14 * B, :], w2b_ref[0],
                 preferred_element_type=jnp.float32)
    for ky in range(1, 3):
        y2 = y2 + jnp.dot(a1p_ref[ky * B:(ky + 14) * B, :], w2b_ref[ky],
                          preferred_element_type=jnp.float32)       # (14B, 896)

    # ---------------- BN2 + ReLU --------------------------------------------
    n2 = float(B * 14 * 14)
    mean2 = _group_sum(jnp.sum(y2, axis=0, keepdims=True), 14, 64) / n2  # (1,64)
    d2 = y2 - _tile_lanes(mean2, 14)
    var2 = _group_sum(jnp.sum(d2 * d2, axis=0, keepdims=True), 14, 64) / n2
    scale2 = g2_ref[...] * jax.lax.rsqrt(var2 + EPS)
    z2 = jnp.maximum(d2 * _tile_lanes(scale2, 14)
                     + _tile_lanes(bt2_ref[...], 14), 0.0)          # (14B, 896)

    # ---------------- 2x2 max-pool #2 (stays a value) ------------------------
    z2r = z2.reshape(7, 2 * B, 14 * 64)
    hm2 = jnp.maximum(z2r[:, :B, :], z2r[:, B:, :])                 # (7,B,896)
    p2 = jnp.concatenate(
        [jnp.maximum(hm2[:, :, (2 * i) * 64:(2 * i + 1) * 64],
                     hm2[:, :, (2 * i + 1) * 64:(2 * i + 2) * 64])
         for i in range(7)], axis=2).astype(jnp.bfloat16)           # (7,B,448)

    # ------- fc1 (+ReLU): flatten folded into 7 accumulating dots -----------
    h1 = jnp.dot(p2[0], fw1_ref[0], preferred_element_type=jnp.float32)
    for hh in range(1, 7):
        h1 = h1 + jnp.dot(p2[hh], fw1_ref[hh],
                          preferred_element_type=jnp.float32)       # (B, 128)
    h1 = jnp.maximum(h1 + fb1_ref[...], 0.0)

    # ------- fc2 (lane-dense 128-wide output) --------------------------------
    out_ref[...] = jnp.dot(h1.astype(jnp.bfloat16), fw2_ref[...],
                           preferred_element_type=jnp.float32) + fb2_ref[...]


# -------------------------------- JAX glue --------------------------------- #

def _banded_conv_weights(w_hwio, in_w, out_w):
    """Banded matrix for 'width-as-contraction' conv.

    Returns (kh, in_w*cin, out_w*cout) with
      band[ky, wb*cin+ci, ow*cout+co] = w[ky, wb-ow+1, ci, co] if 0<=wb-ow+1<kw.
    The input buffer is assumed to have NO left w-padding (buffer col == w);
    the left halo is handled by band truncation, the right halo by zero cols.
    """
    kh, kw, cin, cout = w_hwio.shape
    wb = jnp.arange(in_w)[:, None]
    ow = jnp.arange(out_w)[None, :]
    kx = wb - ow + 1
    valid = ((kx >= 0) & (kx < kw)).astype(w_hwio.dtype)
    kx_c = jnp.clip(kx, 0, kw - 1)
    w_k = w_hwio[:, kx_c, :, :]                       # (kh, in_w, out_w, cin, cout)
    w_k = w_k * valid[None, :, :, None, None]
    band = jnp.transpose(w_k, (0, 1, 3, 2, 4))        # (kh, in_w, cin, out_w, cout)
    return band.reshape(kh, in_w * cin, out_w * cout)


def improved_cnn_forward(x_nchw, p):
    x = x_nchw[:, 0, :, :].astype(jnp.float32)                       # (B,28,28)
    B = x.shape[0]

    # Raw zero-padded image only: +1 row top/bottom (conv1 h halo), width 28->32
    # (right-only zeros; the left w halo is folded into the banded weights).
    xp = jnp.pad(x, ((0, 0), (1, 1), (0, 4)))                        # (B,30,32)
    img = jnp.transpose(xp, (1, 0, 2)).reshape(30 * B, 32).astype(jnp.bfloat16)

    w1b = _banded_conv_weights(p["w1"], in_w=32, out_w=28).astype(jnp.bfloat16)
    w2b = _banded_conv_weights(p["w2"], in_w=16, out_w=14).astype(jnp.bfloat16)

    # Fold PyTorch's NCHW flatten into fc1: rows (c,h,w) -> (h, (w,c)).
    fw1k = (p["fw1"].reshape(64, 7, 7, 128).transpose(1, 2, 0, 3)
            .reshape(7, 7 * 64, 128).astype(jnp.bfloat16))
    fw2k = jnp.pad(p["fw2"], ((0, 0), (0, 128 - 47))).astype(jnp.bfloat16)
    fb2k = jnp.pad(p["fb2"], ((0, 128 - 47),)).reshape(1, 128).astype(jnp.float32)

    out = pl.pallas_call(
        fused_cnn_kernel,
        out_shape=jax.ShapeDtypeStruct((B, 128), jnp.float32),
        in_specs=[_vmem_spec()] * 11,
        out_specs=_vmem_spec(),
        scratch_shapes=[pltpu.VMEM((16 * B, 16 * 32), jnp.bfloat16)],
        compiler_params=pltpu.CompilerParams(
            vmem_limit_bytes=32 * 1024 * 1024),
    )(img, w1b,
      p["g1"].reshape(1, 32).astype(jnp.float32),
      p["bt1"].reshape(1, 32).astype(jnp.float32),
      w2b,
      p["g2"].reshape(1, 64).astype(jnp.float32),
      p["bt2"].reshape(1, 64).astype(jnp.float32),
      fw1k, p["fb1"].reshape(1, 128).astype(jnp.float32), fw2k, fb2k)
    return out[:, :47]


def init_params(key):
    ks = jax.random.split(key, 12)

    def nrm(k, shape, scale):
        return (scale * jax.random.normal(k, shape)).astype(jnp.float32)

    return {
        # conv1 weights stored as HWIO (3,3,1,32)
        "w1": nrm(ks[0], (3, 3, 1, 32), 1.0 / 3.0),
        "b1": nrm(ks[1], (32,), 0.1),       # used by the reference; cancels under BN
        "g1": 1.0 + nrm(ks[2], (32,), 0.1),
        "bt1": nrm(ks[3], (32,), 0.1),
        # conv2 weights as HWIO (3,3,32,64)
        "w2": nrm(ks[4], (3, 3, 32, 64), 1.0 / 17.0),
        "b2": nrm(ks[5], (64,), 0.1),
        "g2": 1.0 + nrm(ks[6], (64,), 0.1),
        "bt2": nrm(ks[7], (64,), 0.1),
        # fc1: (3136,128), rows in PyTorch NCHW-flatten order (c,h,w)
        "fw1": nrm(ks[8], (3136, 128), 0.02),
        "fb1": nrm(ks[9], (128,), 0.02),
        # fc2: (128,47)
        "fw2": nrm(ks[10], (128, 47), 0.09),
        "fb2": nrm(ks[11], (47,), 0.09),
    }


def _reference_forward(x_nchw, p):
    """Pure-JAX f32 reference with PyTorch semantics (conv bias + training BN)."""
    x = jnp.transpose(x_nchw, (0, 2, 3, 1)).astype(jnp.float32)

    def block(x, w, b, g, bt):
        y = jax.lax.conv_general_dilated(
            x, w, (1, 1), "SAME", dimension_numbers=("NHWC", "HWIO", "NHWC")) + b
        mean = y.mean(axis=(0, 1, 2))
        var = ((y - mean) ** 2).mean(axis=(0, 1, 2))
        y = (y - mean) / jnp.sqrt(var + EPS) * g + bt
        y = jnp.maximum(y, 0.0)
        B, H, W, C = y.shape
        return y.reshape(B, H // 2, 2, W // 2, 2, C).max(axis=(2, 4))

    x = block(x, p["w1"], p["b1"], p["g1"], p["bt1"])
    x = block(x, p["w2"], p["b2"], p["g2"], p["bt2"])
    B = x.shape[0]
    flat = jnp.transpose(x, (0, 3, 1, 2)).reshape(B, 64 * 7 * 7)   # NCHW flatten
    h = jnp.maximum(flat @ p["fw1"] + p["fb1"], 0.0)
    return h @ p["fw2"] + p["fb2"]


if __name__ == "__main__":
    key = jax.random.PRNGKey(0)
    pkey, xkey = jax.random.split(key)
    params = init_params(pkey)
    # EMNIST-style input: batch=2, 1 channel, 28x28 (forced by fc1 = 64*7*7)
    x = jax.random.normal(xkey, (2, 1, 28, 28), dtype=jnp.float32)

    out = jax.block_until_ready(jax.jit(improved_cnn_forward)(x, params))
    assert out.shape == (2, 47), out.shape

    ref = _reference_forward(x, params)
    err = float(jnp.max(jnp.abs(out - ref)))
    assert jnp.allclose(out, ref, atol=5e-2, rtol=5e-2), f"max abs err {err}"

    print("KERNEL_OK")
</pallas_src>

<mosaic_0001>
module attributes {stable_mosaic.version = 11 : i64} {
  func.func @fused_cnn_kernel(%arg0: memref<60x32xbf16, #tpu.memory_space<vmem>>, %arg1: memref<3x32x896xbf16, #tpu.memory_space<vmem>>, %arg2: memref<1x32xf32, #tpu.memory_space<vmem>>, %arg3: memref<1x32xf32, #tpu.memory_space<vmem>>, %arg4: memref<3x512x896xbf16, #tpu.memory_space<vmem>>, %arg5: memref<1x64xf32, #tpu.memory_space<vmem>>, %arg6: memref<1x64xf32, #tpu.memory_space<vmem>>, %arg7: memref<7x448x128xbf16, #tpu.memory_space<vmem>>, %arg8: memref<1x128xf32, #tpu.memory_space<vmem>>, %arg9: memref<128x128xbf16, #tpu.memory_space<vmem>>, %arg10: memref<1x128xf32, #tpu.memory_space<vmem>>, %arg11: memref<2x128xf32, #tpu.memory_space<vmem>>, %arg12: memref<32x512xbf16, #tpu.memory_space<vmem>>) attributes {dimension_semantics = [], scalar_prefetch = 0 : i64, scratch_operands = 1 : i64, tpu.core_type = #tpu.core_type<tc>} {
    %c0 = arith.constant 0 : index
    %c0_0 = arith.constant 0 : index
    %0 = vector.load %arg0[%c0, %c0_0] : memref<60x32xbf16, #tpu.memory_space<vmem>>, vector<56x32xbf16>
    %c0_1 = arith.constant 0 : index
    %c0_2 = arith.constant 0 : index
    %c0_3 = arith.constant 0 : index
    %1 = vector.load %arg1[%c0_1, %c0_2, %c0_3] : memref<3x32x896xbf16, #tpu.memory_space<vmem>>, vector<1x32x896xbf16>
    %2 = vector.shape_cast %1 : vector<1x32x896xbf16> to vector<32x896xbf16>
    %cst = arith.constant dense<0.000000e+00> : vector<56x896xf32>
    %3 = tpu.matmul %0, %2, %cst {dimension_numbers = #tpu.dot_dimension_numbers<[1], [0], [0], [1], [0, 0, 1, 1], [], []>} : vector<56x32xbf16>, vector<32x896xbf16>, vector<56x896xf32> -> vector<56x896xf32>
    %c2 = arith.constant 2 : index
    %c0_4 = arith.constant 0 : index
    %4 = vector.load %arg0[%c2, %c0_4] : memref<60x32xbf16, #tpu.memory_space<vmem>>, vector<56x32xbf16>
    %c1 = arith.constant 1 : index
    %c0_5 = arith.constant 0 : index
    %c0_6 = arith.constant 0 : index
    %5 = vector.load %arg1[%c1, %c0_5, %c0_6] : memref<3x32x896xbf16, #tpu.memory_space<vmem>>, vector<1x32x896xbf16>
    %6 = vector.shape_cast %5 : vector<1x32x896xbf16> to vector<32x896xbf16>
    %cst_7 = arith.constant dense<0.000000e+00> : vector<56x896xf32>
    %7 = tpu.matmul %4, %6, %cst_7 {dimension_numbers = #tpu.dot_dimension_numbers<[1], [0], [0], [1], [0, 0, 1, 1], [], []>} : vector<56x32xbf16>, vector<32x896xbf16>, vector<56x896xf32> -> vector<56x896xf32>
    %8 = arith.addf %3, %7 : vector<56x896xf32>
    %c4 = arith.constant 4 : index
    %c0_8 = arith.constant 0 : index
    %9 = vector.load %arg0[%c4, %c0_8] : memref<60x32xbf16, #tpu.memory_space<vmem>>, vector<56x32xbf16>
    %c2_9 = arith.constant 2 : index
    %c0_10 = arith.constant 0 : index
    %c0_11 = arith.constant 0 : index
    %10 = vector.load %arg1[%c2_9, %c0_10, %c0_11] : memref<3x32x896xbf16, #tpu.memory_space<vmem>>, vector<1x32x896xbf16>
    %11 = vector.shape_cast %10 : vector<1x32x896xbf16> to vector<32x896xbf16>
    %cst_12 = arith.constant dense<0.000000e+00> : vector<56x896xf32>
    %12 = tpu.matmul %9, %11, %cst_12 {dimension_numbers = #tpu.dot_dimension_numbers<[1], [0], [0], [1], [0, 0, 1, 1], [], []>} : vector<56x32xbf16>, vector<32x896xbf16>, vector<56x896xf32> -> vector<56x896xf32>
    %13 = arith.addf %8, %12 : vector<56x896xf32>
    %cst_13 = arith.constant dense<0.000000e+00> : vector<896xf32>
    %14 = vector.multi_reduction <add>, %13, %cst_13 [0] : vector<56x896xf32> to vector<896xf32>
    %15 = vector.shape_cast %14 : vector<896xf32> to vector<1x896xf32>
    %16 = vector.extract_strided_slice %15 {offsets = [0, 0], sizes = [1, 32], strides = [1, 1]} : vector<1x896xf32> to vector<1x32xf32>
    %17 = vector.extract_strided_slice %15 {offsets = [0, 32], sizes = [1, 32], strides = [1, 1]} : vector<1x896xf32> to vector<1x32xf32>
    %18 = arith.addf %16, %17 : vector<1x32xf32>
    %19 = vector.extract_strided_slice %15 {offsets = [0, 64], sizes = [1, 32], strides = [1, 1]} : vector<1x896xf32> to vector<1x32xf32>
    %20 = arith.addf %18, %19 : vector<1x32xf32>
    %21 = vector.extract_strided_slice %15 {offsets = [0, 96], sizes = [1, 32], strides = [1, 1]} : vector<1x896xf32> to vector<1x32xf32>
    %22 = arith.addf %20, %21 : vector<1x32xf32>
    %23 = vector.extract_strided_slice %15 {offsets = [0, 128], sizes = [1, 32], strides = [1, 1]} : vector<1x896xf32> to vector<1x32xf32>
    %24 = arith.addf %22, %23 : vector<1x32xf32>
    %25 = vector.extract_strided_slice %15 {offsets = [0, 160], sizes = [1, 32], strides = [1, 1]} : vector<1x896xf32> to vector<1x32xf32>
    %26 = arith.addf %24, %25 : vector<1x32xf32>
    %27 = vector.extract_strided_slice %15 {offsets = [0, 192], sizes = [1, 32], strides = [1, 1]} : vector<1x896xf32> to vector<1x32xf32>
    %28 = arith.addf %26, %27 : vector<1x32xf32>
    %29 = vector.extract_strided_slice %15 {offsets = [0, 224], sizes = [1, 32], strides = [1, 1]} : vector<1x896xf32> to vector<1x32xf32>
    %30 = arith.addf %28, %29 : vector<1x32xf32>
    %31 = vector.extract_strided_slice %15 {offsets = [0, 256], sizes = [1, 32], strides = [1, 1]} : vector<1x896xf32> to vector<1x32xf32>
    %32 = arith.addf %30, %31 : vector<1x32xf32>
    %33 = vector.extract_strided_slice %15 {offsets = [0, 288], sizes = [1, 32], strides = [1, 1]} : vector<1x896xf32> to vector<1x32xf32>
    %34 = arith.addf %32, %33 : vector<1x32xf32>
    %35 = vector.extract_strided_slice %15 {offsets = [0, 320], sizes = [1, 32], strides = [1, 1]} : vector<1x896xf32> to vector<1x32xf32>
    %36 = arith.addf %34, %35 : vector<1x32xf32>
    %37 = vector.extract_strided_slice %15 {offsets = [0, 352], sizes = [1, 32], strides = [1, 1]} : vector<1x896xf32> to vector<1x32xf32>
    %38 = arith.addf %36, %37 : vector<1x32xf32>
    %39 = vector.extract_strided_slice %15 {offsets = [0, 384], sizes = [1, 32], strides = [1, 1]} : vector<1x896xf32> to vector<1x32xf32>
    %40 = arith.addf %38, %39 : vector<1x32xf32>
    %41 = vector.extract_strided_slice %15 {offsets = [0, 416], sizes = [1, 32], strides = [1, 1]} : vector<1x896xf32> to vector<1x32xf32>
    %42 = arith.addf %40, %41 : vector<1x32xf32>
    %43 = vector.extract_strided_slice %15 {offsets = [0, 448], sizes = [1, 32], strides = [1, 1]} : vector<1x896xf32> to vector<1x32xf32>
    %44 = arith.addf %42, %43 : vector<1x32xf32>
    %45 = vector.extract_strided_slice %15 {offsets = [0, 480], sizes = [1, 32], strides = [1, 1]} : vector<1x896xf32> to vector<1x32xf32>
    %46 = arith.addf %44, %45 : vector<1x32xf32>
    %47 = vector.extract_strided_slice %15 {offsets = [0, 512], sizes = [1, 32], strides = [1, 1]} : vector<1x896xf32> to vector<1x32xf32>
    %48 = arith.addf %46, %47 : vector<1x32xf32>
    %49 = vector.extract_strided_slice %15 {offsets = [0, 544], sizes = [1, 32], strides = [1, 1]} : vector<1x896xf32> to vector<1x32xf32>
    %50 = arith.addf %48, %49 : vector<1x32xf32>
    %51 = vector.extract_strided_slice %15 {offsets = [0, 576], sizes = [1, 32], strides = [1, 1]} : vector<1x896xf32> to vector<1x32xf32>
    %52 = arith.addf %50, %51 : vector<1x32xf32>
    %53 = vector.extract_strided_slice %15 {offsets = [0, 608], sizes = [1, 32], strides = [1, 1]} : vector<1x896xf32> to vector<1x32xf32>
    %54 = arith.addf %52, %53 : vector<1x32xf32>
    %55 = vector.extract_strided_slice %15 {offsets = [0, 640], sizes = [1, 32], strides = [1, 1]} : vector<1x896xf32> to vector<1x32xf32>
    %56 = arith.addf %54, %55 : vector<1x32xf32>
    %57 = vector.extract_strided_slice %15 {offsets = [0, 672], sizes = [1, 32], strides = [1, 1]} : vector<1x896xf32> to vector<1x32xf32>
    %58 = arith.addf %56, %57 : vector<1x32xf32>
    %59 = vector.extract_strided_slice %15 {offsets = [0, 704], sizes = [1, 32], strides = [1, 1]} : vector<1x896xf32> to vector<1x32xf32>
    %60 = arith.addf %58, %59 : vector<1x32xf32>
    %61 = vector.extract_strided_slice %15 {offsets = [0, 736], sizes = [1, 32], strides = [1, 1]} : vector<1x896xf32> to vector<1x32xf32>
    %62 = arith.addf %60, %61 : vector<1x32xf32>
    %63 = vector.extract_strided_slice %15 {offsets = [0, 768], sizes = [1, 32], strides = [1, 1]} : vector<1x896xf32> to vector<1x32xf32>
    %64 = arith.addf %62, %63 : vector<1x32xf32>
    %65 = vector.extract_strided_slice %15 {offsets = [0, 800], sizes = [1, 32], strides = [1, 1]} : vector<1x896xf32> to vector<1x32xf32>
    %66 = arith.addf %64, %65 : vector<1x32xf32>
    %67 = vector.extract_strided_slice %15 {offsets = [0, 832], sizes = [1, 32], strides = [1, 1]} : vector<1x896xf32> to vector<1x32xf32>
    %68 = arith.addf %66, %67 : vector<1x32xf32>
    %69 = vector.extract_strided_slice %15 {offsets = [0, 864], sizes = [1, 32], strides = [1, 1]} : vector<1x896xf32> to vector<1x32xf32>
    %70 = arith.addf %68, %69 : vector<1x32xf32>
    %cst_14 = arith.constant 1.568000e+03 : f32
    %71 = vector.broadcast %cst_14 : f32 to vector<1x32xf32>
    %72 = arith.divf %70, %71 : vector<1x32xf32>
    %73 = tpu.concatenate %72, %72, %72, %72, %72, %72, %72, %72, %72, %72, %72, %72, %72, %72, %72, %72 in 1 : vector<1x32xf32>, vector<1x32xf32>, vector<1x32xf32>, vector<1x32xf32>, vector<1x32xf32>, vector<1x32xf32>, vector<1x32xf32>, vector<1x32xf32>, vector<1x32xf32>, vector<1x32xf32>, vector<1x32xf32>, vector<1x32xf32>, vector<1x32xf32>, vector<1x32xf32>, vector<1x32xf32>, vector<1x32xf32> -> vector<1x512xf32>
    %74 = tpu.concatenate %72, %72, %72, %72, %72, %72, %72, %72, %72, %72, %72, %72 in 1 : vector<1x32xf32>, vector<1x32xf32>, vector<1x32xf32>, vector<1x32xf32>, vector<1x32xf32>, vector<1x32xf32>, vector<1x32xf32>, vector<1x32xf32>, vector<1x32xf32>, vector<1x32xf32>, vector<1x32xf32>, vector<1x32xf32> -> vector<1x384xf32>
    %75 = tpu.concatenate %73, %74 in 1 : vector<1x512xf32>, vector<1x384xf32> -> vector<1x896xf32>
    %76 = vector.broadcast %75 : vector<1x896xf32> to vector<56x896xf32>
    %77 = arith.subf %13, %76 : vector<56x896xf32>
    %78 = arith.mulf %77, %77 : vector<56x896xf32>
    %cst_15 = arith.constant dense<0.000000e+00> : vector<896xf32>
    %79 = vector.multi_reduction <add>, %78, %cst_15 [0] : vector<56x896xf32> to vector<896xf32>
    %80 = vector.shape_cast %79 : vector<896xf32> to vector<1x896xf32>
    %81 = vector.extract_strided_slice %80 {offsets = [0, 0], sizes = [1, 32], strides = [1, 1]} : vector<1x896xf32> to vector<1x32xf32>
    %82 = vector.extract_strided_slice %80 {offsets = [0, 32], sizes = [1, 32], strides = [1, 1]} : vector<1x896xf32> to vector<1x32xf32>
    %83 = arith.addf %81, %82 : vector<1x32xf32>
    %84 = vector.extract_strided_slice %80 {offsets = [0, 64], sizes = [1, 32], strides = [1, 1]} : vector<1x896xf32> to vector<1x32xf32>
    %85 = arith.addf %83, %84 : vector<1x32xf32>
    %86 = vector.extract_strided_slice %80 {offsets = [0, 96], sizes = [1, 32], strides = [1, 1]} : vector<1x896xf32> to vector<1x32xf32>
    %87 = arith.addf %85, %86 : vector<1x32xf32>
    %88 = vector.extract_strided_slice %80 {offsets = [0, 128], sizes = [1, 32], strides = [1, 1]} : vector<1x896xf32> to vector<1x32xf32>
    %89 = arith.addf %87, %88 : vector<1x32xf32>
    %90 = vector.extract_strided_slice %80 {offsets = [0, 160], sizes = [1, 32], strides = [1, 1]} : vector<1x896xf32> to vector<1x32xf32>
    %91 = arith.addf %89, %90 : vector<1x32xf32>
    %92 = vector.extract_strided_slice %80 {offsets = [0, 192], sizes = [1, 32], strides = [1, 1]} : vector<1x896xf32> to vector<1x32xf32>
    %93 = arith.addf %91, %92 : vector<1x32xf32>
    %94 = vector.extract_strided_slice %80 {offsets = [0, 224], sizes = [1, 32], strides = [1, 1]} : vector<1x896xf32> to vector<1x32xf32>
    %95 = arith.addf %93, %94 : vector<1x32xf32>
    %96 = vector.extract_strided_slice %80 {offsets = [0, 256], sizes = [1, 32], strides = [1, 1]} : vector<1x896xf32> to vector<1x32xf32>
    %97 = arith.addf %95, %96 : vector<1x32xf32>
    %98 = vector.extract_strided_slice %80 {offsets = [0, 288], sizes = [1, 32], strides = [1, 1]} : vector<1x896xf32> to vector<1x32xf32>
    %99 = arith.addf %97, %98 : vector<1x32xf32>
    %100 = vector.extract_strided_slice %80 {offsets = [0, 320], sizes = [1, 32], strides = [1, 1]} : vector<1x896xf32> to vector<1x32xf32>
    %101 = arith.addf %99, %100 : vector<1x32xf32>
    %102 = vector.extract_strided_slice %80 {offsets = [0, 352], sizes = [1, 32], strides = [1, 1]} : vector<1x896xf32> to vector<1x32xf32>
    %103 = arith.addf %101, %102 : vector<1x32xf32>
    %104 = vector.extract_strided_slice %80 {offsets = [0, 384], sizes = [1, 32], strides = [1, 1]} : vector<1x896xf32> to vector<1x32xf32>
    %105 = arith.addf %103, %104 : vector<1x32xf32>
    %106 = vector.extract_strided_slice %80 {offsets = [0, 416], sizes = [1, 32], strides = [1, 1]} : vector<1x896xf32> to vector<1x32xf32>
    %107 = arith.addf %105, %106 : vector<1x32xf32>
    %108 = vector.extract_strided_slice %80 {offsets = [0, 448], sizes = [1, 32], strides = [1, 1]} : vector<1x896xf32> to vector<1x32xf32>
    %109 = arith.addf %107, %108 : vector<1x32xf32>
    %110 = vector.extract_strided_slice %80 {offsets = [0, 480], sizes = [1, 32], strides = [1, 1]} : vector<1x896xf32> to vector<1x32xf32>
    %111 = arith.addf %109, %110 : vector<1x32xf32>
    %112 = vector.extract_strided_slice %80 {offsets = [0, 512], sizes = [1, 32], strides = [1, 1]} : vector<1x896xf32> to vector<1x32xf32>
    %113 = arith.addf %111, %112 : vector<1x32xf32>
    %114 = vector.extract_strided_slice %80 {offsets = [0, 544], sizes = [1, 32], strides = [1, 1]} : vector<1x896xf32> to vector<1x32xf32>
    %115 = arith.addf %113, %114 : vector<1x32xf32>
    %116 = vector.extract_strided_slice %80 {offsets = [0, 576], sizes = [1, 32], strides = [1, 1]} : vector<1x896xf32> to vector<1x32xf32>
    %117 = arith.addf %115, %116 : vector<1x32xf32>
    %118 = vector.extract_strided_slice %80 {offsets = [0, 608], sizes = [1, 32], strides = [1, 1]} : vector<1x896xf32> to vector<1x32xf32>
    %119 = arith.addf %117, %118 : vector<1x32xf32>
    %120 = vector.extract_strided_slice %80 {offsets = [0, 640], sizes = [1, 32], strides = [1, 1]} : vector<1x896xf32> to vector<1x32xf32>
    %121 = arith.addf %119, %120 : vector<1x32xf32>
    %122 = vector.extract_strided_slice %80 {offsets = [0, 672], sizes = [1, 32], strides = [1, 1]} : vector<1x896xf32> to vector<1x32xf32>
    %123 = arith.addf %121, %122 : vector<1x32xf32>
    %124 = vector.extract_strided_slice %80 {offsets = [0, 704], sizes = [1, 32], strides = [1, 1]} : vector<1x896xf32> to vector<1x32xf32>
    %125 = arith.addf %123, %124 : vector<1x32xf32>
    %126 = vector.extract_strided_slice %80 {offsets = [0, 736], sizes = [1, 32], strides = [1, 1]} : vector<1x896xf32> to vector<1x32xf32>
    %127 = arith.addf %125, %126 : vector<1x32xf32>
    %128 = vector.extract_strided_slice %80 {offsets = [0, 768], sizes = [1, 32], strides = [1, 1]} : vector<1x896xf32> to vector<1x32xf32>
    %129 = arith.addf %127, %128 : vector<1x32xf32>
    %130 = vector.extract_strided_slice %80 {offsets = [0, 800], sizes = [1, 32], strides = [1, 1]} : vector<1x896xf32> to vector<1x32xf32>
    %131 = arith.addf %129, %130 : vector<1x32xf32>
    %132 = vector.extract_strided_slice %80 {offsets = [0, 832], sizes = [1, 32], strides = [1, 1]} : vector<1x896xf32> to vector<1x32xf32>
    %133 = arith.addf %131, %132 : vector<1x32xf32>
    %134 = vector.extract_strided_slice %80 {offsets = [0, 864], sizes = [1, 32], strides = [1, 1]} : vector<1x896xf32> to vector<1x32xf32>
    %135 = arith.addf %133, %134 : vector<1x32xf32>
    %cst_16 = arith.constant 1.568000e+03 : f32
    %136 = vector.broadcast %cst_16 : f32 to vector<1x32xf32>
    %137 = arith.divf %135, %136 : vector<1x32xf32>
    %c0_17 = arith.constant 0 : index
    %c0_18 = arith.constant 0 : index
    %138 = vector.load %arg2[%c0_17, %c0_18] : memref<1x32xf32, #tpu.memory_space<vmem>>, vector<1x32xf32>
    %cst_19 = arith.constant 9.99999974E-6 : f32
    %139 = vector.broadcast %cst_19 : f32 to vector<1x32xf32>
    %140 = arith.addf %137, %139 : vector<1x32xf32>
    %141 = math.rsqrt %140 : vector<1x32xf32>
    %142 = arith.mulf %138, %141 : vector<1x32xf32>
    %143 = tpu.concatenate %142, %142, %142, %142, %142, %142, %142, %142, %142, %142, %142, %142, %142, %142, %142, %142 in 1 : vector<1x32xf32>, vector<1x32xf32>, vector<1x32xf32>, vector<1x32xf32>, vector<1x32xf32>, vector<1x32xf32>, vector<1x32xf32>, vector<1x32xf32>, vector<1x32xf32>, vector<1x32xf32>, vector<1x32xf32>, vector<1x32xf32>, vector<1x32xf32>, vector<1x32xf32>, vector<1x32xf32>, vector<1x32xf32> -> vector<1x512xf32>
    %144 = tpu.concatenate %142, %142, %142, %142, %142, %142, %142, %142, %142, %142, %142, %142 in 1 : vector<1x32xf32>, vector<1x32xf32>, vector<1x32xf32>, vector<1x32xf32>, vector<1x32xf32>, vector<1x32xf32>, vector<1x32xf32>, vector<1x32xf32>, vector<1x32xf32>, vector<1x32xf32>, vector<1x32xf32>, vector<1x32xf32> -> vector<1x384xf32>
    %145 = tpu.concatenate %143, %144 in 1 : vector<1x512xf32>, vector<1x384xf32> -> vector<1x896xf32>
    %146 = vector.broadcast %145 : vector<1x896xf32> to vector<56x896xf32>
    %147 = arith.mulf %77, %146 : vector<56x896xf32>
    %c0_20 = arith.constant 0 : index
    %c0_21 = arith.constant 0 : index
    %148 = vector.load %arg3[%c0_20, %c0_21] : memref<1x32xf32, #tpu.memory_space<vmem>>, vector<1x32xf32>
    %149 = tpu.concatenate %148, %148, %148, %148, %148, %148, %148, %148, %148, %148, %148, %148, %148, %148, %148, %148 in 1 : vector<1x32xf32>, vector<1x32xf32>, vector<1x32xf32>, vector<1x32xf32>, vector<1x32xf32>, vector<1x32xf32>, vector<1x32xf32>, vector<1x32xf32>, vector<1x32xf32>, vector<1x32xf32>, vector<1x32xf32>, vector<1x32xf32>, vector<1x32xf32>, vector<1x32xf32>, vector<1x32xf32>, vector<1x32xf32> -> vector<1x512xf32>
    %150 = tpu.concatenate %148, %148, %148, %148, %148, %148, %148, %148, %148, %148, %148, %148 in 1 : vector<1x32xf32>, vector<1x32xf32>, vector<1x32xf32>, vector<1x32xf32>, vector<1x32xf32>, vector<1x32xf32>, vector<1x32xf32>, vector<1x32xf32>, vector<1x32xf32>, vector<1x32xf32>, vector<1x32xf32>, vector<1x32xf32> -> vector<1x384xf32>
    %151 = tpu.concatenate %149, %150 in 1 : vector<1x512xf32>, vector<1x384xf32> -> vector<1x896xf32>
    %152 = vector.broadcast %151 : vector<1x896xf32> to vector<56x896xf32>
    %153 = arith.addf %147, %152 : vector<56x896xf32>
    %cst_22 = arith.constant 0.000000e+00 : f32
    %154 = vector.broadcast %cst_22 : f32 to vector<56x896xf32>
    %155 = arith.maximumf %153, %154 : vector<56x896xf32>
    %156 = vector.shape_cast %155 : vector<56x896xf32> to vector<14x4x896xf32>
    %157 = vector.extract_strided_slice %156 {offsets = [0, 0, 0], sizes = [14, 2, 896], strides = [1, 1, 1]} : vector<14x4x896xf32> to vector<14x2x896xf32>
    %158 = vector.extract_strided_slice %156 {offsets = [0, 2, 0], sizes = [14, 2, 896], strides = [1, 1, 1]} : vector<14x4x896xf32> to vector<14x2x896xf32>
    %159 = arith.maximumf %157, %158 : vector<14x2x896xf32>
    %160 = vector.extract_strided_slice %159 {offsets = [0, 0, 0], sizes = [14, 2, 32], strides = [1, 1, 1]} : vector<14x2x896xf32> to vector<14x2x32xf32>
    %161 = vector.extract_strided_slice %159 {offsets = [0, 0, 32], sizes = [14, 2, 32], strides = [1, 1, 1]} : vector<14x2x896xf32> to vector<14x2x32xf32>
    %162 = arith.maximumf %160, %161 : vector<14x2x32xf32>
    %163 = vector.extract_strided_slice %159 {offsets = [0, 0, 64], sizes = [14, 2, 32], strides = [1, 1, 1]} : vector<14x2x896xf32> to vector<14x2x32xf32>
    %164 = vector.extract_strided_slice %159 {offsets = [0, 0, 96], sizes = [14, 2, 32], strides = [1, 1, 1]} : vector<14x2x896xf32> to vector<14x2x32xf32>
    %165 = arith.maximumf %163, %164 : vector<14x2x32xf32>
    %166 = vector.extract_strided_slice %159 {offsets = [0, 0, 128], sizes = [14, 2, 32], strides = [1, 1, 1]} : vector<14x2x896xf32> to vector<14x2x32xf32>
    %167 = vector.extract_strided_slice %159 {offsets = [0, 0, 160], sizes = [14, 2, 32], strides = [1, 1, 1]} : vector<14x2x896xf32> to vector<14x2x32xf32>
    %168 = arith.maximumf %166, %167 : vector<14x2x32xf32>
    %169 = vector.extract_strided_slice %159 {offsets = [0, 0, 192], sizes = [14, 2, 32], strides = [1, 1, 1]} : vector<14x2x896xf32> to vector<14x2x32xf32>
    %170 = vector.extract_strided_slice %159 {offsets = [0, 0, 224], sizes = [14, 2, 32], strides = [1, 1, 1]} : vector<14x2x896xf32> to vector<14x2x32xf32>
    %171 = arith.maximumf %169, %170 : vector<14x2x32xf32>
    %172 = vector.extract_strided_slice %159 {offsets = [0, 0, 256], sizes = [14, 2, 32], strides = [1, 1, 1]} : vector<14x2x896xf32> to vector<14x2x32xf32>
    %173 = vector.extract_strided_slice %159 {offsets = [0, 0, 288], sizes = [14, 2, 32], strides = [1, 1, 1]} : vector<14x2x896xf32> to vector<14x2x32xf32>
    %174 = arith.maximumf %172, %173 : vector<14x2x32xf32>
    %175 = vector.extract_strided_slice %159 {offsets = [0, 0, 320], sizes = [14, 2, 32], strides = [1, 1, 1]} : vector<14x2x896xf32> to vector<14x2x32xf32>
    %176 = vector.extract_strided_slice %159 {offsets = [0, 0, 352], sizes = [14, 2, 32], strides = [1, 1, 1]} : vector<14x2x896xf32> to vector<14x2x32xf32>
    %177 = arith.maximumf %175, %176 : vector<14x2x32xf32>
    %178 = vector.extract_strided_slice %159 {offsets = [0, 0, 384], sizes = [14, 2, 32], strides = [1, 1, 1]} : vector<14x2x896xf32> to vector<14x2x32xf32>
    %179 = vector.extract_strided_slice %159 {offsets = [0, 0, 416], sizes = [14, 2, 32], strides = [1, 1, 1]} : vector<14x2x896xf32> to vector<14x2x32xf32>
    %180 = arith.maximumf %178, %179 : vector<14x2x32xf32>
    %181 = vector.extract_strided_slice %159 {offsets = [0, 0, 448], sizes = [14, 2, 32], strides = [1, 1, 1]} : vector<14x2x896xf32> to vector<14x2x32xf32>
    %182 = vector.extract_strided_slice %159 {offsets = [0, 0, 480], sizes = [14, 2, 32], strides = [1, 1, 1]} : vector<14x2x896xf32> to vector<14x2x32xf32>
    %183 = arith.maximumf %181, %182 : vector<14x2x32xf32>
    %184 = vector.extract_strided_slice %159 {offsets = [0, 0, 512], sizes = [14, 2, 32], strides = [1, 1, 1]} : vector<14x2x896xf32> to vector<14x2x32xf32>
    %185 = vector.extract_strided_slice %159 {offsets = [0, 0, 544], sizes = [14, 2, 32], strides = [1, 1, 1]} : vector<14x2x896xf32> to vector<14x2x32xf32>
    %186 = arith.maximumf %184, %185 : vector<14x2x32xf32>
    %187 = vector.extract_strided_slice %159 {offsets = [0, 0, 576], sizes = [14, 2, 32], strides = [1, 1, 1]} : vector<14x2x896xf32> to vector<14x2x32xf32>
    %188 = vector.extract_strided_slice %159 {offsets = [0, 0, 608], sizes = [14, 2, 32], strides = [1, 1, 1]} : vector<14x2x896xf32> to vector<14x2x32xf32>
    %189 = arith.maximumf %187, %188 : vector<14x2x32xf32>
    %190 = vector.extract_strided_slice %159 {offsets = [0, 0, 640], sizes = [14, 2, 32], strides = [1, 1, 1]} : vector<14x2x896xf32> to vector<14x2x32xf32>
    %191 = vector.extract_strided_slice %159 {offsets = [0, 0, 672], sizes = [14, 2, 32], strides = [1, 1, 1]} : vector<14x2x896xf32> to vector<14x2x32xf32>
    %192 = arith.maximumf %190, %191 : vector<14x2x32xf32>
    %193 = vector.extract_strided_slice %159 {offsets = [0, 0, 704], sizes = [14, 2, 32], strides = [1, 1, 1]} : vector<14x2x896xf32> to vector<14x2x32xf32>
    %194 = vector.extract_strided_slice %159 {offsets = [0, 0, 736], sizes = [14, 2, 32], strides = [1, 1, 1]} : vector<14x2x896xf32> to vector<14x2x32xf32>
    %195 = arith.maximumf %193, %194 : vector<14x2x32xf32>
    %196 = vector.extract_strided_slice %159 {offsets = [0, 0, 768], sizes = [14, 2, 32], strides = [1, 1, 1]} : vector<14x2x896xf32> to vector<14x2x32xf32>
    %197 = vector.extract_strided_slice %159 {offsets = [0, 0, 800], sizes = [14, 2, 32], strides = [1, 1, 1]} : vector<14x2x896xf32> to vector<14x2x32xf32>
    %198 = arith.maximumf %196, %197 : vector<14x2x32xf32>
    %199 = vector.extract_strided_slice %159 {offsets = [0, 0, 832], sizes = [14, 2, 32], strides = [1, 1, 1]} : vector<14x2x896xf32> to vector<14x2x32xf32>
    %200 = vector.extract_strided_slice %159 {offsets = [0, 0, 864], sizes = [14, 2, 32], strides = [1, 1, 1]} : vector<14x2x896xf32> to vector<14x2x32xf32>
    %201 = arith.maximumf %199, %200 : vector<14x2x32xf32>
    %202 = tpu.concatenate %162, %165, %168, %171, %174, %177, %180, %183, %186, %189, %192, %195, %198, %201 in 2 : vector<14x2x32xf32>, vector<14x2x32xf32>, vector<14x2x32xf32>, vector<14x2x32xf32>, vector<14x2x32xf32>, vector<14x2x32xf32>, vector<14x2x32xf32>, vector<14x2x32xf32>, vector<14x2x32xf32>, vector<14x2x32xf32>, vector<14x2x32xf32>, vector<14x2x32xf32>, vector<14x2x32xf32>, vector<14x2x32xf32> -> vector<14x2x448xf32>
    %cst_23 = arith.constant 0.000000e+00 : bf16
    %203 = vector.broadcast %cst_23 : bf16 to vector<32x512xbf16>
    %c0_24 = arith.constant 0 : index
    %c0_25 = arith.constant 0 : index
    %204 = vector.load %arg12[%c0_24, %c0_25] : memref<32x512xbf16, #tpu.memory_space<vmem>>, vector<32x512xbf16>
    tpu.vector_store %arg12[%c0_24, %c0_25], %203 {strides = array<i32>} : memref<32x512xbf16, #tpu.memory_space<vmem>>, vector<32x512xbf16>,
    %205 = vector.shape_cast %202 : vector<14x2x448xf32> to vector<28x448xf32>
    %206 = arith.truncf %205 : vector<28x448xf32> to vector<28x448xbf16>
    %c2_26 = arith.constant 2 : index
    %c0_27 = arith.constant 0 : index
    %207 = vector.load %arg12[%c2_26, %c0_27] : memref<32x512xbf16, #tpu.memory_space<vmem>>, vector<28x448xbf16>
    tpu.vector_store %arg12[%c2_26, %c0_27], %206 {strides = array<i32>} : memref<32x512xbf16, #tpu.memory_space<vmem>>, vector<28x448xbf16>,
    %c0_28 = arith.constant 0 : index
    %c0_29 = arith.constant 0 : index
    %208 = vector.load %arg12[%c0_28, %c0_29] : memref<32x512xbf16, #tpu.memory_space<vmem>>, vector<28x512xbf16>
    %c0_30 = arith.constant 0 : index
    %c0_31 = arith.constant 0 : index
    %c0_32 = arith.constant 0 : index
    %209 = vector.load %arg4[%c0_30, %c0_31, %c0_32] : memref<3x512x896xbf16, #tpu.memory_space<vmem>>, vector<1x512x896xbf16>
    %210 = vector.shape_cast %209 : vector<1x512x896xbf16> to vector<512x896xbf16>
    %cst_33 = arith.constant dense<0.000000e+00> : vector<28x896xf32>
    %211 = tpu.matmul %208, %210, %cst_33 {dimension_numbers = #tpu.dot_dimension_numbers<[1], [0], [0], [1], [0, 0, 1, 1], [], []>} : vector<28x512xbf16>, vector<512x896xbf16>, vector<28x896xf32> -> vector<28x896xf32>
    %c2_34 = arith.constant 2 : index
    %c0_35 = arith.constant 0 : index
    %212 = vector.load %arg12[%c2_34, %c0_35] : memref<32x512xbf16, #tpu.memory_space<vmem>>, vector<28x512xbf16>
    %c1_36 = arith.constant 1 : index
    %c0_37 = arith.constant 0 : index
    %c0_38 = arith.constant 0 : index
    %213 = vector.load %arg4[%c1_36, %c0_37, %c0_38] : memref<3x512x896xbf16, #tpu.memory_space<vmem>>, vector<1x512x896xbf16>
    %214 = vector.shape_cast %213 : vector<1x512x896xbf16> to vector<512x896xbf16>
    %cst_39 = arith.constant dense<0.000000e+00> : vector<28x896xf32>
    %215 = tpu.matmul %212, %214, %cst_39 {dimension_numbers = #tpu.dot_dimension_numbers<[1], [0], [0], [1], [0, 0, 1, 1], [], []>} : vector<28x512xbf16>, vector<512x896xbf16>, vector<28x896xf32> -> vector<28x896xf32>
    %216 = arith.addf %211, %215 : vector<28x896xf32>
    %c4_40 = arith.constant 4 : index
    %c0_41 = arith.constant 0 : index
    %217 = vector.load %arg12[%c4_40, %c0_41] : memref<32x512xbf16, #tpu.memory_space<vmem>>, vector<28x512xbf16>
    %c2_42 = arith.constant 2 : index
    %c0_43 = arith.constant 0 : index
    %c0_44 = arith.constant 0 : index
    %218 = vector.load %arg4[%c2_42, %c0_43, %c0_44] : memref<3x512x896xbf16, #tpu.memory_space<vmem>>, vector<1x512x896xbf16>
    %219 = vector.shape_cast %218 : vector<1x512x896xbf16> to vector<512x896xbf16>
    %cst_45 = arith.constant dense<0.000000e+00> : vector<28x896xf32>
    %220 = tpu.matmul %217, %219, %cst_45 {dimension_numbers = #tpu.dot_dimension_numbers<[1], [0], [0], [1], [0, 0, 1, 1], [], []>} : vector<28x512xbf16>, vector<512x896xbf16>, vector<28x896xf32> -> vector<28x896xf32>
    %221 = arith.addf %216, %220 : vector<28x896xf32>
    %cst_46 = arith.constant dense<0.000000e+00> : vector<896xf32>
    %222 = vector.multi_reduction <add>, %221, %cst_46 [0] : vector<28x896xf32> to vector<896xf32>
    %223 = vector.shape_cast %222 : vector<896xf32> to vector<1x896xf32>
    %224 = vector.extract_strided_slice %223 {offsets = [0, 0], sizes = [1, 64], strides = [1, 1]} : vector<1x896xf32> to vector<1x64xf32>
    %225 = vector.extract_strided_slice %223 {offsets = [0, 64], sizes = [1, 64], strides = [1, 1]} : vector<1x896xf32> to vector<1x64xf32>
    %226 = arith.addf %224, %225 : vector<1x64xf32>
    %227 = vector.extract_strided_slice %223 {offsets = [0, 128], sizes = [1, 64], strides = [1, 1]} : vector<1x896xf32> to vector<1x64xf32>
    %228 = arith.addf %226, %227 : vector<1x64xf32>
    %229 = vector.extract_strided_slice %223 {offsets = [0, 192], sizes = [1, 64], strides = [1, 1]} : vector<1x896xf32> to vector<1x64xf32>
    %230 = arith.addf %228, %229 : vector<1x64xf32>
    %231 = vector.extract_strided_slice %223 {offsets = [0, 256], sizes = [1, 64], strides = [1, 1]} : vector<1x896xf32> to vector<1x64xf32>
    %232 = arith.addf %230, %231 : vector<1x64xf32>
    %233 = vector.extract_strided_slice %223 {offsets = [0, 320], sizes = [1, 64], strides = [1, 1]} : vector<1x896xf32> to vector<1x64xf32>
    %234 = arith.addf %232, %233 : vector<1x64xf32>
    %235 = vector.extract_strided_slice %223 {offsets = [0, 384], sizes = [1, 64], strides = [1, 1]} : vector<1x896xf32> to vector<1x64xf32>
    %236 = arith.addf %234, %235 : vector<1x64xf32>
    %237 = vector.extract_strided_slice %223 {offsets = [0, 448], sizes = [1, 64], strides = [1, 1]} : vector<1x896xf32> to vector<1x64xf32>
    %238 = arith.addf %236, %237 : vector<1x64xf32>
    %239 = vector.extract_strided_slice %223 {offsets = [0, 512], sizes = [1, 64], strides = [1, 1]} : vector<1x896xf32> to vector<1x64xf32>
    %240 = arith.addf %238, %239 : vector<1x64xf32>
    %241 = vector.extract_strided_slice %223 {offsets = [0, 576], sizes = [1, 64], strides = [1, 1]} : vector<1x896xf32> to vector<1x64xf32>
    %242 = arith.addf %240, %241 : vector<1x64xf32>
    %243 = vector.extract_strided_slice %223 {offsets = [0, 640], sizes = [1, 64], strides = [1, 1]} : vector<1x896xf32> to vector<1x64xf32>
    %244 = arith.addf %242, %243 : vector<1x64xf32>
    %245 = vector.extract_strided_slice %223 {offsets = [0, 704], sizes = [1, 64], strides = [1, 1]} : vector<1x896xf32> to vector<1x64xf32>
    %246 = arith.addf %244, %245 : vector<1x64xf32>
    %247 = vector.extract_strided_slice %223 {offsets = [0, 768], sizes = [1, 64], strides = [1, 1]} : vector<1x896xf32> to vector<1x64xf32>
    %248 = arith.addf %246, %247 : vector<1x64xf32>
    %249 = vector.extract_strided_slice %223 {offsets = [0, 832], sizes = [1, 64], strides = [1, 1]} : vector<1x896xf32> to vector<1x64xf32>
    %250 = arith.addf %248, %249 : vector<1x64xf32>
    %cst_47 = arith.constant 3.920000e+02 : f32
    %251 = vector.broadcast %cst_47 : f32 to vector<1x64xf32>
    %252 = arith.divf %250, %251 : vector<1x64xf32>
    %253 = tpu.concatenate %252, %252, %252, %252, %252, %252, %252, %252, %252, %252, %252, %252, %252, %252 in 1 : vector<1x64xf32>, vector<1x64xf32>, vector<1x64xf32>, vector<1x64xf32>, vector<1x64xf32>, vector<1x64xf32>, vector<1x64xf32>, vector<1x64xf32>, vector<1x64xf32>, vector<1x64xf32>, vector<1x64xf32>, vector<1x64xf32>, vector<1x64xf32>, vector<1x64xf32> -> vector<1x896xf32>
    %254 = vector.broadcast %253 : vector<1x896xf32> to vector<28x896xf32>
    %255 = arith.subf %221, %254 : vector<28x896xf32>
    %256 = arith.mulf %255, %255 : vector<28x896xf32>
    %cst_48 = arith.constant dense<0.000000e+00> : vector<896xf32>
    %257 = vector.multi_reduction <add>, %256, %cst_48 [0] : vector<28x896xf32> to vector<896xf32>
    %258 = vector.shape_cast %257 : vector<896xf32> to vector<1x896xf32>
    %259 = vector.extract_strided_slice %258 {offsets = [0, 0], sizes = [1, 64], strides = [1, 1]} : vector<1x896xf32> to vector<1x64xf32>
    %260 = vector.extract_strided_slice %258 {offsets = [0, 64], sizes = [1, 64], strides = [1, 1]} : vector<1x896xf32> to vector<1x64xf32>
    %261 = arith.addf %259, %260 : vector<1x64xf32>
    %262 = vector.extract_strided_slice %258 {offsets = [0, 128], sizes = [1, 64], strides = [1, 1]} : vector<1x896xf32> to vector<1x64xf32>
    %263 = arith.addf %261, %262 : vector<1x64xf32>
    %264 = vector.extract_strided_slice %258 {offsets = [0, 192], sizes = [1, 64], strides = [1, 1]} : vector<1x896xf32> to vector<1x64xf32>
    %265 = arith.addf %263, %264 : vector<1x64xf32>
    %266 = vector.extract_strided_slice %258 {offsets = [0, 256], sizes = [1, 64], strides = [1, 1]} : vector<1x896xf32> to vector<1x64xf32>
    %267 = arith.addf %265, %266 : vector<1x64xf32>
    %268 = vector.extract_strided_slice %258 {offsets = [0, 320], sizes = [1, 64], strides = [1, 1]} : vector<1x896xf32> to vector<1x64xf32>
    %269 = arith.addf %267, %268 : vector<1x64xf32>
    %270 = vector.extract_strided_slice %258 {offsets = [0, 384], sizes = [1, 64], strides = [1, 1]} : vector<1x896xf32> to vector<1x64xf32>
    %271 = arith.addf %269, %270 : vector<1x64xf32>
    %272 = vector.extract_strided_slice %258 {offsets = [0, 448], sizes = [1, 64], strides = [1, 1]} : vector<1x896xf32> to vector<1x64xf32>
    %273 = arith.addf %271, %272 : vector<1x64xf32>
    %274 = vector.extract_strided_slice %258 {offsets = [0, 512], sizes = [1, 64], strides = [1, 1]} : vector<1x896xf32> to vector<1x64xf32>
    %275 = arith.addf %273, %274 : vector<1x64xf32>
    %276 = vector.extract_strided_slice %258 {offsets = [0, 576], sizes = [1, 64], strides = [1, 1]} : vector<1x896xf32> to vector<1x64xf32>
    %277 = arith.addf %275, %276 : vector<1x64xf32>
    %278 = vector.extract_strided_slice %258 {offsets = [0, 640], sizes = [1, 64], strides = [1, 1]} : vector<1x896xf32> to vector<1x64xf32>
    %279 = arith.addf %277, %278 : vector<1x64xf32>
    %280 = vector.extract_strided_slice %258 {offsets = [0, 704], sizes = [1, 64], strides = [1, 1]} : vector<1x896xf32> to vector<1x64xf32>
    %281 = arith.addf %279, %280 : vector<1x64xf32>
    %282 = vector.extract_strided_slice %258 {offsets = [0, 768], sizes = [1, 64], strides = [1, 1]} : vector<1x896xf32> to vector<1x64xf32>
    %283 = arith.addf %281, %282 : vector<1x64xf32>
    %284 = vector.extract_strided_slice %258 {offsets = [0, 832], sizes = [1, 64], strides = [1, 1]} : vector<1x896xf32> to vector<1x64xf32>
    %285 = arith.addf %283, %284 : vector<1x64xf32>
    %cst_49 = arith.constant 3.920000e+02 : f32
    %286 = vector.broadcast %cst_49 : f32 to vector<1x64xf32>
    %287 = arith.divf %285, %286 : vector<1x64xf32>
    %c0_50 = arith.constant 0 : index
    %c0_51 = arith.constant 0 : index
    %288 = vector.load %arg5[%c0_50, %c0_51] : memref<1x64xf32, #tpu.memory_space<vmem>>, vector<1x64xf32>
    %cst_52 = arith.constant 9.99999974E-6 : f32
    %289 = vector.broadcast %cst_52 : f32 to vector<1x64xf32>
    %290 = arith.addf %287, %289 : vector<1x64xf32>
    %291 = math.rsqrt %290 : vector<1x64xf32>
    %292 = arith.mulf %288, %291 : vector<1x64xf32>
    %293 = tpu.concatenate %292, %292, %292, %292, %292, %292, %292, %292, %292, %292, %292, %292, %292, %292 in 1 : vector<1x64xf32>, vector<1x64xf32>, vector<1x64xf32>, vector<1x64xf32>, vector<1x64xf32>, vector<1x64xf32>, vector<1x64xf32>, vector<1x64xf32>, vector<1x64xf32>, vector<1x64xf32>, vector<1x64xf32>, vector<1x64xf32>, vector<1x64xf32>, vector<1x64xf32> -> vector<1x896xf32>
    %294 = vector.broadcast %293 : vector<1x896xf32> to vector<28x896xf32>
    %295 = arith.mulf %255, %294 : vector<28x896xf32>
    %c0_53 = arith.constant 0 : index
    %c0_54 = arith.constant 0 : index
    %296 = vector.load %arg6[%c0_53, %c0_54] : memref<1x64xf32, #tpu.memory_space<vmem>>, vector<1x64xf32>
    %297 = tpu.concatenate %296, %296, %296, %296, %296, %296, %296, %296, %296, %296, %296, %296, %296, %296 in 1 : vector<1x64xf32>, vector<1x64xf32>, vector<1x64xf32>, vector<1x64xf32>, vector<1x64xf32>, vector<1x64xf32>, vector<1x64xf32>, vector<1x64xf32>, vector<1x64xf32>, vector<1x64xf32>, vector<1x64xf32>, vector<1x64xf32>, vector<1x64xf32>, vector<1x64xf32> -> vector<1x896xf32>
    %298 = vector.broadcast %297 : vector<1x896xf32> to vector<28x896xf32>
    %299 = arith.addf %295, %298 : vector<28x896xf32>
    %cst_55 = arith.constant 0.000000e+00 : f32
    %300 = vector.broadcast %cst_55 : f32 to vector<28x896xf32>
    %301 = arith.maximumf %299, %300 : vector<28x896xf32>
    %302 = vector.shape_cast %301 : vector<28x896xf32> to vector<7x4x896xf32>
    %303 = vector.extract_strided_slice %302 {offsets = [0, 0, 0], sizes = [7, 2, 896], strides = [1, 1, 1]} : vector<7x4x896xf32> to vector<7x2x896xf32>
    %304 = vector.extract_strided_slice %302 {offsets = [0, 2, 0], sizes = [7, 2, 896], strides = [1, 1, 1]} : vector<7x4x896xf32> to vector<7x2x896xf32>
    %305 = arith.maximumf %303, %304 : vector<7x2x896xf32>
    %306 = vector.extract_strided_slice %305 {offsets = [0, 0, 0], sizes = [7, 2, 64], strides = [1, 1, 1]} : vector<7x2x896xf32> to vector<7x2x64xf32>
    %307 = vector.extract_strided_slice %305 {offsets = [0, 0, 64], sizes = [7, 2, 64], strides = [1, 1, 1]} : vector<7x2x896xf32> to vector<7x2x64xf32>
    %308 = arith.maximumf %306, %307 : vector<7x2x64xf32>
    %309 = vector.extract_strided_slice %305 {offsets = [0, 0, 128], sizes = [7, 2, 64], strides = [1, 1, 1]} : vector<7x2x896xf32> to vector<7x2x64xf32>
    %310 = vector.extract_strided_slice %305 {offsets = [0, 0, 192], sizes = [7, 2, 64], strides = [1, 1, 1]} : vector<7x2x896xf32> to vector<7x2x64xf32>
    %311 = arith.maximumf %309, %310 : vector<7x2x64xf32>
    %312 = vector.extract_strided_slice %305 {offsets = [0, 0, 256], sizes = [7, 2, 64], strides = [1, 1, 1]} : vector<7x2x896xf32> to vector<7x2x64xf32>
    %313 = vector.extract_strided_slice %305 {offsets = [0, 0, 320], sizes = [7, 2, 64], strides = [1, 1, 1]} : vector<7x2x896xf32> to vector<7x2x64xf32>
    %314 = arith.maximumf %312, %313 : vector<7x2x64xf32>
    %315 = vector.extract_strided_slice %305 {offsets = [0, 0, 384], sizes = [7, 2, 64], strides = [1, 1, 1]} : vector<7x2x896xf32> to vector<7x2x64xf32>
    %316 = vector.extract_strided_slice %305 {offsets = [0, 0, 448], sizes = [7, 2, 64], strides = [1, 1, 1]} : vector<7x2x896xf32> to vector<7x2x64xf32>
    %317 = arith.maximumf %315, %316 : vector<7x2x64xf32>
    %318 = vector.extract_strided_slice %305 {offsets = [0, 0, 512], sizes = [7, 2, 64], strides = [1, 1, 1]} : vector<7x2x896xf32> to vector<7x2x64xf32>
    %319 = vector.extract_strided_slice %305 {offsets = [0, 0, 576], sizes = [7, 2, 64], strides = [1, 1, 1]} : vector<7x2x896xf32> to vector<7x2x64xf32>
    %320 = arith.maximumf %318, %319 : vector<7x2x64xf32>
    %321 = vector.extract_strided_slice %305 {offsets = [0, 0, 640], sizes = [7, 2, 64], strides = [1, 1, 1]} : vector<7x2x896xf32> to vector<7x2x64xf32>
    %322 = vector.extract_strided_slice %305 {offsets = [0, 0, 704], sizes = [7, 2, 64], strides = [1, 1, 1]} : vector<7x2x896xf32> to vector<7x2x64xf32>
    %323 = arith.maximumf %321, %322 : vector<7x2x64xf32>
    %324 = vector.extract_strided_slice %305 {offsets = [0, 0, 768], sizes = [7, 2, 64], strides = [1, 1, 1]} : vector<7x2x896xf32> to vector<7x2x64xf32>
    %325 = vector.extract_strided_slice %305 {offsets = [0, 0, 832], sizes = [7, 2, 64], strides = [1, 1, 1]} : vector<7x2x896xf32> to vector<7x2x64xf32>
    %326 = arith.maximumf %324, %325 : vector<7x2x64xf32>
    %327 = tpu.concatenate %308, %311, %314, %317, %320, %323, %326 in 2 : vector<7x2x64xf32>, vector<7x2x64xf32>, vector<7x2x64xf32>, vector<7x2x64xf32>, vector<7x2x64xf32>, vector<7x2x64xf32>, vector<7x2x64xf32> -> vector<7x2x448xf32>
    %328 = arith.truncf %327 : vector<7x2x448xf32> to vector<7x2x448xbf16>
    %329 = vector.extract_strided_slice %328 {offsets = [0, 0, 0], sizes = [1, 2, 448], strides = [1, 1, 1]} : vector<7x2x448xbf16> to vector<1x2x448xbf16>
    %330 = vector.shape_cast %329 : vector<1x2x448xbf16> to vector<2x448xbf16>
    %c0_56 = arith.constant 0 : index
    %c0_57 = arith.constant 0 : index
    %c0_58 = arith.constant 0 : index
    %331 = vector.load %arg7[%c0_56, %c0_57, %c0_58] : memref<7x448x128xbf16, #tpu.memory_space<vmem>>, vector<1x448x128xbf16>
    %332 = vector.shape_cast %331 : vector<1x448x128xbf16> to vector<448x128xbf16>
    %cst_59 = arith.constant dense<0.000000e+00> : vector<2x128xf32>
    %333 = tpu.matmul %330, %332, %cst_59 {dimension_numbers = #tpu.dot_dimension_numbers<[1], [0], [0], [1], [0, 0, 1, 1], [], []>} : vector<2x448xbf16>, vector<448x128xbf16>, vector<2x128xf32> -> vector<2x128xf32>
    %334 = vector.extract_strided_slice %328 {offsets = [1, 0, 0], sizes = [1, 2, 448], strides = [1, 1, 1]} : vector<7x2x448xbf16> to vector<1x2x448xbf16>
    %335 = vector.shape_cast %334 : vector<1x2x448xbf16> to vector<2x448xbf16>
    %c1_60 = arith.constant 1 : index
    %c0_61 = arith.constant 0 : index
    %c0_62 = arith.constant 0 : index
    %336 = vector.load %arg7[%c1_60, %c0_61, %c0_62] : memref<7x448x128xbf16, #tpu.memory_space<vmem>>, vector<1x448x128xbf16>
    %337 = vector.shape_cast %336 : vector<1x448x128xbf16> to vector<448x128xbf16>
    %cst_63 = arith.constant dense<0.000000e+00> : vector<2x128xf32>
    %338 = tpu.matmul %335, %337, %cst_63 {dimension_numbers = #tpu.dot_dimension_numbers<[1], [0], [0], [1], [0, 0, 1, 1], [], []>} : vector<2x448xbf16>, vector<448x128xbf16>, vector<2x128xf32> -> vector<2x128xf32>
    %339 = arith.addf %333, %338 : vector<2x128xf32>
    %340 = vector.extract_strided_slice %328 {offsets = [2, 0, 0], sizes = [1, 2, 448], strides = [1, 1, 1]} : vector<7x2x448xbf16> to vector<1x2x448xbf16>
    %341 = vector.shape_cast %340 : vector<1x2x448xbf16> to vector<2x448xbf16>
    %c2_64 = arith.constant 2 : index
    %c0_65 = arith.constant 0 : index
    %c0_66 = arith.constant 0 : index
    %342 = vector.load %arg7[%c2_64, %c0_65, %c0_66] : memref<7x448x128xbf16, #tpu.memory_space<vmem>>, vector<1x448x128xbf16>
    %343 = vector.shape_cast %342 : vector<1x448x128xbf16> to vector<448x128xbf16>
    %cst_67 = arith.constant dense<0.000000e+00> : vector<2x128xf32>
    %344 = tpu.matmul %341, %343, %cst_67 {dimension_numbers = #tpu.dot_dimension_numbers<[1], [0], [0], [1], [0, 0, 1, 1], [], []>} : vector<2x448xbf16>, vector<448x128xbf16>, vector<2x128xf32> -> vector<2x128xf32>
    %345 = arith.addf %339, %344 : vector<2x128xf32>
    %346 = vector.extract_strided_slice %328 {offsets = [3, 0, 0], sizes = [1, 2, 448], strides = [1, 1, 1]} : vector<7x2x448xbf16> to vector<1x2x448xbf16>
    %347 = vector.shape_cast %346 : vector<1x2x448xbf16> to vector<2x448xbf16>
    %c3 = arith.constant 3 : index
    %c0_68 = arith.constant 0 : index
    %c0_69 = arith.constant 0 : index
    %348 = vector.load %arg7[%c3, %c0_68, %c0_69] : memref<7x448x128xbf16, #tpu.memory_space<vmem>>, vector<1x448x128xbf16>
    %349 = vector.shape_cast %348 : vector<1x448x128xbf16> to vector<448x128xbf16>
    %cst_70 = arith.constant dense<0.000000e+00> : vector<2x128xf32>
    %350 = tpu.matmul %347, %349, %cst_70 {dimension_numbers = #tpu.dot_dimension_numbers<[1], [0], [0], [1], [0, 0, 1, 1], [], []>} : vector<2x448xbf16>, vector<448x128xbf16>, vector<2x128xf32> -> vector<2x128xf32>
    %351 = arith.addf %345, %350 : vector<2x128xf32>
    %352 = vector.extract_strided_slice %328 {offsets = [4, 0, 0], sizes = [1, 2, 448], strides = [1, 1, 1]} : vector<7x2x448xbf16> to vector<1x2x448xbf16>
    %353 = vector.shape_cast %352 : vector<1x2x448xbf16> to vector<2x448xbf16>
    %c4_71 = arith.constant 4 : index
    %c0_72 = arith.constant 0 : index
    %c0_73 = arith.constant 0 : index
    %354 = vector.load %arg7[%c4_71, %c0_72, %c0_73] : memref<7x448x128xbf16, #tpu.memory_space<vmem>>, vector<1x448x128xbf16>
    %355 = vector.shape_cast %354 : vector<1x448x128xbf16> to vector<448x128xbf16>
    %cst_74 = arith.constant dense<0.000000e+00> : vector<2x128xf32>
    %356 = tpu.matmul %353, %355, %cst_74 {dimension_numbers = #tpu.dot_dimension_numbers<[1], [0], [0], [1], [0, 0, 1, 1], [], []>} : vector<2x448xbf16>, vector<448x128xbf16>, vector<2x128xf32> -> vector<2x128xf32>
    %357 = arith.addf %351, %356 : vector<2x128xf32>
    %358 = vector.extract_strided_slice %328 {offsets = [5, 0, 0], sizes = [1, 2, 448], strides = [1, 1, 1]} : vector<7x2x448xbf16> to vector<1x2x448xbf16>
    %359 = vector.shape_cast %358 : vector<1x2x448xbf16> to vector<2x448xbf16>
    %c5 = arith.constant 5 : index
    %c0_75 = arith.constant 0 : index
    %c0_76 = arith.constant 0 : index
    %360 = vector.load %arg7[%c5, %c0_75, %c0_76] : memref<7x448x128xbf16, #tpu.memory_space<vmem>>, vector<1x448x128xbf16>
    %361 = vector.shape_cast %360 : vector<1x448x128xbf16> to vector<448x128xbf16>
    %cst_77 = arith.constant dense<0.000000e+00> : vector<2x128xf32>
    %362 = tpu.matmul %359, %361, %cst_77 {dimension_numbers = #tpu.dot_dimension_numbers<[1], [0], [0], [1], [0, 0, 1, 1], [], []>} : vector<2x448xbf16>, vector<448x128xbf16>, vector<2x128xf32> -> vector<2x128xf32>
    %363 = arith.addf %357, %362 : vector<2x128xf32>
    %364 = vector.extract_strided_slice %328 {offsets = [6, 0, 0], sizes = [1, 2, 448], strides = [1, 1, 1]} : vector<7x2x448xbf16> to vector<1x2x448xbf16>
    %365 = vector.shape_cast %364 : vector<1x2x448xbf16> to vector<2x448xbf16>
    %c6 = arith.constant 6 : index
    %c0_78 = arith.constant 0 : index
    %c0_79 = arith.constant 0 : index
    %366 = vector.load %arg7[%c6, %c0_78, %c0_79] : memref<7x448x128xbf16, #tpu.memory_space<vmem>>, vector<1x448x128xbf16>
    %367 = vector.shape_cast %366 : vector<1x448x128xbf16> to vector<448x128xbf16>
    %cst_80 = arith.constant dense<0.000000e+00> : vector<2x128xf32>
    %368 = tpu.matmul %365, %367, %cst_80 {dimension_numbers = #tpu.dot_dimension_numbers<[1], [0], [0], [1], [0, 0, 1, 1], [], []>} : vector<2x448xbf16>, vector<448x128xbf16>, vector<2x128xf32> -> vector<2x128xf32>
    %369 = arith.addf %363, %368 : vector<2x128xf32>
    %c0_81 = arith.constant 0 : index
    %c0_82 = arith.constant 0 : index
    %370 = vector.load %arg8[%c0_81, %c0_82] : memref<1x128xf32, #tpu.memory_space<vmem>>, vector<1x128xf32>
    %371 = vector.broadcast %370 : vector<1x128xf32> to vector<2x128xf32>
    %372 = arith.addf %369, %371 : vector<2x128xf32>
    %cst_83 = arith.constant 0.000000e+00 : f32
    %373 = vector.broadcast %cst_83 : f32 to vector<2x128xf32>
    %374 = arith.maximumf %372, %373 : vector<2x128xf32>
    %375 = arith.truncf %374 : vector<2x128xf32> to vector<2x128xbf16>
    %c0_84 = arith.constant 0 : index
    %c0_85 = arith.constant 0 : index
    %376 = vector.load %arg9[%c0_84, %c0_85] : memref<128x128xbf16, #tpu.memory_space<vmem>>, vector<128x128xbf16>
    %cst_86 = arith.constant dense<0.000000e+00> : vector<2x128xf32>
    %377 = tpu.matmul %375, %376, %cst_86 {dimension_numbers = #tpu.dot_dimension_numbers<[1], [0], [0], [1], [0, 0, 1, 1], [], []>} : vector<2x128xbf16>, vector<128x128xbf16>, vector<2x128xf32> -> vector<2x128xf32>
    %c0_87 = arith.constant 0 : index
    %c0_88 = arith.constant 0 : index
    %378 = vector.load %arg10[%c0_87, %c0_88] : memref<1x128xf32, #tpu.memory_space<vmem>>, vector<1x128xf32>
    %379 = vector.broadcast %378 : vector<1x128xf32> to vector<2x128xf32>
    %380 = arith.addf %377, %379 : vector<2x128xf32>
    %c0_89 = arith.constant 0 : index
    %c0_90 = arith.constant 0 : index
    %381 = vector.load %arg11[%c0_89, %c0_90] : memref<2x128xf32, #tpu.memory_space<vmem>>, vector<2x128xf32>
    tpu.vector_store %arg11[%c0_89, %c0_90], %380 {strides = array<i32>} : memref<2x128xf32, #tpu.memory_space<vmem>>, vector<2x128xf32>,
    return
  }
}

</mosaic_0001>

<llo_original>
// kernel: improved_cnn_forward.1
$region0: #{improved_cnn_forward.1}
  #allocation0 [shape = 'u32[]', space=smem, size = 0x4, offset = 0x4, fixed_abs, tag = 'smem constant byte address 0x4 - core index']
  #allocation1 [shape = 'u32[144,128]{1,0:T(1,128)}', space=vmem, size = 0x12000, scoped, tag = 'internal scratch']
  #allocation2 [shape = 'bf16[32,512]{1,0:T(8,128)(2,1)}', space=vmem, size = 0x8000, scoped, tag = 'scratch operand']
  %s0 = inlined_call_operand.vmem [shape: bf16[60,32], index: 0, kind: input, shape index: {}]
  %s1 = inlined_call_operand.vmem [shape: bf16[3,32,896], index: 1, kind: input, shape index: {}]
  %s2 = inlined_call_operand.vmem [shape: f32[1,32], index: 2, kind: input, shape index: {}]
  %s3 = inlined_call_operand.vmem [shape: f32[1,32], index: 3, kind: input, shape index: {}]
  %s4 = inlined_call_operand.vmem [shape: bf16[3,512,896], index: 4, kind: input, shape index: {}]
  %s5 = inlined_call_operand.vmem [shape: f32[1,64], index: 5, kind: input, shape index: {}]
  %s6 = inlined_call_operand.vmem [shape: f32[1,64], index: 6, kind: input, shape index: {}]
  %s7 = inlined_call_operand.vmem [shape: bf16[7,448,128], index: 7, kind: input, shape index: {}]
  %s8 = inlined_call_operand.vmem [shape: f32[1,128], index: 8, kind: input, shape index: {}]
  %s9 = inlined_call_operand.vmem [shape: bf16[128,128], index: 9, kind: input, shape index: {}]
  %s10 = inlined_call_operand.vmem [shape: f32[1,128], index: 10, kind: input, shape index: {}]
  %s11 = inlined_call_operand.hbm [shape: f32[2,128], index: 11, kind: output, shape index: {}]
  %s12 = sld [smem:[#allocation0]]
  $region54: #{improved_cnn_forward.1} parent=0
    _
  %s14 = ssub.s32 1, %s12
  %s15 = scalar_select 0, %s14, %s12
  $region1: #{improved_cnn_forward.1} parent=0
    #allocation3 [shape = 'u8[1024]{0}', space=vmem, size = 0x400, scoped, tag = 'output window, operand 0, single buffered']
    #allocation4 [shape = 's32[1]{0}', space=sflag, size = 0x4, scoped, tag = 'scoped memory for improved_cnn_forward.1']
    %16 = vsyncpa [#allocation4], 0
    // Predicated region
    $region2: #{improved_cnn_forward.1} parent=1 // pred_check
      _
    $region3: #{improved_cnn_forward.1} parent=1 // pred_check_branch
      %18 = sbr.rel (0) target = $region5
    $region4: #{improved_cnn_forward.1} parent=1 // pred_region
      _
    $region5: #{improved_cnn_forward.1} parent=1 // pred_fallthru
      _
    // Predicated region
    $region6: #{improved_cnn_forward.1} parent=1 // pred_check
      _
    $region7: #{improved_cnn_forward.1} parent=1 // pred_check_branch
      %20 = sbr.rel (0) target = $region9
    $region8: #{improved_cnn_forward.1} parent=1 // pred_region
      _
    $region9: #{improved_cnn_forward.1} parent=1 // pred_fallthru
      _
    // Predicated region
    $region10: #{improved_cnn_forward.1} parent=1 // pred_check
      _
    $region11: #{improved_cnn_forward.1} parent=1 // pred_check_branch
      %22 = sbr.rel (0) target = $region13
    $region12: #{improved_cnn_forward.1} parent=1 // pred_region
      _
    $region13: #{improved_cnn_forward.1} parent=1 // pred_fallthru
      _
    // Predicated region
    $region14: #{improved_cnn_forward.1} parent=1 // pred_check
      _
    $region15: #{improved_cnn_forward.1} parent=1 // pred_check_branch
      %24 = sbr.rel (0) target = $region17
    $region16: #{improved_cnn_forward.1} parent=1 // pred_region
      _
    $region17: #{improved_cnn_forward.1} parent=1 // pred_fallthru
      _
    // Predicated region
    $region18: #{improved_cnn_forward.1} parent=1 // pred_check
      _
    $region19: #{improved_cnn_forward.1} parent=1 // pred_check_branch
      %26 = sbr.rel (0) target = $region21
    $region20: #{improved_cnn_forward.1} parent=1 // pred_region
      _
    $region21: #{improved_cnn_forward.1} parent=1 // pred_fallthru
      _
    // Predicated region
    $region22: #{improved_cnn_forward.1} parent=1 // pred_check
      _
    $region23: #{improved_cnn_forward.1} parent=1 // pred_check_branch
      %28 = sbr.rel (0) target = $region25
    $region24: #{improved_cnn_forward.1} parent=1 // pred_region
      _
    $region25: #{improved_cnn_forward.1} parent=1 // pred_fallthru
      _
    // Predicated region
    $region26: #{improved_cnn_forward.1} parent=1 // pred_check
      _
    $region27: #{improved_cnn_forward.1} parent=1 // pred_check_branch
      %30 = sbr.rel (0) target = $region29
    $region28: #{improved_cnn_forward.1} parent=1 // pred_region
      _
    $region29: #{improved_cnn_forward.1} parent=1 // pred_fallthru
      _
    // Predicated region
    $region30: #{improved_cnn_forward.1} parent=1 // pred_check
      _
    $region31: #{improved_cnn_forward.1} parent=1 // pred_check_branch
      %32 = sbr.rel (0) target = $region33
    $region32: #{improved_cnn_forward.1} parent=1 // pred_region
      _
    $region33: #{improved_cnn_forward.1} parent=1 // pred_fallthru
      _
    // Predicated region
    $region34: #{improved_cnn_forward.1} parent=1 // pred_check
      _
    $region35: #{improved_cnn_forward.1} parent=1 // pred_check_branch
      %34 = sbr.rel (0) target = $region37
    $region36: #{improved_cnn_forward.1} parent=1 // pred_region
      _
    $region37: #{improved_cnn_forward.1} parent=1 // pred_fallthru
      _
    // Predicated region
    $region38: #{improved_cnn_forward.1} parent=1 // pred_check
      _
    $region39: #{improved_cnn_forward.1} parent=1 // pred_check_branch
      %36 = sbr.rel (0) target = $region41
    $region40: #{improved_cnn_forward.1} parent=1 // pred_region
      _
    $region41: #{improved_cnn_forward.1} parent=1 // pred_fallthru
      _
    // Predicated region
    $region42: #{improved_cnn_forward.1} parent=1 // pred_check
      _
    $region43: #{improved_cnn_forward.1} parent=1 // pred_check_branch
      %38 = sbr.rel (0) target = $region45
    $region44: #{improved_cnn_forward.1} parent=1 // pred_region
      _
    $region45: #{improved_cnn_forward.1} parent=1 // pred_fallthru
      _
    %v40 = vld [vmem:[%s0] sm:$0xf]
    %v41 = vld [vmem:[%s0 + $0x4] sm:$0xf]
    %v42 = vld [vmem:[%s0 + $0x8] sm:$0xf]
    %v43 = vld [vmem:[%s0 + $0xc] sm:$0xf]
    %v44 = vld [vmem:[%s0 + $0x10] sm:$0xf]
    %v45 = vld [vmem:[%s0 + $0x14] sm:$0xf]
    %v46 = vld [vmem:[%s0 + $0x18] sm:$0xf]
    %v47 = vld [vmem:[%s1] sm:$0xff]
    %v48 = vld [vmem:[%s1 + $0x8] sm:$0xff]
    %v49 = vld [vmem:[%s1 + $0x10] sm:$0xff]
    %v50 = vld [vmem:[%s1 + $0x18] sm:$0xf]
    %v51 = vld [vmem:[%s1 + $0x1c] sm:$0xff]
    %v52 = vld [vmem:[%s1 + $0x24] sm:$0xff]
    %v53 = vld [vmem:[%s1 + $0x2c] sm:$0xff]
    %v54 = vld [vmem:[%s1 + $0x34] sm:$0xf]
    %v55 = vld [vmem:[%s1 + $0x38] sm:$0xff]
    %v56 = vld [vmem:[%s1 + $0x40] sm:$0xff]
    %v57 = vld [vmem:[%s1 + $0x48] sm:$0xff]
    %v58 = vld [vmem:[%s1 + $0x50] sm:$0xf]
    %v59 = vld [vmem:[%s1 + $0x54] sm:$0xff]
    %v60 = vld [vmem:[%s1 + $0x5c] sm:$0xff]
    %v61 = vld [vmem:[%s1 + $0x64] sm:$0xff]
    %v62 = vld [vmem:[%s1 + $0x6c] sm:$0xf]
    %v63 = vld [vmem:[%s0] sm:$0xe]
    %v64 = vld [vmem:[%s0 + $0x1c] sm:$0x1]
    %s65 = scalar_lea.vmem %s1, 112
    %v66 = vld [vmem:[%s65] sm:$0xff]
    %v67 = vld [vmem:[%s65 + $0x8] sm:$0xff]
    %v68 = vld [vmem:[%s65 + $0x10] sm:$0xff]
    %v69 = vld [vmem:[%s65 + $0x18] sm:$0xf]
    %v70 = vld [vmem:[%s65 + $0x1c] sm:$0xff]
    %v71 = vld [vmem:[%s65 + $0x24] sm:$0xff]
    %v72 = vld [vmem:[%s65 + $0x2c] sm:$0xff]
    %v73 = vld [vmem:[%s65 + $0x34] sm:$0xf]
    %v74 = vld [vmem:[%s65 + $0x38] sm:$0xff]
    %v75 = vld [vmem:[%s65 + $0x40] sm:$0xff]
    %v76 = vld [vmem:[%s65 + $0x48] sm:$0xff]
    %v77 = vld [vmem:[%s65 + $0x50] sm:$0xf]
    %v78 = vld [vmem:[%s65 + $0x54] sm:$0xff]
    %v79 = vld [vmem:[%s65 + $0x5c] sm:$0xff]
    %v80 = vld [vmem:[%s65 + $0x64] sm:$0xff]
    %v81 = vld [vmem:[%s65 + $0x6c] sm:$0xf]
    %v90 = vunpack.c.l.b16 %v63
    %v91 = vunpack.c.l.b16 %v41
    %v92 = vunpack.c.l.b16 %v42
    %v93 = vunpack.c.l.b16 %v43
    %v94 = vunpack.c.l.b16 %v44
    %v95 = vunpack.c.l.b16 %v45
    %v96 = vunpack.c.l.b16 %v46
    %v97 = vunpack.c.l.b16 %v64
    %v98 = vpack.c.b16 %v91, %v90
    %v99 = vpack.c.b16 %v93, %v92
    %v100 = vpack.c.b16 %v95, %v94
    %v101 = vpack.c.b16 %v97, %v96
    %vm102 = vcmask 1046528
    %v103 = vrot.slane %v98, 1
    %v104 = vrot.slane %v99, 1
    %v105 = vsel %vm102, %v103, %v104
    %v106 = vrot.slane %v100, 1
    %v107 = vsel %vm102, %v104, %v106
    %v108 = vrot.slane %v101, 1
    %v109 = vsel %vm102, %v106, %v108
    %v126 = vunpack.c.l.b16 %v66
    %v127 = vunpack.c.h.b16 %v66
    %v128 = vunpack.c.l.b16 %v67
    %v129 = vunpack.c.h.b16 %v67
    %v130 = vunpack.c.l.b16 %v68
    %v131 = vunpack.c.h.b16 %v68
    %v132 = vunpack.c.l.b16 %v69
    %v133 = vunpack.c.l.b16 %v70
    %v134 = vunpack.c.h.b16 %v70
    %v135 = vunpack.c.l.b16 %v71
    %v136 = vunpack.c.h.b16 %v71
    %v137 = vunpack.c.l.b16 %v72
    %v138 = vunpack.c.h.b16 %v72
    %v139 = vunpack.c.l.b16 %v73
    %v140 = vunpack.c.l.b16 %v74
    %v141 = vunpack.c.h.b16 %v74
    %v142 = vunpack.c.l.b16 %v75
    %v143 = vunpack.c.h.b16 %v75
    %v144 = vunpack.c.l.b16 %v76
    %v145 = vunpack.c.h.b16 %v76
    %v146 = vunpack.c.l.b16 %v77
    %v147 = vunpack.c.l.b16 %v78
    %v148 = vunpack.c.h.b16 %v78
    %v149 = vunpack.c.l.b16 %v79
    %v150 = vunpack.c.h.b16 %v79
    %v151 = vunpack.c.l.b16 %v80
    %v152 = vunpack.c.h.b16 %v80
    %v153 = vunpack.c.l.b16 %v81
    %v154 = vpack.c.b16 %v133, %v126
    %v155 = vpack.c.b16 %v134, %v127
    %v156 = vpack.c.b16 %v135, %v128
    %v157 = vpack.c.b16 %v136, %v129
    %v158 = vpack.c.b16 %v137, %v130
    %v159 = vpack.c.b16 %v138, %v131
    %v160 = vpack.c.b16 %v139, %v132
    %v161 = vpack.c.b16 %v147, %v140
    %v162 = vpack.c.b16 %v148, %v141
    %v163 = vpack.c.b16 %v149, %v142
    %v164 = vpack.c.b16 %v150, %v143
    %v165 = vpack.c.b16 %v151, %v144
    %v166 = vpack.c.b16 %v152, %v145
    %v167 = vpack.c.b16 %v153, %v146
    %vm182 = vcmask 261120
    %v184 = vsel %vm182, %v105, 0
    %v187 = vsel %vm182, %v107, 0
    %v190 = vsel %vm182, %v109, 0
    %v193 = vsel %vm182, %v108, 0
    %195 = vmatprep.subr.bf16.mxu0 0
    %196 = vmatpush1.bf16.msra.mxu0 0
    %197 = vmatprep.subr.bf16.mxu0 0
    %198 = vmatpush1.bf16.msra.mxu0 0
    %199 = vmatprep.subr.bf16.mxu0 0
    %200 = vmatpush1.bf16.msra.mxu0 0
    %201 = vmatprep.subr.bf16.mxu0 0
    %202 = vmatpush1.bf16.msra.mxu0 0
    %203 = vmatprep.subr.bf16.mxu0 0
    %204 = vmatpush1.bf16.msra.mxu0 0
    %205 = vmatprep.subr.bf16.mxu0 0
    %206 = vmatpush1.bf16.msra.mxu0 0
    %207 = vmatprep.subr.bf16.mxu0 %v162
    %208 = vmatpush1.bf16.msra.mxu0 %v161
    %209 = vmatprep.subr.bf16.mxu0 %v155
    %210 = vmatpush1.bf16.msra.mxu0 %v154
    %211 = vmatprep.subr.bf16.mxu0 0
    %212 = vmatpush2.bf16.msra.mxu0 0
    %213 = vmatprep.subr.bf16.mxu0 0
    %214 = vmatpush2.bf16.msra.mxu0 0
    %215 = vmatprep.subr.bf16.mxu0 0
    %216 = vmatpush2.bf16.msra.mxu0 0
    %217 = vmatprep.subr.bf16.mxu0 0
    %218 = vmatpush2.bf16.msra.mxu0 0
    %219 = vmatprep.subr.bf16.mxu0 0
    %220 = vmatpush2.bf16.msra.mxu0 0
    %221 = vmatprep.subr.bf16.mxu0 0
    %222 = vmatpush2.bf16.msra.mxu0 0
    %223 = vmatprep.subr.bf16.mxu0 0
    %224 = vmatpush2.bf16.msra.mxu0 0
    %225 = vmatprep.subr.bf16.mxu0 0
    %226 = vmatpush2.bf16.msra.mxu0 0
    %227 = vmatprep.mubr.bf16.mxu0 0
    %228 = vmatmul.mubr.bf16.gmra.mxu0 %v184
    %v229 = vpop.f32.mrf.mxu0
    %v230 = vadd.f32 0.0, %v229
    %v231 = vpop.f32.mrf.mxu0
    %v232 = vadd.f32 0.0, %v231
    %v233 = vpop.f32.mrf.mxu0
    %v234 = vadd.f32 0.0, %v233
    %v235 = vpop.f32.mrf.mxu0
    %v236 = vadd.f32 0.0, %v235
    %237 = vmatprep.mubr.bf16.mxu0 0
    %238 = vmatmul.mubr.bf16.gmra.mxu0 %v187
    %v239 = vpop.f32.mrf.mxu0
    %v240 = vadd.f32 0.0, %v239
    %v241 = vpop.f32.mrf.mxu0
    %v242 = vadd.f32 0.0, %v241
    %v243 = vpop.f32.mrf.mxu0
    %v244 = vadd.f32 0.0, %v243
    %v245 = vpop.f32.mrf.mxu0
    %v246 = vadd.f32 0.0, %v245
    %247 = vmatprep.mubr.bf16.mxu0 0
    %248 = vmatmul.mubr.bf16.gmra.mxu0 %v190
    %v249 = vpop.f32.mrf.mxu0
    %v250 = vadd.f32 0.0, %v249
    %v251 = vpop.f32.mrf.mxu0
    %v252 = vadd.f32 0.0, %v251
    %v253 = vpop.f32.mrf.mxu0
    %v254 = vadd.f32 0.0, %v253
    %v255 = vpop.f32.mrf.mxu0
    %v256 = vadd.f32 0.0, %v255
    %257 = vmatprep.mubr.bf16.mxu0 0
    %258 = vmatmul.mubr.bf16.gmra.mxu0 %v193
    %v259 = vpop.f32.mrf.mxu0
    %v260 = vadd.f32 0.0, %v259
    %v261 = vpop.f32.mrf.mxu0
    %v262 = vadd.f32 0.0, %v261
    %v263 = vpop.f32.mrf.mxu0
    %v264 = vpop.f32.mrf.mxu0
    %265 = vdwg.mxu0
    %266 = vmatprep.subr.bf16.mxu0 0
    %267 = vmatpush1.bf16.msra.mxu0 0
    %268 = vmatprep.subr.bf16.mxu0 0
    %269 = vmatpush1.bf16.msra.mxu0 0
    %270 = vmatprep.subr.bf16.mxu0 0
    %271 = vmatpush1.bf16.msra.mxu0 0
    %272 = vmatprep.subr.bf16.mxu0 0
    %273 = vmatpush1.bf16.msra.mxu0 0
    %274 = vmatprep.subr.bf16.mxu0 0
    %275 = vmatpush1.bf16.msra.mxu0 0
    %276 = vmatprep.subr.bf16.mxu0 0
    %277 = vmatpush1.bf16.msra.mxu0 0
    %278 = vmatprep.subr.bf16.mxu0 %v164
    %279 = vmatpush1.bf16.msra.mxu0 %v163
    %280 = vmatprep.subr.bf16.mxu0 %v157
    %281 = vmatpush1.bf16.msra.mxu0 %v156
    %282 = vmatprep.subr.bf16.mxu0 0
    %283 = vmatpush2.bf16.msra.mxu0 0
    %284 = vmatprep.subr.bf16.mxu0 0
    %285 = vmatpush2.bf16.msra.mxu0 0
    %286 = vmatprep.subr.bf16.mxu0 0
    %287 = vmatpush2.bf16.msra.mxu0 0
    %288 = vmatprep.subr.bf16.mxu0 0
    %289 = vmatpush2.bf16.msra.mxu0 0
    %290 = vmatprep.subr.bf16.mxu0 0
    %291 = vmatpush2.bf16.msra.mxu0 0
    %292 = vmatprep.subr.bf16.mxu0 0
    %293 = vmatpush2.bf16.msra.mxu0 0
    %294 = vmatprep.subr.bf16.mxu0 0
    %295 = vmatpush2.bf16.msra.mxu0 0
    %296 = vmatprep.subr.bf16.mxu0 0
    %297 = vmatpush2.bf16.msra.mxu0 0
    %298 = vmatprep.mubr.bf16.mxu0 0
    %299 = vmatmul.mubr.bf16.gmra.mxu0 %v184
    %v300 = vpop.f32.mrf.mxu0
    %v301 = vadd.f32 0.0, %v300
    %v302 = vpop.f32.mrf.mxu0
    %v303 = vadd.f32 0.0, %v302
    %v304 = vpop.f32.mrf.mxu0
    %v305 = vadd.f32 0.0, %v304
    %v306 = vpop.f32.mrf.mxu0
    %v307 = vadd.f32 0.0, %v306
    %308 = vmatprep.mubr.bf16.mxu0 0
    %309 = vmatmul.mubr.bf16.gmra.mxu0 %v187
    %v310 = vpop.f32.mrf.mxu0
    %v311 = vadd.f32 0.0, %v310
    %v312 = vpop.f32.mrf.mxu0
    %v313 = vadd.f32 0.0, %v312
    %v314 = vpop.f32.mrf.mxu0
    %v315 = vadd.f32 0.0, %v314
    %v316 = vpop.f32.mrf.mxu0
    %v317 = vadd.f32 0.0, %v316
    %318 = vmatprep.mubr.bf16.mxu0 0
    %319 = vmatmul.mubr.bf16.gmra.mxu0 %v190
    %v320 = vpop.f32.mrf.mxu0
    %v321 = vadd.f32 0.0, %v320
    %v322 = vpop.f32.mrf.mxu0
    %v323 = vadd.f32 0.0, %v322
    %v324 = vpop.f32.mrf.mxu0
    %v325 = vadd.f32 0.0, %v324
    %v326 = vpop.f32.mrf.mxu0
    %v327 = vadd.f32 0.0, %v326
    %328 = vmatprep.mubr.bf16.mxu0 0
    %329 = vmatmul.mubr.bf16.gmra.mxu0 %v193
    %v330 = vpop.f32.mrf.mxu0
    %v331 = vadd.f32 0.0, %v330
    %v332 = vpop.f32.mrf.mxu0
    %v333 = vadd.f32 0.0, %v332
    %v334 = vpop.f32.mrf.mxu0
    %v335 = vpop.f32.mrf.mxu0
    %336 = vdwg.mxu0
    %337 = vmatprep.subr.bf16.mxu0 0
    %338 = vmatpush1.bf16.msra.mxu0 0
    %339 = vmatprep.subr.bf16.mxu0 0
    %340 = vmatpush1.bf16.msra.mxu0 0
    %341 = vmatprep.subr.bf16.mxu0 0
    %342 = vmatpush1.bf16.msra.mxu0 0
    %343 = vmatprep.subr.bf16.mxu0 0
    %344 = vmatpush1.bf16.msra.mxu0 0
    %345 = vmatprep.subr.bf16.mxu0 0
    %346 = vmatpush1.bf16.msra.mxu0 0
    %347 = vmatprep.subr.bf16.mxu0 0
    %348 = vmatpush1.bf16.msra.mxu0 0
    %349 = vmatprep.subr.bf16.mxu0 %v166
    %350 = vmatpush1.bf16.msra.mxu0 %v165
    %351 = vmatprep.subr.bf16.mxu0 %v159
    %352 = vmatpush1.bf16.msra.mxu0 %v158
    %353 = vmatprep.subr.bf16.mxu0 0
    %354 = vmatpush2.bf16.msra.mxu0 0
    %355 = vmatprep.subr.bf16.mxu0 0
    %356 = vmatpush2.bf16.msra.mxu0 0
    %357 = vmatprep.subr.bf16.mxu0 0
    %358 = vmatpush2.bf16.msra.mxu0 0
    %359 = vmatprep.subr.bf16.mxu0 0
    %360 = vmatpush2.bf16.msra.mxu0 0
    %361 = vmatprep.subr.bf16.mxu0 0
    %362 = vmatpush2.bf16.msra.mxu0 0
    %363 = vmatprep.subr.bf16.mxu0 0
    %364 = vmatpush2.bf16.msra.mxu0 0
    %365 = vmatprep.subr.bf16.mxu0 0
    %366 = vmatpush2.bf16.msra.mxu0 0
    %367 = vmatprep.subr.bf16.mxu0 0
    %368 = vmatpush2.bf16.msra.mxu0 0
    %369 = vmatprep.mubr.bf16.mxu0 0
    %370 = vmatmul.mubr.bf16.gmra.mxu0 %v184
    %v371 = vpop.f32.mrf.mxu0
    %v372 = vadd.f32 0.0, %v371
    %v373 = vpop.f32.mrf.mxu0
    %v374 = vadd.f32 0.0, %v373
    %v375 = vpop.f32.mrf.mxu0
    %v376 = vadd.f32 0.0, %v375
    %v377 = vpop.f32.mrf.mxu0
    %v378 = vadd.f32 0.0, %v377
    %379 = vmatprep.mubr.bf16.mxu0 0
    %380 = vmatmul.mubr.bf16.gmra.mxu0 %v187
    %v381 = vpop.f32.mrf.mxu0
    %v382 = vadd.f32 0.0, %v381
    %v383 = vpop.f32.mrf.mxu0
    %v384 = vadd.f32 0.0, %v383
    %v385 = vpop.f32.mrf.mxu0
    %v386 = vadd.f32 0.0, %v385
    %v387 = vpop.f32.mrf.mxu0
    %v388 = vadd.f32 0.0, %v387
    %389 = vmatprep.mubr.bf16.mxu0 0
    %390 = vmatmul.mubr.bf16.gmra.mxu0 %v190
    %v391 = vpop.f32.mrf.mxu0
    %v392 = vadd.f32 0.0, %v391
    %v393 = vpop.f32.mrf.mxu0
    %v394 = vadd.f32 0.0, %v393
    %v395 = vpop.f32.mrf.mxu0
    %v396 = vadd.f32 0.0, %v395
    %v397 = vpop.f32.mrf.mxu0
    %v398 = vadd.f32 0.0, %v397
    %399 = vmatprep.mubr.bf16.mxu0 0
    %400 = vmatmul.mubr.bf16.gmra.mxu0 %v193
    %v401 = vpop.f32.mrf.mxu0
    %v402 = vadd.f32 0.0, %v401
    %v403 = vpop.f32.mrf.mxu0
    %v404 = vadd.f32 0.0, %v403
    %v405 = vpop.f32.mrf.mxu0
    %v406 = vpop.f32.mrf.mxu0
    %407 = vdwg.mxu0
    %408 = vmatprep.subr.bf16.mxu0 0
    %409 = vmatpush1.bf16.msra.mxu0 0
    %410 = vmatprep.subr.bf16.mxu0 0
    %411 = vmatpush1.bf16.msra.mxu0 0
    %412 = vmatprep.subr.bf16.mxu0 0
    %413 = vmatpush1.bf16.msra.mxu0 0
    %414 = vmatprep.subr.bf16.mxu0 0
    %415 = vmatpush1.bf16.msra.mxu0 0
    %416 = vmatprep.subr.bf16.mxu0 0
    %417 = vmatpush1.bf16.msra.mxu0 0
    %418 = vmatprep.subr.bf16.mxu0 0
    %419 = vmatpush1.bf16.msra.mxu0 0
    %420 = vmatprep.subr.bf16.mxu0 0
    %421 = vmatpush1.bf16.msra.mxu0 %v167
    %422 = vmatprep.subr.bf16.mxu0 0
    %423 = vmatpush1.bf16.msra.mxu0 %v160
    %424 = vmatprep.subr.bf16.mxu0 0
    %425 = vmatpush2.bf16.msra.mxu0 0
    %426 = vmatprep.subr.bf16.mxu0 0
    %427 = vmatpush2.bf16.msra.mxu0 0
    %428 = vmatprep.subr.bf16.mxu0 0
    %429 = vmatpush2.bf16.msra.mxu0 0
    %430 = vmatprep.subr.bf16.mxu0 0
    %431 = vmatpush2.bf16.msra.mxu0 0
    %432 = vmatprep.subr.bf16.mxu0 0
    %433 = vmatpush2.bf16.msra.mxu0 0
    %434 = vmatprep.subr.bf16.mxu0 0
    %435 = vmatpush2.bf16.msra.mxu0 0
    %436 = vmatprep.subr.bf16.mxu0 0
    %437 = vmatpush2.bf16.msra.mxu0 0
    %438 = vmatprep.subr.bf16.mxu0 0
    %439 = vmatpush2.bf16.msra.mxu0 0
    %440 = vmatprep.mubr.bf16.mxu0 0
    %441 = vmatmul.mubr.bf16.gmra.mxu0 %v184
    %v442 = vpop.f32.mrf.mxu0
    %v443 = vadd.f32 0.0, %v442
    %v444 = vpop.f32.mrf.mxu0
    %v445 = vpop.f32.mrf.mxu0
    %v446 = vadd.f32 0.0, %v445
    %v447 = vpop.f32.mrf.mxu0
    %448 = vmatprep.mubr.bf16.mxu0 0
    %449 = vmatmul.mubr.bf16.gmra.mxu0 %v187
    %v450 = vpop.f32.mrf.mxu0
    %v451 = vadd.f32 0.0, %v450
    %v452 = vpop.f32.mrf.mxu0
    %v453 = vpop.f32.mrf.mxu0
    %v454 = vadd.f32 0.0, %v453
    %v455 = vpop.f32.mrf.mxu0
    %456 = vmatprep.mubr.bf16.mxu0 0
    %457 = vmatmul.mubr.bf16.gmra.mxu0 %v190
    %v458 = vpop.f32.mrf.mxu0
    %v459 = vadd.f32 0.0, %v458
    %v460 = vpop.f32.mrf.mxu0
    %v461 = vpop.f32.mrf.mxu0
    %v462 = vadd.f32 0.0, %v461
    %v463 = vpop.f32.mrf.mxu0
    %464 = vmatprep.mubr.bf16.mxu0 0
    %465 = vmatmul.mubr.bf16.gmra.mxu0 %v193
    %v466 = vpop.f32.mrf.mxu0
    %v467 = vadd.f32 0.0, %v466
    %v468 = vpop.f32.mrf.mxu0
    %v469 = vpop.f32.mrf.mxu0
    %v470 = vpop.f32.mrf.mxu0
    %471 = vdwg.mxu0
    %v473 = vunpack.c.l.b16 %v40
    %v474 = vpack.c.b16 %v91, %v473
    %v475 = vpack.c.b16 %v96, %v96
    %v492 = vunpack.c.l.b16 %v47
    %v493 = vunpack.c.h.b16 %v47
    %v494 = vunpack.c.l.b16 %v48
    %v495 = vunpack.c.h.b16 %v48
    %v496 = vunpack.c.l.b16 %v49
    %v497 = vunpack.c.h.b16 %v49
    %v498 = vunpack.c.l.b16 %v50
    %v499 = vunpack.c.l.b16 %v51
    %v500 = vunpack.c.h.b16 %v51
    %v501 = vunpack.c.l.b16 %v52
    %v502 = vunpack.c.h.b16 %v52
    %v503 = vunpack.c.l.b16 %v53
    %v504 = vunpack.c.h.b16 %v53
    %v505 = vunpack.c.l.b16 %v54
    %v506 = vunpack.c.l.b16 %v55
    %v507 = vunpack.c.h.b16 %v55
    %v508 = vunpack.c.l.b16 %v56
    %v509 = vunpack.c.h.b16 %v56
    %v510 = vunpack.c.l.b16 %v57
    %v511 = vunpack.c.h.b16 %v57
    %v512 = vunpack.c.l.b16 %v58
    %v513 = vunpack.c.l.b16 %v59
    %v514 = vunpack.c.h.b16 %v59
    %v515 = vunpack.c.l.b16 %v60
    %v516 = vunpack.c.h.b16 %v60
    %v517 = vunpack.c.l.b16 %v61
    %v518 = vunpack.c.h.b16 %v61
    %v519 = vunpack.c.l.b16 %v62
    %v520 = vpack.c.b16 %v499, %v492
    %v521 = vpack.c.b16 %v500, %v493
    %v522 = vpack.c.b16 %v501, %v494
    %v523 = vpack.c.b16 %v502, %v495
    %v524 = vpack.c.b16 %v503, %v496
    %v525 = vpack.c.b16 %v504, %v497
    %v526 = vpack.c.b16 %v505, %v498
    %v527 = vpack.c.b16 %v513, %v506
    %v528 = vpack.c.b16 %v514, %v507
    %v529 = vpack.c.b16 %v515, %v508
    %v530 = vpack.c.b16 %v516, %v509
    %v531 = vpack.c.b16 %v517, %v510
    %v532 = vpack.c.b16 %v518, %v511
    %v533 = vpack.c.b16 %v519, %v512
    %v549 = vsel %vm182, %v474, 0
    %v552 = vsel %vm182, %v99, 0
    %v555 = vsel %vm182, %v100, 0
    %v558 = vsel %vm182, %v475, 0
    %560 = vmatprep.subr.bf16.mxu0 0
    %561 = vmatpush1.bf16.msra.mxu0 0
    %562 = vmatprep.subr.bf16.mxu0 0
    %563 = vmatpush1.bf16.msra.mxu0 0
    %564 = vmatprep.subr.bf16.mxu0 0
    %565 = vmatpush1.bf16.msra.mxu0 0
    %566 = vmatprep.subr.bf16.mxu0 0
    %567 = vmatpush1.bf16.msra.mxu0 0
    %568 = vmatprep.subr.bf16.mxu0 0
    %569 = vmatpush1.bf16.msra.mxu0 0
    %570 = vmatprep.subr.bf16.mxu0 0
    %571 = vmatpush1.bf16.msra.mxu0 0
    %572 = vmatprep.subr.bf16.mxu0 %v528
    %573 = vmatpush1.bf16.msra.mxu0 %v527
    %574 = vmatprep.subr.bf16.mxu0 %v521
    %575 = vmatpush1.bf16.msra.mxu0 %v520
    %576 = vmatprep.subr.bf16.mxu0 0
    %577 = vmatpush2.bf16.msra.mxu0 0
    %578 = vmatprep.subr.bf16.mxu0 0
    %579 = vmatpush2.bf16.msra.mxu0 0
    %580 = vmatprep.subr.bf16.mxu0 0
    %581 = vmatpush2.bf16.msra.mxu0 0
    %582 = vmatprep.subr.bf16.mxu0 0
    %583 = vmatpush2.bf16.msra.mxu0 0
    %584 = vmatprep.subr.bf16.mxu0 0
    %585 = vmatpush2.bf16.msra.mxu0 0
    %586 = vmatprep.subr.bf16.mxu0 0
    %587 = vmatpush2.bf16.msra.mxu0 0
    %588 = vmatprep.subr.bf16.mxu0 0
    %589 = vmatpush2.bf16.msra.mxu0 0
    %590 = vmatprep.subr.bf16.mxu0 0
    %591 = vmatpush2.bf16.msra.mxu0 0
    %592 = vmatprep.mubr.bf16.mxu0 0
    %593 = vmatmul.mubr.bf16.gmra.mxu0 %v549
    %v594 = vpop.f32.mrf.mxu0
    %v595 = vadd.f32 %v230, %v594
    %v596 = vpop.f32.mrf.mxu0
    %v597 = vadd.f32 %v232, %v596
    %v598 = vpop.f32.mrf.mxu0
    %v599 = vadd.f32 %v234, %v598
    %v600 = vpop.f32.mrf.mxu0
    %v601 = vadd.f32 %v236, %v600
    %602 = vmatprep.mubr.bf16.mxu0 0
    %603 = vmatmul.mubr.bf16.gmra.mxu0 %v552
    %v604 = vpop.f32.mrf.mxu0
    %v605 = vadd.f32 %v240, %v604
    %v606 = vpop.f32.mrf.mxu0
    %v607 = vadd.f32 %v242, %v606
    %v608 = vpop.f32.mrf.mxu0
    %v609 = vadd.f32 %v244, %v608
    %v610 = vpop.f32.mrf.mxu0
    %v611 = vadd.f32 %v246, %v610
    %612 = vmatprep.mubr.bf16.mxu0 0
    %613 = vmatmul.mubr.bf16.gmra.mxu0 %v555
    %v614 = vpop.f32.mrf.mxu0
    %v615 = vadd.f32 %v250, %v614
    %v616 = vpop.f32.mrf.mxu0
    %v617 = vadd.f32 %v252, %v616
    %v618 = vpop.f32.mrf.mxu0
    %v619 = vadd.f32 %v254, %v618
    %v620 = vpop.f32.mrf.mxu0
    %v621 = vadd.f32 %v256, %v620
    %622 = vmatprep.mubr.bf16.mxu0 0
    %623 = vmatmul.mubr.bf16.gmra.mxu0 %v558
    %v624 = vpop.f32.mrf.mxu0
    %v625 = vadd.f32 %v260, %v624
    %v626 = vpop.f32.mrf.mxu0
    %v627 = vadd.f32 %v262, %v626
    %v628 = vpop.f32.mrf.mxu0
    %v629 = vpop.f32.mrf.mxu0
    %630 = vdwg.mxu0
    %631 = vmatprep.subr.bf16.mxu0 0
    %632 = vmatpush1.bf16.msra.mxu0 0
    %633 = vmatprep.subr.bf16.mxu0 0
    %634 = vmatpush1.bf16.msra.mxu0 0
    %635 = vmatprep.subr.bf16.mxu0 0
    %636 = vmatpush1.bf16.msra.mxu0 0
    %637 = vmatprep.subr.bf16.mxu0 0
    %638 = vmatpush1.bf16.msra.mxu0 0
    %639 = vmatprep.subr.bf16.mxu0 0
    %640 = vmatpush1.bf16.msra.mxu0 0
    %641 = vmatprep.subr.bf16.mxu0 0
    %642 = vmatpush1.bf16.msra.mxu0 0
    %643 = vmatprep.subr.bf16.mxu0 %v530
    %644 = vmatpush1.bf16.msra.mxu0 %v529
    %645 = vmatprep.subr.bf16.mxu0 %v523
    %646 = vmatpush1.bf16.msra.mxu0 %v522
    %647 = vmatprep.subr.bf16.mxu0 0
    %648 = vmatpush2.bf16.msra.mxu0 0
    %649 = vmatprep.subr.bf16.mxu0 0
    %650 = vmatpush2.bf16.msra.mxu0 0
    %651 = vmatprep.subr.bf16.mxu0 0
    %652 = vmatpush2.bf16.msra.mxu0 0
    %653 = vmatprep.subr.bf16.mxu0 0
    %654 = vmatpush2.bf16.msra.mxu0 0
    %655 = vmatprep.subr.bf16.mxu0 0
    %656 = vmatpush2.bf16.msra.mxu0 0
    %657 = vmatprep.subr.bf16.mxu0 0
    %658 = vmatpush2.bf16.msra.mxu0 0
    %659 = vmatprep.subr.bf16.mxu0 0
    %660 = vmatpush2.bf16.msra.mxu0 0
    %661 = vmatprep.subr.bf16.mxu0 0
    %662 = vmatpush2.bf16.msra.mxu0 0
    %663 = vmatprep.mubr.bf16.mxu0 0
    %664 = vmatmul.mubr.bf16.gmra.mxu0 %v549
    %v665 = vpop.f32.mrf.mxu0
    %v666 = vadd.f32 %v301, %v665
    %v667 = vpop.f32.mrf.mxu0
    %v668 = vadd.f32 %v303, %v667
    %v669 = vpop.f32.mrf.mxu0
    %v670 = vadd.f32 %v305, %v669
    %v671 = vpop.f32.mrf.mxu0
    %v672 = vadd.f32 %v307, %v671
    %673 = vmatprep.mubr.bf16.mxu0 0
    %674 = vmatmul.mubr.bf16.gmra.mxu0 %v552
    %v675 = vpop.f32.mrf.mxu0
    %v676 = vadd.f32 %v311, %v675
    %v677 = vpop.f32.mrf.mxu0
    %v678 = vadd.f32 %v313, %v677
    %v679 = vpop.f32.mrf.mxu0
    %v680 = vadd.f32 %v315, %v679
    %v681 = vpop.f32.mrf.mxu0
    %v682 = vadd.f32 %v317, %v681
    %683 = vmatprep.mubr.bf16.mxu0 0
    %684 = vmatmul.mubr.bf16.gmra.mxu0 %v555
    %v685 = vpop.f32.mrf.mxu0
    %v686 = vadd.f32 %v321, %v685
    %v687 = vpop.f32.mrf.mxu0
    %v688 = vadd.f32 %v323, %v687
    %v689 = vpop.f32.mrf.mxu0
    %v690 = vadd.f32 %v325, %v689
    %v691 = vpop.f32.mrf.mxu0
    %v692 = vadd.f32 %v327, %v691
    %693 = vmatprep.mubr.bf16.mxu0 0
    %694 = vmatmul.mubr.bf16.gmra.mxu0 %v558
    %v695 = vpop.f32.mrf.mxu0
    %v696 = vadd.f32 %v331, %v695
    %v697 = vpop.f32.mrf.mxu0
    %v698 = vadd.f32 %v333, %v697
    %v699 = vpop.f32.mrf.mxu0
    %v700 = vpop.f32.mrf.mxu0
    %701 = vdwg.mxu0
    %702 = vmatprep.subr.bf16.mxu0 0
    %703 = vmatpush1.bf16.msra.mxu0 0
    %704 = vmatprep.subr.bf16.mxu0 0
    %705 = vmatpush1.bf16.msra.mxu0 0
    %706 = vmatprep.subr.bf16.mxu0 0
    %707 = vmatpush1.bf16.msra.mxu0 0
    %708 = vmatprep.subr.bf16.mxu0 0
    %709 = vmatpush1.bf16.msra.mxu0 0
    %710 = vmatprep.subr.bf16.mxu0 0
    %711 = vmatpush1.bf16.msra.mxu0 0
    %712 = vmatprep.subr.bf16.mxu0 0
    %713 = vmatpush1.bf16.msra.mxu0 0
    %714 = vmatprep.subr.bf16.mxu0 %v532
    %715 = vmatpush1.bf16.msra.mxu0 %v531
    %716 = vmatprep.subr.bf16.mxu0 %v525
    %717 = vmatpush1.bf16.msra.mxu0 %v524
    %718 = vmatprep.subr.bf16.mxu0 0
    %719 = vmatpush2.bf16.msra.mxu0 0
    %720 = vmatprep.subr.bf16.mxu0 0
    %721 = vmatpush2.bf16.msra.mxu0 0
    %722 = vmatprep.subr.bf16.mxu0 0
    %723 = vmatpush2.bf16.msra.mxu0 0
    %724 = vmatprep.subr.bf16.mxu0 0
    %725 = vmatpush2.bf16.msra.mxu0 0
    %726 = vmatprep.subr.bf16.mxu0 0
    %727 = vmatpush2.bf16.msra.mxu0 0
    %728 = vmatprep.subr.bf16.mxu0 0
    %729 = vmatpush2.bf16.msra.mxu0 0
    %730 = vmatprep.subr.bf16.mxu0 0
    %731 = vmatpush2.bf16.msra.mxu0 0
    %732 = vmatprep.subr.bf16.mxu0 0
    %733 = vmatpush2.bf16.msra.mxu0 0
    %734 = vmatprep.mubr.bf16.mxu0 0
    %735 = vmatmul.mubr.bf16.gmra.mxu0 %v549
    %v736 = vpop.f32.mrf.mxu0
    %v737 = vadd.f32 %v372, %v736
    %v738 = vpop.f32.mrf.mxu0
    %v739 = vadd.f32 %v374, %v738
    %v740 = vpop.f32.mrf.mxu0
    %v741 = vadd.f32 %v376, %v740
    %v742 = vpop.f32.mrf.mxu0
    %v743 = vadd.f32 %v378, %v742
    %744 = vmatprep.mubr.bf16.mxu0 0
    %745 = vmatmul.mubr.bf16.gmra.mxu0 %v552
    %v746 = vpop.f32.mrf.mxu0
    %v747 = vadd.f32 %v382, %v746
    %v748 = vpop.f32.mrf.mxu0
    %v749 = vadd.f32 %v384, %v748
    %v750 = vpop.f32.mrf.mxu0
    %v751 = vadd.f32 %v386, %v750
    %v752 = vpop.f32.mrf.mxu0
    %v753 = vadd.f32 %v388, %v752
    %754 = vmatprep.mubr.bf16.mxu0 0
    %755 = vmatmul.mubr.bf16.gmra.mxu0 %v555
    %v756 = vpop.f32.mrf.mxu0
    %v757 = vadd.f32 %v392, %v756
    %v758 = vpop.f32.mrf.mxu0
    %v759 = vadd.f32 %v394, %v758
    %v760 = vpop.f32.mrf.mxu0
    %v761 = vadd.f32 %v396, %v760
    %v762 = vpop.f32.mrf.mxu0
    %v763 = vadd.f32 %v398, %v762
    %764 = vmatprep.mubr.bf16.mxu0 0
    %765 = vmatmul.mubr.bf16.gmra.mxu0 %v558
    %v766 = vpop.f32.mrf.mxu0
    %v767 = vadd.f32 %v402, %v766
    %v768 = vpop.f32.mrf.mxu0
    %v769 = vadd.f32 %v404, %v768
    %v770 = vpop.f32.mrf.mxu0
    %v771 = vpop.f32.mrf.mxu0
    %772 = vdwg.mxu0
    %773 = vmatprep.subr.bf16.mxu0 0
    %774 = vmatpush1.bf16.msra.mxu0 0
    %775 = vmatprep.subr.bf16.mxu0 0
    %776 = vmatpush1.bf16.msra.mxu0 0
    %777 = vmatprep.subr.bf16.mxu0 0
    %778 = vmatpush1.bf16.msra.mxu0 0
    %779 = vmatprep.subr.bf16.mxu0 0
    %780 = vmatpush1.bf16.msra.mxu0 0
    %781 = vmatprep.subr.bf16.mxu0 0
    %782 = vmatpush1.bf16.msra.mxu0 0
    %783 = vmatprep.subr.bf16.mxu0 0
    %784 = vmatpush1.bf16.msra.mxu0 0
    %785 = vmatprep.subr.bf16.mxu0 0
    %786 = vmatpush1.bf16.msra.mxu0 %v533
    %787 = vmatprep.subr.bf16.mxu0 0
    %788 = vmatpush1.bf16.msra.mxu0 %v526
    %789 = vmatprep.subr.bf16.mxu0 0
    %790 = vmatpush2.bf16.msra.mxu0 0
    %791 = vmatprep.subr.bf16.mxu0 0
    %792 = vmatpush2.bf16.msra.mxu0 0
    %793 = vmatprep.subr.bf16.mxu0 0
    %794 = vmatpush2.bf16.msra.mxu0 0
    %795 = vmatprep.subr.bf16.mxu0 0
    %796 = vmatpush2.bf16.msra.mxu0 0
    %797 = vmatprep.subr.bf16.mxu0 0
    %798 = vmatpush2.bf16.msra.mxu0 0
    %799 = vmatprep.subr.bf16.mxu0 0
    %800 = vmatpush2.bf16.msra.mxu0 0
    %801 = vmatprep.subr.bf16.mxu0 0
    %802 = vmatpush2.bf16.msra.mxu0 0
    %803 = vmatprep.subr.bf16.mxu0 0
    %804 = vmatpush2.bf16.msra.mxu0 0
    %805 = vmatprep.mubr.bf16.mxu0 0
    %806 = vmatmul.mubr.bf16.gmra.mxu0 %v549
    %v807 = vpop.f32.mrf.mxu0
    %v808 = vadd.f32 %v443, %v807
    %v809 = vpop.f32.mrf.mxu0
    %v810 = vpop.f32.mrf.mxu0
    %v811 = vadd.f32 %v446, %v810
    %v812 = vpop.f32.mrf.mxu0
    %813 = vmatprep.mubr.bf16.mxu0 0
    %814 = vmatmul.mubr.bf16.gmra.mxu0 %v552
    %v815 = vpop.f32.mrf.mxu0
    %v816 = vadd.f32 %v451, %v815
    %v817 = vpop.f32.mrf.mxu0
    %v818 = vpop.f32.mrf.mxu0
    %v819 = vadd.f32 %v454, %v818
    %v820 = vpop.f32.mrf.mxu0
    %821 = vmatprep.mubr.bf16.mxu0 0
    %822 = vmatmul.mubr.bf16.gmra.mxu0 %v555
    %v823 = vpop.f32.mrf.mxu0
    %v824 = vadd.f32 %v459, %v823
    %v825 = vpop.f32.mrf.mxu0
    %v826 = vpop.f32.mrf.mxu0
    %v827 = vadd.f32 %v462, %v826
    %v828 = vpop.f32.mrf.mxu0
    %829 = vmatprep.mubr.bf16.mxu0 0
    %830 = vmatmul.mubr.bf16.gmra.mxu0 %v558
    %v831 = vpop.f32.mrf.mxu0
    %v832 = vadd.f32 %v467, %v831
    %v833 = vpop.f32.mrf.mxu0
    %v834 = vpop.f32.mrf.mxu0
    %v835 = vpop.f32.mrf.mxu0
    %836 = vdwg.mxu0
    %v837 = vld [vmem:[%s0] sm:$0xc]
    %v838 = vld [vmem:[%s0 + $0x1c] sm:$0x3]
    %s839 = scalar_lea.vmem %s1, 224
    %v840 = vld [vmem:[%s839] sm:$0xff]
    %v841 = vld [vmem:[%s839 + $0x8] sm:$0xff]
    %v842 = vld [vmem:[%s839 + $0x10] sm:$0xff]
    %v843 = vld [vmem:[%s839 + $0x18] sm:$0xf]
    %v844 = vld [vmem:[%s839 + $0x1c] sm:$0xff]
    %v845 = vld [vmem:[%s839 + $0x24] sm:$0xff]
    %v846 = vld [vmem:[%s839 + $0x2c] sm:$0xff]
    %v847 = vld [vmem:[%s839 + $0x34] sm:$0xf]
    %v848 = vld [vmem:[%s839 + $0x38] sm:$0xff]
    %v849 = vld [vmem:[%s839 + $0x40] sm:$0xff]
    %v850 = vld [vmem:[%s839 + $0x48] sm:$0xff]
    %v851 = vld [vmem:[%s839 + $0x50] sm:$0xf]
    %v852 = vld [vmem:[%s839 + $0x54] sm:$0xff]
    %v853 = vld [vmem:[%s839 + $0x5c] sm:$0xff]
    %v854 = vld [vmem:[%s839 + $0x64] sm:$0xff]
    %v855 = vld [vmem:[%s839 + $0x6c] sm:$0xf]
    %v858 = vunpack.c.l.b16 %v837
    %v859 = vunpack.c.l.b16 %v838
    %v860 = vpack.c.b16 %v91, %v858
    %v861 = vpack.c.b16 %v859, %v96
    %vm862 = vcmask 1045504
    %v863 = vrot.slane %v860, 2
    %v864 = vrot.slane %v99, 2
    %v865 = vsel %vm862, %v863, %v864
    %v866 = vrot.slane %v100, 2
    %v867 = vsel %vm862, %v864, %v866
    %v868 = vrot.slane %v861, 2
    %v869 = vsel %vm862, %v866, %v868
    %v886 = vunpack.c.l.b16 %v840
    %v887 = vunpack.c.h.b16 %v840
    %v888 = vunpack.c.l.b16 %v841
    %v889 = vunpack.c.h.b16 %v841
    %v890 = vunpack.c.l.b16 %v842
    %v891 = vunpack.c.h.b16 %v842
    %v892 = vunpack.c.l.b16 %v843
    %v893 = vunpack.c.l.b16 %v844
    %v894 = vunpack.c.h.b16 %v844
    %v895 = vunpack.c.l.b16 %v845
    %v896 = vunpack.c.h.b16 %v845
    %v897 = vunpack.c.l.b16 %v846
    %v898 = vunpack.c.h.b16 %v846
    %v899 = vunpack.c.l.b16 %v847
    %v900 = vunpack.c.l.b16 %v848
    %v901 = vunpack.c.h.b16 %v848
    %v902 = vunpack.c.l.b16 %v849
    %v903 = vunpack.c.h.b16 %v849
    %v904 = vunpack.c.l.b16 %v850
    %v905 = vunpack.c.h.b16 %v850
    %v906 = vunpack.c.l.b16 %v851
    %v907 = vunpack.c.l.b16 %v852
    %v908 = vunpack.c.h.b16 %v852
    %v909 = vunpack.c.l.b16 %v853
    %v910 = vunpack.c.h.b16 %v853
    %v911 = vunpack.c.l.b16 %v854
    %v912 = vunpack.c.h.b16 %v854
    %v913 = vunpack.c.l.b16 %v855
    %v914 = vpack.c.b16 %v893, %v886
    %v915 = vpack.c.b16 %v894, %v887
    %v916 = vpack.c.b16 %v895, %v888
    %v917 = vpack.c.b16 %v896, %v889
    %v918 = vpack.c.b16 %v897, %v890
    %v919 = vpack.c.b16 %v898, %v891
    %v920 = vpack.c.b16 %v899, %v892
    %v921 = vpack.c.b16 %v907, %v900
    %v922 = vpack.c.b16 %v908, %v901
    %v923 = vpack.c.b16 %v909, %v902
    %v924 = vpack.c.b16 %v910, %v903
    %v925 = vpack.c.b16 %v911, %v904
    %v926 = vpack.c.b16 %v912, %v905
    %v927 = vpack.c.b16 %v913, %v906
    %v943 = vsel %vm182, %v865, 0
    %v946 = vsel %vm182, %v867, 0
    %v949 = vsel %vm182, %v869, 0
    %v952 = vsel %vm182, %v868, 0
    %954 = vmatprep.subr.bf16.mxu0 0
    %955 = vmatpush1.bf16.msra.mxu0 0
    %956 = vmatprep.subr.bf16.mxu0 0
    %957 = vmatpush1.bf16.msra.mxu0 0
    %958 = vmatprep.subr.bf16.mxu0 0
    %959 = vmatpush1.bf16.msra.mxu0 0
    %960 = vmatprep.subr.bf16.mxu0 0
    %961 = vmatpush1.bf16.msra.mxu0 0
    %962 = vmatprep.subr.bf16.mxu0 0
    %963 = vmatpush1.bf16.msra.mxu0 0
    %964 = vmatprep.subr.bf16.mxu0 0
    %965 = vmatpush1.bf16.msra.mxu0 0
    %966 = vmatprep.subr.bf16.mxu0 %v922
    %967 = vmatpush1.bf16.msra.mxu0 %v921
    %968 = vmatprep.subr.bf16.mxu0 %v915
    %969 = vmatpush1.bf16.msra.mxu0 %v914
    %970 = vmatprep.subr.bf16.mxu0 0
    %971 = vmatpush2.bf16.msra.mxu0 0
    %972 = vmatprep.subr.bf16.mxu0 0
    %973 = vmatpush2.bf16.msra.mxu0 0
    %974 = vmatprep.subr.bf16.mxu0 0
    %975 = vmatpush2.bf16.msra.mxu0 0
    %976 = vmatprep.subr.bf16.mxu0 0
    %977 = vmatpush2.bf16.msra.mxu0 0
    %978 = vmatprep.subr.bf16.mxu0 0
    %979 = vmatpush2.bf16.msra.mxu0 0
    %980 = vmatprep.subr.bf16.mxu0 0
    %981 = vmatpush2.bf16.msra.mxu0 0
    %982 = vmatprep.subr.bf16.mxu0 0
    %983 = vmatpush2.bf16.msra.mxu0 0
    %984 = vmatprep.subr.bf16.mxu0 0
    %985 = vmatpush2.bf16.msra.mxu0 0
    %986 = vmatprep.mubr.bf16.mxu0 0
    %987 = vmatmul.mubr.bf16.gmra.mxu0 %v943
    %v988 = vpop.f32.mrf.mxu0
    %v989 = vadd.f32 0.0, %v988
    %v990 = vpop.f32.mrf.mxu0
    %v991 = vadd.f32 0.0, %v990
    %v992 = vpop.f32.mrf.mxu0
    %v993 = vadd.f32 0.0, %v992
    %v994 = vpop.f32.mrf.mxu0
    %v995 = vadd.f32 0.0, %v994
    %996 = vmatprep.mubr.bf16.mxu0 0
    %997 = vmatmul.mubr.bf16.gmra.mxu0 %v946
    %v998 = vpop.f32.mrf.mxu0
    %v999 = vadd.f32 0.0, %v998
    %v1000 = vpop.f32.mrf.mxu0
    %v1001 = vadd.f32 0.0, %v1000
    %v1002 = vpop.f32.mrf.mxu0
    %v1003 = vadd.f32 0.0, %v1002
    %v1004 = vpop.f32.mrf.mxu0
    %v1005 = vadd.f32 0.0, %v1004
    %1006 = vmatprep.mubr.bf16.mxu0 0
    %1007 = vmatmul.mubr.bf16.gmra.mxu0 %v949
    %v1008 = vpop.f32.mrf.mxu0
    %v1009 = vadd.f32 0.0, %v1008
    %v1010 = vpop.f32.mrf.mxu0
    %v1011 = vadd.f32 0.0, %v1010
    %v1012 = vpop.f32.mrf.mxu0
    %v1013 = vadd.f32 0.0, %v1012
    %v1014 = vpop.f32.mrf.mxu0
    %v1015 = vadd.f32 0.0, %v1014
    %1016 = vmatprep.mubr.bf16.mxu0 0
    %1017 = vmatmul.mubr.bf16.gmra.mxu0 %v952
    %v1018 = vpop.f32.mrf.mxu0
    %v1019 = vadd.f32 0.0, %v1018
    %v1020 = vpop.f32.mrf.mxu0
    %v1021 = vadd.f32 0.0, %v1020
    %v1022 = vpop.f32.mrf.mxu0
    %v1023 = vpop.f32.mrf.mxu0
    %1024 = vdwg.mxu0
    %1025 = vmatprep.subr.bf16.mxu0 0
    %1026 = vmatpush1.bf16.msra.mxu0 0
    %1027 = vmatprep.subr.bf16.mxu0 0
    %1028 = vmatpush1.bf16.msra.mxu0 0
    %1029 = vmatprep.subr.bf16.mxu0 0
    %1030 = vmatpush1.bf16.msra.mxu0 0
    %1031 = vmatprep.subr.bf16.mxu0 0
    %1032 = vmatpush1.bf16.msra.mxu0 0
    %1033 = vmatprep.subr.bf16.mxu0 0
    %1034 = vmatpush1.bf16.msra.mxu0 0
    %1035 = vmatprep.subr.bf16.mxu0 0
    %1036 = vmatpush1.bf16.msra.mxu0 0
    %1037 = vmatprep.subr.bf16.mxu0 %v924
    %1038 = vmatpush1.bf16.msra.mxu0 %v923
    %1039 = vmatprep.subr.bf16.mxu0 %v917
    %1040 = vmatpush1.bf16.msra.mxu0 %v916
    %1041 = vmatprep.subr.bf16.mxu0 0
    %1042 = vmatpush2.bf16.msra.mxu0 0
    %1043 = vmatprep.subr.bf16.mxu0 0
    %1044 = vmatpush2.bf16.msra.mxu0 0
    %1045 = vmatprep.subr.bf16.mxu0 0
    %1046 = vmatpush2.bf16.msra.mxu0 0
    %1047 = vmatprep.subr.bf16.mxu0 0
    %1048 = vmatpush2.bf16.msra.mxu0 0
    %1049 = vmatprep.subr.bf16.mxu0 0
    %1050 = vmatpush2.bf16.msra.mxu0 0
    %1051 = vmatprep.subr.bf16.mxu0 0
    %1052 = vmatpush2.bf16.msra.mxu0 0
    %1053 = vmatprep.subr.bf16.mxu0 0
    %1054 = vmatpush2.bf16.msra.mxu0 0
    %1055 = vmatprep.subr.bf16.mxu0 0
    %1056 = vmatpush2.bf16.msra.mxu0 0
    %1057 = vmatprep.mubr.bf16.mxu0 0
    %1058 = vmatmul.mubr.bf16.gmra.mxu0 %v943
    %v1059 = vpop.f32.mrf.mxu0
    %v1060 = vadd.f32 0.0, %v1059
    %v1061 = vpop.f32.mrf.mxu0
    %v1062 = vadd.f32 0.0, %v1061
    %v1063 = vpop.f32.mrf.mxu0
    %v1064 = vadd.f32 0.0, %v1063
    %v1065 = vpop.f32.mrf.mxu0
    %v1066 = vadd.f32 0.0, %v1065
    %1067 = vmatprep.mubr.bf16.mxu0 0
    %1068 = vmatmul.mubr.bf16.gmra.mxu0 %v946
    %v1069 = vpop.f32.mrf.mxu0
    %v1070 = vadd.f32 0.0, %v1069
    %v1071 = vpop.f32.mrf.mxu0
    %v1072 = vadd.f32 0.0, %v1071
    %v1073 = vpop.f32.mrf.mxu0
    %v1074 = vadd.f32 0.0, %v1073
    %v1075 = vpop.f32.mrf.mxu0
    %v1076 = vadd.f32 0.0, %v1075
    %1077 = vmatprep.mubr.bf16.mxu0 0
    %1078 = vmatmul.mubr.bf16.gmra.mxu0 %v949
    %v1079 = vpop.f32.mrf.mxu0
    %v1080 = vadd.f32 0.0, %v1079
    %v1081 = vpop.f32.mrf.mxu0
    %v1082 = vadd.f32 0.0, %v1081
    %v1083 = vpop.f32.mrf.mxu0
    %v1084 = vadd.f32 0.0, %v1083
    %v1085 = vpop.f32.mrf.mxu0
    %v1086 = vadd.f32 0.0, %v1085
    %1087 = vmatprep.mubr.bf16.mxu0 0
    %1088 = vmatmul.mubr.bf16.gmra.mxu0 %v952
    %v1089 = vpop.f32.mrf.mxu0
    %v1090 = vadd.f32 0.0, %v1089
    %v1091 = vpop.f32.mrf.mxu0
    %v1092 = vadd.f32 0.0, %v1091
    %v1093 = vpop.f32.mrf.mxu0
    %v1094 = vpop.f32.mrf.mxu0
    %1095 = vdwg.mxu0
    %1096 = vmatprep.subr.bf16.mxu0 0
    %1097 = vmatpush1.bf16.msra.mxu0 0
    %1098 = vmatprep.subr.bf16.mxu0 0
    %1099 = vmatpush1.bf16.msra.mxu0 0
    %1100 = vmatprep.subr.bf16.mxu0 0
    %1101 = vmatpush1.bf16.msra.mxu0 0
    %1102 = vmatprep.subr.bf16.mxu0 0
    %1103 = vmatpush1.bf16.msra.mxu0 0
    %1104 = vmatprep.subr.bf16.mxu0 0
    %1105 = vmatpush1.bf16.msra.mxu0 0
    %1106 = vmatprep.subr.bf16.mxu0 0
    %1107 = vmatpush1.bf16.msra.mxu0 0
    %1108 = vmatprep.subr.bf16.mxu0 %v926
    %1109 = vmatpush1.bf16.msra.mxu0 %v925
    %1110 = vmatprep.subr.bf16.mxu0 %v919
    %1111 = vmatpush1.bf16.msra.mxu0 %v918
    %1112 = vmatprep.subr.bf16.mxu0 0
    %1113 = vmatpush2.bf16.msra.mxu0 0
    %1114 = vmatprep.subr.bf16.mxu0 0
    %1115 = vmatpush2.bf16.msra.mxu0 0
    %1116 = vmatprep.subr.bf16.mxu0 0
    %1117 = vmatpush2.bf16.msra.mxu0 0
    %1118 = vmatprep.subr.bf16.mxu0 0
    %1119 = vmatpush2.bf16.msra.mxu0 0
    %1120 = vmatprep.subr.bf16.mxu0 0
    %1121 = vmatpush2.bf16.msra.mxu0 0
    %1122 = vmatprep.subr.bf16.mxu0 0
    %1123 = vmatpush2.bf16.msra.mxu0 0
    %1124 = vmatprep.subr.bf16.mxu0 0
    %1125 = vmatpush2.bf16.msra.mxu0 0
    %1126 = vmatprep.subr.bf16.mxu0 0
    %1127 = vmatpush2.bf16.msra.mxu0 0
    %1128 = vmatprep.mubr.bf16.mxu0 0
    %1129 = vmatmul.mubr.bf16.gmra.mxu0 %v943
    %v1130 = vpop.f32.mrf.mxu0
    %v1131 = vadd.f32 0.0, %v1130
    %v1132 = vpop.f32.mrf.mxu0
    %v1133 = vadd.f32 0.0, %v1132
    %v1134 = vpop.f32.mrf.mxu0
    %v1135 = vadd.f32 0.0, %v1134
    %v1136 = vpop.f32.mrf.mxu0
    %v1137 = vadd.f32 0.0, %v1136
    %1138 = vmatprep.mubr.bf16.mxu0 0
    %1139 = vmatmul.mubr.bf16.gmra.mxu0 %v946
    %v1140 = vpop.f32.mrf.mxu0
    %v1141 = vadd.f32 0.0, %v1140
    %v1142 = vpop.f32.mrf.mxu0
    %v1143 = vadd.f32 0.0, %v1142
    %v1144 = vpop.f32.mrf.mxu0
    %v1145 = vadd.f32 0.0, %v1144
    %v1146 = vpop.f32.mrf.mxu0
    %v1147 = vadd.f32 0.0, %v1146
    %1148 = vmatprep.mubr.bf16.mxu0 0
    %1149 = vmatmul.mubr.bf16.gmra.mxu0 %v949
    %v1150 = vpop.f32.mrf.mxu0
    %v1151 = vadd.f32 0.0, %v1150
    %v1152 = vpop.f32.mrf.mxu0
    %v1153 = vadd.f32 0.0, %v1152
    %v1154 = vpop.f32.mrf.mxu0
    %v1155 = vadd.f32 0.0, %v1154
    %v1156 = vpop.f32.mrf.mxu0
    %v1157 = vadd.f32 0.0, %v1156
    %1158 = vmatprep.mubr.bf16.mxu0 0
    %1159 = vmatmul.mubr.bf16.gmra.mxu0 %v952
    %v1160 = vpop.f32.mrf.mxu0
    %v1161 = vadd.f32 0.0, %v1160
    %v1162 = vpop.f32.mrf.mxu0
    %v1163 = vadd.f32 0.0, %v1162
    %v1164 = vpop.f32.mrf.mxu0
    %v1165 = vpop.f32.mrf.mxu0
    %1166 = vdwg.mxu0
    %1167 = vmatprep.subr.bf16.mxu0 0
    %1168 = vmatpush1.bf16.msra.mxu0 0
    %1169 = vmatprep.subr.bf16.mxu0 0
    %1170 = vmatpush1.bf16.msra.mxu0 0
    %1171 = vmatprep.subr.bf16.mxu0 0
    %1172 = vmatpush1.bf16.msra.mxu0 0
    %1173 = vmatprep.subr.bf16.mxu0 0
    %1174 = vmatpush1.bf16.msra.mxu0 0
    %1175 = vmatprep.subr.bf16.mxu0 0
    %1176 = vmatpush1.bf16.msra.mxu0 0
    %1177 = vmatprep.subr.bf16.mxu0 0
    %1178 = vmatpush1.bf16.msra.mxu0 0
    %1179 = vmatprep.subr.bf16.mxu0 0
    %1180 = vmatpush1.bf16.msra.mxu0 %v927
    %1181 = vmatprep.subr.bf16.mxu0 0
    %1182 = vmatpush1.bf16.msra.mxu0 %v920
    %1183 = vmatprep.subr.bf16.mxu0 0
    %1184 = vmatpush2.bf16.msra.mxu0 0
    %1185 = vmatprep.subr.bf16.mxu0 0
    %1186 = vmatpush2.bf16.msra.mxu0 0
    %1187 = vmatprep.subr.bf16.mxu0 0
    %1188 = vmatpush2.bf16.msra.mxu0 0
    %1189 = vmatprep.subr.bf16.mxu0 0
    %1190 = vmatpush2.bf16.msra.mxu0 0
    %1191 = vmatprep.subr.bf16.mxu0 0
    %1192 = vmatpush2.bf16.msra.mxu0 0
    %1193 = vmatprep.subr.bf16.mxu0 0
    %1194 = vmatpush2.bf16.msra.mxu0 0
    %1195 = vmatprep.subr.bf16.mxu0 0
    %1196 = vmatpush2.bf16.msra.mxu0 0
    %1197 = vmatprep.subr.bf16.mxu0 0
    %1198 = vmatpush2.bf16.msra.mxu0 0
    %1199 = vmatprep.mubr.bf16.mxu0 0
    %1200 = vmatmul.mubr.bf16.gmra.mxu0 %v943
    %v1201 = vpop.f32.mrf.mxu0
    %v1202 = vadd.f32 0.0, %v1201
    %v1203 = vpop.f32.mrf.mxu0
    %v1204 = vpop.f32.mrf.mxu0
    %v1205 = vadd.f32 0.0, %v1204
    %v1206 = vpop.f32.mrf.mxu0
    %1207 = vmatprep.mubr.bf16.mxu0 0
    %1208 = vmatmul.mubr.bf16.gmra.mxu0 %v946
    %v1209 = vpop.f32.mrf.mxu0
    %v1210 = vadd.f32 0.0, %v1209
    %v1211 = vpop.f32.mrf.mxu0
    %v1212 = vpop.f32.mrf.mxu0
    %v1213 = vadd.f32 0.0, %v1212
    %v1214 = vpop.f32.mrf.mxu0
    %1215 = vmatprep.mubr.bf16.mxu0 0
    %1216 = vmatmul.mubr.bf16.gmra.mxu0 %v949
    %v1217 = vpop.f32.mrf.mxu0
    %v1218 = vadd.f32 0.0, %v1217
    %v1219 = vpop.f32.mrf.mxu0
    %v1220 = vpop.f32.mrf.mxu0
    %v1221 = vadd.f32 0.0, %v1220
    %v1222 = vpop.f32.mrf.mxu0
    %1223 = vmatprep.mubr.bf16.mxu0 0
    %1224 = vmatmul.mubr.bf16.gmra.mxu0 %v952
    %v1225 = vpop.f32.mrf.mxu0
    %v1226 = vadd.f32 0.0, %v1225
    %v1227 = vpop.f32.mrf.mxu0
    %v1228 = vpop.f32.mrf.mxu0
    %v1229 = vpop.f32.mrf.mxu0
    %1230 = vdwg.mxu0
    %v1231 = vadd.f32 %v595, %v989
    %v1232 = vadd.f32 %v597, %v991
    %v1233 = vadd.f32 %v666, %v1060
    %v1234 = vadd.f32 %v668, %v1062
    %v1235 = vadd.f32 %v737, %v1131
    %v1236 = vadd.f32 %v739, %v1133
    %v1237 = vadd.f32 %v808, %v1202
    %v1238 = vadd.f32 %v599, %v993
    %v1239 = vadd.f32 %v601, %v995
    %v1240 = vadd.f32 %v670, %v1064
    %v1241 = vadd.f32 %v672, %v1066
    %v1242 = vadd.f32 %v741, %v1135
    %v1243 = vadd.f32 %v743, %v1137
    %v1244 = vadd.f32 %v811, %v1205
    %v1245 = vadd.f32 %v605, %v999
    %v1246 = vadd.f32 %v607, %v1001
    %v1247 = vadd.f32 %v676, %v1070
    %v1248 = vadd.f32 %v678, %v1072
    %v1249 = vadd.f32 %v747, %v1141
    %v1250 = vadd.f32 %v749, %v1143
    %v1251 = vadd.f32 %v816, %v1210
    %v1252 = vadd.f32 %v609, %v1003
    %v1253 = vadd.f32 %v611, %v1005
    %v1254 = vadd.f32 %v680, %v1074
    %v1255 = vadd.f32 %v682, %v1076
    %v1256 = vadd.f32 %v751, %v1145
    %v1257 = vadd.f32 %v753, %v1147
    %v1258 = vadd.f32 %v819, %v1213
    %v1259 = vadd.f32 %v615, %v1009
    %v1260 = vadd.f32 %v617, %v1011
    %v1261 = vadd.f32 %v686, %v1080
    %v1262 = vadd.f32 %v688, %v1082
    %v1263 = vadd.f32 %v757, %v1151
    %v1264 = vadd.f32 %v759, %v1153
    %v1265 = vadd.f32 %v824, %v1218
    %v1266 = vadd.f32 %v619, %v1013
    %v1267 = vadd.f32 %v621, %v1015
    %v1268 = vadd.f32 %v690, %v1084
    %v1269 = vadd.f32 %v692, %v1086
    %v1270 = vadd.f32 %v761, %v1155
    %v1271 = vadd.f32 %v763, %v1157
    %v1272 = vadd.f32 %v827, %v1221
    %v1273 = vadd.f32 %v625, %v1019
    %v1274 = vadd.f32 %v627, %v1021
    %v1275 = vadd.f32 %v696, %v1090
    %v1276 = vadd.f32 %v698, %v1092
    %v1277 = vadd.f32 %v767, %v1161
    %v1278 = vadd.f32 %v769, %v1163
    %v1279 = vadd.f32 %v832, %v1226
    %v1280 = vadd.f32 %v1231, %v1238
    %v1281 = vadd.f32 %v1280, %v1245
    %v1282 = vadd.f32 %v1281, %v1252
    %v1283 = vadd.f32 %v1282, %v1259
    %v1284 = vadd.f32 %v1283, %v1266
    %v1285 = vadd.f32 %v1284, %v1273
    %v1286 = vrot.slane %v1285, 4
    %v1287 = vadd.f32 %v1285, %v1286
    %v1288 = vrot.slane %v1287, 2
    %v1289 = vadd.f32 %v1287, %v1288
    %v1290 = vrot.slane %v1289, 1
    %v1291 = vadd.f32 %v1289, %v1290
    %v1292 = vadd.f32 %v1232, %v1239
    %v1293 = vadd.f32 %v1292, %v1246
    %v1294 = vadd.f32 %v1293, %v1253
    %v1295 = vadd.f32 %v1294, %v1260
    %v1296 = vadd.f32 %v1295, %v1267
    %v1297 = vadd.f32 %v1296, %v1274
    %v1298 = vrot.slane %v1297, 4
    %v1299 = vadd.f32 %v1297, %v1298
    %v1300 = vrot.slane %v1299, 2
    %v1301 = vadd.f32 %v1299, %v1300
    %v1302 = vrot.slane %v1301, 1
    %v1303 = vadd.f32 %v1301, %v1302
    %v1304 = vadd.f32 %v1233, %v1240
    %v1305 = vadd.f32 %v1304, %v1247
    %v1306 = vadd.f32 %v1305, %v1254
    %v1307 = vadd.f32 %v1306, %v1261
    %v1308 = vadd.f32 %v1307, %v1268
    %v1309 = vadd.f32 %v1308, %v1275
    %v1310 = vrot.slane %v1309, 4
    %v1311 = vadd.f32 %v1309, %v1310
    %v1312 = vrot.slane %v1311, 2
    %v1313 = vadd.f32 %v1311, %v1312
    %v1314 = vrot.slane %v1313, 1
    %v1315 = vadd.f32 %v1313, %v1314
    %v1316 = vadd.f32 %v1234, %v1241
    %v1317 = vadd.f32 %v1316, %v1248
    %v1318 = vadd.f32 %v1317, %v1255
    %v1319 = vadd.f32 %v1318, %v1262
    %v1320 = vadd.f32 %v1319, %v1269
    %v1321 = vadd.f32 %v1320, %v1276
    %v1322 = vrot.slane %v1321, 4
    %v1323 = vadd.f32 %v1321, %v1322
    %v1324 = vrot.slane %v1323, 2
    %v1325 = vadd.f32 %v1323, %v1324
    %v1326 = vrot.slane %v1325, 1
    %v1327 = vadd.f32 %v1325, %v1326
    %v1328 = vadd.f32 %v1235, %v1242
    %v1329 = vadd.f32 %v1328, %v1249
    %v1330 = vadd.f32 %v1329, %v1256
    %v1331 = vadd.f32 %v1330, %v1263
    %v1332 = vadd.f32 %v1331, %v1270
    %v1333 = vadd.f32 %v1332, %v1277
    %v1334 = vrot.slane %v1333, 4
    %v1335 = vadd.f32 %v1333, %v1334
    %v1336 = vrot.slane %v1335, 2
    %v1337 = vadd.f32 %v1335, %v1336
    %v1338 = vrot.slane %v1337, 1
    %v1339 = vadd.f32 %v1337, %v1338
    %v1340 = vadd.f32 %v1236, %v1243
    %v1341 = vadd.f32 %v1340, %v1250
    %v1342 = vadd.f32 %v1341, %v1257
    %v1343 = vadd.f32 %v1342, %v1264
    %v1344 = vadd.f32 %v1343, %v1271
    %v1345 = vadd.f32 %v1344, %v1278
    %v1346 = vrot.slane %v1345, 4
    %v1347 = vadd.f32 %v1345, %v1346
    %v1348 = vrot.slane %v1347, 2
    %v1349 = vadd.f32 %v1347, %v1348
    %v1350 = vrot.slane %v1349, 1
    %v1351 = vadd.f32 %v1349, %v1350
    %v1352 = vadd.f32 %v1237, %v1244
    %v1353 = vadd.f32 %v1352, %v1251
    %v1354 = vadd.f32 %v1353, %v1258
    %v1355 = vadd.f32 %v1354, %v1265
    %v1356 = vadd.f32 %v1355, %v1272
    %v1357 = vadd.f32 %v1356, %v1279
    %v1358 = vrot.slane %v1357, 4
    %v1359 = vadd.f32 %v1357, %v1358
    %v1360 = vrot.slane %v1359, 2
    %v1361 = vadd.f32 %v1359, %v1360
    %v1362 = vrot.slane %v1361, 1
    %v1363 = vadd.f32 %v1361, %v1362
    %1365 = vrot.lane.b32.xlu0 %v1291, 96
    %v1366 = vpop.permute.xlu0 %1365
    %v1368 = vadd.f32 %v1291, %v1366
    %1369 = vrot.lane.b32.xlu0 %v1291, 64
    %v1370 = vpop.permute.xlu0 %1369
    %v1372 = vadd.f32 %v1368, %v1370
    %1373 = vrot.lane.b32.xlu0 %v1291, 32
    %v1374 = vpop.permute.xlu0 %1373
    %v1376 = vadd.f32 %v1372, %v1374
    %v1377 = vadd.f32 %v1376, %v1303
    %1379 = vrot.lane.b32.xlu0 %v1303, 96
    %v1380 = vpop.permute.xlu0 %1379
    %v1382 = vadd.f32 %v1377, %v1380
    %1383 = vrot.lane.b32.xlu0 %v1303, 64
    %v1384 = vpop.permute.xlu0 %1383
    %v1386 = vadd.f32 %v1382, %v1384
    %1387 = vrot.lane.b32.xlu0 %v1303, 32
    %v1388 = vpop.permute.xlu0 %1387
    %v1390 = vadd.f32 %v1386, %v1388
    %v1391 = vadd.f32 %v1390, %v1315
    %1393 = vrot.lane.b32.xlu0 %v1315, 96
    %v1394 = vpop.permute.xlu0 %1393
    %v1396 = vadd.f32 %v1391, %v1394
    %1397 = vrot.lane.b32.xlu0 %v1315, 64
    %v1398 = vpop.permute.xlu0 %1397
    %v1400 = vadd.f32 %v1396, %v1398
    %1401 = vrot.lane.b32.xlu0 %v1315, 32
    %v1402 = vpop.permute.xlu0 %1401
    %v1404 = vadd.f32 %v1400, %v1402
    %v1405 = vadd.f32 %v1404, %v1327
    %1407 = vrot.lane.b32.xlu0 %v1327, 96
    %v1408 = vpop.permute.xlu0 %1407
    %v1410 = vadd.f32 %v1405, %v1408
    %1411 = vrot.lane.b32.xlu0 %v1327, 64
    %v1412 = vpop.permute.xlu0 %1411
    %v1414 = vadd.f32 %v1410, %v1412
    %1415 = vrot.lane.b32.xlu0 %v1327, 32
    %v1416 = vpop.permute.xlu0 %1415
    %v1418 = vadd.f32 %v1414, %v1416
    %v1419 = vadd.f32 %v1418, %v1339
    %1421 = vrot.lane.b32.xlu0 %v1339, 96
    %v1422 = vpop.permute.xlu0 %1421
    %v1424 = vadd.f32 %v1419, %v1422
    %1425 = vrot.lane.b32.xlu0 %v1339, 64
    %v1426 = vpop.permute.xlu0 %1425
    %v1428 = vadd.f32 %v1424, %v1426
    %1429 = vrot.lane.b32.xlu0 %v1339, 32
    %v1430 = vpop.permute.xlu0 %1429
    %v1432 = vadd.f32 %v1428, %v1430
    %v1433 = vadd.f32 %v1432, %v1351
    %1435 = vrot.lane.b32.xlu0 %v1351, 96
    %v1436 = vpop.permute.xlu0 %1435
    %v1438 = vadd.f32 %v1433, %v1436
    %1439 = vrot.lane.b32.xlu0 %v1351, 64
    %v1440 = vpop.permute.xlu0 %1439
    %v1442 = vadd.f32 %v1438, %v1440
    %1443 = vrot.lane.b32.xlu0 %v1351, 32
    %v1444 = vpop.permute.xlu0 %1443
    %v1446 = vadd.f32 %v1442, %v1444
    %v1447 = vadd.f32 %v1446, %v1363
    %1449 = vrot.lane.b32.xlu0 %v1363, 96
    %v1450 = vpop.permute.xlu0 %1449
    %v1452 = vadd.f32 %v1447, %v1450
    %1453 = vrot.lane.b32.xlu0 %v1363, 64
    %v1454 = vpop.permute.xlu0 %1453
    %v1456 = vadd.f32 %v1452, %v1454
    %1457 = vrot.lane.b32.xlu0 %v1363, 32
    %v1458 = vpop.permute.xlu0 %1457
    %v1460 = vadd.f32 %v1456, %v1458
    %v1461 = vrcp.pop 1568.0
    %v1462 = vmul.f32 %v1460, %v1461
    %1464 = vrot.lane.b32.xlu0 %v1462, 32
    %v1465 = vpop.permute.xlu0 %1464
    %1467 = vrot.lane.b32.xlu0 %v1462, 64
    %v1468 = vpop.permute.xlu0 %1467
    %1470 = vrot.lane.b32.xlu0 %v1462, 96
    %v1471 = vpop.permute.xlu0 %1470
    %v1473 = vsel %vm182, %v1462, %v1465
    %vm1474 = vcmask 523264
    %v1475 = vsel %vm1474, %v1473, %v1468
    %vm1476 = vcmask 785408
    %v1477 = vsel %vm1476, %v1475, %v1471
    %v1478 = vlaneseq
    %v1479 = vshrl.u32 %v1478, 7
    %v1480 = vsub.s32 0, %v1479
    %v1481 = vrot.slane %v1477, %v1480
    %v1482 = vsub.f32 %v1231, %v1481
    %v1483 = vsub.f32 %v1232, %v1481
    %v1484 = vsub.f32 %v1233, %v1481
    %v1485 = vsub.f32 %v1234, %v1481
    %v1486 = vsub.f32 %v1235, %v1481
    %v1487 = vsub.f32 %v1236, %v1481
    %v1488 = vsub.f32 %v1237, %v1481
    %v1489 = vsub.f32 %v1238, %v1481
    %v1490 = vsub.f32 %v1239, %v1481
    %v1491 = vsub.f32 %v1240, %v1481
    %v1492 = vsub.f32 %v1241, %v1481
    %v1493 = vsub.f32 %v1242, %v1481
    %v1494 = vsub.f32 %v1243, %v1481
    %v1495 = vsub.f32 %v1244, %v1481
    %v1496 = vsub.f32 %v1245, %v1481
    %v1497 = vsub.f32 %v1246, %v1481
    %v1498 = vsub.f32 %v1247, %v1481
    %v1499 = vsub.f32 %v1248, %v1481
    %v1500 = vsub.f32 %v1249, %v1481
    %v1501 = vsub.f32 %v1250, %v1481
    %v1502 = vsub.f32 %v1251, %v1481
    %v1503 = vsub.f32 %v1252, %v1481
    %v1504 = vsub.f32 %v1253, %v1481
    %v1505 = vsub.f32 %v1254, %v1481
    %v1506 = vsub.f32 %v1255, %v1481
    %v1507 = vsub.f32 %v1256, %v1481
    %v1508 = vsub.f32 %v1257, %v1481
    %v1509 = vsub.f32 %v1258, %v1481
    %v1510 = vsub.f32 %v1259, %v1481
    %v1511 = vsub.f32 %v1260, %v1481
    %v1512 = vsub.f32 %v1261, %v1481
    %v1513 = vsub.f32 %v1262, %v1481
    %v1514 = vsub.f32 %v1263, %v1481
    %v1515 = vsub.f32 %v1264, %v1481
    %v1516 = vsub.f32 %v1265, %v1481
    %v1517 = vsub.f32 %v1266, %v1481
    %v1518 = vsub.f32 %v1267, %v1481
    %v1519 = vsub.f32 %v1268, %v1481
    %v1520 = vsub.f32 %v1269, %v1481
    %v1521 = vsub.f32 %v1270, %v1481
    %v1522 = vsub.f32 %v1271, %v1481
    %v1523 = vsub.f32 %v1272, %v1481
    %v1524 = vsub.f32 %v1273, %v1481
    %v1525 = vsub.f32 %v1274, %v1481
    %v1526 = vsub.f32 %v1275, %v1481
    %v1527 = vsub.f32 %v1276, %v1481
    %v1528 = vsub.f32 %v1277, %v1481
    %v1529 = vsub.f32 %v1278, %v1481
    %v1530 = vsub.f32 %v1279, %v1481
    %v1531 = vmul.f32 %v1482, %v1482
    %v1532 = vmul.f32 %v1483, %v1483
    %v1533 = vmul.f32 %v1484, %v1484
    %v1534 = vmul.f32 %v1485, %v1485
    %v1535 = vmul.f32 %v1486, %v1486
    %v1536 = vmul.f32 %v1487, %v1487
    %v1537 = vmul.f32 %v1488, %v1488
    %v1538 = vmul.f32 %v1489, %v1489
    %v1539 = vmul.f32 %v1490, %v1490
    %v1540 = vmul.f32 %v1491, %v1491
    %v1541 = vmul.f32 %v1492, %v1492
    %v1542 = vmul.f32 %v1493, %v1493
    %v1543 = vmul.f32 %v1494, %v1494
    %v1544 = vmul.f32 %v1495, %v1495
    %v1545 = vmul.f32 %v1496, %v1496
    %v1546 = vmul.f32 %v1497, %v1497
    %v1547 = vmul.f32 %v1498, %v1498
    %v1548 = vmul.f32 %v1499, %v1499
    %v1549 = vmul.f32 %v1500, %v1500
    %v1550 = vmul.f32 %v1501, %v1501
    %v1551 = vmul.f32 %v1502, %v1502
    %v1552 = vmul.f32 %v1503, %v1503
    %v1553 = vmul.f32 %v1504, %v1504
    %v1554 = vmul.f32 %v1505, %v1505
    %v1555 = vmul.f32 %v1506, %v1506
    %v1556 = vmul.f32 %v1507, %v1507
    %v1557 = vmul.f32 %v1508, %v1508
    %v1558 = vmul.f32 %v1509, %v1509
    %v1559 = vmul.f32 %v1510, %v1510
    %v1560 = vmul.f32 %v1511, %v1511
    %v1561 = vmul.f32 %v1512, %v1512
    %v1562 = vmul.f32 %v1513, %v1513
    %v1563 = vmul.f32 %v1514, %v1514
    %v1564 = vmul.f32 %v1515, %v1515
    %v1565 = vmul.f32 %v1516, %v1516
    %v1566 = vmul.f32 %v1517, %v1517
    %v1567 = vmul.f32 %v1518, %v1518
    %v1568 = vmul.f32 %v1519, %v1519
    %v1569 = vmul.f32 %v1520, %v1520
    %v1570 = vmul.f32 %v1521, %v1521
    %v1571 = vmul.f32 %v1522, %v1522
    %v1572 = vmul.f32 %v1523, %v1523
    %v1573 = vmul.f32 %v1524, %v1524
    %v1574 = vmul.f32 %v1525, %v1525
    %v1575 = vmul.f32 %v1526, %v1526
    %v1576 = vmul.f32 %v1527, %v1527
    %v1577 = vmul.f32 %v1528, %v1528
    %v1578 = vmul.f32 %v1529, %v1529
    %v1579 = vmul.f32 %v1530, %v1530
    %v1580 = vadd.f32 %v1531, %v1538
    %v1581 = vadd.f32 %v1580, %v1545
    %v1582 = vadd.f32 %v1581, %v1552
    %v1583 = vadd.f32 %v1582, %v1559
    %v1584 = vadd.f32 %v1583, %v1566
    %v1585 = vadd.f32 %v1584, %v1573
    %v1586 = vrot.slane %v1585, 4
    %v1587 = vadd.f32 %v1585, %v1586
    %v1588 = vrot.slane %v1587, 2
    %v1589 = vadd.f32 %v1587, %v1588
    %v1590 = vrot.slane %v1589, 1
    %v1591 = vadd.f32 %v1589, %v1590
    %v1592 = vadd.f32 %v1532, %v1539
    %v1593 = vadd.f32 %v1592, %v1546
    %v1594 = vadd.f32 %v1593, %v1553
    %v1595 = vadd.f32 %v1594, %v1560
    %v1596 = vadd.f32 %v1595, %v1567
    %v1597 = vadd.f32 %v1596, %v1574
    %v1598 = vrot.slane %v1597, 4
    %v1599 = vadd.f32 %v1597, %v1598
    %v1600 = vrot.slane %v1599, 2
    %v1601 = vadd.f32 %v1599, %v1600
    %v1602 = vrot.slane %v1601, 1
    %v1603 = vadd.f32 %v1601, %v1602
    %v1604 = vadd.f32 %v1533, %v1540
    %v1605 = vadd.f32 %v1604, %v1547
    %v1606 = vadd.f32 %v1605, %v1554
    %v1607 = vadd.f32 %v1606, %v1561
    %v1608 = vadd.f32 %v1607, %v1568
    %v1609 = vadd.f32 %v1608, %v1575
    %v1610 = vrot.slane %v1609, 4
    %v1611 = vadd.f32 %v1609, %v1610
    %v1612 = vrot.slane %v1611, 2
    %v1613 = vadd.f32 %v1611, %v1612
    %v1614 = vrot.slane %v1613, 1
    %v1615 = vadd.f32 %v1613, %v1614
    %v1616 = vadd.f32 %v1534, %v1541
    %v1617 = vadd.f32 %v1616, %v1548
    %v1618 = vadd.f32 %v1617, %v1555
    %v1619 = vadd.f32 %v1618, %v1562
    %v1620 = vadd.f32 %v1619, %v1569
    %v1621 = vadd.f32 %v1620, %v1576
    %v1622 = vrot.slane %v1621, 4
    %v1623 = vadd.f32 %v1621, %v1622
    %v1624 = vrot.slane %v1623, 2
    %v1625 = vadd.f32 %v1623, %v1624
    %v1626 = vrot.slane %v1625, 1
    %v1627 = vadd.f32 %v1625, %v1626
    %v1628 = vadd.f32 %v1535, %v1542
    %v1629 = vadd.f32 %v1628, %v1549
    %v1630 = vadd.f32 %v1629, %v1556
    %v1631 = vadd.f32 %v1630, %v1563
    %v1632 = vadd.f32 %v1631, %v1570
    %v1633 = vadd.f32 %v1632, %v1577
    %v1634 = vrot.slane %v1633, 4
    %v1635 = vadd.f32 %v1633, %v1634
    %v1636 = vrot.slane %v1635, 2
    %v1637 = vadd.f32 %v1635, %v1636
    %v1638 = vrot.slane %v1637, 1
    %v1639 = vadd.f32 %v1637, %v1638
    %v1640 = vadd.f32 %v1536, %v1543
    %v1641 = vadd.f32 %v1640, %v1550
    %v1642 = vadd.f32 %v1641, %v1557
    %v1643 = vadd.f32 %v1642, %v1564
    %v1644 = vadd.f32 %v1643, %v1571
    %v1645 = vadd.f32 %v1644, %v1578
    %v1646 = vrot.slane %v1645, 4
    %v1647 = vadd.f32 %v1645, %v1646
    %v1648 = vrot.slane %v1647, 2
    %v1649 = vadd.f32 %v1647, %v1648
    %v1650 = vrot.slane %v1649, 1
    %v1651 = vadd.f32 %v1649, %v1650
    %v1652 = vadd.f32 %v1537, %v1544
    %v1653 = vadd.f32 %v1652, %v1551
    %v1654 = vadd.f32 %v1653, %v1558
    %v1655 = vadd.f32 %v1654, %v1565
    %v1656 = vadd.f32 %v1655, %v1572
    %v1657 = vadd.f32 %v1656, %v1579
    %v1658 = vrot.slane %v1657, 4
    %v1659 = vadd.f32 %v1657, %v1658
    %v1660 = vrot.slane %v1659, 2
    %v1661 = vadd.f32 %v1659, %v1660
    %v1662 = vrot.slane %v1661, 1
    %v1663 = vadd.f32 %v1661, %v1662
    %1665 = vrot.lane.b32.xlu0 %v1591, 96
    %v1666 = vpop.permute.xlu0 %1665
    %v1668 = vadd.f32 %v1591, %v1666
    %1669 = vrot.lane.b32.xlu0 %v1591, 64
    %v1670 = vpop.permute.xlu0 %1669
    %v1672 = vadd.f32 %v1668, %v1670
    %1673 = vrot.lane.b32.xlu0 %v1591, 32
    %v1674 = vpop.permute.xlu0 %1673
    %v1676 = vadd.f32 %v1672, %v1674
    %v1677 = vadd.f32 %v1676, %v1603
    %1679 = vrot.lane.b32.xlu0 %v1603, 96
    %v1680 = vpop.permute.xlu0 %1679
    %v1682 = vadd.f32 %v1677, %v1680
    %1683 = vrot.lane.b32.xlu0 %v1603, 64
    %v1684 = vpop.permute.xlu0 %1683
    %v1686 = vadd.f32 %v1682, %v1684
    %1687 = vrot.lane.b32.xlu0 %v1603, 32
    %v1688 = vpop.permute.xlu0 %1687
    %v1690 = vadd.f32 %v1686, %v1688
    %v1691 = vadd.f32 %v1690, %v1615
    %1693 = vrot.lane.b32.xlu0 %v1615, 96
    %v1694 = vpop.permute.xlu0 %1693
    %v1696 = vadd.f32 %v1691, %v1694
    %1697 = vrot.lane.b32.xlu0 %v1615, 64
    %v1698 = vpop.permute.xlu0 %1697
    %v1700 = vadd.f32 %v1696, %v1698
    %1701 = vrot.lane.b32.xlu0 %v1615, 32
    %v1702 = vpop.permute.xlu0 %1701
    %v1704 = vadd.f32 %v1700, %v1702
    %v1705 = vadd.f32 %v1704, %v1627
    %1707 = vrot.lane.b32.xlu0 %v1627, 96
    %v1708 = vpop.permute.xlu0 %1707
    %v1710 = vadd.f32 %v1705, %v1708
    %1711 = vrot.lane.b32.xlu0 %v1627, 64
    %v1712 = vpop.permute.xlu0 %1711
    %v1714 = vadd.f32 %v1710, %v1712
    %1715 = vrot.lane.b32.xlu0 %v1627, 32
    %v1716 = vpop.permute.xlu0 %1715
    %v1718 = vadd.f32 %v1714, %v1716
    %v1719 = vadd.f32 %v1718, %v1639
    %1721 = vrot.lane.b32.xlu0 %v1639, 96
    %v1722 = vpop.permute.xlu0 %1721
    %v1724 = vadd.f32 %v1719, %v1722
    %1725 = vrot.lane.b32.xlu0 %v1639, 64
    %v1726 = vpop.permute.xlu0 %1725
    %v1728 = vadd.f32 %v1724, %v1726
    %1729 = vrot.lane.b32.xlu0 %v1639, 32
    %v1730 = vpop.permute.xlu0 %1729
    %v1732 = vadd.f32 %v1728, %v1730
    %v1733 = vadd.f32 %v1732, %v1651
    %1735 = vrot.lane.b32.xlu0 %v1651, 96
    %v1736 = vpop.permute.xlu0 %1735
    %v1738 = vadd.f32 %v1733, %v1736
    %1739 = vrot.lane.b32.xlu0 %v1651, 64
    %v1740 = vpop.permute.xlu0 %1739
    %v1742 = vadd.f32 %v1738, %v1740
    %1743 = vrot.lane.b32.xlu0 %v1651, 32
    %v1744 = vpop.permute.xlu0 %1743
    %v1746 = vadd.f32 %v1742, %v1744
    %v1747 = vadd.f32 %v1746, %v1663
    %1749 = vrot.lane.b32.xlu0 %v1663, 96
    %v1750 = vpop.permute.xlu0 %1749
    %v1752 = vadd.f32 %v1747, %v1750
    %1753 = vrot.lane.b32.xlu0 %v1663, 64
    %v1754 = vpop.permute.xlu0 %1753
    %v1756 = vadd.f32 %v1752, %v1754
    %1757 = vrot.lane.b32.xlu0 %v1663, 32
    %v1758 = vpop.permute.xlu0 %1757
    %v1760 = vadd.f32 %v1756, %v1758
    %v1761 = vmul.f32 %v1760, %v1461
    %v1762 = vld [vmem:[%s2] sm:$0x1]
    %v1763 = vadd.f32 %v1761, 1e-05
    %v1764 = vrsqrt.pop %v1763
    %v1765 = vmul.f32 %v1762, %v1764
    %v1767 = vlaneseq
    %v1768 = vshrl.u32 %v1767, 7
    %v1769 = vsub.s32 0, %v1768
    %v1770 = vrot.slane %v1765, %v1769
    %1771 = vrot.lane.b32.xlu0 %v1770, 32
    %v1772 = vpop.permute.xlu0 %1771
    %1774 = vrot.lane.b32.xlu0 %v1770, 64
    %v1775 = vpop.permute.xlu0 %1774
    %1777 = vrot.lane.b32.xlu0 %v1770, 96
    %v1778 = vpop.permute.xlu0 %1777
    %v1780 = vsel %vm182, %v1765, %v1772
    %v1781 = vsel %vm1474, %v1780, %v1775
    %v1782 = vsel %vm1476, %v1781, %v1778
    %v1783 = vlaneseq
    %v1784 = vshrl.u32 %v1783, 7
    %v1785 = vsub.s32 0, %v1784
    %v1786 = vrot.slane %v1782, %v1785
    %v1787 = vmul.f32 %v1482, %v1786
    %v1788 = vmul.f32 %v1483, %v1786
    %v1789 = vmul.f32 %v1484, %v1786
    %v1790 = vmul.f32 %v1485, %v1786
    %v1791 = vmul.f32 %v1486, %v1786
    %v1792 = vmul.f32 %v1487, %v1786
    %v1793 = vmul.f32 %v1488, %v1786
    %v1794 = vmul.f32 %v1489, %v1786
    %v1795 = vmul.f32 %v1490, %v1786
    %v1796 = vmul.f32 %v1491, %v1786
    %v1797 = vmul.f32 %v1492, %v1786
    %v1798 = vmul.f32 %v1493, %v1786
    %v1799 = vmul.f32 %v1494, %v1786
    %v1800 = vmul.f32 %v1495, %v1786
    %v1801 = vmul.f32 %v1496, %v1786
    %v1802 = vmul.f32 %v1497, %v1786
    %v1803 = vmul.f32 %v1498, %v1786
    %v1804 = vmul.f32 %v1499, %v1786
    %v1805 = vmul.f32 %v1500, %v1786
    %v1806 = vmul.f32 %v1501, %v1786
    %v1807 = vmul.f32 %v1502, %v1786
    %v1808 = vmul.f32 %v1503, %v1786
    %v1809 = vmul.f32 %v1504, %v1786
    %v1810 = vmul.f32 %v1505, %v1786
    %v1811 = vmul.f32 %v1506, %v1786
    %v1812 = vmul.f32 %v1507, %v1786
    %v1813 = vmul.f32 %v1508, %v1786
    %v1814 = vmul.f32 %v1509, %v1786
    %v1815 = vmul.f32 %v1510, %v1786
    %v1816 = vmul.f32 %v1511, %v1786
    %v1817 = vmul.f32 %v1512, %v1786
    %v1818 = vmul.f32 %v1513, %v1786
    %v1819 = vmul.f32 %v1514, %v1786
    %v1820 = vmul.f32 %v1515, %v1786
    %v1821 = vmul.f32 %v1516, %v1786
    %v1822 = vmul.f32 %v1517, %v1786
    %v1823 = vmul.f32 %v1518, %v1786
    %v1824 = vmul.f32 %v1519, %v1786
    %v1825 = vmul.f32 %v1520, %v1786
    %v1826 = vmul.f32 %v1521, %v1786
    %v1827 = vmul.f32 %v1522, %v1786
    %v1828 = vmul.f32 %v1523, %v1786
    %v1829 = vmul.f32 %v1524, %v1786
    %v1830 = vmul.f32 %v1525, %v1786
    %v1831 = vmul.f32 %v1526, %v1786
    %v1832 = vmul.f32 %v1527, %v1786
    %v1833 = vmul.f32 %v1528, %v1786
    %v1834 = vmul.f32 %v1529, %v1786
    %v1835 = vmul.f32 %v1530, %v1786
    %v1836 = vld [vmem:[%s3] sm:$0x1]
    %v1838 = vlaneseq
    %v1839 = vshrl.u32 %v1838, 7
    %v1840 = vsub.s32 0, %v1839
    %v1841 = vrot.slane %v1836, %v1840
    %1842 = vrot.lane.b32.xlu0 %v1841, 32
    %v1843 = vpop.permute.xlu0 %1842
    %1845 = vrot.lane.b32.xlu0 %v1841, 64
    %v1846 = vpop.permute.xlu0 %1845
    %1848 = vrot.lane.b32.xlu0 %v1841, 96
    %v1849 = vpop.permute.xlu0 %1848
    %v1851 = vsel %vm182, %v1836, %v1843
    %v1852 = vsel %vm1474, %v1851, %v1846
    %v1853 = vsel %vm1476, %v1852, %v1849
    %v1854 = vlaneseq
    %v1855 = vshrl.u32 %v1854, 7
    %v1856 = vsub.s32 0, %v1855
    %v1857 = vrot.slane %v1853, %v1856
    %v1858 = vadd.f32 %v1787, %v1857
    %v1859 = vadd.f32 %v1788, %v1857
    %v1860 = vadd.f32 %v1789, %v1857
    %v1861 = vadd.f32 %v1790, %v1857
    %v1862 = vadd.f32 %v1791, %v1857
    %v1863 = vadd.f32 %v1792, %v1857
    %v1864 = vadd.f32 %v1793, %v1857
    %v1865 = vadd.f32 %v1794, %v1857
    %v1866 = vadd.f32 %v1795, %v1857
    %v1867 = vadd.f32 %v1796, %v1857
    %v1868 = vadd.f32 %v1797, %v1857
    %v1869 = vadd.f32 %v1798, %v1857
    %v1870 = vadd.f32 %v1799, %v1857
    %v1871 = vadd.f32 %v1800, %v1857
    %v1872 = vadd.f32 %v1801, %v1857
    %v1873 = vadd.f32 %v1802, %v1857
    %v1874 = vadd.f32 %v1803, %v1857
    %v1875 = vadd.f32 %v1804, %v1857
    %v1876 = vadd.f32 %v1805, %v1857
    %v1877 = vadd.f32 %v1806, %v1857
    %v1878 = vadd.f32 %v1807, %v1857
    %v1879 = vadd.f32 %v1808, %v1857
    %v1880 = vadd.f32 %v1809, %v1857
    %v1881 = vadd.f32 %v1810, %v1857
    %v1882 = vadd.f32 %v1811, %v1857
    %v1883 = vadd.f32 %v1812, %v1857
    %v1884 = vadd.f32 %v1813, %v1857
    %v1885 = vadd.f32 %v1814, %v1857
    %v1886 = vadd.f32 %v1815, %v1857
    %v1887 = vadd.f32 %v1816, %v1857
    %v1888 = vadd.f32 %v1817, %v1857
    %v1889 = vadd.f32 %v1818, %v1857
    %v1890 = vadd.f32 %v1819, %v1857
    %v1891 = vadd.f32 %v1820, %v1857
    %v1892 = vadd.f32 %v1821, %v1857
    %v1893 = vadd.f32 %v1822, %v1857
    %v1894 = vadd.f32 %v1823, %v1857
    %v1895 = vadd.f32 %v1824, %v1857
    %v1896 = vadd.f32 %v1825, %v1857
    %v1897 = vadd.f32 %v1826, %v1857
    %v1898 = vadd.f32 %v1827, %v1857
    %v1899 = vadd.f32 %v1828, %v1857
    %v1900 = vadd.f32 %v1829, %v1857
    %v1901 = vadd.f32 %v1830, %v1857
    %v1902 = vadd.f32 %v1831, %v1857
    %v1903 = vadd.f32 %v1832, %v1857
    %v1904 = vadd.f32 %v1833, %v1857
    %v1905 = vadd.f32 %v1834, %v1857
    %v1906 = vadd.f32 %v1835, %v1857
    %v1907 = vmax.f32 %v1858, 0.0
    %v1908 = vmax.f32 %v1859, 0.0
    %v1909 = vmax.f32 %v1860, 0.0
    %v1910 = vmax.f32 %v1861, 0.0
    %v1911 = vmax.f32 %v1862, 0.0
    %v1912 = vmax.f32 %v1863, 0.0
    %v1913 = vmax.f32 %v1864, 0.0
    %v1914 = vmax.f32 %v1865, 0.0
    %v1915 = vmax.f32 %v1866, 0.0
    %v1916 = vmax.f32 %v1867, 0.0
    %v1917 = vmax.f32 %v1868, 0.0
    %v1918 = vmax.f32 %v1869, 0.0
    %v1919 = vmax.f32 %v1870, 0.0
    %v1920 = vmax.f32 %v1871, 0.0
    %v1921 = vmax.f32 %v1872, 0.0
    %v1922 = vmax.f32 %v1873, 0.0
    %v1923 = vmax.f32 %v1874, 0.0
    %v1924 = vmax.f32 %v1875, 0.0
    %v1925 = vmax.f32 %v1876, 0.0
    %v1926 = vmax.f32 %v1877, 0.0
    %v1927 = vmax.f32 %v1878, 0.0
    %v1928 = vmax.f32 %v1879, 0.0
    %v1929 = vmax.f32 %v1880, 0.0
    %v1930 = vmax.f32 %v1881, 0.0
    %v1931 = vmax.f32 %v1882, 0.0
    %v1932 = vmax.f32 %v1883, 0.0
    %v1933 = vmax.f32 %v1884, 0.0
    %v1934 = vmax.f32 %v1885, 0.0
    %v1935 = vmax.f32 %v1886, 0.0
    %v1936 = vmax.f32 %v1887, 0.0
    %v1937 = vmax.f32 %v1888, 0.0
    %v1938 = vmax.f32 %v1889, 0.0
    %v1939 = vmax.f32 %v1890, 0.0
    %v1940 = vmax.f32 %v1891, 0.0
    %v1941 = vmax.f32 %v1892, 0.0
    %v1942 = vmax.f32 %v1893, 0.0
    %v1943 = vmax.f32 %v1894, 0.0
    %v1944 = vmax.f32 %v1895, 0.0
    %v1945 = vmax.f32 %v1896, 0.0
    %v1946 = vmax.f32 %v1897, 0.0
    %v1947 = vmax.f32 %v1898, 0.0
    %v1948 = vmax.f32 %v1899, 0.0
    %v1949 = vmax.f32 %v1900, 0.0
    %v1950 = vmax.f32 %v1901, 0.0
    %v1951 = vmax.f32 %v1902, 0.0
    %v1952 = vmax.f32 %v1903, 0.0
    %v1953 = vmax.f32 %v1904, 0.0
    %v1954 = vmax.f32 %v1905, 0.0
    %v1955 = vmax.f32 %v1906, 0.0
    %v2005 = vcombine.low %v1907, %v1908
    %v2006 = vcombine.high %v1907, %v1908
    %v2007 = vcombine.low %v1909, %v1910
    %v2008 = vcombine.high %v1909, %v1910
    %v2009 = vcombine.low %v1911, %v1912
    %v2010 = vcombine.high %v1911, %v1912
    %v2011 = vcombine.high %v1913, %v1913
    %v2012 = vcombine.low %v1914, %v1915
    %v2013 = vcombine.high %v1914, %v1915
    %v2014 = vcombine.low %v1916, %v1917
    %v2015 = vcombine.high %v1916, %v1917
    %v2016 = vcombine.low %v1918, %v1919
    %v2017 = vcombine.high %v1918, %v1919
    %v2018 = vcombine.high %v1920, %v1920
    %v2019 = vcombine.low %v1921, %v1922
    %v2020 = vcombine.high %v1921, %v1922
    %v2021 = vcombine.low %v1923, %v1924
    %v2022 = vcombine.high %v1923, %v1924
    %v2023 = vcombine.low %v1925, %v1926
    %v2024 = vcombine.high %v1925, %v1926
    %v2025 = vcombine.high %v1927, %v1927
    %v2026 = vcombine.low %v1928, %v1929
    %v2027 = vcombine.high %v1928, %v1929
    %v2028 = vcombine.low %v1930, %v1931
    %v2029 = vcombine.high %v1930, %v1931
    %v2030 = vcombine.low %v1932, %v1933
    %v2031 = vcombine.high %v1932, %v1933
    %v2032 = vcombine.high %v1934, %v1934
    %v2033 = vcombine.low %v1935, %v1936
    %v2034 = vcombine.high %v1935, %v1936
    %v2035 = vcombine.low %v1937, %v1938
    %v2036 = vcombine.high %v1937, %v1938
    %v2037 = vcombine.low %v1939, %v1940
    %v2038 = vcombine.high %v1939, %v1940
    %v2039 = vcombine.high %v1941, %v1941
    %v2040 = vcombine.low %v1942, %v1943
    %v2041 = vcombine.high %v1942, %v1943
    %v2042 = vcombine.low %v1944, %v1945
    %v2043 = vcombine.high %v1944, %v1945
    %v2044 = vcombine.low %v1946, %v1947
    %v2045 = vcombine.high %v1946, %v1947
    %v2046 = vcombine.high %v1948, %v1948
    %v2047 = vcombine.low %v1949, %v1950
    %v2048 = vcombine.high %v1949, %v1950
    %v2049 = vcombine.low %v1951, %v1952
    %v2050 = vcombine.high %v1951, %v1952
    %v2051 = vcombine.low %v1953, %v1954
    %v2052 = vcombine.high %v1953, %v1954
    %v2053 = vcombine.high %v1955, %v1955
    %v2103 = vrot.slane %v2005, 6
    %v2104 = vrot.slane %v2103, 4
    %v2105 = vrot.slane %v2007, 6
    %v2106 = vrot.slane %v2105, 4
    %v2107 = vrot.slane %v2009, 6
    %v2108 = vrot.slane %v2107, 4
    %v2109 = vrot.slane %v1913, 6
    %v2110 = vrot.slane %v2109, 4
    %v2111 = vrot.slane %v2006, 6
    %v2112 = vrot.slane %v2111, 4
    %v2113 = vrot.slane %v2008, 6
    %v2114 = vrot.slane %v2113, 4
    %v2115 = vrot.slane %v2010, 6
    %v2116 = vrot.slane %v2115, 4
    %v2117 = vrot.slane %v2011, 6
    %v2118 = vrot.slane %v2117, 4
    %v2119 = vrot.slane %v2012, 6
    %v2120 = vrot.slane %v2119, 4
    %v2121 = vrot.slane %v2014, 6
    %v2122 = vrot.slane %v2121, 4
    %v2123 = vrot.slane %v2016, 6
    %v2124 = vrot.slane %v2123, 4
    %v2125 = vrot.slane %v1920, 6
    %v2126 = vrot.slane %v2125, 4
    %v2127 = vrot.slane %v2013, 6
    %v2128 = vrot.slane %v2127, 4
    %v2129 = vrot.slane %v2015, 6
    %v2130 = vrot.slane %v2129, 4
    %v2131 = vrot.slane %v2017, 6
    %v2132 = vrot.slane %v2131, 4
    %v2133 = vrot.slane %v2018, 6
    %v2134 = vrot.slane %v2133, 4
    %v2135 = vrot.slane %v2019, 6
    %v2136 = vrot.slane %v2135, 4
    %v2137 = vrot.slane %v2021, 6
    %v2138 = vrot.slane %v2137, 4
    %v2139 = vrot.slane %v2023, 6
    %v2140 = vrot.slane %v2139, 4
    %v2141 = vrot.slane %v1927, 6
    %v2142 = vrot.slane %v2141, 4
    %v2143 = vrot.slane %v2020, 6
    %v2144 = vrot.slane %v2143, 4
    %v2145 = vrot.slane %v2022, 6
    %v2146 = vrot.slane %v2145, 4
    %v2147 = vrot.slane %v2024, 6
    %v2148 = vrot.slane %v2147, 4
    %v2149 = vrot.slane %v2025, 6
    %v2150 = vrot.slane %v2149, 4
    %v2151 = vrot.slane %v2026, 6
    %v2152 = vrot.slane %v2151, 4
    %v2153 = vrot.slane %v2028, 6
    %v2154 = vrot.slane %v2153, 4
    %v2155 = vrot.slane %v2030, 6
    %v2156 = vrot.slane %v2155, 4
    %v2157 = vrot.slane %v1934, 6
    %v2158 = vrot.slane %v2157, 4
    %v2159 = vrot.slane %v2027, 6
    %v2160 = vrot.slane %v2159, 4
    %v2161 = vrot.slane %v2029, 6
    %v2162 = vrot.slane %v2161, 4
    %v2163 = vrot.slane %v2031, 6
    %v2164 = vrot.slane %v2163, 4
    %v2165 = vrot.slane %v2032, 6
    %v2166 = vrot.slane %v2165, 4
    %v2167 = vrot.slane %v2033, 6
    %v2168 = vrot.slane %v2167, 4
    %v2169 = vrot.slane %v2035, 6
    %v2170 = vrot.slane %v2169, 4
    %v2171 = vrot.slane %v2037, 6
    %v2172 = vrot.slane %v2171, 4
    %v2173 = vrot.slane %v1941, 6
    %v2174 = vrot.slane %v2173, 4
    %v2175 = vrot.slane %v2034, 6
    %v2176 = vrot.slane %v2175, 4
    %v2177 = vrot.slane %v2036, 6
    %v2178 = vrot.slane %v2177, 4
    %v2179 = vrot.slane %v2038, 6
    %v2180 = vrot.slane %v2179, 4
    %v2181 = vrot.slane %v2039, 6
    %v2182 = vrot.slane %v2181, 4
    %v2183 = vrot.slane %v2040, 6
    %v2184 = vrot.slane %v2183, 4
    %v2185 = vrot.slane %v2042, 6
    %v2186 = vrot.slane %v2185, 4
    %v2187 = vrot.slane %v2044, 6
    %v2188 = vrot.slane %v2187, 4
    %v2189 = vrot.slane %v1948, 6
    %v2190 = vrot.slane %v2189, 4
    %v2191 = vrot.slane %v2041, 6
    %v2192 = vrot.slane %v2191, 4
    %v2193 = vrot.slane %v2043, 6
    %v2194 = vrot.slane %v2193, 4
    %v2195 = vrot.slane %v2045, 6
    %v2196 = vrot.slane %v2195, 4
    %v2197 = vrot.slane %v2046, 6
    %v2198 = vrot.slane %v2197, 4
    %v2199 = vrot.slane %v2047, 6
    %v2200 = vrot.slane %v2199, 4
    %v2201 = vrot.slane %v2049, 6
    %v2202 = vrot.slane %v2201, 4
    %v2203 = vrot.slane %v2051, 6
    %v2204 = vrot.slane %v2203, 4
    %v2205 = vrot.slane %v1955, 6
    %v2206 = vrot.slane %v2205, 4
    %v2207 = vrot.slane %v2048, 6
    %v2208 = vrot.slane %v2207, 4
    %v2209 = vrot.slane %v2050, 6
    %v2210 = vrot.slane %v2209, 4
    %v2211 = vrot.slane %v2052, 6
    %v2212 = vrot.slane %v2211, 4
    %v2213 = vrot.slane %v2053, 6
    %v2214 = vrot.slane %v2213, 4
    %v2271 = vmax.f32 %v2005, %v2104
    %v2272 = vmax.f32 %v2007, %v2106
    %v2273 = vmax.f32 %v2009, %v2108
    %v2274 = vmax.f32 %v1913, %v2110
    %v2275 = vmax.f32 %v2006, %v2112
    %v2276 = vmax.f32 %v2008, %v2114
    %v2277 = vmax.f32 %v2010, %v2116
    %v2278 = vmax.f32 %v2011, %v2118
    %v2279 = vmax.f32 %v2012, %v2120
    %v2280 = vmax.f32 %v2014, %v2122
    %v2281 = vmax.f32 %v2016, %v2124
    %v2282 = vmax.f32 %v1920, %v2126
    %v2283 = vmax.f32 %v2013, %v2128
    %v2284 = vmax.f32 %v2015, %v2130
    %v2285 = vmax.f32 %v2017, %v2132
    %v2286 = vmax.f32 %v2018, %v2134
    %v2287 = vmax.f32 %v2019, %v2136
    %v2288 = vmax.f32 %v2021, %v2138
    %v2289 = vmax.f32 %v2023, %v2140
    %v2290 = vmax.f32 %v1927, %v2142
    %v2291 = vmax.f32 %v2020, %v2144
    %v2292 = vmax.f32 %v2022, %v2146
    %v2293 = vmax.f32 %v2024, %v2148
    %v2294 = vmax.f32 %v2025, %v2150
    %v2295 = vmax.f32 %v2026, %v2152
    %v2296 = vmax.f32 %v2028, %v2154
    %v2297 = vmax.f32 %v2030, %v2156
    %v2298 = vmax.f32 %v1934, %v2158
    %v2299 = vmax.f32 %v2027, %v2160
    %v2300 = vmax.f32 %v2029, %v2162
    %v2301 = vmax.f32 %v2031, %v2164
    %v2302 = vmax.f32 %v2032, %v2166
    %v2303 = vmax.f32 %v2033, %v2168
    %v2304 = vmax.f32 %v2035, %v2170
    %v2305 = vmax.f32 %v2037, %v2172
    %v2306 = vmax.f32 %v1941, %v2174
    %v2307 = vmax.f32 %v2034, %v2176
    %v2308 = vmax.f32 %v2036, %v2178
    %v2309 = vmax.f32 %v2038, %v2180
    %v2310 = vmax.f32 %v2039, %v2182
    %v2311 = vmax.f32 %v2040, %v2184
    %v2312 = vmax.f32 %v2042, %v2186
    %v2313 = vmax.f32 %v2044, %v2188
    %v2314 = vmax.f32 %v1948, %v2190
    %v2315 = vmax.f32 %v2041, %v2192
    %v2316 = vmax.f32 %v2043, %v2194
    %v2317 = vmax.f32 %v2045, %v2196
    %v2318 = vmax.f32 %v2046, %v2198
    %v2319 = vmax.f32 %v2047, %v2200
    %v2320 = vmax.f32 %v2049, %v2202
    %v2321 = vmax.f32 %v2051, %v2204
    %v2322 = vmax.f32 %v1955, %v2206
    %v2323 = vmax.f32 %v2048, %v2208
    %v2324 = vmax.f32 %v2050, %v2210
    %v2325 = vmax.f32 %v2052, %v2212
    %v2326 = vmax.f32 %v2053, %v2214
    %2341 = vrot.lane.b32.xlu0 %v2271, 96
    %v2342 = vpop.permute.xlu0 %2341
    %2343 = vrot.lane.b32.xlu0 %v2275, 96
    %v2344 = vpop.permute.xlu0 %2343
    %2345 = vrot.lane.b32.xlu0 %v2279, 96
    %v2346 = vpop.permute.xlu0 %2345
    %2347 = vrot.lane.b32.xlu0 %v2283, 96
    %v2348 = vpop.permute.xlu0 %2347
    %2349 = vrot.lane.b32.xlu0 %v2287, 96
    %v2350 = vpop.permute.xlu0 %2349
    %2351 = vrot.lane.b32.xlu0 %v2291, 96
    %v2352 = vpop.permute.xlu0 %2351
    %2353 = vrot.lane.b32.xlu0 %v2295, 96
    %v2354 = vpop.permute.xlu0 %2353
    %2355 = vrot.lane.b32.xlu0 %v2299, 96
    %v2356 = vpop.permute.xlu0 %2355
    %2357 = vrot.lane.b32.xlu0 %v2303, 96
    %v2358 = vpop.permute.xlu0 %2357
    %2359 = vrot.lane.b32.xlu0 %v2307, 96
    %v2360 = vpop.permute.xlu0 %2359
    %2361 = vrot.lane.b32.xlu0 %v2311, 96
    %v2362 = vpop.permute.xlu0 %2361
    %2363 = vrot.lane.b32.xlu0 %v2315, 96
    %v2364 = vpop.permute.xlu0 %2363
    %2365 = vrot.lane.b32.xlu0 %v2319, 96
    %v2366 = vpop.permute.xlu0 %2365
    %2367 = vrot.lane.b32.xlu0 %v2323, 96
    %v2368 = vpop.permute.xlu0 %2367
    %v2383 = vmax.f32 %v2271, %v2342
    %v2384 = vmax.f32 %v2275, %v2344
    %v2385 = vmax.f32 %v2279, %v2346
    %v2386 = vmax.f32 %v2283, %v2348
    %v2387 = vmax.f32 %v2287, %v2350
    %v2388 = vmax.f32 %v2291, %v2352
    %v2389 = vmax.f32 %v2295, %v2354
    %v2390 = vmax.f32 %v2299, %v2356
    %v2391 = vmax.f32 %v2303, %v2358
    %v2392 = vmax.f32 %v2307, %v2360
    %v2393 = vmax.f32 %v2311, %v2362
    %v2394 = vmax.f32 %v2315, %v2364
    %v2395 = vmax.f32 %v2319, %v2366
    %v2396 = vmax.f32 %v2323, %v2368
    %v2397 = vrot.slane %v2271, 4
    %v2398 = vrot.slane %v2275, 4
    %v2399 = vrot.slane %v2279, 4
    %v2400 = vrot.slane %v2283, 4
    %v2401 = vrot.slane %v2287, 4
    %v2402 = vrot.slane %v2291, 4
    %v2403 = vrot.slane %v2295, 4
    %v2404 = vrot.slane %v2299, 4
    %v2405 = vrot.slane %v2303, 4
    %v2406 = vrot.slane %v2307, 4
    %v2407 = vrot.slane %v2311, 4
    %v2408 = vrot.slane %v2315, 4
    %v2409 = vrot.slane %v2319, 4
    %v2410 = vrot.slane %v2323, 4
    %v2425 = vrot.slane %v2342, 4
    %v2426 = vrot.slane %v2344, 4
    %v2427 = vrot.slane %v2346, 4
    %v2428 = vrot.slane %v2348, 4
    %v2429 = vrot.slane %v2350, 4
    %v2430 = vrot.slane %v2352, 4
    %v2431 = vrot.slane %v2354, 4
    %v2432 = vrot.slane %v2356, 4
    %v2433 = vrot.slane %v2358, 4
    %v2434 = vrot.slane %v2360, 4
    %v2435 = vrot.slane %v2362, 4
    %v2436 = vrot.slane %v2364, 4
    %v2437 = vrot.slane %v2366, 4
    %v2438 = vrot.slane %v2368, 4
    %v2453 = vmax.f32 %v2397, %v2425
    %v2454 = vmax.f32 %v2398, %v2426
    %v2455 = vmax.f32 %v2399, %v2427
    %v2456 = vmax.f32 %v2400, %v2428
    %v2457 = vmax.f32 %v2401, %v2429
    %v2458 = vmax.f32 %v2402, %v2430
    %v2459 = vmax.f32 %v2403, %v2431
    %v2460 = vmax.f32 %v2404, %v2432
    %v2461 = vmax.f32 %v2405, %v2433
    %v2462 = vmax.f32 %v2406, %v2434
    %v2463 = vmax.f32 %v2407, %v2435
    %v2464 = vmax.f32 %v2408, %v2436
    %v2465 = vmax.f32 %v2409, %v2437
    %v2466 = vmax.f32 %v2410, %v2438
    %2467 = vrot.lane.b32.xlu0 %v2271, 64
    %v2468 = vpop.permute.xlu0 %2467
    %2469 = vrot.lane.b32.xlu0 %v2275, 64
    %v2470 = vpop.permute.xlu0 %2469
    %2471 = vrot.lane.b32.xlu0 %v2279, 64
    %v2472 = vpop.permute.xlu0 %2471
    %2473 = vrot.lane.b32.xlu0 %v2283, 64
    %v2474 = vpop.permute.xlu0 %2473
    %2475 = vrot.lane.b32.xlu0 %v2287, 64
    %v2476 = vpop.permute.xlu0 %2475
    %2477 = vrot.lane.b32.xlu0 %v2291, 64
    %v2478 = vpop.permute.xlu0 %2477
    %2479 = vrot.lane.b32.xlu0 %v2295, 64
    %v2480 = vpop.permute.xlu0 %2479
    %2481 = vrot.lane.b32.xlu0 %v2299, 64
    %v2482 = vpop.permute.xlu0 %2481
    %2483 = vrot.lane.b32.xlu0 %v2303, 64
    %v2484 = vpop.permute.xlu0 %2483
    %2485 = vrot.lane.b32.xlu0 %v2307, 64
    %v2486 = vpop.permute.xlu0 %2485
    %2487 = vrot.lane.b32.xlu0 %v2311, 64
    %v2488 = vpop.permute.xlu0 %2487
    %2489 = vrot.lane.b32.xlu0 %v2315, 64
    %v2490 = vpop.permute.xlu0 %2489
    %2491 = vrot.lane.b32.xlu0 %v2319, 64
    %v2492 = vpop.permute.xlu0 %2491
    %2493 = vrot.lane.b32.xlu0 %v2323, 64
    %v2494 = vpop.permute.xlu0 %2493
    %v2495 = vrot.slane %v2468, 4
    %v2496 = vrot.slane %v2470, 4
    %v2497 = vrot.slane %v2472, 4
    %v2498 = vrot.slane %v2474, 4
    %v2499 = vrot.slane %v2476, 4
    %v2500 = vrot.slane %v2478, 4
    %v2501 = vrot.slane %v2480, 4
    %v2502 = vrot.slane %v2482, 4
    %v2503 = vrot.slane %v2484, 4
    %v2504 = vrot.slane %v2486, 4
    %v2505 = vrot.slane %v2488, 4
    %v2506 = vrot.slane %v2490, 4
    %v2507 = vrot.slane %v2492, 4
    %v2508 = vrot.slane %v2494, 4
    %2523 = vrot.lane.b32.xlu0 %v2271, 32
    %v2524 = vpop.permute.xlu0 %2523
    %2525 = vrot.lane.b32.xlu0 %v2275, 32
    %v2526 = vpop.permute.xlu0 %2525
    %2527 = vrot.lane.b32.xlu0 %v2279, 32
    %v2528 = vpop.permute.xlu0 %2527
    %2529 = vrot.lane.b32.xlu0 %v2283, 32
    %v2530 = vpop.permute.xlu0 %2529
    %2531 = vrot.lane.b32.xlu0 %v2287, 32
    %v2532 = vpop.permute.xlu0 %2531
    %2533 = vrot.lane.b32.xlu0 %v2291, 32
    %v2534 = vpop.permute.xlu0 %2533
    %2535 = vrot.lane.b32.xlu0 %v2295, 32
    %v2536 = vpop.permute.xlu0 %2535
    %2537 = vrot.lane.b32.xlu0 %v2299, 32
    %v2538 = vpop.permute.xlu0 %2537
    %2539 = vrot.lane.b32.xlu0 %v2303, 32
    %v2540 = vpop.permute.xlu0 %2539
    %2541 = vrot.lane.b32.xlu0 %v2307, 32
    %v2542 = vpop.permute.xlu0 %2541
    %2543 = vrot.lane.b32.xlu0 %v2311, 32
    %v2544 = vpop.permute.xlu0 %2543
    %2545 = vrot.lane.b32.xlu0 %v2315, 32
    %v2546 = vpop.permute.xlu0 %2545
    %2547 = vrot.lane.b32.xlu0 %v2319, 32
    %v2548 = vpop.permute.xlu0 %2547
    %2549 = vrot.lane.b32.xlu0 %v2323, 32
    %v2550 = vpop.permute.xlu0 %2549
    %v2551 = vrot.slane %v2524, 4
    %v2552 = vrot.slane %v2526, 4
    %v2553 = vrot.slane %v2528, 4
    %v2554 = vrot.slane %v2530, 4
    %v2555 = vrot.slane %v2532, 4
    %v2556 = vrot.slane %v2534, 4
    %v2557 = vrot.slane %v2536, 4
    %v2558 = vrot.slane %v2538, 4
    %v2559 = vrot.slane %v2540, 4
    %v2560 = vrot.slane %v2542, 4
    %v2561 = vrot.slane %v2544, 4
    %v2562 = vrot.slane %v2546, 4
    %v2563 = vrot.slane %v2548, 4
    %v2564 = vrot.slane %v2550, 4
    %v2579 = vmax.f32 %v2495, %v2551
    %v2580 = vmax.f32 %v2496, %v2552
    %v2581 = vmax.f32 %v2497, %v2553
    %v2582 = vmax.f32 %v2498, %v2554
    %v2583 = vmax.f32 %v2499, %v2555
    %v2584 = vmax.f32 %v2500, %v2556
    %v2585 = vmax.f32 %v2501, %v2557
    %v2586 = vmax.f32 %v2502, %v2558
    %v2587 = vmax.f32 %v2503, %v2559
    %v2588 = vmax.f32 %v2504, %v2560
    %v2589 = vmax.f32 %v2505, %v2561
    %v2590 = vmax.f32 %v2506, %v2562
    %v2591 = vmax.f32 %v2507, %v2563
    %v2592 = vmax.f32 %v2508, %v2564
    %2607 = vrot.lane.b32.xlu0 %v2272, 96
    %v2608 = vpop.permute.xlu0 %2607
    %2609 = vrot.lane.b32.xlu0 %v2276, 96
    %v2610 = vpop.permute.xlu0 %2609
    %2611 = vrot.lane.b32.xlu0 %v2280, 96
    %v2612 = vpop.permute.xlu0 %2611
    %2613 = vrot.lane.b32.xlu0 %v2284, 96
    %v2614 = vpop.permute.xlu0 %2613
    %2615 = vrot.lane.b32.xlu0 %v2288, 96
    %v2616 = vpop.permute.xlu0 %2615
    %2617 = vrot.lane.b32.xlu0 %v2292, 96
    %v2618 = vpop.permute.xlu0 %2617
    %2619 = vrot.lane.b32.xlu0 %v2296, 96
    %v2620 = vpop.permute.xlu0 %2619
    %2621 = vrot.lane.b32.xlu0 %v2300, 96
    %v2622 = vpop.permute.xlu0 %2621
    %2623 = vrot.lane.b32.xlu0 %v2304, 96
    %v2624 = vpop.permute.xlu0 %2623
    %2625 = vrot.lane.b32.xlu0 %v2308, 96
    %v2626 = vpop.permute.xlu0 %2625
    %2627 = vrot.lane.b32.xlu0 %v2312, 96
    %v2628 = vpop.permute.xlu0 %2627
    %2629 = vrot.lane.b32.xlu0 %v2316, 96
    %v2630 = vpop.permute.xlu0 %2629
    %2631 = vrot.lane.b32.xlu0 %v2320, 96
    %v2632 = vpop.permute.xlu0 %2631
    %2633 = vrot.lane.b32.xlu0 %v2324, 96
    %v2634 = vpop.permute.xlu0 %2633
    %v2649 = vmax.f32 %v2272, %v2608
    %v2650 = vmax.f32 %v2276, %v2610
    %v2651 = vmax.f32 %v2280, %v2612
    %v2652 = vmax.f32 %v2284, %v2614
    %v2653 = vmax.f32 %v2288, %v2616
    %v2654 = vmax.f32 %v2292, %v2618
    %v2655 = vmax.f32 %v2296, %v2620
    %v2656 = vmax.f32 %v2300, %v2622
    %v2657 = vmax.f32 %v2304, %v2624
    %v2658 = vmax.f32 %v2308, %v2626
    %v2659 = vmax.f32 %v2312, %v2628
    %v2660 = vmax.f32 %v2316, %v2630
    %v2661 = vmax.f32 %v2320, %v2632
    %v2662 = vmax.f32 %v2324, %v2634
    %v2663 = vrot.slane %v2272, 4
    %v2664 = vrot.slane %v2276, 4
    %v2665 = vrot.slane %v2280, 4
    %v2666 = vrot.slane %v2284, 4
    %v2667 = vrot.slane %v2288, 4
    %v2668 = vrot.slane %v2292, 4
    %v2669 = vrot.slane %v2296, 4
    %v2670 = vrot.slane %v2300, 4
    %v2671 = vrot.slane %v2304, 4
    %v2672 = vrot.slane %v2308, 4
    %v2673 = vrot.slane %v2312, 4
    %v2674 = vrot.slane %v2316, 4
    %v2675 = vrot.slane %v2320, 4
    %v2676 = vrot.slane %v2324, 4
    %v2691 = vrot.slane %v2608, 4
    %v2692 = vrot.slane %v2610, 4
    %v2693 = vrot.slane %v2612, 4
    %v2694 = vrot.slane %v2614, 4
    %v2695 = vrot.slane %v2616, 4
    %v2696 = vrot.slane %v2618, 4
    %v2697 = vrot.slane %v2620, 4
    %v2698 = vrot.slane %v2622, 4
    %v2699 = vrot.slane %v2624, 4
    %v2700 = vrot.slane %v2626, 4
    %v2701 = vrot.slane %v2628, 4
    %v2702 = vrot.slane %v2630, 4
    %v2703 = vrot.slane %v2632, 4
    %v2704 = vrot.slane %v2634, 4
    %v2719 = vmax.f32 %v2663, %v2691
    %v2720 = vmax.f32 %v2664, %v2692
    %v2721 = vmax.f32 %v2665, %v2693
    %v2722 = vmax.f32 %v2666, %v2694
    %v2723 = vmax.f32 %v2667, %v2695
    %v2724 = vmax.f32 %v2668, %v2696
    %v2725 = vmax.f32 %v2669, %v2697
    %v2726 = vmax.f32 %v2670, %v2698
    %v2727 = vmax.f32 %v2671, %v2699
    %v2728 = vmax.f32 %v2672, %v2700
    %v2729 = vmax.f32 %v2673, %v2701
    %v2730 = vmax.f32 %v2674, %v2702
    %v2731 = vmax.f32 %v2675, %v2703
    %v2732 = vmax.f32 %v2676, %v2704
    %2733 = vrot.lane.b32.xlu0 %v2272, 64
    %v2734 = vpop.permute.xlu0 %2733
    %2735 = vrot.lane.b32.xlu0 %v2276, 64
    %v2736 = vpop.permute.xlu0 %2735
    %2737 = vrot.lane.b32.xlu0 %v2280, 64
    %v2738 = vpop.permute.xlu0 %2737
    %2739 = vrot.lane.b32.xlu0 %v2284, 64
    %v2740 = vpop.permute.xlu0 %2739
    %2741 = vrot.lane.b32.xlu0 %v2288, 64
    %v2742 = vpop.permute.xlu0 %2741
    %2743 = vrot.lane.b32.xlu0 %v2292, 64
    %v2744 = vpop.permute.xlu0 %2743
    %2745 = vrot.lane.b32.xlu0 %v2296, 64
    %v2746 = vpop.permute.xlu0 %2745
    %2747 = vrot.lane.b32.xlu0 %v2300, 64
    %v2748 = vpop.permute.xlu0 %2747
    %2749 = vrot.lane.b32.xlu0 %v2304, 64
    %v2750 = vpop.permute.xlu0 %2749
    %2751 = vrot.lane.b32.xlu0 %v2308, 64
    %v2752 = vpop.permute.xlu0 %2751
    %2753 = vrot.lane.b32.xlu0 %v2312, 64
    %v2754 = vpop.permute.xlu0 %2753
    %2755 = vrot.lane.b32.xlu0 %v2316, 64
    %v2756 = vpop.permute.xlu0 %2755
    %2757 = vrot.lane.b32.xlu0 %v2320, 64
    %v2758 = vpop.permute.xlu0 %2757
    %2759 = vrot.lane.b32.xlu0 %v2324, 64
    %v2760 = vpop.permute.xlu0 %2759
    %v2761 = vrot.slane %v2734, 4
    %v2762 = vrot.slane %v2736, 4
    %v2763 = vrot.slane %v2738, 4
    %v2764 = vrot.slane %v2740, 4
    %v2765 = vrot.slane %v2742, 4
    %v2766 = vrot.slane %v2744, 4
    %v2767 = vrot.slane %v2746, 4
    %v2768 = vrot.slane %v2748, 4
    %v2769 = vrot.slane %v2750, 4
    %v2770 = vrot.slane %v2752, 4
    %v2771 = vrot.slane %v2754, 4
    %v2772 = vrot.slane %v2756, 4
    %v2773 = vrot.slane %v2758, 4
    %v2774 = vrot.slane %v2760, 4
    %2789 = vrot.lane.b32.xlu0 %v2272, 32
    %v2790 = vpop.permute.xlu0 %2789
    %2791 = vrot.lane.b32.xlu0 %v2276, 32
    %v2792 = vpop.permute.xlu0 %2791
    %2793 = vrot.lane.b32.xlu0 %v2280, 32
    %v2794 = vpop.permute.xlu0 %2793
    %2795 = vrot.lane.b32.xlu0 %v2284, 32
    %v2796 = vpop.permute.xlu0 %2795
    %2797 = vrot.lane.b32.xlu0 %v2288, 32
    %v2798 = vpop.permute.xlu0 %2797
    %2799 = vrot.lane.b32.xlu0 %v2292, 32
    %v2800 = vpop.permute.xlu0 %2799
    %2801 = vrot.lane.b32.xlu0 %v2296, 32
    %v2802 = vpop.permute.xlu0 %2801
    %2803 = vrot.lane.b32.xlu0 %v2300, 32
    %v2804 = vpop.permute.xlu0 %2803
    %2805 = vrot.lane.b32.xlu0 %v2304, 32
    %v2806 = vpop.permute.xlu0 %2805
    %2807 = vrot.lane.b32.xlu0 %v2308, 32
    %v2808 = vpop.permute.xlu0 %2807
    %2809 = vrot.lane.b32.xlu0 %v2312, 32
    %v2810 = vpop.permute.xlu0 %2809
    %2811 = vrot.lane.b32.xlu0 %v2316, 32
    %v2812 = vpop.permute.xlu0 %2811
    %2813 = vrot.lane.b32.xlu0 %v2320, 32
    %v2814 = vpop.permute.xlu0 %2813
    %2815 = vrot.lane.b32.xlu0 %v2324, 32
    %v2816 = vpop.permute.xlu0 %2815
    %v2817 = vrot.slane %v2790, 4
    %v2818 = vrot.slane %v2792, 4
    %v2819 = vrot.slane %v2794, 4
    %v2820 = vrot.slane %v2796, 4
    %v2821 = vrot.slane %v2798, 4
    %v2822 = vrot.slane %v2800, 4
    %v2823 = vrot.slane %v2802, 4
    %v2824 = vrot.slane %v2804, 4
    %v2825 = vrot.slane %v2806, 4
    %v2826 = vrot.slane %v2808, 4
    %v2827 = vrot.slane %v2810, 4
    %v2828 = vrot.slane %v2812, 4
    %v2829 = vrot.slane %v2814, 4
    %v2830 = vrot.slane %v2816, 4
    %v2845 = vmax.f32 %v2761, %v2817
    %v2846 = vmax.f32 %v2762, %v2818
    %v2847 = vmax.f32 %v2763, %v2819
    %v2848 = vmax.f32 %v2764, %v2820
    %v2849 = vmax.f32 %v2765, %v2821
    %v2850 = vmax.f32 %v2766, %v2822
    %v2851 = vmax.f32 %v2767, %v2823
    %v2852 = vmax.f32 %v2768, %v2824
    %v2853 = vmax.f32 %v2769, %v2825
    %v2854 = vmax.f32 %v2770, %v2826
    %v2855 = vmax.f32 %v2771, %v2827
    %v2856 = vmax.f32 %v2772, %v2828
    %v2857 = vmax.f32 %v2773, %v2829
    %v2858 = vmax.f32 %v2774, %v2830
    %2873 = vrot.lane.b32.xlu0 %v2273, 96
    %v2874 = vpop.permute.xlu0 %2873
    %2875 = vrot.lane.b32.xlu0 %v2277, 96
    %v2876 = vpop.permute.xlu0 %2875
    %2877 = vrot.lane.b32.xlu0 %v2281, 96
    %v2878 = vpop.permute.xlu0 %2877
    %2879 = vrot.lane.b32.xlu0 %v2285, 96
    %v2880 = vpop.permute.xlu0 %2879
    %2881 = vrot.lane.b32.xlu0 %v2289, 96
    %v2882 = vpop.permute.xlu0 %2881
    %2883 = vrot.lane.b32.xlu0 %v2293, 96
    %v2884 = vpop.permute.xlu0 %2883
    %2885 = vrot.lane.b32.xlu0 %v2297, 96
    %v2886 = vpop.permute.xlu0 %2885
    %2887 = vrot.lane.b32.xlu0 %v2301, 96
    %v2888 = vpop.permute.xlu0 %2887
    %2889 = vrot.lane.b32.xlu0 %v2305, 96
    %v2890 = vpop.permute.xlu0 %2889
    %2891 = vrot.lane.b32.xlu0 %v2309, 96
    %v2892 = vpop.permute.xlu0 %2891
    %2893 = vrot.lane.b32.xlu0 %v2313, 96
    %v2894 = vpop.permute.xlu0 %2893
    %2895 = vrot.lane.b32.xlu0 %v2317, 96
    %v2896 = vpop.permute.xlu0 %2895
    %2897 = vrot.lane.b32.xlu0 %v2321, 96
    %v2898 = vpop.permute.xlu0 %2897
    %2899 = vrot.lane.b32.xlu0 %v2325, 96
    %v2900 = vpop.permute.xlu0 %2899
    %v2915 = vmax.f32 %v2273, %v2874
    %v2916 = vmax.f32 %v2277, %v2876
    %v2917 = vmax.f32 %v2281, %v2878
    %v2918 = vmax.f32 %v2285, %v2880
    %v2919 = vmax.f32 %v2289, %v2882
    %v2920 = vmax.f32 %v2293, %v2884
    %v2921 = vmax.f32 %v2297, %v2886
    %v2922 = vmax.f32 %v2301, %v2888
    %v2923 = vmax.f32 %v2305, %v2890
    %v2924 = vmax.f32 %v2309, %v2892
    %v2925 = vmax.f32 %v2313, %v2894
    %v2926 = vmax.f32 %v2317, %v2896
    %v2927 = vmax.f32 %v2321, %v2898
    %v2928 = vmax.f32 %v2325, %v2900
    %v2929 = vrot.slane %v2273, 4
    %v2930 = vrot.slane %v2277, 4
    %v2931 = vrot.slane %v2281, 4
    %v2932 = vrot.slane %v2285, 4
    %v2933 = vrot.slane %v2289, 4
    %v2934 = vrot.slane %v2293, 4
    %v2935 = vrot.slane %v2297, 4
    %v2936 = vrot.slane %v2301, 4
    %v2937 = vrot.slane %v2305, 4
    %v2938 = vrot.slane %v2309, 4
    %v2939 = vrot.slane %v2313, 4
    %v2940 = vrot.slane %v2317, 4
    %v2941 = vrot.slane %v2321, 4
    %v2942 = vrot.slane %v2325, 4
    %v2957 = vrot.slane %v2874, 4
    %v2958 = vrot.slane %v2876, 4
    %v2959 = vrot.slane %v2878, 4
    %v2960 = vrot.slane %v2880, 4
    %v2961 = vrot.slane %v2882, 4
    %v2962 = vrot.slane %v2884, 4
    %v2963 = vrot.slane %v2886, 4
    %v2964 = vrot.slane %v2888, 4
    %v2965 = vrot.slane %v2890, 4
    %v2966 = vrot.slane %v2892, 4
    %v2967 = vrot.slane %v2894, 4
    %v2968 = vrot.slane %v2896, 4
    %v2969 = vrot.slane %v2898, 4
    %v2970 = vrot.slane %v2900, 4
    %v2985 = vmax.f32 %v2929, %v2957
    %v2986 = vmax.f32 %v2930, %v2958
    %v2987 = vmax.f32 %v2931, %v2959
    %v2988 = vmax.f32 %v2932, %v2960
    %v2989 = vmax.f32 %v2933, %v2961
    %v2990 = vmax.f32 %v2934, %v2962
    %v2991 = vmax.f32 %v2935, %v2963
    %v2992 = vmax.f32 %v2936, %v2964
    %v2993 = vmax.f32 %v2937, %v2965
    %v2994 = vmax.f32 %v2938, %v2966
    %v2995 = vmax.f32 %v2939, %v2967
    %v2996 = vmax.f32 %v2940, %v2968
    %v2997 = vmax.f32 %v2941, %v2969
    %v2998 = vmax.f32 %v2942, %v2970
    %2999 = vrot.lane.b32.xlu0 %v2273, 64
    %v3000 = vpop.permute.xlu0 %2999
    %3001 = vrot.lane.b32.xlu0 %v2277, 64
    %v3002 = vpop.permute.xlu0 %3001
    %3003 = vrot.lane.b32.xlu0 %v2281, 64
    %v3004 = vpop.permute.xlu0 %3003
    %3005 = vrot.lane.b32.xlu0 %v2285, 64
    %v3006 = vpop.permute.xlu0 %3005
    %3007 = vrot.lane.b32.xlu0 %v2289, 64
    %v3008 = vpop.permute.xlu0 %3007
    %3009 = vrot.lane.b32.xlu0 %v2293, 64
    %v3010 = vpop.permute.xlu0 %3009
    %3011 = vrot.lane.b32.xlu0 %v2297, 64
    %v3012 = vpop.permute.xlu0 %3011
    %3013 = vrot.lane.b32.xlu0 %v2301, 64
    %v3014 = vpop.permute.xlu0 %3013
    %3015 = vrot.lane.b32.xlu0 %v2305, 64
    %v3016 = vpop.permute.xlu0 %3015
    %3017 = vrot.lane.b32.xlu0 %v2309, 64
    %v3018 = vpop.permute.xlu0 %3017
    %3019 = vrot.lane.b32.xlu0 %v2313, 64
    %v3020 = vpop.permute.xlu0 %3019
    %3021 = vrot.lane.b32.xlu0 %v2317, 64
    %v3022 = vpop.permute.xlu0 %3021
    %3023 = vrot.lane.b32.xlu0 %v2321, 64
    %v3024 = vpop.permute.xlu0 %3023
    %3025 = vrot.lane.b32.xlu0 %v2325, 64
    %v3026 = vpop.permute.xlu0 %3025
    %v3027 = vrot.slane %v3000, 4
    %v3028 = vrot.slane %v3002, 4
    %v3029 = vrot.slane %v3004, 4
    %v3030 = vrot.slane %v3006, 4
    %v3031 = vrot.slane %v3008, 4
    %v3032 = vrot.slane %v3010, 4
    %v3033 = vrot.slane %v3012, 4
    %v3034 = vrot.slane %v3014, 4
    %v3035 = vrot.slane %v3016, 4
    %v3036 = vrot.slane %v3018, 4
    %v3037 = vrot.slane %v3020, 4
    %v3038 = vrot.slane %v3022, 4
    %v3039 = vrot.slane %v3024, 4
    %v3040 = vrot.slane %v3026, 4
    %3055 = vrot.lane.b32.xlu0 %v2273, 32
    %v3056 = vpop.permute.xlu0 %3055
    %3057 = vrot.lane.b32.xlu0 %v2277, 32
    %v3058 = vpop.permute.xlu0 %3057
    %3059 = vrot.lane.b32.xlu0 %v2281, 32
    %v3060 = vpop.permute.xlu0 %3059
    %3061 = vrot.lane.b32.xlu0 %v2285, 32
    %v3062 = vpop.permute.xlu0 %3061
    %3063 = vrot.lane.b32.xlu0 %v2289, 32
    %v3064 = vpop.permute.xlu0 %3063
    %3065 = vrot.lane.b32.xlu0 %v2293, 32
    %v3066 = vpop.permute.xlu0 %3065
    %3067 = vrot.lane.b32.xlu0 %v2297, 32
    %v3068 = vpop.permute.xlu0 %3067
    %3069 = vrot.lane.b32.xlu0 %v2301, 32
    %v3070 = vpop.permute.xlu0 %3069
    %3071 = vrot.lane.b32.xlu0 %v2305, 32
    %v3072 = vpop.permute.xlu0 %3071
    %3073 = vrot.lane.b32.xlu0 %v2309, 32
    %v3074 = vpop.permute.xlu0 %3073
    %3075 = vrot.lane.b32.xlu0 %v2313, 32
    %v3076 = vpop.permute.xlu0 %3075
    %3077 = vrot.lane.b32.xlu0 %v2317, 32
    %v3078 = vpop.permute.xlu0 %3077
    %3079 = vrot.lane.b32.xlu0 %v2321, 32
    %v3080 = vpop.permute.xlu0 %3079
    %3081 = vrot.lane.b32.xlu0 %v2325, 32
    %v3082 = vpop.permute.xlu0 %3081
    %v3083 = vrot.slane %v3056, 4
    %v3084 = vrot.slane %v3058, 4
    %v3085 = vrot.slane %v3060, 4
    %v3086 = vrot.slane %v3062, 4
    %v3087 = vrot.slane %v3064, 4
    %v3088 = vrot.slane %v3066, 4
    %v3089 = vrot.slane %v3068, 4
    %v3090 = vrot.slane %v3070, 4
    %v3091 = vrot.slane %v3072, 4
    %v3092 = vrot.slane %v3074, 4
    %v3093 = vrot.slane %v3076, 4
    %v3094 = vrot.slane %v3078, 4
    %v3095 = vrot.slane %v3080, 4
    %v3096 = vrot.slane %v3082, 4
    %v3111 = vmax.f32 %v3027, %v3083
    %v3112 = vmax.f32 %v3028, %v3084
    %v3113 = vmax.f32 %v3029, %v3085
    %v3114 = vmax.f32 %v3030, %v3086
    %v3115 = vmax.f32 %v3031, %v3087
    %v3116 = vmax.f32 %v3032, %v3088
    %v3117 = vmax.f32 %v3033, %v3089
    %v3118 = vmax.f32 %v3034, %v3090
    %v3119 = vmax.f32 %v3035, %v3091
    %v3120 = vmax.f32 %v3036, %v3092
    %v3121 = vmax.f32 %v3037, %v3093
    %v3122 = vmax.f32 %v3038, %v3094
    %v3123 = vmax.f32 %v3039, %v3095
    %v3124 = vmax.f32 %v3040, %v3096
    %3139 = vrot.lane.b32.xlu0 %v2274, 96
    %v3140 = vpop.permute.xlu0 %3139
    %3141 = vrot.lane.b32.xlu0 %v2278, 96
    %v3142 = vpop.permute.xlu0 %3141
    %3143 = vrot.lane.b32.xlu0 %v2282, 96
    %v3144 = vpop.permute.xlu0 %3143
    %3145 = vrot.lane.b32.xlu0 %v2286, 96
    %v3146 = vpop.permute.xlu0 %3145
    %3147 = vrot.lane.b32.xlu0 %v2290, 96
    %v3148 = vpop.permute.xlu0 %3147
    %3149 = vrot.lane.b32.xlu0 %v2294, 96
    %v3150 = vpop.permute.xlu0 %3149
    %3151 = vrot.lane.b32.xlu0 %v2298, 96
    %v3152 = vpop.permute.xlu0 %3151
    %3153 = vrot.lane.b32.xlu0 %v2302, 96
    %v3154 = vpop.permute.xlu0 %3153
    %3155 = vrot.lane.b32.xlu0 %v2306, 96
    %v3156 = vpop.permute.xlu0 %3155
    %3157 = vrot.lane.b32.xlu0 %v2310, 96
    %v3158 = vpop.permute.xlu0 %3157
    %3159 = vrot.lane.b32.xlu0 %v2314, 96
    %v3160 = vpop.permute.xlu0 %3159
    %3161 = vrot.lane.b32.xlu0 %v2318, 96
    %v3162 = vpop.permute.xlu0 %3161
    %3163 = vrot.lane.b32.xlu0 %v2322, 96
    %v3164 = vpop.permute.xlu0 %3163
    %3165 = vrot.lane.b32.xlu0 %v2326, 96
    %v3166 = vpop.permute.xlu0 %3165
    %v3181 = vmax.f32 %v2274, %v3140
    %v3182 = vmax.f32 %v2278, %v3142
    %v3183 = vmax.f32 %v2282, %v3144
    %v3184 = vmax.f32 %v2286, %v3146
    %v3185 = vmax.f32 %v2290, %v3148
    %v3186 = vmax.f32 %v2294, %v3150
    %v3187 = vmax.f32 %v2298, %v3152
    %v3188 = vmax.f32 %v2302, %v3154
    %v3189 = vmax.f32 %v2306, %v3156
    %v3190 = vmax.f32 %v2310, %v3158
    %v3191 = vmax.f32 %v2314, %v3160
    %v3192 = vmax.f32 %v2318, %v3162
    %v3193 = vmax.f32 %v2322, %v3164
    %v3194 = vmax.f32 %v2326, %v3166
    %3209 = vrot.lane.b32.xlu0 %v2383, 96
    %v3210 = vpop.permute.xlu0 %3209
    %3211 = vrot.lane.b32.xlu0 %v2384, 96
    %v3212 = vpop.permute.xlu0 %3211
    %3213 = vrot.lane.b32.xlu0 %v2385, 96
    %v3214 = vpop.permute.xlu0 %3213
    %3215 = vrot.lane.b32.xlu0 %v2386, 96
    %v3216 = vpop.permute.xlu0 %3215
    %3217 = vrot.lane.b32.xlu0 %v2387, 96
    %v3218 = vpop.permute.xlu0 %3217
    %3219 = vrot.lane.b32.xlu0 %v2388, 96
    %v3220 = vpop.permute.xlu0 %3219
    %3221 = vrot.lane.b32.xlu0 %v2389, 96
    %v3222 = vpop.permute.xlu0 %3221
    %3223 = vrot.lane.b32.xlu0 %v2390, 96
    %v3224 = vpop.permute.xlu0 %3223
    %3225 = vrot.lane.b32.xlu0 %v2391, 96
    %v3226 = vpop.permute.xlu0 %3225
    %3227 = vrot.lane.b32.xlu0 %v2392, 96
    %v3228 = vpop.permute.xlu0 %3227
    %3229 = vrot.lane.b32.xlu0 %v2393, 96
    %v3230 = vpop.permute.xlu0 %3229
    %3231 = vrot.lane.b32.xlu0 %v2394, 96
    %v3232 = vpop.permute.xlu0 %3231
    %3233 = vrot.lane.b32.xlu0 %v2395, 96
    %v3234 = vpop.permute.xlu0 %3233
    %3235 = vrot.lane.b32.xlu0 %v2396, 96
    %v3236 = vpop.permute.xlu0 %3235
    %3265 = vrot.lane.b32.xlu0 %v2453, 64
    %v3266 = vpop.permute.xlu0 %3265
    %3267 = vrot.lane.b32.xlu0 %v2454, 64
    %v3268 = vpop.permute.xlu0 %3267
    %3269 = vrot.lane.b32.xlu0 %v2455, 64
    %v3270 = vpop.permute.xlu0 %3269
    %3271 = vrot.lane.b32.xlu0 %v2456, 64
    %v3272 = vpop.permute.xlu0 %3271
    %3273 = vrot.lane.b32.xlu0 %v2457, 64
    %v3274 = vpop.permute.xlu0 %3273
    %3275 = vrot.lane.b32.xlu0 %v2458, 64
    %v3276 = vpop.permute.xlu0 %3275
    %3277 = vrot.lane.b32.xlu0 %v2459, 64
    %v3278 = vpop.permute.xlu0 %3277
    %3279 = vrot.lane.b32.xlu0 %v2460, 64
    %v3280 = vpop.permute.xlu0 %3279
    %3281 = vrot.lane.b32.xlu0 %v2461, 64
    %v3282 = vpop.permute.xlu0 %3281
    %3283 = vrot.lane.b32.xlu0 %v2462, 64
    %v3284 = vpop.permute.xlu0 %3283
    %3285 = vrot.lane.b32.xlu0 %v2463, 64
    %v3286 = vpop.permute.xlu0 %3285
    %3287 = vrot.lane.b32.xlu0 %v2464, 64
    %v3288 = vpop.permute.xlu0 %3287
    %3289 = vrot.lane.b32.xlu0 %v2465, 64
    %v3290 = vpop.permute.xlu0 %3289
    %3291 = vrot.lane.b32.xlu0 %v2466, 64
    %v3292 = vpop.permute.xlu0 %3291
    %3321 = vrot.lane.b32.xlu0 %v2579, 96
    %v3322 = vpop.permute.xlu0 %3321
    %3323 = vrot.lane.b32.xlu0 %v2580, 96
    %v3324 = vpop.permute.xlu0 %3323
    %3325 = vrot.lane.b32.xlu0 %v2581, 96
    %v3326 = vpop.permute.xlu0 %3325
    %3327 = vrot.lane.b32.xlu0 %v2582, 96
    %v3328 = vpop.permute.xlu0 %3327
    %3329 = vrot.lane.b32.xlu0 %v2583, 96
    %v3330 = vpop.permute.xlu0 %3329
    %3331 = vrot.lane.b32.xlu0 %v2584, 96
    %v3332 = vpop.permute.xlu0 %3331
    %3333 = vrot.lane.b32.xlu0 %v2585, 96
    %v3334 = vpop.permute.xlu0 %3333
    %3335 = vrot.lane.b32.xlu0 %v2586, 96
    %v3336 = vpop.permute.xlu0 %3335
    %3337 = vrot.lane.b32.xlu0 %v2587, 96
    %v3338 = vpop.permute.xlu0 %3337
    %3339 = vrot.lane.b32.xlu0 %v2588, 96
    %v3340 = vpop.permute.xlu0 %3339
    %3341 = vrot.lane.b32.xlu0 %v2589, 96
    %v3342 = vpop.permute.xlu0 %3341
    %3343 = vrot.lane.b32.xlu0 %v2590, 96
    %v3344 = vpop.permute.xlu0 %3343
    %3345 = vrot.lane.b32.xlu0 %v2591, 96
    %v3346 = vpop.permute.xlu0 %3345
    %3347 = vrot.lane.b32.xlu0 %v2592, 96
    %v3348 = vpop.permute.xlu0 %3347
    %3377 = vrot.lane.b32.xlu0 %v2649, 96
    %v3378 = vpop.permute.xlu0 %3377
    %3379 = vrot.lane.b32.xlu0 %v2650, 96
    %v3380 = vpop.permute.xlu0 %3379
    %3381 = vrot.lane.b32.xlu0 %v2651, 96
    %v3382 = vpop.permute.xlu0 %3381
    %3383 = vrot.lane.b32.xlu0 %v2652, 96
    %v3384 = vpop.permute.xlu0 %3383
    %3385 = vrot.lane.b32.xlu0 %v2653, 96
    %v3386 = vpop.permute.xlu0 %3385
    %3387 = vrot.lane.b32.xlu0 %v2654, 96
    %v3388 = vpop.permute.xlu0 %3387
    %3389 = vrot.lane.b32.xlu0 %v2655, 96
    %v3390 = vpop.permute.xlu0 %3389
    %3391 = vrot.lane.b32.xlu0 %v2656, 96
    %v3392 = vpop.permute.xlu0 %3391
    %3393 = vrot.lane.b32.xlu0 %v2657, 96
    %v3394 = vpop.permute.xlu0 %3393
    %3395 = vrot.lane.b32.xlu0 %v2658, 96
    %v3396 = vpop.permute.xlu0 %3395
    %3397 = vrot.lane.b32.xlu0 %v2659, 96
    %v3398 = vpop.permute.xlu0 %3397
    %3399 = vrot.lane.b32.xlu0 %v2660, 96
    %v3400 = vpop.permute.xlu0 %3399
    %3401 = vrot.lane.b32.xlu0 %v2661, 96
    %v3402 = vpop.permute.xlu0 %3401
    %3403 = vrot.lane.b32.xlu0 %v2662, 96
    %v3404 = vpop.permute.xlu0 %3403
    %3433 = vrot.lane.b32.xlu0 %v2719, 64
    %v3434 = vpop.permute.xlu0 %3433
    %3435 = vrot.lane.b32.xlu0 %v2720, 64
    %v3436 = vpop.permute.xlu0 %3435
    %3437 = vrot.lane.b32.xlu0 %v2721, 64
    %v3438 = vpop.permute.xlu0 %3437
    %3439 = vrot.lane.b32.xlu0 %v2722, 64
    %v3440 = vpop.permute.xlu0 %3439
    %3441 = vrot.lane.b32.xlu0 %v2723, 64
    %v3442 = vpop.permute.xlu0 %3441
    %3443 = vrot.lane.b32.xlu0 %v2724, 64
    %v3444 = vpop.permute.xlu0 %3443
    %3445 = vrot.lane.b32.xlu0 %v2725, 64
    %v3446 = vpop.permute.xlu0 %3445
    %3447 = vrot.lane.b32.xlu0 %v2726, 64
    %v3448 = vpop.permute.xlu0 %3447
    %3449 = vrot.lane.b32.xlu0 %v2727, 64
    %v3450 = vpop.permute.xlu0 %3449
    %3451 = vrot.lane.b32.xlu0 %v2728, 64
    %v3452 = vpop.permute.xlu0 %3451
    %3453 = vrot.lane.b32.xlu0 %v2729, 64
    %v3454 = vpop.permute.xlu0 %3453
    %3455 = vrot.lane.b32.xlu0 %v2730, 64
    %v3456 = vpop.permute.xlu0 %3455
    %3457 = vrot.lane.b32.xlu0 %v2731, 64
    %v3458 = vpop.permute.xlu0 %3457
    %3459 = vrot.lane.b32.xlu0 %v2732, 64
    %v3460 = vpop.permute.xlu0 %3459
    %3489 = vrot.lane.b32.xlu0 %v2845, 96
    %v3490 = vpop.permute.xlu0 %3489
    %3491 = vrot.lane.b32.xlu0 %v2846, 96
    %v3492 = vpop.permute.xlu0 %3491
    %3493 = vrot.lane.b32.xlu0 %v2847, 96
    %v3494 = vpop.permute.xlu0 %3493
    %3495 = vrot.lane.b32.xlu0 %v2848, 96
    %v3496 = vpop.permute.xlu0 %3495
    %3497 = vrot.lane.b32.xlu0 %v2849, 96
    %v3498 = vpop.permute.xlu0 %3497
    %3499 = vrot.lane.b32.xlu0 %v2850, 96
    %v3500 = vpop.permute.xlu0 %3499
    %3501 = vrot.lane.b32.xlu0 %v2851, 96
    %v3502 = vpop.permute.xlu0 %3501
    %3503 = vrot.lane.b32.xlu0 %v2852, 96
    %v3504 = vpop.permute.xlu0 %3503
    %3505 = vrot.lane.b32.xlu0 %v2853, 96
    %v3506 = vpop.permute.xlu0 %3505
    %3507 = vrot.lane.b32.xlu0 %v2854, 96
    %v3508 = vpop.permute.xlu0 %3507
    %3509 = vrot.lane.b32.xlu0 %v2855, 96
    %v3510 = vpop.permute.xlu0 %3509
    %3511 = vrot.lane.b32.xlu0 %v2856, 96
    %v3512 = vpop.permute.xlu0 %3511
    %3513 = vrot.lane.b32.xlu0 %v2857, 96
    %v3514 = vpop.permute.xlu0 %3513
    %3515 = vrot.lane.b32.xlu0 %v2858, 96
    %v3516 = vpop.permute.xlu0 %3515
    %3545 = vrot.lane.b32.xlu0 %v2915, 96
    %v3546 = vpop.permute.xlu0 %3545
    %3547 = vrot.lane.b32.xlu0 %v2916, 96
    %v3548 = vpop.permute.xlu0 %3547
    %3549 = vrot.lane.b32.xlu0 %v2917, 96
    %v3550 = vpop.permute.xlu0 %3549
    %3551 = vrot.lane.b32.xlu0 %v2918, 96
    %v3552 = vpop.permute.xlu0 %3551
    %3553 = vrot.lane.b32.xlu0 %v2919, 96
    %v3554 = vpop.permute.xlu0 %3553
    %3555 = vrot.lane.b32.xlu0 %v2920, 96
    %v3556 = vpop.permute.xlu0 %3555
    %3557 = vrot.lane.b32.xlu0 %v2921, 96
    %v3558 = vpop.permute.xlu0 %3557
    %3559 = vrot.lane.b32.xlu0 %v2922, 96
    %v3560 = vpop.permute.xlu0 %3559
    %3561 = vrot.lane.b32.xlu0 %v2923, 96
    %v3562 = vpop.permute.xlu0 %3561
    %3563 = vrot.lane.b32.xlu0 %v2924, 96
    %v3564 = vpop.permute.xlu0 %3563
    %3565 = vrot.lane.b32.xlu0 %v2925, 96
    %v3566 = vpop.permute.xlu0 %3565
    %3567 = vrot.lane.b32.xlu0 %v2926, 96
    %v3568 = vpop.permute.xlu0 %3567
    %3569 = vrot.lane.b32.xlu0 %v2927, 96
    %v3570 = vpop.permute.xlu0 %3569
    %3571 = vrot.lane.b32.xlu0 %v2928, 96
    %v3572 = vpop.permute.xlu0 %3571
    %3601 = vrot.lane.b32.xlu0 %v2985, 64
    %v3602 = vpop.permute.xlu0 %3601
    %3603 = vrot.lane.b32.xlu0 %v2986, 64
    %v3604 = vpop.permute.xlu0 %3603
    %3605 = vrot.lane.b32.xlu0 %v2987, 64
    %v3606 = vpop.permute.xlu0 %3605
    %3607 = vrot.lane.b32.xlu0 %v2988, 64
    %v3608 = vpop.permute.xlu0 %3607
    %3609 = vrot.lane.b32.xlu0 %v2989, 64
    %v3610 = vpop.permute.xlu0 %3609
    %3611 = vrot.lane.b32.xlu0 %v2990, 64
    %v3612 = vpop.permute.xlu0 %3611
    %3613 = vrot.lane.b32.xlu0 %v2991, 64
    %v3614 = vpop.permute.xlu0 %3613
    %3615 = vrot.lane.b32.xlu0 %v2992, 64
    %v3616 = vpop.permute.xlu0 %3615
    %3617 = vrot.lane.b32.xlu0 %v2993, 64
    %v3618 = vpop.permute.xlu0 %3617
    %3619 = vrot.lane.b32.xlu0 %v2994, 64
    %v3620 = vpop.permute.xlu0 %3619
    %3621 = vrot.lane.b32.xlu0 %v2995, 64
    %v3622 = vpop.permute.xlu0 %3621
    %3623 = vrot.lane.b32.xlu0 %v2996, 64
    %v3624 = vpop.permute.xlu0 %3623
    %3625 = vrot.lane.b32.xlu0 %v2997, 64
    %v3626 = vpop.permute.xlu0 %3625
    %3627 = vrot.lane.b32.xlu0 %v2998, 64
    %v3628 = vpop.permute.xlu0 %3627
    %3657 = vrot.lane.b32.xlu0 %v3111, 96
    %v3658 = vpop.permute.xlu0 %3657
    %3659 = vrot.lane.b32.xlu0 %v3112, 96
    %v3660 = vpop.permute.xlu0 %3659
    %3661 = vrot.lane.b32.xlu0 %v3113, 96
    %v3662 = vpop.permute.xlu0 %3661
    %3663 = vrot.lane.b32.xlu0 %v3114, 96
    %v3664 = vpop.permute.xlu0 %3663
    %3665 = vrot.lane.b32.xlu0 %v3115, 96
    %v3666 = vpop.permute.xlu0 %3665
    %3667 = vrot.lane.b32.xlu0 %v3116, 96
    %v3668 = vpop.permute.xlu0 %3667
    %3669 = vrot.lane.b32.xlu0 %v3117, 96
    %v3670 = vpop.permute.xlu0 %3669
    %3671 = vrot.lane.b32.xlu0 %v3118, 96
    %v3672 = vpop.permute.xlu0 %3671
    %3673 = vrot.lane.b32.xlu0 %v3119, 96
    %v3674 = vpop.permute.xlu0 %3673
    %3675 = vrot.lane.b32.xlu0 %v3120, 96
    %v3676 = vpop.permute.xlu0 %3675
    %3677 = vrot.lane.b32.xlu0 %v3121, 96
    %v3678 = vpop.permute.xlu0 %3677
    %3679 = vrot.lane.b32.xlu0 %v3122, 96
    %v3680 = vpop.permute.xlu0 %3679
    %3681 = vrot.lane.b32.xlu0 %v3123, 96
    %v3682 = vpop.permute.xlu0 %3681
    %3683 = vrot.lane.b32.xlu0 %v3124, 96
    %v3684 = vpop.permute.xlu0 %3683
    %3713 = vrot.lane.b32.xlu0 %v3181, 96
    %v3714 = vpop.permute.xlu0 %3713
    %3715 = vrot.lane.b32.xlu0 %v3182, 96
    %v3716 = vpop.permute.xlu0 %3715
    %3717 = vrot.lane.b32.xlu0 %v3183, 96
    %v3718 = vpop.permute.xlu0 %3717
    %3719 = vrot.lane.b32.xlu0 %v3184, 96
    %v3720 = vpop.permute.xlu0 %3719
    %3721 = vrot.lane.b32.xlu0 %v3185, 96
    %v3722 = vpop.permute.xlu0 %3721
    %3723 = vrot.lane.b32.xlu0 %v3186, 96
    %v3724 = vpop.permute.xlu0 %3723
    %3725 = vrot.lane.b32.xlu0 %v3187, 96
    %v3726 = vpop.permute.xlu0 %3725
    %3727 = vrot.lane.b32.xlu0 %v3188, 96
    %v3728 = vpop.permute.xlu0 %3727
    %3729 = vrot.lane.b32.xlu0 %v3189, 96
    %v3730 = vpop.permute.xlu0 %3729
    %3731 = vrot.lane.b32.xlu0 %v3190, 96
    %v3732 = vpop.permute.xlu0 %3731
    %3733 = vrot.lane.b32.xlu0 %v3191, 96
    %v3734 = vpop.permute.xlu0 %3733
    %3735 = vrot.lane.b32.xlu0 %v3192, 96
    %v3736 = vpop.permute.xlu0 %3735
    %3737 = vrot.lane.b32.xlu0 %v3193, 96
    %v3738 = vpop.permute.xlu0 %3737
    %3739 = vrot.lane.b32.xlu0 %v3194, 96
    %v3740 = vpop.permute.xlu0 %3739
    %v3755 = vsel %vm182, %v2383, %v3210
    %v3756 = vsel %vm182, %v2384, %v3212
    %v3757 = vsel %vm182, %v2385, %v3214
    %v3758 = vsel %vm182, %v2386, %v3216
    %v3759 = vsel %vm182, %v2387, %v3218
    %v3760 = vsel %vm182, %v2388, %v3220
    %v3761 = vsel %vm182, %v2389, %v3222
    %v3762 = vsel %vm182, %v2390, %v3224
    %v3763 = vsel %vm182, %v2391, %v3226
    %v3764 = vsel %vm182, %v2392, %v3228
    %v3765 = vsel %vm182, %v2393, %v3230
    %v3766 = vsel %vm182, %v2394, %v3232
    %v3767 = vsel %vm182, %v2395, %v3234
    %v3768 = vsel %vm182, %v2396, %v3236
    %v3769 = vsel %vm1474, %v3755, %v3266
    %v3770 = vsel %vm1474, %v3756, %v3268
    %v3771 = vsel %vm1474, %v3757, %v3270
    %v3772 = vsel %vm1474, %v3758, %v3272
    %v3773 = vsel %vm1474, %v3759, %v3274
    %v3774 = vsel %vm1474, %v3760, %v3276
    %v3775 = vsel %vm1474, %v3761, %v3278
    %v3776 = vsel %vm1474, %v3762, %v3280
    %v3777 = vsel %vm1474, %v3763, %v3282
    %v3778 = vsel %vm1474, %v3764, %v3284
    %v3779 = vsel %vm1474, %v3765, %v3286
    %v3780 = vsel %vm1474, %v3766, %v3288
    %v3781 = vsel %vm1474, %v3767, %v3290
    %v3782 = vsel %vm1474, %v3768, %v3292
    %v3783 = vsel %vm1476, %v3769, %v3322
    %v3784 = vsel %vm1476, %v3770, %v3324
    %v3785 = vsel %vm1476, %v3771, %v3326
    %v3786 = vsel %vm1476, %v3772, %v3328
    %v3787 = vsel %vm1476, %v3773, %v3330
    %v3788 = vsel %vm1476, %v3774, %v3332
    %v3789 = vsel %vm1476, %v3775, %v3334
    %v3790 = vsel %vm1476, %v3776, %v3336
    %v3791 = vsel %vm1476, %v3777, %v3338
    %v3792 = vsel %vm1476, %v3778, %v3340
    %v3793 = vsel %vm1476, %v3779, %v3342
    %v3794 = vsel %vm1476, %v3780, %v3344
    %v3795 = vsel %vm1476, %v3781, %v3346
    %v3796 = vsel %vm1476, %v3782, %v3348
    %v3797 = vsel %vm182, %v2649, %v3378
    %v3798 = vsel %vm182, %v2650, %v3380
    %v3799 = vsel %vm182, %v2651, %v3382
    %v3800 = vsel %vm182, %v2652, %v3384
    %v3801 = vsel %vm182, %v2653, %v3386
    %v3802 = vsel %vm182, %v2654, %v3388
    %v3803 = vsel %vm182, %v2655, %v3390
    %v3804 = vsel %vm182, %v2656, %v3392
    %v3805 = vsel %vm182, %v2657, %v3394
    %v3806 = vsel %vm182, %v2658, %v3396
    %v3807 = vsel %vm182, %v2659, %v3398
    %v3808 = vsel %vm182, %v2660, %v3400
    %v3809 = vsel %vm182, %v2661, %v3402
    %v3810 = vsel %vm182, %v2662, %v3404
    %v3811 = vsel %vm1474, %v3797, %v3434
    %v3812 = vsel %vm1474, %v3798, %v3436
    %v3813 = vsel %vm1474, %v3799, %v3438
    %v3814 = vsel %vm1474, %v3800, %v3440
    %v3815 = vsel %vm1474, %v3801, %v3442
    %v3816 = vsel %vm1474, %v3802, %v3444
    %v3817 = vsel %vm1474, %v3803, %v3446
    %v3818 = vsel %vm1474, %v3804, %v3448
    %v3819 = vsel %vm1474, %v3805, %v3450
    %v3820 = vsel %vm1474, %v3806, %v3452
    %v3821 = vsel %vm1474, %v3807, %v3454
    %v3822 = vsel %vm1474, %v3808, %v3456
    %v3823 = vsel %vm1474, %v3809, %v3458
    %v3824 = vsel %vm1474, %v3810, %v3460
    %v3825 = vsel %vm1476, %v3811, %v3490
    %v3826 = vsel %vm1476, %v3812, %v3492
    %v3827 = vsel %vm1476, %v3813, %v3494
    %v3828 = vsel %vm1476, %v3814, %v3496
    %v3829 = vsel %vm1476, %v3815, %v3498
    %v3830 = vsel %vm1476, %v3816, %v3500
    %v3831 = vsel %vm1476, %v3817, %v3502
    %v3832 = vsel %vm1476, %v3818, %v3504
    %v3833 = vsel %vm1476, %v3819, %v3506
    %v3834 = vsel %vm1476, %v3820, %v3508
    %v3835 = vsel %vm1476, %v3821, %v3510
    %v3836 = vsel %vm1476, %v3822, %v3512
    %v3837 = vsel %vm1476, %v3823, %v3514
    %v3838 = vsel %vm1476, %v3824, %v3516
    %v3839 = vsel %vm182, %v2915, %v3546
    %v3840 = vsel %vm182, %v2916, %v3548
    %v3841 = vsel %vm182, %v2917, %v3550
    %v3842 = vsel %vm182, %v2918, %v3552
    %v3843 = vsel %vm182, %v2919, %v3554
    %v3844 = vsel %vm182, %v2920, %v3556
    %v3845 = vsel %vm182, %v2921, %v3558
    %v3846 = vsel %vm182, %v2922, %v3560
    %v3847 = vsel %vm182, %v2923, %v3562
    %v3848 = vsel %vm182, %v2924, %v3564
    %v3849 = vsel %vm182, %v2925, %v3566
    %v3850 = vsel %vm182, %v2926, %v3568
    %v3851 = vsel %vm182, %v2927, %v3570
    %v3852 = vsel %vm182, %v2928, %v3572
    %v3853 = vsel %vm1474, %v3839, %v3602
    %v3854 = vsel %vm1474, %v3840, %v3604
    %v3855 = vsel %vm1474, %v3841, %v3606
    %v3856 = vsel %vm1474, %v3842, %v3608
    %v3857 = vsel %vm1474, %v3843, %v3610
    %v3858 = vsel %vm1474, %v3844, %v3612
    %v3859 = vsel %vm1474, %v3845, %v3614
    %v3860 = vsel %vm1474, %v3846, %v3616
    %v3861 = vsel %vm1474, %v3847, %v3618
    %v3862 = vsel %vm1474, %v3848, %v3620
    %v3863 = vsel %vm1474, %v3849, %v3622
    %v3864 = vsel %vm1474, %v3850, %v3624
    %v3865 = vsel %vm1474, %v3851, %v3626
    %v3866 = vsel %vm1474, %v3852, %v3628
    %v3867 = vsel %vm1476, %v3853, %v3658
    %v3868 = vsel %vm1476, %v3854, %v3660
    %v3869 = vsel %vm1476, %v3855, %v3662
    %v3870 = vsel %vm1476, %v3856, %v3664
    %v3871 = vsel %vm1476, %v3857, %v3666
    %v3872 = vsel %vm1476, %v3858, %v3668
    %v3873 = vsel %vm1476, %v3859, %v3670
    %v3874 = vsel %vm1476, %v3860, %v3672
    %v3875 = vsel %vm1476, %v3861, %v3674
    %v3876 = vsel %vm1476, %v3862, %v3676
    %v3877 = vsel %vm1476, %v3863, %v3678
    %v3878 = vsel %vm1476, %v3864, %v3680
    %v3879 = vsel %vm1476, %v3865, %v3682
    %v3880 = vsel %vm1476, %v3866, %v3684
    %v3881 = vsel %vm182, %v3181, %v3714
    %v3882 = vsel %vm182, %v3182, %v3716
    %v3883 = vsel %vm182, %v3183, %v3718
    %v3884 = vsel %vm182, %v3184, %v3720
    %v3885 = vsel %vm182, %v3185, %v3722
    %v3886 = vsel %vm182, %v3186, %v3724
    %v3887 = vsel %vm182, %v3187, %v3726
    %v3888 = vsel %vm182, %v3188, %v3728
    %v3889 = vsel %vm182, %v3189, %v3730
    %v3890 = vsel %vm182, %v3190, %v3732
    %v3891 = vsel %vm182, %v3191, %v3734
    %v3892 = vsel %vm182, %v3192, %v3736
    %v3893 = vsel %vm182, %v3193, %v3738
    %v3894 = vsel %vm182, %v3194, %v3740
    %3895 = vst [vmem:[#allocation2] sm:$0xff] 0
    %3896 = vst [vmem:[#allocation2 + $0x8] sm:$0xff] 0
    %3897 = vst [vmem:[#allocation2 + $0x10] sm:$0xff] 0
    %3898 = vst [vmem:[#allocation2 + $0x18] sm:$0xff] 0
    %3899 = vst [vmem:[#allocation2 + $0x20] sm:$0xff] 0
    %3900 = vst [vmem:[#allocation2 + $0x28] sm:$0xff] 0
    %3901 = vst [vmem:[#allocation2 + $0x30] sm:$0xff] 0
    %3902 = vst [vmem:[#allocation2 + $0x38] sm:$0xff] 0
    %v3959 = vcombine.low %v3783, %v3825
    %v3960 = vcombine.low %v3867, %v3881
    %v3962 = vunpack.c.l.s4 1983009808
    %v3963 = vunpack.c.0.s8 %v3962
    %v3964 = vlaneseq
    %v3965 = vshrl.u32 %v3964, 7
    %v3966 = vsub.s32 %v3963, %v3965
    %v3967 = vrot.slane %v3959, %v3966
    %v3969 = vunpack.c.l.s4 1983009808
    %v3970 = vunpack.c.0.s8 %v3969
    %v3971 = vlaneseq
    %v3972 = vshrl.u32 %v3971, 7
    %v3973 = vsub.s32 %v3970, %v3972
    %v3974 = vrot.slane %v3960, %v3973
    %v3975 = vcombine.low %v3967, %v3974
    %v3976 = vcombine.low %v3784, %v3826
    %v3977 = vcombine.low %v3868, %v3882
    %v3979 = vunpack.c.l.s4 1983009808
    %v3980 = vunpack.c.0.s8 %v3979
    %v3981 = vlaneseq
    %v3982 = vshrl.u32 %v3981, 7
    %v3983 = vsub.s32 %v3980, %v3982
    %v3984 = vrot.slane %v3976, %v3983
    %v3986 = vunpack.c.l.s4 1983009808
    %v3987 = vunpack.c.0.s8 %v3986
    %v3988 = vlaneseq
    %v3989 = vshrl.u32 %v3988, 7
    %v3990 = vsub.s32 %v3987, %v3989
    %v3991 = vrot.slane %v3977, %v3990
    %v3992 = vcombine.low %v3984, %v3991
    %v3993 = vcombine.low %v3785, %v3827
    %v3994 = vcombine.low %v3869, %v3883
    %v3996 = vunpack.c.l.s4 1983009808
    %v3997 = vunpack.c.0.s8 %v3996
    %v3998 = vlaneseq
    %v3999 = vshrl.u32 %v3998, 7
    %v4000 = vsub.s32 %v3997, %v3999
    %v4001 = vrot.slane %v3993, %v4000
    %v4003 = vunpack.c.l.s4 1983009808
    %v4004 = vunpack.c.0.s8 %v4003
    %v4005 = vlaneseq
    %v4006 = vshrl.u32 %v4005, 7
    %v4007 = vsub.s32 %v4004, %v4006
    %v4008 = vrot.slane %v3994, %v4007
    %v4009 = vcombine.low %v4001, %v4008
    %v4010 = vcombine.low %v3786, %v3828
    %v4011 = vcombine.low %v3870, %v3884
    %v4013 = vunpack.c.l.s4 1983009808
    %v4014 = vunpack.c.0.s8 %v4013
    %v4015 = vlaneseq
    %v4016 = vshrl.u32 %v4015, 7
    %v4017 = vsub.s32 %v4014, %v4016
    %v4018 = vrot.slane %v4010, %v4017
    %v4020 = vunpack.c.l.s4 1983009808
    %v4021 = vunpack.c.0.s8 %v4020
    %v4022 = vlaneseq
    %v4023 = vshrl.u32 %v4022, 7
    %v4024 = vsub.s32 %v4021, %v4023
    %v4025 = vrot.slane %v4011, %v4024
    %v4026 = vcombine.low %v4018, %v4025
    %v4027 = vcombine.low %v3787, %v3829
    %v4028 = vcombine.low %v3871, %v3885
    %v4030 = vunpack.c.l.s4 1983009808
    %v4031 = vunpack.c.0.s8 %v4030
    %v4032 = vlaneseq
    %v4033 = vshrl.u32 %v4032, 7
    %v4034 = vsub.s32 %v4031, %v4033
    %v4035 = vrot.slane %v4027, %v4034
    %v4037 = vunpack.c.l.s4 1983009808
    %v4038 = vunpack.c.0.s8 %v4037
    %v4039 = vlaneseq
    %v4040 = vshrl.u32 %v4039, 7
    %v4041 = vsub.s32 %v4038, %v4040
    %v4042 = vrot.slane %v4028, %v4041
    %v4043 = vcombine.low %v4035, %v4042
    %v4044 = vcombine.low %v3788, %v3830
    %v4045 = vcombine.low %v3872, %v3886
    %v4047 = vunpack.c.l.s4 1983009808
    %v4048 = vunpack.c.0.s8 %v4047
    %v4049 = vlaneseq
    %v4050 = vshrl.u32 %v4049, 7
    %v4051 = vsub.s32 %v4048, %v4050
    %v4052 = vrot.slane %v4044, %v4051
    %v4054 = vunpack.c.l.s4 1983009808
    %v4055 = vunpack.c.0.s8 %v4054
    %v4056 = vlaneseq
    %v4057 = vshrl.u32 %v4056, 7
    %v4058 = vsub.s32 %v4055, %v4057
    %v4059 = vrot.slane %v4045, %v4058
    %v4060 = vcombine.low %v4052, %v4059
    %v4061 = vcombine.low %v3789, %v3831
    %v4062 = vcombine.low %v3873, %v3887
    %v4064 = vunpack.c.l.s4 1983009808
    %v4065 = vunpack.c.0.s8 %v4064
    %v4066 = vlaneseq
    %v4067 = vshrl.u32 %v4066, 7
    %v4068 = vsub.s32 %v4065, %v4067
    %v4069 = vrot.slane %v4061, %v4068
    %v4071 = vunpack.c.l.s4 1983009808
    %v4072 = vunpack.c.0.s8 %v4071
    %v4073 = vlaneseq
    %v4074 = vshrl.u32 %v4073, 7
    %v4075 = vsub.s32 %v4072, %v4074
    %v4076 = vrot.slane %v4062, %v4075
    %v4077 = vcombine.low %v4069, %v4076
    %v4078 = vcombine.low %v3790, %v3832
    %v4079 = vcombine.low %v3874, %v3888
    %v4081 = vunpack.c.l.s4 1983009808
    %v4082 = vunpack.c.0.s8 %v4081
    %v4083 = vlaneseq
    %v4084 = vshrl.u32 %v4083, 7
    %v4085 = vsub.s32 %v4082, %v4084
    %v4086 = vrot.slane %v4078, %v4085
    %v4088 = vunpack.c.l.s4 1983009808
    %v4089 = vunpack.c.0.s8 %v4088
    %v4090 = vlaneseq
    %v4091 = vshrl.u32 %v4090, 7
    %v4092 = vsub.s32 %v4089, %v4091
    %v4093 = vrot.slane %v4079, %v4092
    %v4094 = vcombine.low %v4086, %v4093
    %v4095 = vcombine.low %v3791, %v3833
    %v4096 = vcombine.low %v3875, %v3889
    %v4098 = vunpack.c.l.s4 1983009808
    %v4099 = vunpack.c.0.s8 %v4098
    %v4100 = vlaneseq
    %v4101 = vshrl.u32 %v4100, 7
    %v4102 = vsub.s32 %v4099, %v4101
    %v4103 = vrot.slane %v4095, %v4102
    %v4105 = vunpack.c.l.s4 1983009808
    %v4106 = vunpack.c.0.s8 %v4105
    %v4107 = vlaneseq
    %v4108 = vshrl.u32 %v4107, 7
    %v4109 = vsub.s32 %v4106, %v4108
    %v4110 = vrot.slane %v4096, %v4109
    %v4111 = vcombine.low %v4103, %v4110
    %v4112 = vcombine.low %v3792, %v3834
    %v4113 = vcombine.low %v3876, %v3890
    %v4115 = vunpack.c.l.s4 1983009808
    %v4116 = vunpack.c.0.s8 %v4115
    %v4117 = vlaneseq
    %v4118 = vshrl.u32 %v4117, 7
    %v4119 = vsub.s32 %v4116, %v4118
    %v4120 = vrot.slane %v4112, %v4119
    %v4122 = vunpack.c.l.s4 1983009808
    %v4123 = vunpack.c.0.s8 %v4122
    %v4124 = vlaneseq
    %v4125 = vshrl.u32 %v4124, 7
    %v4126 = vsub.s32 %v4123, %v4125
    %v4127 = vrot.slane %v4113, %v4126
    %v4128 = vcombine.low %v4120, %v4127
    %v4129 = vcombine.low %v3793, %v3835
    %v4130 = vcombine.low %v3877, %v3891
    %v4132 = vunpack.c.l.s4 1983009808
    %v4133 = vunpack.c.0.s8 %v4132
    %v4134 = vlaneseq
    %v4135 = vshrl.u32 %v4134, 7
    %v4136 = vsub.s32 %v4133, %v4135
    %v4137 = vrot.slane %v4129, %v4136
    %v4139 = vunpack.c.l.s4 1983009808
    %v4140 = vunpack.c.0.s8 %v4139
    %v4141 = vlaneseq
    %v4142 = vshrl.u32 %v4141, 7
    %v4143 = vsub.s32 %v4140, %v4142
    %v4144 = vrot.slane %v4130, %v4143
    %v4145 = vcombine.low %v4137, %v4144
    %v4146 = vcombine.low %v3794, %v3836
    %v4147 = vcombine.low %v3878, %v3892
    %v4149 = vunpack.c.l.s4 1983009808
    %v4150 = vunpack.c.0.s8 %v4149
    %v4151 = vlaneseq
    %v4152 = vshrl.u32 %v4151, 7
    %v4153 = vsub.s32 %v4150, %v4152
    %v4154 = vrot.slane %v4146, %v4153
    %v4156 = vunpack.c.l.s4 1983009808
    %v4157 = vunpack.c.0.s8 %v4156
    %v4158 = vlaneseq
    %v4159 = vshrl.u32 %v4158, 7
    %v4160 = vsub.s32 %v4157, %v4159
    %v4161 = vrot.slane %v4147, %v4160
    %v4162 = vcombine.low %v4154, %v4161
    %v4163 = vcombine.low %v3795, %v3837
    %v4164 = vcombine.low %v3879, %v3893
    %v4166 = vunpack.c.l.s4 1983009808
    %v4167 = vunpack.c.0.s8 %v4166
    %v4168 = vlaneseq
    %v4169 = vshrl.u32 %v4168, 7
    %v4170 = vsub.s32 %v4167, %v4169
    %v4171 = vrot.slane %v4163, %v4170
    %v4173 = vunpack.c.l.s4 1983009808
    %v4174 = vunpack.c.0.s8 %v4173
    %v4175 = vlaneseq
    %v4176 = vshrl.u32 %v4175, 7
    %v4177 = vsub.s32 %v4174, %v4176
    %v4178 = vrot.slane %v4164, %v4177
    %v4179 = vcombine.low %v4171, %v4178
    %v4180 = vcombine.low %v3796, %v3838
    %v4181 = vcombine.low %v3880, %v3894
    %v4183 = vunpack.c.l.s4 1983009808
    %v4184 = vunpack.c.0.s8 %v4183
    %v4185 = vlaneseq
    %v4186 = vshrl.u32 %v4185, 7
    %v4187 = vsub.s32 %v4184, %v4186
    %v4188 = vrot.slane %v4180, %v4187
    %v4190 = vunpack.c.l.s4 1983009808
    %v4191 = vunpack.c.0.s8 %v4190
    %v4192 = vlaneseq
    %v4193 = vshrl.u32 %v4192, 7
    %v4194 = vsub.s32 %v4191, %v4193
    %v4195 = vrot.slane %v4181, %v4194
    %v4196 = vcombine.low %v4188, %v4195
    %v4197 = vcombine.low %v3975, %v3992
    %v4198 = vcombine.high %v3975, %v3992
    %v4199 = vcombine.low %v4009, %v4026
    %v4200 = vcombine.high %v4009, %v4026
    %v4202 = vunpack.c.l.s4 1983009808
    %v4203 = vunpack.c.0.s8 %v4202
    %v4204 = vlaneseq
    %v4205 = vshrl.u32 %v4204, 7
    %v4206 = vsub.s32 %v4203, %v4205
    %v4207 = vrot.slane %v4197, %v4206
    %v4209 = vunpack.c.l.s4 1983009808
    %v4210 = vunpack.c.0.s8 %v4209
    %v4211 = vlaneseq
    %v4212 = vshrl.u32 %v4211, 7
    %v4213 = vsub.s32 %v4210, %v4212
    %v4214 = vrot.slane %v4198, %v4213
    %v4216 = vunpack.c.l.s4 1983009808
    %v4217 = vunpack.c.0.s8 %v4216
    %v4218 = vlaneseq
    %v4219 = vshrl.u32 %v4218, 7
    %v4220 = vsub.s32 %v4217, %v4219
    %v4221 = vrot.slane %v4199, %v4220
    %v4223 = vunpack.c.l.s4 1983009808
    %v4224 = vunpack.c.0.s8 %v4223
    %v4225 = vlaneseq
    %v4226 = vshrl.u32 %v4225, 7
    %v4227 = vsub.s32 %v4224, %v4226
    %v4228 = vrot.slane %v4200, %v4227
    %v4229 = vcombine.low %v4207, %v4221
    %v4230 = vcombine.high %v4207, %v4221
    %v4231 = vcombine.low %v4214, %v4228
    %v4232 = vcombine.high %v4214, %v4228
    %v4233 = vcombine.low %v4043, %v4060
    %v4234 = vcombine.high %v4043, %v4060
    %v4235 = vcombine.low %v4077, %v4094
    %v4236 = vcombine.high %v4077, %v4094
    %v4238 = vunpack.c.l.s4 1983009808
    %v4239 = vunpack.c.0.s8 %v4238
    %v4240 = vlaneseq
    %v4241 = vshrl.u32 %v4240, 7
    %v4242 = vsub.s32 %v4239, %v4241
    %v4243 = vrot.slane %v4233, %v4242
    %v4245 = vunpack.c.l.s4 1983009808
    %v4246 = vunpack.c.0.s8 %v4245
    %v4247 = vlaneseq
    %v4248 = vshrl.u32 %v4247, 7
    %v4249 = vsub.s32 %v4246, %v4248
    %v4250 = vrot.slane %v4234, %v4249
    %v4252 = vunpack.c.l.s4 1983009808
    %v4253 = vunpack.c.0.s8 %v4252
    %v4254 = vlaneseq
    %v4255 = vshrl.u32 %v4254, 7
    %v4256 = vsub.s32 %v4253, %v4255
    %v4257 = vrot.slane %v4235, %v4256
    %v4259 = vunpack.c.l.s4 1983009808
    %v4260 = vunpack.c.0.s8 %v4259
    %v4261 = vlaneseq
    %v4262 = vshrl.u32 %v4261, 7
    %v4263 = vsub.s32 %v4260, %v4262
    %v4264 = vrot.slane %v4236, %v4263
    %v4265 = vcombine.low %v4243, %v4257
    %v4266 = vcombine.high %v4243, %v4257
    %v4267 = vcombine.low %v4250, %v4264
    %v4268 = vcombine.high %v4250, %v4264
    %v4269 = vcombine.low %v4111, %v4128
    %v4270 = vcombine.high %v4111, %v4128
    %v4271 = vcombine.low %v4145, %v4162
    %v4272 = vcombine.high %v4145, %v4162
    %v4274 = vunpack.c.l.s4 1983009808
    %v4275 = vunpack.c.0.s8 %v4274
    %v4276 = vlaneseq
    %v4277 = vshrl.u32 %v4276, 7
    %v4278 = vsub.s32 %v4275, %v4277
    %v4279 = vrot.slane %v4269, %v4278
    %v4281 = vunpack.c.l.s4 1983009808
    %v4282 = vunpack.c.0.s8 %v4281
    %v4283 = vlaneseq
    %v4284 = vshrl.u32 %v4283, 7
    %v4285 = vsub.s32 %v4282, %v4284
    %v4286 = vrot.slane %v4270, %v4285
    %v4288 = vunpack.c.l.s4 1983009808
    %v4289 = vunpack.c.0.s8 %v4288
    %v4290 = vlaneseq
    %v4291 = vshrl.u32 %v4290, 7
    %v4292 = vsub.s32 %v4289, %v4291
    %v4293 = vrot.slane %v4271, %v4292
    %v4295 = vunpack.c.l.s4 1983009808
    %v4296 = vunpack.c.0.s8 %v4295
    %v4297 = vlaneseq
    %v4298 = vshrl.u32 %v4297, 7
    %v4299 = vsub.s32 %v4296, %v4298
    %v4300 = vrot.slane %v4272, %v4299
    %v4301 = vcombine.low %v4279, %v4293
    %v4302 = vcombine.high %v4279, %v4293
    %v4303 = vcombine.low %v4286, %v4300
    %v4304 = vcombine.high %v4286, %v4300
    %v4305 = vcombine.low %v4179, %v4196
    %v4306 = vcombine.high %v4179, %v4196
    %v4308 = vunpack.c.l.s4 1983009808
    %v4309 = vunpack.c.0.s8 %v4308
    %v4310 = vlaneseq
    %v4311 = vshrl.u32 %v4310, 7
    %v4312 = vsub.s32 %v4309, %v4311
    %v4313 = vrot.slane %v4305, %v4312
    %v4315 = vunpack.c.l.s4 1983009808
    %v4316 = vunpack.c.0.s8 %v4315
    %v4317 = vlaneseq
    %v4318 = vshrl.u32 %v4317, 7
    %v4319 = vsub.s32 %v4316, %v4318
    %v4320 = vrot.slane %v4306, %v4319
    %v4321 = vcombine.high %v4313, %v4313
    %v4322 = vcombine.high %v4320, %v4320
    %v4339 = vpack.c.bf16 %v4265, %v4229
    %v4340 = vpack.c.bf16 %v4266, %v4230
    %v4341 = vpack.c.bf16 %v4267, %v4231
    %v4342 = vpack.c.bf16 %v4268, %v4232
    %v4343 = vpack.c.bf16 %v4313, %v4301
    %v4344 = vpack.c.bf16 %v4321, %v4302
    %v4345 = vpack.c.bf16 %v4320, %v4303
    %v4346 = vpack.c.bf16 %v4322, %v4304
    %v4355 = vunpack.c.l.b16 %v4339
    %v4356 = vunpack.c.l.b16 %v4340
    %v4357 = vunpack.c.l.b16 %v4341
    %v4358 = vunpack.c.l.b16 %v4342
    %v4359 = vunpack.c.h.b16 %v4339
    %v4360 = vunpack.c.h.b16 %v4340
    %v4361 = vunpack.c.h.b16 %v4341
    %v4362 = vunpack.c.h.b16 %v4342
    %v4363 = vunpack.c.l.b16 %v4343
    %v4364 = vunpack.c.l.b16 %v4344
    %v4365 = vunpack.c.l.b16 %v4345
    %v4366 = vunpack.c.l.b16 %v4346
    %v4367 = vunpack.c.h.b16 %v4343
    %v4368 = vunpack.c.h.b16 %v4344
    %v4369 = vunpack.c.h.b16 %v4345
    %v4370 = vunpack.c.h.b16 %v4346
    %v4371 = vpack.c.b16 %v4356, %v4355
    %v4372 = vpack.c.b16 %v4358, %v4357
    %v4373 = vpack.c.b16 %v4360, %v4359
    %v4374 = vpack.c.b16 %v4362, %v4361
    %v4375 = vpack.c.b16 %v4364, %v4363
    %v4376 = vpack.c.b16 %v4366, %v4365
    %v4377 = vpack.c.b16 %v4368, %v4367
    %v4378 = vpack.c.b16 %v4370, %v4369
    %vm4379 = vcmask 1040384
    %vm4380 = vcmask 1044484
    %vm4381 = vmor %vm4379, %vm4380
    %v4382 = vrot.slane %v4371, 7
    %v4383 = vrot.slane %v4372, 7
    %v4384 = vrot.slane %v4382, 4
    %v4385 = vrot.slane %v4373, 7
    %v4386 = vsel %vm4381, %v4384, %v4385
    %v4387 = vrot.slane %v4383, 4
    %v4388 = vrot.slane %v4374, 7
    %v4389 = vsel %vm4381, %v4387, %v4388
    %v4390 = vrot.slane %v4385, 4
    %v4391 = vrot.slane %v4375, 7
    %v4392 = vsel %vm4381, %v4390, %v4391
    %v4393 = vrot.slane %v4388, 4
    %v4394 = vrot.slane %v4376, 7
    %v4395 = vsel %vm4381, %v4393, %v4394
    %v4396 = vrot.slane %v4391, 4
    %v4397 = vrot.slane %v4377, 7
    %v4398 = vsel %vm4381, %v4396, %v4397
    %v4399 = vrot.slane %v4394, 4
    %v4400 = vrot.slane %v4378, 7
    %v4401 = vsel %vm4381, %v4399, %v4400
    %4410 = vst [vmem:[#allocation2] sm:$0xee] %v4382
    %vm4411 = vcmask 1043457
    %vm4412 = vcmask 523269
    %vm4413 = vmor %vm4412, %vm4411
    %4414 = vst.msk [vmem:[#allocation2 + $0x8] sm:$0xee] %vm4413, %v4383
    %4415 = vst [vmem:[#allocation2 + $0x10] sm:$0xff] %v4386
    %vm4416 = vcmask 1043456
    %vm4417 = vcmask 523268
    %vm4418 = vmor %vm4417, %vm4416
    %4419 = vst.msk [vmem:[#allocation2 + $0x18] sm:$0xff] %vm4418, %v4389
    %4420 = vst [vmem:[#allocation2 + $0x20] sm:$0xff] %v4392
    %4421 = vst.msk [vmem:[#allocation2 + $0x28] sm:$0xff] %vm4418, %v4395
    %4422 = vst [vmem:[#allocation2 + $0x30] sm:$0x77] %v4398
    %vm4423 = vcmask 1042432
    %vm4424 = vcmask 522244
    %vm4425 = vmor %vm4424, %vm4423
    %4426 = vst.msk [vmem:[#allocation2 + $0x38] sm:$0x77] %vm4425, %v4401
    %v4427 = vld [vmem:[#allocation2] sm:$0xff]
    %v4428 = vld [vmem:[#allocation2 + $0x8] sm:$0xff]
    %v4429 = vld [vmem:[#allocation2 + $0x10] sm:$0xff]
    %v4430 = vld [vmem:[#allocation2 + $0x18] sm:$0xff]
    %v4431 = vld [vmem:[#allocation2 + $0x20] sm:$0xff]
    %v4432 = vld [vmem:[#allocation2 + $0x28] sm:$0xff]
    %v4433 = vld [vmem:[#allocation2 + $0x30] sm:$0x33]
    %v4434 = vld [vmem:[#allocation2 + $0x38] sm:$0x33]
    %v4435 = vld [vmem:[%s4] sm:$0xff]
    %v4436 = vld [vmem:[%s4 + $0x8] sm:$0xff]
    %v4437 = vld [vmem:[%s4 + $0x10] sm:$0xff]
    %v4438 = vld [vmem:[%s4 + $0x18] sm:$0xf]
    %v4439 = vld [vmem:[%s4 + $0x1c] sm:$0xff]
    %v4440 = vld [vmem:[%s4 + $0x24] sm:$0xff]
    %v4441 = vld [vmem:[%s4 + $0x2c] sm:$0xff]
    %v4442 = vld [vmem:[%s4 + $0x34] sm:$0xf]
    %v4443 = vld [vmem:[%s4 + $0x38] sm:$0xff]
    %v4444 = vld [vmem:[%s4 + $0x40] sm:$0xff]
    %v4445 = vld [vmem:[%s4 + $0x48] sm:$0xff]
    %v4446 = vld [vmem:[%s4 + $0x50] sm:$0xf]
    %v4447 = vld [vmem:[%s4 + $0x54] sm:$0xff]
    %v4448 = vld [vmem:[%s4 + $0x5c] sm:$0xff]
    %v4449 = vld [vmem:[%s4 + $0x64] sm:$0xff]
    %v4450 = vld [vmem:[%s4 + $0x6c] sm:$0xf]
    %v4451 = vld [vmem:[%s4 + $0x70] sm:$0xff]
    %v4452 = vld [vmem:[%s4 + $0x78] sm:$0xff]
    %v4453 = vld [vmem:[%s4 + $0x80] sm:$0xff]
    %v4454 = vld [vmem:[%s4 + $0x88] sm:$0xf]
    %v4455 = vld [vmem:[%s4 + $0x8c] sm:$0xff]
    %v4456 = vld [vmem:[%s4 + $0x94] sm:$0xff]
    %v4457 = vld [vmem:[%s4 + $0x9c] sm:$0xff]
    %v4458 = vld [vmem:[%s4 + $0xa4] sm:$0xf]
    %v4459 = vld [vmem:[%s4 + $0xa8] sm:$0xff]
    %v4460 = vld [vmem:[%s4 + $0xb0] sm:$0xff]
    %v4461 = vld [vmem:[%s4 + $0xb8] sm:$0xff]
    %v4462 = vld [vmem:[%s4 + $0xc0] sm:$0xf]
    %v4463 = vld [vmem:[%s4 + $0xc4] sm:$0xff]
    %v4464 = vld [vmem:[%s4 + $0xcc] sm:$0xff]
    %v4465 = vld [vmem:[%s4 + $0xd4] sm:$0xff]
    %v4466 = vld [vmem:[%s4 + $0xdc] sm:$0xf]
    %v4467 = vld [vmem:[%s4 + $0xe0] sm:$0xff]
    %v4468 = vld [vmem:[%s4 + $0xe8] sm:$0xff]
    %v4469 = vld [vmem:[%s4 + $0xf0] sm:$0xff]
    %v4470 = vld [vmem:[%s4 + $0xf8] sm:$0xf]
    %v4471 = vld [vmem:[%s4 + $0xfc] sm:$0xff]
    %v4472 = vld [vmem:[%s4 + $0x104] sm:$0xff]
    %v4473 = vld [vmem:[%s4 + $0x10c] sm:$0xff]
    %v4474 = vld [vmem:[%s4 + $0x114] sm:$0xf]
    %v4475 = vld [vmem:[%s4 + $0x118] sm:$0xff]
    %v4476 = vld [vmem:[%s4 + $0x120] sm:$0xff]
    %v4477 = vld [vmem:[%s4 + $0x128] sm:$0xff]
    %v4478 = vld [vmem:[%s4 + $0x130] sm:$0xf]
    %v4479 = vld [vmem:[%s4 + $0x134] sm:$0xff]
    %v4480 = vld [vmem:[%s4 + $0x13c] sm:$0xff]
    %v4481 = vld [vmem:[%s4 + $0x144] sm:$0xff]
    %v4482 = vld [vmem:[%s4 + $0x14c] sm:$0xf]
    %v4483 = vld [vmem:[%s4 + $0x150] sm:$0xff]
    %v4484 = vld [vmem:[%s4 + $0x158] sm:$0xff]
    %v4485 = vld [vmem:[%s4 + $0x160] sm:$0xff]
    %v4486 = vld [vmem:[%s4 + $0x168] sm:$0xf]
    %v4487 = vld [vmem:[%s4 + $0x16c] sm:$0xff]
    %v4488 = vld [vmem:[%s4 + $0x174] sm:$0xff]
    %v4489 = vld [vmem:[%s4 + $0x17c] sm:$0xff]
    %v4490 = vld [vmem:[%s4 + $0x184] sm:$0xf]
    %v4491 = vld [vmem:[%s4 + $0x188] sm:$0xff]
    %v4492 = vld [vmem:[%s4 + $0x190] sm:$0xff]
    %v4493 = vld [vmem:[%s4 + $0x198] sm:$0xff]
    %v4494 = vld [vmem:[%s4 + $0x1a0] sm:$0xf]
    %v4495 = vld [vmem:[%s4 + $0x1a4] sm:$0xff]
    %v4496 = vld [vmem:[%s4 + $0x1ac] sm:$0xff]
    %v4497 = vld [vmem:[%s4 + $0x1b4] sm:$0xff]
    %v4498 = vld [vmem:[%s4 + $0x1bc] sm:$0xf]
    %v4499 = vld [vmem:[%s4 + $0x1c0] sm:$0xff]
    %v4500 = vld [vmem:[%s4 + $0x1c8] sm:$0xff]
    %v4501 = vld [vmem:[%s4 + $0x1d0] sm:$0xff]
    %v4502 = vld [vmem:[%s4 + $0x1d8] sm:$0xf]
    %v4503 = vld [vmem:[%s4 + $0x1dc] sm:$0xff]
    %v4504 = vld [vmem:[%s4 + $0x1e4] sm:$0xff]
    %v4505 = vld [vmem:[%s4 + $0x1ec] sm:$0xff]
    %v4506 = vld [vmem:[%s4 + $0x1f4] sm:$0xf]
    %v4507 = vld [vmem:[%s4 + $0x1f8] sm:$0xff]
    %v4508 = vld [vmem:[%s4 + $0x200] sm:$0xff]
    %v4509 = vld [vmem:[%s4 + $0x208] sm:$0xff]
    %v4510 = vld [vmem:[%s4 + $0x210] sm:$0xf]
    %v4511 = vld [vmem:[%s4 + $0x214] sm:$0xff]
    %v4512 = vld [vmem:[%s4 + $0x21c] sm:$0xff]
    %v4513 = vld [vmem:[%s4 + $0x224] sm:$0xff]
    %v4514 = vld [vmem:[%s4 + $0x22c] sm:$0xf]
    %v4515 = vld [vmem:[%s4 + $0x230] sm:$0xff]
    %v4516 = vld [vmem:[%s4 + $0x238] sm:$0xff]
    %v4517 = vld [vmem:[%s4 + $0x240] sm:$0xff]
    %v4518 = vld [vmem:[%s4 + $0x248] sm:$0xf]
    %v4519 = vld [vmem:[%s4 + $0x24c] sm:$0xff]
    %v4520 = vld [vmem:[%s4 + $0x254] sm:$0xff]
    %v4521 = vld [vmem:[%s4 + $0x25c] sm:$0xff]
    %v4522 = vld [vmem:[%s4 + $0x264] sm:$0xf]
    %v4523 = vld [vmem:[%s4 + $0x268] sm:$0xff]
    %v4524 = vld [vmem:[%s4 + $0x270] sm:$0xff]
    %v4525 = vld [vmem:[%s4 + $0x278] sm:$0xff]
    %v4526 = vld [vmem:[%s4 + $0x280] sm:$0xf]
    %v4527 = vld [vmem:[%s4 + $0x284] sm:$0xff]
    %v4528 = vld [vmem:[%s4 + $0x28c] sm:$0xff]
    %v4529 = vld [vmem:[%s4 + $0x294] sm:$0xff]
    %v4530 = vld [vmem:[%s4 + $0x29c] sm:$0xf]
    %v4531 = vld [vmem:[%s4 + $0x2a0] sm:$0xff]
    %v4532 = vld [vmem:[%s4 + $0x2a8] sm:$0xff]
    %v4533 = vld [vmem:[%s4 + $0x2b0] sm:$0xff]
    %v4534 = vld [vmem:[%s4 + $0x2b8] sm:$0xf]
    %v4535 = vld [vmem:[%s4 + $0x2bc] sm:$0xff]
    %v4536 = vld [vmem:[%s4 + $0x2c4] sm:$0xff]
    %v4537 = vld [vmem:[%s4 + $0x2cc] sm:$0xff]
    %v4538 = vld [vmem:[%s4 + $0x2d4] sm:$0xf]
    %v4539 = vld [vmem:[%s4 + $0x2d8] sm:$0xff]
    %v4540 = vld [vmem:[%s4 + $0x2e0] sm:$0xff]
    %v4541 = vld [vmem:[%s4 + $0x2e8] sm:$0xff]
    %v4542 = vld [vmem:[%s4 + $0x2f0] sm:$0xf]
    %v4543 = vld [vmem:[%s4 + $0x2f4] sm:$0xff]
    %v4544 = vld [vmem:[%s4 + $0x2fc] sm:$0xff]
    %v4545 = vld [vmem:[%s4 + $0x304] sm:$0xff]
    %v4546 = vld [vmem:[%s4 + $0x30c] sm:$0xf]
    %v4547 = vld [vmem:[%s4 + $0x310] sm:$0xff]
    %v4548 = vld [vmem:[%s4 + $0x318] sm:$0xff]
    %v4549 = vld [vmem:[%s4 + $0x320] sm:$0xff]
    %v4550 = vld [vmem:[%s4 + $0x328] sm:$0xf]
    %v4551 = vld [vmem:[%s4 + $0x32c] sm:$0xff]
    %v4552 = vld [vmem:[%s4 + $0x334] sm:$0xff]
    %v4553 = vld [vmem:[%s4 + $0x33c] sm:$0xff]
    %v4554 = vld [vmem:[%s4 + $0x344] sm:$0xf]
    %v4555 = vld [vmem:[%s4 + $0x348] sm:$0xff]
    %v4556 = vld [vmem:[%s4 + $0x350] sm:$0xff]
    %v4557 = vld [vmem:[%s4 + $0x358] sm:$0xff]
    %v4558 = vld [vmem:[%s4 + $0x360] sm:$0xf]
    %v4559 = vld [vmem:[%s4 + $0x364] sm:$0xff]
    %v4560 = vld [vmem:[%s4 + $0x36c] sm:$0xff]
    %v4561 = vld [vmem:[%s4 + $0x374] sm:$0xff]
    %v4562 = vld [vmem:[%s4 + $0x37c] sm:$0xf]
    %v4563 = vld [vmem:[%s4 + $0x380] sm:$0xff]
    %v4564 = vld [vmem:[%s4 + $0x388] sm:$0xff]
    %v4565 = vld [vmem:[%s4 + $0x390] sm:$0xff]
    %v4566 = vld [vmem:[%s4 + $0x398] sm:$0xf]
    %v4567 = vld [vmem:[%s4 + $0x39c] sm:$0xff]
    %v4568 = vld [vmem:[%s4 + $0x3a4] sm:$0xff]
    %v4569 = vld [vmem:[%s4 + $0x3ac] sm:$0xff]
    %v4570 = vld [vmem:[%s4 + $0x3b4] sm:$0xf]
    %v4571 = vld [vmem:[%s4 + $0x3b8] sm:$0xff]
    %v4572 = vld [vmem:[%s4 + $0x3c0] sm:$0xff]
    %v4573 = vld [vmem:[%s4 + $0x3c8] sm:$0xff]
    %v4574 = vld [vmem:[%s4 + $0x3d0] sm:$0xf]
    %v4575 = vld [vmem:[%s4 + $0x3d4] sm:$0xff]
    %v4576 = vld [vmem:[%s4 + $0x3dc] sm:$0xff]
    %v4577 = vld [vmem:[%s4 + $0x3e4] sm:$0xff]
    %v4578 = vld [vmem:[%s4 + $0x3ec] sm:$0xf]
    %v4579 = vld [vmem:[%s4 + $0x3f0] sm:$0xff]
    %v4580 = vld [vmem:[%s4 + $0x3f8] sm:$0xff]
    %v4581 = vld [vmem:[%s4 + $0x400] sm:$0xff]
    %v4582 = vld [vmem:[%s4 + $0x408] sm:$0xf]
    %v4583 = vld [vmem:[%s4 + $0x40c] sm:$0xff]
    %v4584 = vld [vmem:[%s4 + $0x414] sm:$0xff]
    %v4585 = vld [vmem:[%s4 + $0x41c] sm:$0xff]
    %v4586 = vld [vmem:[%s4 + $0x424] sm:$0xf]
    %v4587 = vld [vmem:[%s4 + $0x428] sm:$0xff]
    %v4588 = vld [vmem:[%s4 + $0x430] sm:$0xff]
    %v4589 = vld [vmem:[%s4 + $0x438] sm:$0xff]
    %v4590 = vld [vmem:[%s4 + $0x440] sm:$0xf]
    %v4591 = vld [vmem:[%s4 + $0x444] sm:$0xff]
    %v4592 = vld [vmem:[%s4 + $0x44c] sm:$0xff]
    %v4593 = vld [vmem:[%s4 + $0x454] sm:$0xff]
    %v4594 = vld [vmem:[%s4 + $0x45c] sm:$0xf]
    %v4595 = vld [vmem:[%s4 + $0x460] sm:$0xff]
    %v4596 = vld [vmem:[%s4 + $0x468] sm:$0xff]
    %v4597 = vld [vmem:[%s4 + $0x470] sm:$0xff]
    %v4598 = vld [vmem:[%s4 + $0x478] sm:$0xf]
    %v4599 = vld [vmem:[%s4 + $0x47c] sm:$0xff]
    %v4600 = vld [vmem:[%s4 + $0x484] sm:$0xff]
    %v4601 = vld [vmem:[%s4 + $0x48c] sm:$0xff]
    %v4602 = vld [vmem:[%s4 + $0x494] sm:$0xf]
    %v4603 = vld [vmem:[%s4 + $0x498] sm:$0xff]
    %v4604 = vld [vmem:[%s4 + $0x4a0] sm:$0xff]
    %v4605 = vld [vmem:[%s4 + $0x4a8] sm:$0xff]
    %v4606 = vld [vmem:[%s4 + $0x4b0] sm:$0xf]
    %v4607 = vld [vmem:[%s4 + $0x4b4] sm:$0xff]
    %v4608 = vld [vmem:[%s4 + $0x4bc] sm:$0xff]
    %v4609 = vld [vmem:[%s4 + $0x4c4] sm:$0xff]
    %v4610 = vld [vmem:[%s4 + $0x4cc] sm:$0xf]
    %v4611 = vld [vmem:[%s4 + $0x4d0] sm:$0xff]
    %v4612 = vld [vmem:[%s4 + $0x4d8] sm:$0xff]
    %v4613 = vld [vmem:[%s4 + $0x4e0] sm:$0xff]
    %v4614 = vld [vmem:[%s4 + $0x4e8] sm:$0xf]
    %v4615 = vld [vmem:[%s4 + $0x4ec] sm:$0xff]
    %v4616 = vld [vmem:[%s4 + $0x4f4] sm:$0xff]
    %v4617 = vld [vmem:[%s4 + $0x4fc] sm:$0xff]
    %v4618 = vld [vmem:[%s4 + $0x504] sm:$0xf]
    %v4619 = vld [vmem:[%s4 + $0x508] sm:$0xff]
    %v4620 = vld [vmem:[%s4 + $0x510] sm:$0xff]
    %v4621 = vld [vmem:[%s4 + $0x518] sm:$0xff]
    %v4622 = vld [vmem:[%s4 + $0x520] sm:$0xf]
    %v4623 = vld [vmem:[%s4 + $0x524] sm:$0xff]
    %v4624 = vld [vmem:[%s4 + $0x52c] sm:$0xff]
    %v4625 = vld [vmem:[%s4 + $0x534] sm:$0xff]
    %v4626 = vld [vmem:[%s4 + $0x53c] sm:$0xf]
    %v4627 = vld [vmem:[%s4 + $0x540] sm:$0xff]
    %v4628 = vld [vmem:[%s4 + $0x548] sm:$0xff]
    %v4629 = vld [vmem:[%s4 + $0x550] sm:$0xff]
    %v4630 = vld [vmem:[%s4 + $0x558] sm:$0xf]
    %v4631 = vld [vmem:[%s4 + $0x55c] sm:$0xff]
    %v4632 = vld [vmem:[%s4 + $0x564] sm:$0xff]
    %v4633 = vld [vmem:[%s4 + $0x56c] sm:$0xff]
    %v4634 = vld [vmem:[%s4 + $0x574] sm:$0xf]
    %v4635 = vld [vmem:[%s4 + $0x578] sm:$0xff]
    %v4636 = vld [vmem:[%s4 + $0x580] sm:$0xff]
    %v4637 = vld [vmem:[%s4 + $0x588] sm:$0xff]
    %v4638 = vld [vmem:[%s4 + $0x590] sm:$0xf]
    %v4639 = vld [vmem:[%s4 + $0x594] sm:$0xff]
    %v4640 = vld [vmem:[%s4 + $0x59c] sm:$0xff]
    %v4641 = vld [vmem:[%s4 + $0x5a4] sm:$0xff]
    %v4642 = vld [vmem:[%s4 + $0x5ac] sm:$0xf]
    %v4643 = vld [vmem:[%s4 + $0x5b0] sm:$0xff]
    %v4644 = vld [vmem:[%s4 + $0x5b8] sm:$0xff]
    %v4645 = vld [vmem:[%s4 + $0x5c0] sm:$0xff]
    %v4646 = vld [vmem:[%s4 + $0x5c8] sm:$0xf]
    %v4647 = vld [vmem:[%s4 + $0x5cc] sm:$0xff]
    %v4648 = vld [vmem:[%s4 + $0x5d4] sm:$0xff]
    %v4649 = vld [vmem:[%s4 + $0x5dc] sm:$0xff]
    %v4650 = vld [vmem:[%s4 + $0x5e4] sm:$0xf]
    %v4651 = vld [vmem:[%s4 + $0x5e8] sm:$0xff]
    %v4652 = vld [vmem:[%s4 + $0x5f0] sm:$0xff]
    %v4653 = vld [vmem:[%s4 + $0x5f8] sm:$0xff]
    %v4654 = vld [vmem:[%s4 + $0x600] sm:$0xf]
    %v4655 = vld [vmem:[%s4 + $0x604] sm:$0xff]
    %v4656 = vld [vmem:[%s4 + $0x60c] sm:$0xff]
    %v4657 = vld [vmem:[%s4 + $0x614] sm:$0xff]
    %v4658 = vld [vmem:[%s4 + $0x61c] sm:$0xf]
    %v4659 = vld [vmem:[%s4 + $0x620] sm:$0xff]
    %v4660 = vld [vmem:[%s4 + $0x628] sm:$0xff]
    %v4661 = vld [vmem:[%s4 + $0x630] sm:$0xff]
    %v4662 = vld [vmem:[%s4 + $0x638] sm:$0xf]
    %v4663 = vld [vmem:[%s4 + $0x63c] sm:$0xff]
    %v4664 = vld [vmem:[%s4 + $0x644] sm:$0xff]
    %v4665 = vld [vmem:[%s4 + $0x64c] sm:$0xff]
    %v4666 = vld [vmem:[%s4 + $0x654] sm:$0xf]
    %v4667 = vld [vmem:[%s4 + $0x658] sm:$0xff]
    %v4668 = vld [vmem:[%s4 + $0x660] sm:$0xff]
    %v4669 = vld [vmem:[%s4 + $0x668] sm:$0xff]
    %v4670 = vld [vmem:[%s4 + $0x670] sm:$0xf]
    %v4671 = vld [vmem:[%s4 + $0x674] sm:$0xff]
    %v4672 = vld [vmem:[%s4 + $0x67c] sm:$0xff]
    %v4673 = vld [vmem:[%s4 + $0x684] sm:$0xff]
    %v4674 = vld [vmem:[%s4 + $0x68c] sm:$0xf]
    %v4675 = vld [vmem:[%s4 + $0x690] sm:$0xff]
    %v4676 = vld [vmem:[%s4 + $0x698] sm:$0xff]
    %v4677 = vld [vmem:[%s4 + $0x6a0] sm:$0xff]
    %v4678 = vld [vmem:[%s4 + $0x6a8] sm:$0xf]
    %v4679 = vld [vmem:[%s4 + $0x6ac] sm:$0xff]
    %v4680 = vld [vmem:[%s4 + $0x6b4] sm:$0xff]
    %v4681 = vld [vmem:[%s4 + $0x6bc] sm:$0xff]
    %v4682 = vld [vmem:[%s4 + $0x6c4] sm:$0xf]
    %v4683 = vld [vmem:[%s4 + $0x6c8] sm:$0xff]
    %v4684 = vld [vmem:[%s4 + $0x6d0] sm:$0xff]
    %v4685 = vld [vmem:[%s4 + $0x6d8] sm:$0xff]
    %v4686 = vld [vmem:[%s4 + $0x6e0] sm:$0xf]
    %v4687 = vld [vmem:[%s4 + $0x6e4] sm:$0xff]
    %v4688 = vld [vmem:[%s4 + $0x6ec] sm:$0xff]
    %v4689 = vld [vmem:[%s4 + $0x6f4] sm:$0xff]
    %v4690 = vld [vmem:[%s4 + $0x6fc] sm:$0xf]
    %v4691 = vld [vmem:[#allocation2] sm:$0xee]
    %v4692 = vld [vmem:[#allocation2 + $0x8] sm:$0xee]
    %v4693 = vld [vmem:[#allocation2 + $0x30] sm:$0x77]
    %v4694 = vld [vmem:[#allocation2 + $0x38] sm:$0x77]
    %s4695 = scalar_lea.vmem %s4, 1792
    %v4696 = vld [vmem:[%s4695] sm:$0xff]
    %v4697 = vld [vmem:[%s4695 + $0x8] sm:$0xff]
    %v4698 = vld [vmem:[%s4695 + $0x10] sm:$0xff]
    %v4699 = vld [vmem:[%s4695 + $0x18] sm:$0xf]
    %v4700 = vld [vmem:[%s4695 + $0x1c] sm:$0xff]
    %v4701 = vld [vmem:[%s4695 + $0x24] sm:$0xff]
    %v4702 = vld [vmem:[%s4695 + $0x2c] sm:$0xff]
    %v4703 = vld [vmem:[%s4695 + $0x34] sm:$0xf]
    %v4704 = vld [vmem:[%s4695 + $0x38] sm:$0xff]
    %v4705 = vld [vmem:[%s4695 + $0x40] sm:$0xff]
    %v4706 = vld [vmem:[%s4695 + $0x48] sm:$0xff]
    %v4707 = vld [vmem:[%s4695 + $0x50] sm:$0xf]
    %v4708 = vld [vmem:[%s4695 + $0x54] sm:$0xff]
    %v4709 = vld [vmem:[%s4695 + $0x5c] sm:$0xff]
    %v4710 = vld [vmem:[%s4695 + $0x64] sm:$0xff]
    %v4711 = vld [vmem:[%s4695 + $0x6c] sm:$0xf]
    %v4712 = vld [vmem:[%s4695 + $0x70] sm:$0xff]
    %v4713 = vld [vmem:[%s4695 + $0x78] sm:$0xff]
    %v4714 = vld [vmem:[%s4695 + $0x80] sm:$0xff]
    %v4715 = vld [vmem:[%s4695 + $0x88] sm:$0xf]
    %v4716 = vld [vmem:[%s4695 + $0x8c] sm:$0xff]
    %v4717 = vld [vmem:[%s4695 + $0x94] sm:$0xff]
    %v4718 = vld [vmem:[%s4695 + $0x9c] sm:$0xff]
    %v4719 = vld [vmem:[%s4695 + $0xa4] sm:$0xf]
    %v4720 = vld [vmem:[%s4695 + $0xa8] sm:$0xff]
    %v4721 = vld [vmem:[%s4695 + $0xb0] sm:$0xff]
    %v4722 = vld [vmem:[%s4695 + $0xb8] sm:$0xff]
    %v4723 = vld [vmem:[%s4695 + $0xc0] sm:$0xf]
    %v4724 = vld [vmem:[%s4695 + $0xc4] sm:$0xff]
    %v4725 = vld [vmem:[%s4695 + $0xcc] sm:$0xff]
    %v4726 = vld [vmem:[%s4695 + $0xd4] sm:$0xff]
    %v4727 = vld [vmem:[%s4695 + $0xdc] sm:$0xf]
    %v4728 = vld [vmem:[%s4695 + $0xe0] sm:$0xff]
    %v4729 = vld [vmem:[%s4695 + $0xe8] sm:$0xff]
    %v4730 = vld [vmem:[%s4695 + $0xf0] sm:$0xff]
    %v4731 = vld [vmem:[%s4695 + $0xf8] sm:$0xf]
    %v4732 = vld [vmem:[%s4695 + $0xfc] sm:$0xff]
    %v4733 = vld [vmem:[%s4695 + $0x104] sm:$0xff]
    %v4734 = vld [vmem:[%s4695 + $0x10c] sm:$0xff]
    %v4735 = vld [vmem:[%s4695 + $0x114] sm:$0xf]
    %v4736 = vld [vmem:[%s4695 + $0x118] sm:$0xff]
    %v4737 = vld [vmem:[%s4695 + $0x120] sm:$0xff]
    %v4738 = vld [vmem:[%s4695 + $0x128] sm:$0xff]
    %v4739 = vld [vmem:[%s4695 + $0x130] sm:$0xf]
    %v4740 = vld [vmem:[%s4695 + $0x134] sm:$0xff]
    %v4741 = vld [vmem:[%s4695 + $0x13c] sm:$0xff]
    %v4742 = vld [vmem:[%s4695 + $0x144] sm:$0xff]
    %v4743 = vld [vmem:[%s4695 + $0x14c] sm:$0xf]
    %v4744 = vld [vmem:[%s4695 + $0x150] sm:$0xff]
    %v4745 = vld [vmem:[%s4695 + $0x158] sm:$0xff]
    %v4746 = vld [vmem:[%s4695 + $0x160] sm:$0xff]
    %v4747 = vld [vmem:[%s4695 + $0x168] sm:$0xf]
    %v4748 = vld [vmem:[%s4695 + $0x16c] sm:$0xff]
    %v4749 = vld [vmem:[%s4695 + $0x174] sm:$0xff]
    %v4750 = vld [vmem:[%s4695 + $0x17c] sm:$0xff]
    %v4751 = vld [vmem:[%s4695 + $0x184] sm:$0xf]
    %v4752 = vld [vmem:[%s4695 + $0x188] sm:$0xff]
    %v4753 = vld [vmem:[%s4695 + $0x190] sm:$0xff]
    %v4754 = vld [vmem:[%s4695 + $0x198] sm:$0xff]
    %v4755 = vld [vmem:[%s4695 + $0x1a0] sm:$0xf]
    %v4756 = vld [vmem:[%s4695 + $0x1a4] sm:$0xff]
    %v4757 = vld [vmem:[%s4695 + $0x1ac] sm:$0xff]
    %v4758 = vld [vmem:[%s4695 + $0x1b4] sm:$0xff]
    %v4759 = vld [vmem:[%s4695 + $0x1bc] sm:$0xf]
    %v4760 = vld [vmem:[%s4695 + $0x1c0] sm:$0xff]
    %v4761 = vld [vmem:[%s4695 + $0x1c8] sm:$0xff]
    %v4762 = vld [vmem:[%s4695 + $0x1d0] sm:$0xff]
    %v4763 = vld [vmem:[%s4695 + $0x1d8] sm:$0xf]
    %v4764 = vld [vmem:[%s4695 + $0x1dc] sm:$0xff]
    %v4765 = vld [vmem:[%s4695 + $0x1e4] sm:$0xff]
    %v4766 = vld [vmem:[%s4695 + $0x1ec] sm:$0xff]
    %v4767 = vld [vmem:[%s4695 + $0x1f4] sm:$0xf]
    %v4768 = vld [vmem:[%s4695 + $0x1f8] sm:$0xff]
    %v4769 = vld [vmem:[%s4695 + $0x200] sm:$0xff]
    %v4770 = vld [vmem:[%s4695 + $0x208] sm:$0xff]
    %v4771 = vld [vmem:[%s4695 + $0x210] sm:$0xf]
    %v4772 = vld [vmem:[%s4695 + $0x214] sm:$0xff]
    %v4773 = vld [vmem:[%s4695 + $0x21c] sm:$0xff]
    %v4774 = vld [vmem:[%s4695 + $0x224] sm:$0xff]
    %v4775 = vld [vmem:[%s4695 + $0x22c] sm:$0xf]
    %v4776 = vld [vmem:[%s4695 + $0x230] sm:$0xff]
    %v4777 = vld [vmem:[%s4695 + $0x238] sm:$0xff]
    %v4778 = vld [vmem:[%s4695 + $0x240] sm:$0xff]
    %v4779 = vld [vmem:[%s4695 + $0x248] sm:$0xf]
    %v4780 = vld [vmem:[%s4695 + $0x24c] sm:$0xff]
    %v4781 = vld [vmem:[%s4695 + $0x254] sm:$0xff]
    %v4782 = vld [vmem:[%s4695 + $0x25c] sm:$0xff]
    %v4783 = vld [vmem:[%s4695 + $0x264] sm:$0xf]
    %v4784 = vld [vmem:[%s4695 + $0x268] sm:$0xff]
    %v4785 = vld [vmem:[%s4695 + $0x270] sm:$0xff]
    %v4786 = vld [vmem:[%s4695 + $0x278] sm:$0xff]
    %v4787 = vld [vmem:[%s4695 + $0x280] sm:$0xf]
    %v4788 = vld [vmem:[%s4695 + $0x284] sm:$0xff]
    %v4789 = vld [vmem:[%s4695 + $0x28c] sm:$0xff]
    %v4790 = vld [vmem:[%s4695 + $0x294] sm:$0xff]
    %v4791 = vld [vmem:[%s4695 + $0x29c] sm:$0xf]
    %v4792 = vld [vmem:[%s4695 + $0x2a0] sm:$0xff]
    %v4793 = vld [vmem:[%s4695 + $0x2a8] sm:$0xff]
    %v4794 = vld [vmem:[%s4695 + $0x2b0] sm:$0xff]
    %v4795 = vld [vmem:[%s4695 + $0x2b8] sm:$0xf]
    %v4796 = vld [vmem:[%s4695 + $0x2bc] sm:$0xff]
    %v4797 = vld [vmem:[%s4695 + $0x2c4] sm:$0xff]
    %v4798 = vld [vmem:[%s4695 + $0x2cc] sm:$0xff]
    %v4799 = vld [vmem:[%s4695 + $0x2d4] sm:$0xf]
    %v4800 = vld [vmem:[%s4695 + $0x2d8] sm:$0xff]
    %v4801 = vld [vmem:[%s4695 + $0x2e0] sm:$0xff]
    %v4802 = vld [vmem:[%s4695 + $0x2e8] sm:$0xff]
    %v4803 = vld [vmem:[%s4695 + $0x2f0] sm:$0xf]
    %v4804 = vld [vmem:[%s4695 + $0x2f4] sm:$0xff]
    %v4805 = vld [vmem:[%s4695 + $0x2fc] sm:$0xff]
    %v4806 = vld [vmem:[%s4695 + $0x304] sm:$0xff]
    %v4807 = vld [vmem:[%s4695 + $0x30c] sm:$0xf]
    %v4808 = vld [vmem:[%s4695 + $0x310] sm:$0xff]
    %v4809 = vld [vmem:[%s4695 + $0x318] sm:$0xff]
    %v4810 = vld [vmem:[%s4695 + $0x320] sm:$0xff]
    %v4811 = vld [vmem:[%s4695 + $0x328] sm:$0xf]
    %v4812 = vld [vmem:[%s4695 + $0x32c] sm:$0xff]
    %v4813 = vld [vmem:[%s4695 + $0x334] sm:$0xff]
    %v4814 = vld [vmem:[%s4695 + $0x33c] sm:$0xff]
    %v4815 = vld [vmem:[%s4695 + $0x344] sm:$0xf]
    %v4816 = vld [vmem:[%s4695 + $0x348] sm:$0xff]
    %v4817 = vld [vmem:[%s4695 + $0x350] sm:$0xff]
    %v4818 = vld [vmem:[%s4695 + $0x358] sm:$0xff]
    %v4819 = vld [vmem:[%s4695 + $0x360] sm:$0xf]
    %v4820 = vld [vmem:[%s4695 + $0x364] sm:$0xff]
    %v4821 = vld [vmem:[%s4695 + $0x36c] sm:$0xff]
    %v4822 = vld [vmem:[%s4695 + $0x374] sm:$0xff]
    %v4823 = vld [vmem:[%s4695 + $0x37c] sm:$0xf]
    %v4824 = vld [vmem:[%s4695 + $0x380] sm:$0xff]
    %v4825 = vld [vmem:[%s4695 + $0x388] sm:$0xff]
    %v4826 = vld [vmem:[%s4695 + $0x390] sm:$0xff]
    %v4827 = vld [vmem:[%s4695 + $0x398] sm:$0xf]
    %v4828 = vld [vmem:[%s4695 + $0x39c] sm:$0xff]
    %v4829 = vld [vmem:[%s4695 + $0x3a4] sm:$0xff]
    %v4830 = vld [vmem:[%s4695 + $0x3ac] sm:$0xff]
    %v4831 = vld [vmem:[%s4695 + $0x3b4] sm:$0xf]
    %v4832 = vld [vmem:[%s4695 + $0x3b8] sm:$0xff]
    %v4833 = vld [vmem:[%s4695 + $0x3c0] sm:$0xff]
    %v4834 = vld [vmem:[%s4695 + $0x3c8] sm:$0xff]
    %v4835 = vld [vmem:[%s4695 + $0x3d0] sm:$0xf]
    %v4836 = vld [vmem:[%s4695 + $0x3d4] sm:$0xff]
    %v4837 = vld [vmem:[%s4695 + $0x3dc] sm:$0xff]
    %v4838 = vld [vmem:[%s4695 + $0x3e4] sm:$0xff]
    %v4839 = vld [vmem:[%s4695 + $0x3ec] sm:$0xf]
    %v4840 = vld [vmem:[%s4695 + $0x3f0] sm:$0xff]
    %v4841 = vld [vmem:[%s4695 + $0x3f8] sm:$0xff]
    %v4842 = vld [vmem:[%s4695 + $0x400] sm:$0xff]
    %v4843 = vld [vmem:[%s4695 + $0x408] sm:$0xf]
    %v4844 = vld [vmem:[%s4695 + $0x40c] sm:$0xff]
    %v4845 = vld [vmem:[%s4695 + $0x414] sm:$0xff]
    %v4846 = vld [vmem:[%s4695 + $0x41c] sm:$0xff]
    %v4847 = vld [vmem:[%s4695 + $0x424] sm:$0xf]
    %v4848 = vld [vmem:[%s4695 + $0x428] sm:$0xff]
    %v4849 = vld [vmem:[%s4695 + $0x430] sm:$0xff]
    %v4850 = vld [vmem:[%s4695 + $0x438] sm:$0xff]
    %v4851 = vld [vmem:[%s4695 + $0x440] sm:$0xf]
    %v4852 = vld [vmem:[%s4695 + $0x444] sm:$0xff]
    %v4853 = vld [vmem:[%s4695 + $0x44c] sm:$0xff]
    %v4854 = vld [vmem:[%s4695 + $0x454] sm:$0xff]
    %v4855 = vld [vmem:[%s4695 + $0x45c] sm:$0xf]
    %v4856 = vld [vmem:[%s4695 + $0x460] sm:$0xff]
    %v4857 = vld [vmem:[%s4695 + $0x468] sm:$0xff]
    %v4858 = vld [vmem:[%s4695 + $0x470] sm:$0xff]
    %v4859 = vld [vmem:[%s4695 + $0x478] sm:$0xf]
    %v4860 = vld [vmem:[%s4695 + $0x47c] sm:$0xff]
    %v4861 = vld [vmem:[%s4695 + $0x484] sm:$0xff]
    %v4862 = vld [vmem:[%s4695 + $0x48c] sm:$0xff]
    %v4863 = vld [vmem:[%s4695 + $0x494] sm:$0xf]
    %v4864 = vld [vmem:[%s4695 + $0x498] sm:$0xff]
    %v4865 = vld [vmem:[%s4695 + $0x4a0] sm:$0xff]
    %v4866 = vld [vmem:[%s4695 + $0x4a8] sm:$0xff]
    %v4867 = vld [vmem:[%s4695 + $0x4b0] sm:$0xf]
    %v4868 = vld [vmem:[%s4695 + $0x4b4] sm:$0xff]
    %v4869 = vld [vmem:[%s4695 + $0x4bc] sm:$0xff]
    %v4870 = vld [vmem:[%s4695 + $0x4c4] sm:$0xff]
    %v4871 = vld [vmem:[%s4695 + $0x4cc] sm:$0xf]
    %v4872 = vld [vmem:[%s4695 + $0x4d0] sm:$0xff]
    %v4873 = vld [vmem:[%s4695 + $0x4d8] sm:$0xff]
    %v4874 = vld [vmem:[%s4695 + $0x4e0] sm:$0xff]
    %v4875 = vld [vmem:[%s4695 + $0x4e8] sm:$0xf]
    %v4876 = vld [vmem:[%s4695 + $0x4ec] sm:$0xff]
    %v4877 = vld [vmem:[%s4695 + $0x4f4] sm:$0xff]
    %v4878 = vld [vmem:[%s4695 + $0x4fc] sm:$0xff]
    %v4879 = vld [vmem:[%s4695 + $0x504] sm:$0xf]
    %v4880 = vld [vmem:[%s4695 + $0x508] sm:$0xff]
    %v4881 = vld [vmem:[%s4695 + $0x510] sm:$0xff]
    %v4882 = vld [vmem:[%s4695 + $0x518] sm:$0xff]
    %v4883 = vld [vmem:[%s4695 + $0x520] sm:$0xf]
    %v4884 = vld [vmem:[%s4695 + $0x524] sm:$0xff]
    %v4885 = vld [vmem:[%s4695 + $0x52c] sm:$0xff]
    %v4886 = vld [vmem:[%s4695 + $0x534] sm:$0xff]
    %v4887 = vld [vmem:[%s4695 + $0x53c] sm:$0xf]
    %v4888 = vld [vmem:[%s4695 + $0x540] sm:$0xff]
    %v4889 = vld [vmem:[%s4695 + $0x548] sm:$0xff]
    %v4890 = vld [vmem:[%s4695 + $0x550] sm:$0xff]
    %v4891 = vld [vmem:[%s4695 + $0x558] sm:$0xf]
    %v4892 = vld [vmem:[%s4695 + $0x55c] sm:$0xff]
    %v4893 = vld [vmem:[%s4695 + $0x564] sm:$0xff]
    %v4894 = vld [vmem:[%s4695 + $0x56c] sm:$0xff]
    %v4895 = vld [vmem:[%s4695 + $0x574] sm:$0xf]
    %v4896 = vld [vmem:[%s4695 + $0x578] sm:$0xff]
    %v4897 = vld [vmem:[%s4695 + $0x580] sm:$0xff]
    %v4898 = vld [vmem:[%s4695 + $0x588] sm:$0xff]
    %v4899 = vld [vmem:[%s4695 + $0x590] sm:$0xf]
    %v4900 = vld [vmem:[%s4695 + $0x594] sm:$0xff]
    %v4901 = vld [vmem:[%s4695 + $0x59c] sm:$0xff]
    %v4902 = vld [vmem:[%s4695 + $0x5a4] sm:$0xff]
    %v4903 = vld [vmem:[%s4695 + $0x5ac] sm:$0xf]
    %v4904 = vld [vmem:[%s4695 + $0x5b0] sm:$0xff]
    %v4905 = vld [vmem:[%s4695 + $0x5b8] sm:$0xff]
    %v4906 = vld [vmem:[%s4695 + $0x5c0] sm:$0xff]
    %v4907 = vld [vmem:[%s4695 + $0x5c8] sm:$0xf]
    %v4908 = vld [vmem:[%s4695 + $0x5cc] sm:$0xff]
    %v4909 = vld [vmem:[%s4695 + $0x5d4] sm:$0xff]
    %v4910 = vld [vmem:[%s4695 + $0x5dc] sm:$0xff]
    %v4911 = vld [vmem:[%s4695 + $0x5e4] sm:$0xf]
    %v4912 = vld [vmem:[%s4695 + $0x5e8] sm:$0xff]
    %v4913 = vld [vmem:[%s4695 + $0x5f0] sm:$0xff]
    %v4914 = vld [vmem:[%s4695 + $0x5f8] sm:$0xff]
    %v4915 = vld [vmem:[%s4695 + $0x600] sm:$0xf]
    %v4916 = vld [vmem:[%s4695 + $0x604] sm:$0xff]
    %v4917 = vld [vmem:[%s4695 + $0x60c] sm:$0xff]
    %v4918 = vld [vmem:[%s4695 + $0x614] sm:$0xff]
    %v4919 = vld [vmem:[%s4695 + $0x61c] sm:$0xf]
    %v4920 = vld [vmem:[%s4695 + $0x620] sm:$0xff]
    %v4921 = vld [vmem:[%s4695 + $0x628] sm:$0xff]
    %v4922 = vld [vmem:[%s4695 + $0x630] sm:$0xff]
    %v4923 = vld [vmem:[%s4695 + $0x638] sm:$0xf]
    %v4924 = vld [vmem:[%s4695 + $0x63c] sm:$0xff]
    %v4925 = vld [vmem:[%s4695 + $0x644] sm:$0xff]
    %v4926 = vld [vmem:[%s4695 + $0x64c] sm:$0xff]
    %v4927 = vld [vmem:[%s4695 + $0x654] sm:$0xf]
    %v4928 = vld [vmem:[%s4695 + $0x658] sm:$0xff]
    %v4929 = vld [vmem:[%s4695 + $0x660] sm:$0xff]
    %v4930 = vld [vmem:[%s4695 + $0x668] sm:$0xff]
    %v4931 = vld [vmem:[%s4695 + $0x670] sm:$0xf]
    %v4932 = vld [vmem:[%s4695 + $0x674] sm:$0xff]
    %v4933 = vld [vmem:[%s4695 + $0x67c] sm:$0xff]
    %v4934 = vld [vmem:[%s4695 + $0x684] sm:$0xff]
    %v4935 = vld [vmem:[%s4695 + $0x68c] sm:$0xf]
    %v4936 = vld [vmem:[%s4695 + $0x690] sm:$0xff]
    %v4937 = vld [vmem:[%s4695 + $0x698] sm:$0xff]
    %v4938 = vld [vmem:[%s4695 + $0x6a0] sm:$0xff]
    %v4939 = vld [vmem:[%s4695 + $0x6a8] sm:$0xf]
    %v4940 = vld [vmem:[%s4695 + $0x6ac] sm:$0xff]
    %v4941 = vld [vmem:[%s4695 + $0x6b4] sm:$0xff]
    %v4942 = vld [vmem:[%s4695 + $0x6bc] sm:$0xff]
    %v4943 = vld [vmem:[%s4695 + $0x6c4] sm:$0xf]
    %v4944 = vld [vmem:[%s4695 + $0x6c8] sm:$0xff]
    %v4945 = vld [vmem:[%s4695 + $0x6d0] sm:$0xff]
    %v4946 = vld [vmem:[%s4695 + $0x6d8] sm:$0xff]
    %v4947 = vld [vmem:[%s4695 + $0x6e0] sm:$0xf]
    %v4948 = vld [vmem:[%s4695 + $0x6e4] sm:$0xff]
    %v4949 = vld [vmem:[%s4695 + $0x6ec] sm:$0xff]
    %v4950 = vld [vmem:[%s4695 + $0x6f4] sm:$0xff]
    %v4951 = vld [vmem:[%s4695 + $0x6fc] sm:$0xf]
    %v4960 = vunpack.c.l.b16 %v4691
    %v4961 = vunpack.c.h.b16 %v4691
    %v4962 = vunpack.c.l.b16 %v4692
    %v4963 = vunpack.c.h.b16 %v4692
    %v4964 = vunpack.c.l.b16 %v4429
    %v4965 = vunpack.c.h.b16 %v4429
    %v4966 = vunpack.c.l.b16 %v4430
    %v4967 = vunpack.c.h.b16 %v4430
    %v4968 = vunpack.c.l.b16 %v4431
    %v4969 = vunpack.c.h.b16 %v4431
    %v4970 = vunpack.c.l.b16 %v4432
    %v4971 = vunpack.c.h.b16 %v4432
    %v4972 = vunpack.c.l.b16 %v4693
    %v4973 = vunpack.c.h.b16 %v4693
    %v4974 = vunpack.c.l.b16 %v4694
    %v4975 = vunpack.c.h.b16 %v4694
    %v4976 = vpack.c.b16 %v4964, %v4960
    %v4977 = vpack.c.b16 %v4965, %v4961
    %v4978 = vpack.c.b16 %v4966, %v4962
    %v4979 = vpack.c.b16 %v4967, %v4963
    %v4980 = vpack.c.b16 %v4972, %v4968
    %v4981 = vpack.c.b16 %v4973, %v4969
    %v4982 = vpack.c.b16 %v4974, %v4970
    %v4983 = vpack.c.b16 %v4975, %v4971
    %v4984 = vrot.slane %v4976, 1
    %v4985 = vrot.slane %v4980, 1
    %v4986 = vsel %vm102, %v4984, %v4985
    %v4987 = vrot.slane %v4977, 1
    %v4988 = vrot.slane %v4981, 1
    %v4989 = vsel %vm102, %v4987, %v4988
    %v4990 = vrot.slane %v4978, 1
    %v4991 = vrot.slane %v4982, 1
    %v4992 = vsel %vm102, %v4990, %v4991
    %v4993 = vrot.slane %v4979, 1
    %v4994 = vrot.slane %v4983, 1
    %v4995 = vsel %vm102, %v4993, %v4994
    %v5260 = vunpack.c.l.b16 %v4696
    %v5261 = vunpack.c.h.b16 %v4696
    %v5262 = vunpack.c.l.b16 %v4697
    %v5263 = vunpack.c.h.b16 %v4697
    %v5264 = vunpack.c.l.b16 %v4698
    %v5265 = vunpack.c.h.b16 %v4698
    %v5266 = vunpack.c.l.b16 %v4699
    %v5267 = vunpack.c.l.b16 %v4700
    %v5268 = vunpack.c.h.b16 %v4700
    %v5269 = vunpack.c.l.b16 %v4701
    %v5270 = vunpack.c.h.b16 %v4701
    %v5271 = vunpack.c.l.b16 %v4702
    %v5272 = vunpack.c.h.b16 %v4702
    %v5273 = vunpack.c.l.b16 %v4703
    %v5274 = vunpack.c.l.b16 %v4704
    %v5275 = vunpack.c.h.b16 %v4704
    %v5276 = vunpack.c.l.b16 %v4705
    %v5277 = vunpack.c.h.b16 %v4705
    %v5278 = vunpack.c.l.b16 %v4706
    %v5279 = vunpack.c.h.b16 %v4706
    %v5280 = vunpack.c.l.b16 %v4707
    %v5281 = vunpack.c.l.b16 %v4708
    %v5282 = vunpack.c.h.b16 %v4708
    %v5283 = vunpack.c.l.b16 %v4709
    %v5284 = vunpack.c.h.b16 %v4709
    %v5285 = vunpack.c.l.b16 %v4710
    %v5286 = vunpack.c.h.b16 %v4710
    %v5287 = vunpack.c.l.b16 %v4711
    %v5288 = vunpack.c.l.b16 %v4712
    %v5289 = vunpack.c.h.b16 %v4712
    %v5290 = vunpack.c.l.b16 %v4713
    %v5291 = vunpack.c.h.b16 %v4713
    %v5292 = vunpack.c.l.b16 %v4714
    %v5293 = vunpack.c.h.b16 %v4714
    %v5294 = vunpack.c.l.b16 %v4715
    %v5295 = vunpack.c.l.b16 %v4716
    %v5296 = vunpack.c.h.b16 %v4716
    %v5297 = vunpack.c.l.b16 %v4717
    %v5298 = vunpack.c.h.b16 %v4717
    %v5299 = vunpack.c.l.b16 %v4718
    %v5300 = vunpack.c.h.b16 %v4718
    %v5301 = vunpack.c.l.b16 %v4719
    %v5302 = vunpack.c.l.b16 %v4720
    %v5303 = vunpack.c.h.b16 %v4720
    %v5304 = vunpack.c.l.b16 %v4721
    %v5305 = vunpack.c.h.b16 %v4721
    %v5306 = vunpack.c.l.b16 %v4722
    %v5307 = vunpack.c.h.b16 %v4722
    %v5308 = vunpack.c.l.b16 %v4723
    %v5309 = vunpack.c.l.b16 %v4724
    %v5310 = vunpack.c.h.b16 %v4724
    %v5311 = vunpack.c.l.b16 %v4725
    %v5312 = vunpack.c.h.b16 %v4725
    %v5313 = vunpack.c.l.b16 %v4726
    %v5314 = vunpack.c.h.b16 %v4726
    %v5315 = vunpack.c.l.b16 %v4727
    %v5316 = vunpack.c.l.b16 %v4728
    %v5317 = vunpack.c.h.b16 %v4728
    %v5318 = vunpack.c.l.b16 %v4729
    %v5319 = vunpack.c.h.b16 %v4729
    %v5320 = vunpack.c.l.b16 %v4730
    %v5321 = vunpack.c.h.b16 %v4730
    %v5322 = vunpack.c.l.b16 %v4731
    %v5323 = vunpack.c.l.b16 %v4732
    %v5324 = vunpack.c.h.b16 %v4732
    %v5325 = vunpack.c.l.b16 %v4733
    %v5326 = vunpack.c.h.b16 %v4733
    %v5327 = vunpack.c.l.b16 %v4734
    %v5328 = vunpack.c.h.b16 %v4734
    %v5329 = vunpack.c.l.b16 %v4735
    %v5330 = vunpack.c.l.b16 %v4736
    %v5331 = vunpack.c.h.b16 %v4736
    %v5332 = vunpack.c.l.b16 %v4737
    %v5333 = vunpack.c.h.b16 %v4737
    %v5334 = vunpack.c.l.b16 %v4738
    %v5335 = vunpack.c.h.b16 %v4738
    %v5336 = vunpack.c.l.b16 %v4739
    %v5337 = vunpack.c.l.b16 %v4740
    %v5338 = vunpack.c.h.b16 %v4740
    %v5339 = vunpack.c.l.b16 %v4741
    %v5340 = vunpack.c.h.b16 %v4741
    %v5341 = vunpack.c.l.b16 %v4742
    %v5342 = vunpack.c.h.b16 %v4742
    %v5343 = vunpack.c.l.b16 %v4743
    %v5344 = vunpack.c.l.b16 %v4744
    %v5345 = vunpack.c.h.b16 %v4744
    %v5346 = vunpack.c.l.b16 %v4745
    %v5347 = vunpack.c.h.b16 %v4745
    %v5348 = vunpack.c.l.b16 %v4746
    %v5349 = vunpack.c.h.b16 %v4746
    %v5350 = vunpack.c.l.b16 %v4747
    %v5351 = vunpack.c.l.b16 %v4748
    %v5352 = vunpack.c.h.b16 %v4748
    %v5353 = vunpack.c.l.b16 %v4749
    %v5354 = vunpack.c.h.b16 %v4749
    %v5355 = vunpack.c.l.b16 %v4750
    %v5356 = vunpack.c.h.b16 %v4750
    %v5357 = vunpack.c.l.b16 %v4751
    %v5358 = vunpack.c.l.b16 %v4752
    %v5359 = vunpack.c.h.b16 %v4752
    %v5360 = vunpack.c.l.b16 %v4753
    %v5361 = vunpack.c.h.b16 %v4753
    %v5362 = vunpack.c.l.b16 %v4754
    %v5363 = vunpack.c.h.b16 %v4754
    %v5364 = vunpack.c.l.b16 %v4755
    %v5365 = vunpack.c.l.b16 %v4756
    %v5366 = vunpack.c.h.b16 %v4756
    %v5367 = vunpack.c.l.b16 %v4757
    %v5368 = vunpack.c.h.b16 %v4757
    %v5369 = vunpack.c.l.b16 %v4758
    %v5370 = vunpack.c.h.b16 %v4758
    %v5371 = vunpack.c.l.b16 %v4759
    %v5372 = vunpack.c.l.b16 %v4760
    %v5373 = vunpack.c.h.b16 %v4760
    %v5374 = vunpack.c.l.b16 %v4761
    %v5375 = vunpack.c.h.b16 %v4761
    %v5376 = vunpack.c.l.b16 %v4762
    %v5377 = vunpack.c.h.b16 %v4762
    %v5378 = vunpack.c.l.b16 %v4763
    %v5379 = vunpack.c.l.b16 %v4764
    %v5380 = vunpack.c.h.b16 %v4764
    %v5381 = vunpack.c.l.b16 %v4765
    %v5382 = vunpack.c.h.b16 %v4765
    %v5383 = vunpack.c.l.b16 %v4766
    %v5384 = vunpack.c.h.b16 %v4766
    %v5385 = vunpack.c.l.b16 %v4767
    %v5386 = vunpack.c.l.b16 %v4768
    %v5387 = vunpack.c.h.b16 %v4768
    %v5388 = vunpack.c.l.b16 %v4769
    %v5389 = vunpack.c.h.b16 %v4769
    %v5390 = vunpack.c.l.b16 %v4770
    %v5391 = vunpack.c.h.b16 %v4770
    %v5392 = vunpack.c.l.b16 %v4771
    %v5393 = vunpack.c.l.b16 %v4772
    %v5394 = vunpack.c.h.b16 %v4772
    %v5395 = vunpack.c.l.b16 %v4773
    %v5396 = vunpack.c.h.b16 %v4773
    %v5397 = vunpack.c.l.b16 %v4774
    %v5398 = vunpack.c.h.b16 %v4774
    %v5399 = vunpack.c.l.b16 %v4775
    %v5400 = vunpack.c.l.b16 %v4776
    %v5401 = vunpack.c.h.b16 %v4776
    %v5402 = vunpack.c.l.b16 %v4777
    %v5403 = vunpack.c.h.b16 %v4777
    %v5404 = vunpack.c.l.b16 %v4778
    %v5405 = vunpack.c.h.b16 %v4778
    %v5406 = vunpack.c.l.b16 %v4779
    %v5407 = vunpack.c.l.b16 %v4780
    %v5408 = vunpack.c.h.b16 %v4780
    %v5409 = vunpack.c.l.b16 %v4781
    %v5410 = vunpack.c.h.b16 %v4781
    %v5411 = vunpack.c.l.b16 %v4782
    %v5412 = vunpack.c.h.b16 %v4782
    %v5413 = vunpack.c.l.b16 %v4783
    %v5414 = vunpack.c.l.b16 %v4784
    %v5415 = vunpack.c.h.b16 %v4784
    %v5416 = vunpack.c.l.b16 %v4785
    %v5417 = vunpack.c.h.b16 %v4785
    %v5418 = vunpack.c.l.b16 %v4786
    %v5419 = vunpack.c.h.b16 %v4786
    %v5420 = vunpack.c.l.b16 %v4787
    %v5421 = vunpack.c.l.b16 %v4788
    %v5422 = vunpack.c.h.b16 %v4788
    %v5423 = vunpack.c.l.b16 %v4789
    %v5424 = vunpack.c.h.b16 %v4789
    %v5425 = vunpack.c.l.b16 %v4790
    %v5426 = vunpack.c.h.b16 %v4790
    %v5427 = vunpack.c.l.b16 %v4791
    %v5428 = vunpack.c.l.b16 %v4792
    %v5429 = vunpack.c.h.b16 %v4792
    %v5430 = vunpack.c.l.b16 %v4793
    %v5431 = vunpack.c.h.b16 %v4793
    %v5432 = vunpack.c.l.b16 %v4794
    %v5433 = vunpack.c.h.b16 %v4794
    %v5434 = vunpack.c.l.b16 %v4795
    %v5435 = vunpack.c.l.b16 %v4796
    %v5436 = vunpack.c.h.b16 %v4796
    %v5437 = vunpack.c.l.b16 %v4797
    %v5438 = vunpack.c.h.b16 %v4797
    %v5439 = vunpack.c.l.b16 %v4798
    %v5440 = vunpack.c.h.b16 %v4798
    %v5441 = vunpack.c.l.b16 %v4799
    %v5442 = vunpack.c.l.b16 %v4800
    %v5443 = vunpack.c.h.b16 %v4800
    %v5444 = vunpack.c.l.b16 %v4801
    %v5445 = vunpack.c.h.b16 %v4801
    %v5446 = vunpack.c.l.b16 %v4802
    %v5447 = vunpack.c.h.b16 %v4802
    %v5448 = vunpack.c.l.b16 %v4803
    %v5449 = vunpack.c.l.b16 %v4804
    %v5450 = vunpack.c.h.b16 %v4804
    %v5451 = vunpack.c.l.b16 %v4805
    %v5452 = vunpack.c.h.b16 %v4805
    %v5453 = vunpack.c.l.b16 %v4806
    %v5454 = vunpack.c.h.b16 %v4806
    %v5455 = vunpack.c.l.b16 %v4807
    %v5456 = vunpack.c.l.b16 %v4808
    %v5457 = vunpack.c.h.b16 %v4808
    %v5458 = vunpack.c.l.b16 %v4809
    %v5459 = vunpack.c.h.b16 %v4809
    %v5460 = vunpack.c.l.b16 %v4810
    %v5461 = vunpack.c.h.b16 %v4810
    %v5462 = vunpack.c.l.b16 %v4811
    %v5463 = vunpack.c.l.b16 %v4812
    %v5464 = vunpack.c.h.b16 %v4812
    %v5465 = vunpack.c.l.b16 %v4813
    %v5466 = vunpack.c.h.b16 %v4813
    %v5467 = vunpack.c.l.b16 %v4814
    %v5468 = vunpack.c.h.b16 %v4814
    %v5469 = vunpack.c.l.b16 %v4815
    %v5470 = vunpack.c.l.b16 %v4816
    %v5471 = vunpack.c.h.b16 %v4816
    %v5472 = vunpack.c.l.b16 %v4817
    %v5473 = vunpack.c.h.b16 %v4817
    %v5474 = vunpack.c.l.b16 %v4818
    %v5475 = vunpack.c.h.b16 %v4818
    %v5476 = vunpack.c.l.b16 %v4819
    %v5477 = vunpack.c.l.b16 %v4820
    %v5478 = vunpack.c.h.b16 %v4820
    %v5479 = vunpack.c.l.b16 %v4821
    %v5480 = vunpack.c.h.b16 %v4821
    %v5481 = vunpack.c.l.b16 %v4822
    %v5482 = vunpack.c.h.b16 %v4822
    %v5483 = vunpack.c.l.b16 %v4823
    %v5484 = vunpack.c.l.b16 %v4824
    %v5485 = vunpack.c.h.b16 %v4824
    %v5486 = vunpack.c.l.b16 %v4825
    %v5487 = vunpack.c.h.b16 %v4825
    %v5488 = vunpack.c.l.b16 %v4826
    %v5489 = vunpack.c.h.b16 %v4826
    %v5490 = vunpack.c.l.b16 %v4827
    %v5491 = vunpack.c.l.b16 %v4828
    %v5492 = vunpack.c.h.b16 %v4828
    %v5493 = vunpack.c.l.b16 %v4829
    %v5494 = vunpack.c.h.b16 %v4829
    %v5495 = vunpack.c.l.b16 %v4830
    %v5496 = vunpack.c.h.b16 %v4830
    %v5497 = vunpack.c.l.b16 %v4831
    %v5498 = vunpack.c.l.b16 %v4832
    %v5499 = vunpack.c.h.b16 %v4832
    %v5500 = vunpack.c.l.b16 %v4833
    %v5501 = vunpack.c.h.b16 %v4833
    %v5502 = vunpack.c.l.b16 %v4834
    %v5503 = vunpack.c.h.b16 %v4834
    %v5504 = vunpack.c.l.b16 %v4835
    %v5505 = vunpack.c.l.b16 %v4836
    %v5506 = vunpack.c.h.b16 %v4836
    %v5507 = vunpack.c.l.b16 %v4837
    %v5508 = vunpack.c.h.b16 %v4837
    %v5509 = vunpack.c.l.b16 %v4838
    %v5510 = vunpack.c.h.b16 %v4838
    %v5511 = vunpack.c.l.b16 %v4839
    %v5512 = vunpack.c.l.b16 %v4840
    %v5513 = vunpack.c.h.b16 %v4840
    %v5514 = vunpack.c.l.b16 %v4841
    %v5515 = vunpack.c.h.b16 %v4841
    %v5516 = vunpack.c.l.b16 %v4842
    %v5517 = vunpack.c.h.b16 %v4842
    %v5518 = vunpack.c.l.b16 %v4843
    %v5519 = vunpack.c.l.b16 %v4844
    %v5520 = vunpack.c.h.b16 %v4844
    %v5521 = vunpack.c.l.b16 %v4845
    %v5522 = vunpack.c.h.b16 %v4845
    %v5523 = vunpack.c.l.b16 %v4846
    %v5524 = vunpack.c.h.b16 %v4846
    %v5525 = vunpack.c.l.b16 %v4847
    %v5526 = vunpack.c.l.b16 %v4848
    %v5527 = vunpack.c.h.b16 %v4848
    %v5528 = vunpack.c.l.b16 %v4849
    %v5529 = vunpack.c.h.b16 %v4849
    %v5530 = vunpack.c.l.b16 %v4850
    %v5531 = vunpack.c.h.b16 %v4850
    %v5532 = vunpack.c.l.b16 %v4851
    %v5533 = vunpack.c.l.b16 %v4852
    %v5534 = vunpack.c.h.b16 %v4852
    %v5535 = vunpack.c.l.b16 %v4853
    %v5536 = vunpack.c.h.b16 %v4853
    %v5537 = vunpack.c.l.b16 %v4854
    %v5538 = vunpack.c.h.b16 %v4854
    %v5539 = vunpack.c.l.b16 %v4855
    %v5540 = vunpack.c.l.b16 %v4856
    %v5541 = vunpack.c.h.b16 %v4856
    %v5542 = vunpack.c.l.b16 %v4857
    %v5543 = vunpack.c.h.b16 %v4857
    %v5544 = vunpack.c.l.b16 %v4858
    %v5545 = vunpack.c.h.b16 %v4858
    %v5546 = vunpack.c.l.b16 %v4859
    %v5547 = vunpack.c.l.b16 %v4860
    %v5548 = vunpack.c.h.b16 %v4860
    %v5549 = vunpack.c.l.b16 %v4861
    %v5550 = vunpack.c.h.b16 %v4861
    %v5551 = vunpack.c.l.b16 %v4862
    %v5552 = vunpack.c.h.b16 %v4862
    %v5553 = vunpack.c.l.b16 %v4863
    %v5554 = vunpack.c.l.b16 %v4864
    %v5555 = vunpack.c.h.b16 %v4864
    %v5556 = vunpack.c.l.b16 %v4865
    %v5557 = vunpack.c.h.b16 %v4865
    %v5558 = vunpack.c.l.b16 %v4866
    %v5559 = vunpack.c.h.b16 %v4866
    %v5560 = vunpack.c.l.b16 %v4867
    %v5561 = vunpack.c.l.b16 %v4868
    %v5562 = vunpack.c.h.b16 %v4868
    %v5563 = vunpack.c.l.b16 %v4869
    %v5564 = vunpack.c.h.b16 %v4869
    %v5565 = vunpack.c.l.b16 %v4870
    %v5566 = vunpack.c.h.b16 %v4870
    %v5567 = vunpack.c.l.b16 %v4871
    %v5568 = vunpack.c.l.b16 %v4872
    %v5569 = vunpack.c.h.b16 %v4872
    %v5570 = vunpack.c.l.b16 %v4873
    %v5571 = vunpack.c.h.b16 %v4873
    %v5572 = vunpack.c.l.b16 %v4874
    %v5573 = vunpack.c.h.b16 %v4874
    %v5574 = vunpack.c.l.b16 %v4875
    %v5575 = vunpack.c.l.b16 %v4876
    %v5576 = vunpack.c.h.b16 %v4876
    %v5577 = vunpack.c.l.b16 %v4877
    %v5578 = vunpack.c.h.b16 %v4877
    %v5579 = vunpack.c.l.b16 %v4878
    %v5580 = vunpack.c.h.b16 %v4878
    %v5581 = vunpack.c.l.b16 %v4879
    %v5582 = vunpack.c.l.b16 %v4880
    %v5583 = vunpack.c.h.b16 %v4880
    %v5584 = vunpack.c.l.b16 %v4881
    %v5585 = vunpack.c.h.b16 %v4881
    %v5586 = vunpack.c.l.b16 %v4882
    %v5587 = vunpack.c.h.b16 %v4882
    %v5588 = vunpack.c.l.b16 %v4883
    %v5589 = vunpack.c.l.b16 %v4884
    %v5590 = vunpack.c.h.b16 %v4884
    %v5591 = vunpack.c.l.b16 %v4885
    %v5592 = vunpack.c.h.b16 %v4885
    %v5593 = vunpack.c.l.b16 %v4886
    %v5594 = vunpack.c.h.b16 %v4886
    %v5595 = vunpack.c.l.b16 %v4887
    %v5596 = vunpack.c.l.b16 %v4888
    %v5597 = vunpack.c.h.b16 %v4888
    %v5598 = vunpack.c.l.b16 %v4889
    %v5599 = vunpack.c.h.b16 %v4889
    %v5600 = vunpack.c.l.b16 %v4890
    %v5601 = vunpack.c.h.b16 %v4890
    %v5602 = vunpack.c.l.b16 %v4891
    %v5603 = vunpack.c.l.b16 %v4892
    %v5604 = vunpack.c.h.b16 %v4892
    %v5605 = vunpack.c.l.b16 %v4893
    %v5606 = vunpack.c.h.b16 %v4893
    %v5607 = vunpack.c.l.b16 %v4894
    %v5608 = vunpack.c.h.b16 %v4894
    %v5609 = vunpack.c.l.b16 %v4895
    %v5610 = vunpack.c.l.b16 %v4896
    %v5611 = vunpack.c.h.b16 %v4896
    %v5612 = vunpack.c.l.b16 %v4897
    %v5613 = vunpack.c.h.b16 %v4897
    %v5614 = vunpack.c.l.b16 %v4898
    %v5615 = vunpack.c.h.b16 %v4898
    %v5616 = vunpack.c.l.b16 %v4899
    %v5617 = vunpack.c.l.b16 %v4900
    %v5618 = vunpack.c.h.b16 %v4900
    %v5619 = vunpack.c.l.b16 %v4901
    %v5620 = vunpack.c.h.b16 %v4901
    %v5621 = vunpack.c.l.b16 %v4902
    %v5622 = vunpack.c.h.b16 %v4902
    %v5623 = vunpack.c.l.b16 %v4903
    %v5624 = vunpack.c.l.b16 %v4904
    %v5625 = vunpack.c.h.b16 %v4904
    %v5626 = vunpack.c.l.b16 %v4905
    %v5627 = vunpack.c.h.b16 %v4905
    %v5628 = vunpack.c.l.b16 %v4906
    %v5629 = vunpack.c.h.b16 %v4906
    %v5630 = vunpack.c.l.b16 %v4907
    %v5631 = vunpack.c.l.b16 %v4908
    %v5632 = vunpack.c.h.b16 %v4908
    %v5633 = vunpack.c.l.b16 %v4909
    %v5634 = vunpack.c.h.b16 %v4909
    %v5635 = vunpack.c.l.b16 %v4910
    %v5636 = vunpack.c.h.b16 %v4910
    %v5637 = vunpack.c.l.b16 %v4911
    %v5638 = vunpack.c.l.b16 %v4912
    %v5639 = vunpack.c.h.b16 %v4912
    %v5640 = vunpack.c.l.b16 %v4913
    %v5641 = vunpack.c.h.b16 %v4913
    %v5642 = vunpack.c.l.b16 %v4914
    %v5643 = vunpack.c.h.b16 %v4914
    %v5644 = vunpack.c.l.b16 %v4915
    %v5645 = vunpack.c.l.b16 %v4916
    %v5646 = vunpack.c.h.b16 %v4916
    %v5647 = vunpack.c.l.b16 %v4917
    %v5648 = vunpack.c.h.b16 %v4917
    %v5649 = vunpack.c.l.b16 %v4918
    %v5650 = vunpack.c.h.b16 %v4918
    %v5651 = vunpack.c.l.b16 %v4919
    %v5652 = vunpack.c.l.b16 %v4920
    %v5653 = vunpack.c.h.b16 %v4920
    %v5654 = vunpack.c.l.b16 %v4921
    %v5655 = vunpack.c.h.b16 %v4921
    %v5656 = vunpack.c.l.b16 %v4922
    %v5657 = vunpack.c.h.b16 %v4922
    %v5658 = vunpack.c.l.b16 %v4923
    %v5659 = vunpack.c.l.b16 %v4924
    %v5660 = vunpack.c.h.b16 %v4924
    %v5661 = vunpack.c.l.b16 %v4925
    %v5662 = vunpack.c.h.b16 %v4925
    %v5663 = vunpack.c.l.b16 %v4926
    %v5664 = vunpack.c.h.b16 %v4926
    %v5665 = vunpack.c.l.b16 %v4927
    %v5666 = vunpack.c.l.b16 %v4928
    %v5667 = vunpack.c.h.b16 %v4928
    %v5668 = vunpack.c.l.b16 %v4929
    %v5669 = vunpack.c.h.b16 %v4929
    %v5670 = vunpack.c.l.b16 %v4930
    %v5671 = vunpack.c.h.b16 %v4930
    %v5672 = vunpack.c.l.b16 %v4931
    %v5673 = vunpack.c.l.b16 %v4932
    %v5674 = vunpack.c.h.b16 %v4932
    %v5675 = vunpack.c.l.b16 %v4933
    %v5676 = vunpack.c.h.b16 %v4933
    %v5677 = vunpack.c.l.b16 %v4934
    %v5678 = vunpack.c.h.b16 %v4934
    %v5679 = vunpack.c.l.b16 %v4935
    %v5680 = vunpack.c.l.b16 %v4936
    %v5681 = vunpack.c.h.b16 %v4936
    %v5682 = vunpack.c.l.b16 %v4937
    %v5683 = vunpack.c.h.b16 %v4937
    %v5684 = vunpack.c.l.b16 %v4938
    %v5685 = vunpack.c.h.b16 %v4938
    %v5686 = vunpack.c.l.b16 %v4939
    %v5687 = vunpack.c.l.b16 %v4940
    %v5688 = vunpack.c.h.b16 %v4940
    %v5689 = vunpack.c.l.b16 %v4941
    %v5690 = vunpack.c.h.b16 %v4941
    %v5691 = vunpack.c.l.b16 %v4942
    %v5692 = vunpack.c.h.b16 %v4942
    %v5693 = vunpack.c.l.b16 %v4943
    %v5694 = vunpack.c.l.b16 %v4944
    %v5695 = vunpack.c.h.b16 %v4944
    %v5696 = vunpack.c.l.b16 %v4945
    %v5697 = vunpack.c.h.b16 %v4945
    %v5698 = vunpack.c.l.b16 %v4946
    %v5699 = vunpack.c.h.b16 %v4946
    %v5700 = vunpack.c.l.b16 %v4947
    %v5701 = vunpack.c.l.b16 %v4948
    %v5702 = vunpack.c.h.b16 %v4948
    %v5703 = vunpack.c.l.b16 %v4949
    %v5704 = vunpack.c.h.b16 %v4949
    %v5705 = vunpack.c.l.b16 %v4950
    %v5706 = vunpack.c.h.b16 %v4950
    %v5707 = vunpack.c.l.b16 %v4951
    %v5708 = vpack.c.b16 %v5267, %v5260
    %v5709 = vpack.c.b16 %v5268, %v5261
    %v5710 = vpack.c.b16 %v5269, %v5262
    %v5711 = vpack.c.b16 %v5270, %v5263
    %v5712 = vpack.c.b16 %v5271, %v5264
    %v5713 = vpack.c.b16 %v5272, %v5265
    %v5714 = vpack.c.b16 %v5273, %v5266
    %v5715 = vpack.c.b16 %v5281, %v5274
    %v5716 = vpack.c.b16 %v5282, %v5275
    %v5717 = vpack.c.b16 %v5283, %v5276
    %v5718 = vpack.c.b16 %v5284, %v5277
    %v5719 = vpack.c.b16 %v5285, %v5278
    %v5720 = vpack.c.b16 %v5286, %v5279
    %v5721 = vpack.c.b16 %v5287, %v5280
    %v5722 = vpack.c.b16 %v5295, %v5288
    %v5723 = vpack.c.b16 %v5296, %v5289
    %v5724 = vpack.c.b16 %v5297, %v5290
    %v5725 = vpack.c.b16 %v5298, %v5291
    %v5726 = vpack.c.b16 %v5299, %v5292
    %v5727 = vpack.c.b16 %v5300, %v5293
    %v5728 = vpack.c.b16 %v5301, %v5294
    %v5729 = vpack.c.b16 %v5309, %v5302
    %v5730 = vpack.c.b16 %v5310, %v5303
    %v5731 = vpack.c.b16 %v5311, %v5304
    %v5732 = vpack.c.b16 %v5312, %v5305
    %v5733 = vpack.c.b16 %v5313, %v5306
    %v5734 = vpack.c.b16 %v5314, %v5307
    %v5735 = vpack.c.b16 %v5315, %v5308
    %v5736 = vpack.c.b16 %v5323, %v5316
    %v5737 = vpack.c.b16 %v5324, %v5317
    %v5738 = vpack.c.b16 %v5325, %v5318
    %v5739 = vpack.c.b16 %v5326, %v5319
    %v5740 = vpack.c.b16 %v5327, %v5320
    %v5741 = vpack.c.b16 %v5328, %v5321
    %v5742 = vpack.c.b16 %v5329, %v5322
    %v5743 = vpack.c.b16 %v5337, %v5330
    %v5744 = vpack.c.b16 %v5338, %v5331
    %v5745 = vpack.c.b16 %v5339, %v5332
    %v5746 = vpack.c.b16 %v5340, %v5333
    %v5747 = vpack.c.b16 %v5341, %v5334
    %v5748 = vpack.c.b16 %v5342, %v5335
    %v5749 = vpack.c.b16 %v5343, %v5336
    %v5750 = vpack.c.b16 %v5351, %v5344
    %v5751 = vpack.c.b16 %v5352, %v5345
    %v5752 = vpack.c.b16 %v5353, %v5346
    %v5753 = vpack.c.b16 %v5354, %v5347
    %v5754 = vpack.c.b16 %v5355, %v5348
    %v5755 = vpack.c.b16 %v5356, %v5349
    %v5756 = vpack.c.b16 %v5357, %v5350
    %v5757 = vpack.c.b16 %v5365, %v5358
    %v5758 = vpack.c.b16 %v5366, %v5359
    %v5759 = vpack.c.b16 %v5367, %v5360
    %v5760 = vpack.c.b16 %v5368, %v5361
    %v5761 = vpack.c.b16 %v5369, %v5362
    %v5762 = vpack.c.b16 %v5370, %v5363
    %v5763 = vpack.c.b16 %v5371, %v5364
    %v5764 = vpack.c.b16 %v5379, %v5372
    %v5765 = vpack.c.b16 %v5380, %v5373
    %v5766 = vpack.c.b16 %v5381, %v5374
    %v5767 = vpack.c.b16 %v5382, %v5375
    %v5768 = vpack.c.b16 %v5383, %v5376
    %v5769 = vpack.c.b16 %v5384, %v5377
    %v5770 = vpack.c.b16 %v5385, %v5378
    %v5771 = vpack.c.b16 %v5393, %v5386
    %v5772 = vpack.c.b16 %v5394, %v5387
    %v5773 = vpack.c.b16 %v5395, %v5388
    %v5774 = vpack.c.b16 %v5396, %v5389
    %v5775 = vpack.c.b16 %v5397, %v5390
    %v5776 = vpack.c.b16 %v5398, %v5391
    %v5777 = vpack.c.b16 %v5399, %v5392
    %v5778 = vpack.c.b16 %v5407, %v5400
    %v5779 = vpack.c.b16 %v5408, %v5401
    %v5780 = vpack.c.b16 %v5409, %v5402
    %v5781 = vpack.c.b16 %v5410, %v5403
    %v5782 = vpack.c.b16 %v5411, %v5404
    %v5783 = vpack.c.b16 %v5412, %v5405
    %v5784 = vpack.c.b16 %v5413, %v5406
    %v5785 = vpack.c.b16 %v5421, %v5414
    %v5786 = vpack.c.b16 %v5422, %v5415
    %v5787 = vpack.c.b16 %v5423, %v5416
    %v5788 = vpack.c.b16 %v5424, %v5417
    %v5789 = vpack.c.b16 %v5425, %v5418
    %v5790 = vpack.c.b16 %v5426, %v5419
    %v5791 = vpack.c.b16 %v5427, %v5420
    %v5792 = vpack.c.b16 %v5435, %v5428
    %v5793 = vpack.c.b16 %v5436, %v5429
    %v5794 = vpack.c.b16 %v5437, %v5430
    %v5795 = vpack.c.b16 %v5438, %v5431
    %v5796 = vpack.c.b16 %v5439, %v5432
    %v5797 = vpack.c.b16 %v5440, %v5433
    %v5798 = vpack.c.b16 %v5441, %v5434
    %v5799 = vpack.c.b16 %v5449, %v5442
    %v5800 = vpack.c.b16 %v5450, %v5443
    %v5801 = vpack.c.b16 %v5451, %v5444
    %v5802 = vpack.c.b16 %v5452, %v5445
    %v5803 = vpack.c.b16 %v5453, %v5446
    %v5804 = vpack.c.b16 %v5454, %v5447
    %v5805 = vpack.c.b16 %v5455, %v5448
    %v5806 = vpack.c.b16 %v5463, %v5456
    %v5807 = vpack.c.b16 %v5464, %v5457
    %v5808 = vpack.c.b16 %v5465, %v5458
    %v5809 = vpack.c.b16 %v5466, %v5459
    %v5810 = vpack.c.b16 %v5467, %v5460
    %v5811 = vpack.c.b16 %v5468, %v5461
    %v5812 = vpack.c.b16 %v5469, %v5462
    %v5813 = vpack.c.b16 %v5477, %v5470
    %v5814 = vpack.c.b16 %v5478, %v5471
    %v5815 = vpack.c.b16 %v5479, %v5472
    %v5816 = vpack.c.b16 %v5480, %v5473
    %v5817 = vpack.c.b16 %v5481, %v5474
    %v5818 = vpack.c.b16 %v5482, %v5475
    %v5819 = vpack.c.b16 %v5483, %v5476
    %v5820 = vpack.c.b16 %v5491, %v5484
    %v5821 = vpack.c.b16 %v5492, %v5485
    %v5822 = vpack.c.b16 %v5493, %v5486
    %v5823 = vpack.c.b16 %v5494, %v5487
    %v5824 = vpack.c.b16 %v5495, %v5488
    %v5825 = vpack.c.b16 %v5496, %v5489
    %v5826 = vpack.c.b16 %v5497, %v5490
    %v5827 = vpack.c.b16 %v5505, %v5498
    %v5828 = vpack.c.b16 %v5506, %v5499
    %v5829 = vpack.c.b16 %v5507, %v5500
    %v5830 = vpack.c.b16 %v5508, %v5501
    %v5831 = vpack.c.b16 %v5509, %v5502
    %v5832 = vpack.c.b16 %v5510, %v5503
    %v5833 = vpack.c.b16 %v5511, %v5504
    %v5834 = vpack.c.b16 %v5519, %v5512
    %v5835 = vpack.c.b16 %v5520, %v5513
    %v5836 = vpack.c.b16 %v5521, %v5514
    %v5837 = vpack.c.b16 %v5522, %v5515
    %v5838 = vpack.c.b16 %v5523, %v5516
    %v5839 = vpack.c.b16 %v5524, %v5517
    %v5840 = vpack.c.b16 %v5525, %v5518
    %v5841 = vpack.c.b16 %v5533, %v5526
    %v5842 = vpack.c.b16 %v5534, %v5527
    %v5843 = vpack.c.b16 %v5535, %v5528
    %v5844 = vpack.c.b16 %v5536, %v5529
    %v5845 = vpack.c.b16 %v5537, %v5530
    %v5846 = vpack.c.b16 %v5538, %v5531
    %v5847 = vpack.c.b16 %v5539, %v5532
    %v5848 = vpack.c.b16 %v5547, %v5540
    %v5849 = vpack.c.b16 %v5548, %v5541
    %v5850 = vpack.c.b16 %v5549, %v5542
    %v5851 = vpack.c.b16 %v5550, %v5543
    %v5852 = vpack.c.b16 %v5551, %v5544
    %v5853 = vpack.c.b16 %v5552, %v5545
    %v5854 = vpack.c.b16 %v5553, %v5546
    %v5855 = vpack.c.b16 %v5561, %v5554
    %v5856 = vpack.c.b16 %v5562, %v5555
    %v5857 = vpack.c.b16 %v5563, %v5556
    %v5858 = vpack.c.b16 %v5564, %v5557
    %v5859 = vpack.c.b16 %v5565, %v5558
    %v5860 = vpack.c.b16 %v5566, %v5559
    %v5861 = vpack.c.b16 %v5567, %v5560
    %v5862 = vpack.c.b16 %v5575, %v5568
    %v5863 = vpack.c.b16 %v5576, %v5569
    %v5864 = vpack.c.b16 %v5577, %v5570
    %v5865 = vpack.c.b16 %v5578, %v5571
    %v5866 = vpack.c.b16 %v5579, %v5572
    %v5867 = vpack.c.b16 %v5580, %v5573
    %v5868 = vpack.c.b16 %v5581, %v5574
    %v5869 = vpack.c.b16 %v5589, %v5582
    %v5870 = vpack.c.b16 %v5590, %v5583
    %v5871 = vpack.c.b16 %v5591, %v5584
    %v5872 = vpack.c.b16 %v5592, %v5585
    %v5873 = vpack.c.b16 %v5593, %v5586
    %v5874 = vpack.c.b16 %v5594, %v5587
    %v5875 = vpack.c.b16 %v5595, %v5588
    %v5876 = vpack.c.b16 %v5603, %v5596
    %v5877 = vpack.c.b16 %v5604, %v5597
    %v5878 = vpack.c.b16 %v5605, %v5598
    %v5879 = vpack.c.b16 %v5606, %v5599
    %v5880 = vpack.c.b16 %v5607, %v5600
    %v5881 = vpack.c.b16 %v5608, %v5601
    %v5882 = vpack.c.b16 %v5609, %v5602
    %v5883 = vpack.c.b16 %v5617, %v5610
    %v5884 = vpack.c.b16 %v5618, %v5611
    %v5885 = vpack.c.b16 %v5619, %v5612
    %v5886 = vpack.c.b16 %v5620, %v5613
    %v5887 = vpack.c.b16 %v5621, %v5614
    %v5888 = vpack.c.b16 %v5622, %v5615
    %v5889 = vpack.c.b16 %v5623, %v5616
    %v5890 = vpack.c.b16 %v5631, %v5624
    %v5891 = vpack.c.b16 %v5632, %v5625
    %v5892 = vpack.c.b16 %v5633, %v5626
    %v5893 = vpack.c.b16 %v5634, %v5627
    %v5894 = vpack.c.b16 %v5635, %v5628
    %v5895 = vpack.c.b16 %v5636, %v5629
    %v5896 = vpack.c.b16 %v5637, %v5630
    %v5897 = vpack.c.b16 %v5645, %v5638
    %v5898 = vpack.c.b16 %v5646, %v5639
    %v5899 = vpack.c.b16 %v5647, %v5640
    %v5900 = vpack.c.b16 %v5648, %v5641
    %v5901 = vpack.c.b16 %v5649, %v5642
    %v5902 = vpack.c.b16 %v5650, %v5643
    %v5903 = vpack.c.b16 %v5651, %v5644
    %v5904 = vpack.c.b16 %v5659, %v5652
    %v5905 = vpack.c.b16 %v5660, %v5653
    %v5906 = vpack.c.b16 %v5661, %v5654
    %v5907 = vpack.c.b16 %v5662, %v5655
    %v5908 = vpack.c.b16 %v5663, %v5656
    %v5909 = vpack.c.b16 %v5664, %v5657
    %v5910 = vpack.c.b16 %v5665, %v5658
    %v5911 = vpack.c.b16 %v5673, %v5666
    %v5912 = vpack.c.b16 %v5674, %v5667
    %v5913 = vpack.c.b16 %v5675, %v5668
    %v5914 = vpack.c.b16 %v5676, %v5669
    %v5915 = vpack.c.b16 %v5677, %v5670
    %v5916 = vpack.c.b16 %v5678, %v5671
    %v5917 = vpack.c.b16 %v5679, %v5672
    %v5918 = vpack.c.b16 %v5687, %v5680
    %v5919 = vpack.c.b16 %v5688, %v5681
    %v5920 = vpack.c.b16 %v5689, %v5682
    %v5921 = vpack.c.b16 %v5690, %v5683
    %v5922 = vpack.c.b16 %v5691, %v5684
    %v5923 = vpack.c.b16 %v5692, %v5685
    %v5924 = vpack.c.b16 %v5693, %v5686
    %v5925 = vpack.c.b16 %v5701, %v5694
    %v5926 = vpack.c.b16 %v5702, %v5695
    %v5927 = vpack.c.b16 %v5703, %v5696
    %v5928 = vpack.c.b16 %v5704, %v5697
    %v5929 = vpack.c.b16 %v5705, %v5698
    %v5930 = vpack.c.b16 %v5706, %v5699
    %v5931 = vpack.c.b16 %v5707, %v5700
    %6156 = vmatprep.subr.bf16.mxu0 %v5758
    %6157 = vmatpush1.bf16.msra.mxu0 %v5757
    %6158 = vmatprep.subr.bf16.mxu0 %v5751
    %6159 = vmatpush1.bf16.msra.mxu0 %v5750
    %6160 = vmatprep.subr.bf16.mxu0 %v5744
    %6161 = vmatpush1.bf16.msra.mxu0 %v5743
    %6162 = vmatprep.subr.bf16.mxu0 %v5737
    %6163 = vmatpush1.bf16.msra.mxu0 %v5736
    %6164 = vmatprep.subr.bf16.mxu0 %v5730
    %6165 = vmatpush1.bf16.msra.mxu0 %v5729
    %6166 = vmatprep.subr.bf16.mxu0 %v5723
    %6167 = vmatpush1.bf16.msra.mxu0 %v5722
    %6168 = vmatprep.subr.bf16.mxu0 %v5716
    %6169 = vmatpush1.bf16.msra.mxu0 %v5715
    %6170 = vmatprep.subr.bf16.mxu0 %v5709
    %6171 = vmatpush1.bf16.msra.mxu0 %v5708
    %6172 = vmatprep.subr.bf16.mxu0 %v5814
    %6173 = vmatpush2.bf16.msra.mxu0 %v5813
    %6174 = vmatprep.subr.bf16.mxu0 %v5807
    %6175 = vmatpush2.bf16.msra.mxu0 %v5806
    %6176 = vmatprep.subr.bf16.mxu0 %v5800
    %6177 = vmatpush2.bf16.msra.mxu0 %v5799
    %6178 = vmatprep.subr.bf16.mxu0 %v5793
    %6179 = vmatpush2.bf16.msra.mxu0 %v5792
    %6180 = vmatprep.subr.bf16.mxu0 %v5786
    %6181 = vmatpush2.bf16.msra.mxu0 %v5785
    %6182 = vmatprep.subr.bf16.mxu0 %v5779
    %6183 = vmatpush2.bf16.msra.mxu0 %v5778
    %6184 = vmatprep.subr.bf16.mxu0 %v5772
    %6185 = vmatpush2.bf16.msra.mxu0 %v5771
    %6186 = vmatprep.subr.bf16.mxu0 %v5765
    %6187 = vmatpush2.bf16.msra.mxu0 %v5764
    %6188 = vmatprep.mubr.bf16.mxu0 %v4989
    %6189 = vmatmul.mubr.bf16.gmra.mxu0 %v4986
    %v6190 = vpop.f32.mrf.mxu0
    %v6191 = vadd.f32 0.0, %v6190
    %v6192 = vpop.f32.mrf.mxu0
    %v6193 = vadd.f32 0.0, %v6192
    %v6194 = vpop.f32.mrf.mxu0
    %v6195 = vadd.f32 0.0, %v6194
    %v6196 = vpop.f32.mrf.mxu0
    %v6197 = vadd.f32 0.0, %v6196
    %6198 = vmatprep.mubr.bf16.mxu0 %v4988
    %6199 = vmatmul.mubr.bf16.gmra.mxu0 %v4985
    %v6200 = vpop.f32.mrf.mxu0
    %v6201 = vadd.f32 0.0, %v6200
    %v6202 = vpop.f32.mrf.mxu0
    %v6203 = vadd.f32 0.0, %v6202
    %v6204 = vpop.f32.mrf.mxu0
    %v6205 = vadd.f32 0.0, %v6204
    %v6206 = vpop.f32.mrf.mxu0
    %v6207 = vadd.f32 0.0, %v6206
    %6208 = vdwg.mxu0
    %6209 = vmatprep.subr.bf16.mxu0 %v5870
    %6210 = vmatpush1.bf16.msra.mxu0 %v5869
    %6211 = vmatprep.subr.bf16.mxu0 %v5863
    %6212 = vmatpush1.bf16.msra.mxu0 %v5862
    %6213 = vmatprep.subr.bf16.mxu0 %v5856
    %6214 = vmatpush1.bf16.msra.mxu0 %v5855
    %6215 = vmatprep.subr.bf16.mxu0 %v5849
    %6216 = vmatpush1.bf16.msra.mxu0 %v5848
    %6217 = vmatprep.subr.bf16.mxu0 %v5842
    %6218 = vmatpush1.bf16.msra.mxu0 %v5841
    %6219 = vmatprep.subr.bf16.mxu0 %v5835
    %6220 = vmatpush1.bf16.msra.mxu0 %v5834
    %6221 = vmatprep.subr.bf16.mxu0 %v5828
    %6222 = vmatpush1.bf16.msra.mxu0 %v5827
    %6223 = vmatprep.subr.bf16.mxu0 %v5821
    %6224 = vmatpush1.bf16.msra.mxu0 %v5820
    %6225 = vmatprep.subr.bf16.mxu0 %v5926
    %6226 = vmatpush2.bf16.msra.mxu0 %v5925
    %6227 = vmatprep.subr.bf16.mxu0 %v5919
    %6228 = vmatpush2.bf16.msra.mxu0 %v5918
    %6229 = vmatprep.subr.bf16.mxu0 %v5912
    %6230 = vmatpush2.bf16.msra.mxu0 %v5911
    %6231 = vmatprep.subr.bf16.mxu0 %v5905
    %6232 = vmatpush2.bf16.msra.mxu0 %v5904
    %6233 = vmatprep.subr.bf16.mxu0 %v5898
    %6234 = vmatpush2.bf16.msra.mxu0 %v5897
    %6235 = vmatprep.subr.bf16.mxu0 %v5891
    %6236 = vmatpush2.bf16.msra.mxu0 %v5890
    %6237 = vmatprep.subr.bf16.mxu0 %v5884
    %6238 = vmatpush2.bf16.msra.mxu0 %v5883
    %6239 = vmatprep.subr.bf16.mxu0 %v5877
    %6240 = vmatpush2.bf16.msra.mxu0 %v5876
    %6241 = vmatprep.mubr.bf16.mxu0 %v4995
    %6242 = vmatmul.mubr.bf16.gmra.mxu0 %v4992
    %v6243 = vpop.f32.mrf.mxu0
    %v6244 = vadd.f32 %v6191, %v6243
    %v6245 = vpop.f32.mrf.mxu0
    %v6246 = vadd.f32 %v6193, %v6245
    %v6247 = vpop.f32.mrf.mxu0
    %v6248 = vadd.f32 %v6195, %v6247
    %v6249 = vpop.f32.mrf.mxu0
    %v6250 = vadd.f32 %v6197, %v6249
    %6251 = vmatprep.mubr.bf16.mxu0 %v4994
    %6252 = vmatmul.mubr.bf16.gmra.mxu0 %v4991
    %v6253 = vpop.f32.mrf.mxu0
    %v6254 = vadd.f32 %v6201, %v6253
    %v6255 = vpop.f32.mrf.mxu0
    %v6256 = vadd.f32 %v6203, %v6255
    %v6257 = vpop.f32.mrf.mxu0
    %v6258 = vadd.f32 %v6205, %v6257
    %v6259 = vpop.f32.mrf.mxu0
    %v6260 = vadd.f32 %v6207, %v6259
    %6261 = vdwg.mxu0
    %6262 = vmatprep.subr.bf16.mxu0 %v5760
    %6263 = vmatpush1.bf16.msra.mxu0 %v5759
    %6264 = vmatprep.subr.bf16.mxu0 %v5753
    %6265 = vmatpush1.bf16.msra.mxu0 %v5752
    %6266 = vmatprep.subr.bf16.mxu0 %v5746
    %6267 = vmatpush1.bf16.msra.mxu0 %v5745
    %6268 = vmatprep.subr.bf16.mxu0 %v5739
    %6269 = vmatpush1.bf16.msra.mxu0 %v5738
    %6270 = vmatprep.subr.bf16.mxu0 %v5732
    %6271 = vmatpush1.bf16.msra.mxu0 %v5731
    %6272 = vmatprep.subr.bf16.mxu0 %v5725
    %6273 = vmatpush1.bf16.msra.mxu0 %v5724
    %6274 = vmatprep.subr.bf16.mxu0 %v5718
    %6275 = vmatpush1.bf16.msra.mxu0 %v5717
    %6276 = vmatprep.subr.bf16.mxu0 %v5711
    %6277 = vmatpush1.bf16.msra.mxu0 %v5710
    %6278 = vmatprep.subr.bf16.mxu0 %v5816
    %6279 = vmatpush2.bf16.msra.mxu0 %v5815
    %6280 = vmatprep.subr.bf16.mxu0 %v5809
    %6281 = vmatpush2.bf16.msra.mxu0 %v5808
    %6282 = vmatprep.subr.bf16.mxu0 %v5802
    %6283 = vmatpush2.bf16.msra.mxu0 %v5801
    %6284 = vmatprep.subr.bf16.mxu0 %v5795
    %6285 = vmatpush2.bf16.msra.mxu0 %v5794
    %6286 = vmatprep.subr.bf16.mxu0 %v5788
    %6287 = vmatpush2.bf16.msra.mxu0 %v5787
    %6288 = vmatprep.subr.bf16.mxu0 %v5781
    %6289 = vmatpush2.bf16.msra.mxu0 %v5780
    %6290 = vmatprep.subr.bf16.mxu0 %v5774
    %6291 = vmatpush2.bf16.msra.mxu0 %v5773
    %6292 = vmatprep.subr.bf16.mxu0 %v5767
    %6293 = vmatpush2.bf16.msra.mxu0 %v5766
    %6294 = vmatprep.mubr.bf16.mxu0 %v4989
    %6295 = vmatmul.mubr.bf16.gmra.mxu0 %v4986
    %v6296 = vpop.f32.mrf.mxu0
    %v6297 = vadd.f32 0.0, %v6296
    %v6298 = vpop.f32.mrf.mxu0
    %v6299 = vadd.f32 0.0, %v6298
    %v6300 = vpop.f32.mrf.mxu0
    %v6301 = vadd.f32 0.0, %v6300
    %v6302 = vpop.f32.mrf.mxu0
    %v6303 = vadd.f32 0.0, %v6302
    %6304 = vmatprep.mubr.bf16.mxu0 %v4988
    %6305 = vmatmul.mubr.bf16.gmra.mxu0 %v4985
    %v6306 = vpop.f32.mrf.mxu0
    %v6307 = vadd.f32 0.0, %v6306
    %v6308 = vpop.f32.mrf.mxu0
    %v6309 = vadd.f32 0.0, %v6308
    %v6310 = vpop.f32.mrf.mxu0
    %v6311 = vadd.f32 0.0, %v6310
    %v6312 = vpop.f32.mrf.mxu0
    %v6313 = vadd.f32 0.0, %v6312
    %6314 = vdwg.mxu0
    %6315 = vmatprep.subr.bf16.mxu0 %v5872
    %6316 = vmatpush1.bf16.msra.mxu0 %v5871
    %6317 = vmatprep.subr.bf16.mxu0 %v5865
    %6318 = vmatpush1.bf16.msra.mxu0 %v5864
    %6319 = vmatprep.subr.bf16.mxu0 %v5858
    %6320 = vmatpush1.bf16.msra.mxu0 %v5857
    %6321 = vmatprep.subr.bf16.mxu0 %v5851
    %6322 = vmatpush1.bf16.msra.mxu0 %v5850
    %6323 = vmatprep.subr.bf16.mxu0 %v5844
    %6324 = vmatpush1.bf16.msra.mxu0 %v5843
    %6325 = vmatprep.subr.bf16.mxu0 %v5837
    %6326 = vmatpush1.bf16.msra.mxu0 %v5836
    %6327 = vmatprep.subr.bf16.mxu0 %v5830
    %6328 = vmatpush1.bf16.msra.mxu0 %v5829
    %6329 = vmatprep.subr.bf16.mxu0 %v5823
    %6330 = vmatpush1.bf16.msra.mxu0 %v5822
    %6331 = vmatprep.subr.bf16.mxu0 %v5928
    %6332 = vmatpush2.bf16.msra.mxu0 %v5927
    %6333 = vmatprep.subr.bf16.mxu0 %v5921
    %6334 = vmatpush2.bf16.msra.mxu0 %v5920
    %6335 = vmatprep.subr.bf16.mxu0 %v5914
    %6336 = vmatpush2.bf16.msra.mxu0 %v5913
    %6337 = vmatprep.subr.bf16.mxu0 %v5907
    %6338 = vmatpush2.bf16.msra.mxu0 %v5906
    %6339 = vmatprep.subr.bf16.mxu0 %v5900
    %6340 = vmatpush2.bf16.msra.mxu0 %v5899
    %6341 = vmatprep.subr.bf16.mxu0 %v5893
    %6342 = vmatpush2.bf16.msra.mxu0 %v5892
    %6343 = vmatprep.subr.bf16.mxu0 %v5886
    %6344 = vmatpush2.bf16.msra.mxu0 %v5885
    %6345 = vmatprep.subr.bf16.mxu0 %v5879
    %6346 = vmatpush2.bf16.msra.mxu0 %v5878
    %6347 = vmatprep.mubr.bf16.mxu0 %v4995
    %6348 = vmatmul.mubr.bf16.gmra.mxu0 %v4992
    %v6349 = vpop.f32.mrf.mxu0
    %v6350 = vadd.f32 %v6297, %v6349
    %v6351 = vpop.f32.mrf.mxu0
    %v6352 = vadd.f32 %v6299, %v6351
    %v6353 = vpop.f32.mrf.mxu0
    %v6354 = vadd.f32 %v6301, %v6353
    %v6355 = vpop.f32.mrf.mxu0
    %v6356 = vadd.f32 %v6303, %v6355
    %6357 = vmatprep.mubr.bf16.mxu0 %v4994
    %6358 = vmatmul.mubr.bf16.gmra.mxu0 %v4991
    %v6359 = vpop.f32.mrf.mxu0
    %v6360 = vadd.f32 %v6307, %v6359
    %v6361 = vpop.f32.mrf.mxu0
    %v6362 = vadd.f32 %v6309, %v6361
    %v6363 = vpop.f32.mrf.mxu0
    %v6364 = vadd.f32 %v6311, %v6363
    %v6365 = vpop.f32.mrf.mxu0
    %v6366 = vadd.f32 %v6313, %v6365
    %6367 = vdwg.mxu0
    %6368 = vmatprep.subr.bf16.mxu0 %v5762
    %6369 = vmatpush1.bf16.msra.mxu0 %v5761
    %6370 = vmatprep.subr.bf16.mxu0 %v5755
    %6371 = vmatpush1.bf16.msra.mxu0 %v5754
    %6372 = vmatprep.subr.bf16.mxu0 %v5748
    %6373 = vmatpush1.bf16.msra.mxu0 %v5747
    %6374 = vmatprep.subr.bf16.mxu0 %v5741
    %6375 = vmatpush1.bf16.msra.mxu0 %v5740
    %6376 = vmatprep.subr.bf16.mxu0 %v5734
    %6377 = vmatpush1.bf16.msra.mxu0 %v5733
    %6378 = vmatprep.subr.bf16.mxu0 %v5727
    %6379 = vmatpush1.bf16.msra.mxu0 %v5726
    %6380 = vmatprep.subr.bf16.mxu0 %v5720
    %6381 = vmatpush1.bf16.msra.mxu0 %v5719
    %6382 = vmatprep.subr.bf16.mxu0 %v5713
    %6383 = vmatpush1.bf16.msra.mxu0 %v5712
    %6384 = vmatprep.subr.bf16.mxu0 %v5818
    %6385 = vmatpush2.bf16.msra.mxu0 %v5817
    %6386 = vmatprep.subr.bf16.mxu0 %v5811
    %6387 = vmatpush2.bf16.msra.mxu0 %v5810
    %6388 = vmatprep.subr.bf16.mxu0 %v5804
    %6389 = vmatpush2.bf16.msra.mxu0 %v5803
    %6390 = vmatprep.subr.bf16.mxu0 %v5797
    %6391 = vmatpush2.bf16.msra.mxu0 %v5796
    %6392 = vmatprep.subr.bf16.mxu0 %v5790
    %6393 = vmatpush2.bf16.msra.mxu0 %v5789
    %6394 = vmatprep.subr.bf16.mxu0 %v5783
    %6395 = vmatpush2.bf16.msra.mxu0 %v5782
    %6396 = vmatprep.subr.bf16.mxu0 %v5776
    %6397 = vmatpush2.bf16.msra.mxu0 %v5775
    %6398 = vmatprep.subr.bf16.mxu0 %v5769
    %6399 = vmatpush2.bf16.msra.mxu0 %v5768
    %6400 = vmatprep.mubr.bf16.mxu0 %v4989
    %6401 = vmatmul.mubr.bf16.gmra.mxu0 %v4986
    %v6402 = vpop.f32.mrf.mxu0
    %v6403 = vadd.f32 0.0, %v6402
    %v6404 = vpop.f32.mrf.mxu0
    %v6405 = vadd.f32 0.0, %v6404
    %v6406 = vpop.f32.mrf.mxu0
    %v6407 = vadd.f32 0.0, %v6406
    %v6408 = vpop.f32.mrf.mxu0
    %v6409 = vadd.f32 0.0, %v6408
    %6410 = vmatprep.mubr.bf16.mxu0 %v4988
    %6411 = vmatmul.mubr.bf16.gmra.mxu0 %v4985
    %v6412 = vpop.f32.mrf.mxu0
    %v6413 = vadd.f32 0.0, %v6412
    %v6414 = vpop.f32.mrf.mxu0
    %v6415 = vadd.f32 0.0, %v6414
    %v6416 = vpop.f32.mrf.mxu0
    %v6417 = vadd.f32 0.0, %v6416
    %v6418 = vpop.f32.mrf.mxu0
    %v6419 = vadd.f32 0.0, %v6418
    %6420 = vdwg.mxu0
    %6421 = vmatprep.subr.bf16.mxu0 %v5874
    %6422 = vmatpush1.bf16.msra.mxu0 %v5873
    %6423 = vmatprep.subr.bf16.mxu0 %v5867
    %6424 = vmatpush1.bf16.msra.mxu0 %v5866
    %6425 = vmatprep.subr.bf16.mxu0 %v5860
    %6426 = vmatpush1.bf16.msra.mxu0 %v5859
    %6427 = vmatprep.subr.bf16.mxu0 %v5853
    %6428 = vmatpush1.bf16.msra.mxu0 %v5852
    %6429 = vmatprep.subr.bf16.mxu0 %v5846
    %6430 = vmatpush1.bf16.msra.mxu0 %v5845
    %6431 = vmatprep.subr.bf16.mxu0 %v5839
    %6432 = vmatpush1.bf16.msra.mxu0 %v5838
    %6433 = vmatprep.subr.bf16.mxu0 %v5832
    %6434 = vmatpush1.bf16.msra.mxu0 %v5831
    %6435 = vmatprep.subr.bf16.mxu0 %v5825
    %6436 = vmatpush1.bf16.msra.mxu0 %v5824
    %6437 = vmatprep.subr.bf16.mxu0 %v5930
    %6438 = vmatpush2.bf16.msra.mxu0 %v5929
    %6439 = vmatprep.subr.bf16.mxu0 %v5923
    %6440 = vmatpush2.bf16.msra.mxu0 %v5922
    %6441 = vmatprep.subr.bf16.mxu0 %v5916
    %6442 = vmatpush2.bf16.msra.mxu0 %v5915
    %6443 = vmatprep.subr.bf16.mxu0 %v5909
    %6444 = vmatpush2.bf16.msra.mxu0 %v5908
    %6445 = vmatprep.subr.bf16.mxu0 %v5902
    %6446 = vmatpush2.bf16.msra.mxu0 %v5901
    %6447 = vmatprep.subr.bf16.mxu0 %v5895
    %6448 = vmatpush2.bf16.msra.mxu0 %v5894
    %6449 = vmatprep.subr.bf16.mxu0 %v5888
    %6450 = vmatpush2.bf16.msra.mxu0 %v5887
    %6451 = vmatprep.subr.bf16.mxu0 %v5881
    %6452 = vmatpush2.bf16.msra.mxu0 %v5880
    %6453 = vmatprep.mubr.bf16.mxu0 %v4995
    %6454 = vmatmul.mubr.bf16.gmra.mxu0 %v4992
    %v6455 = vpop.f32.mrf.mxu0
    %v6456 = vadd.f32 %v6403, %v6455
    %v6457 = vpop.f32.mrf.mxu0
    %v6458 = vadd.f32 %v6405, %v6457
    %v6459 = vpop.f32.mrf.mxu0
    %v6460 = vadd.f32 %v6407, %v6459
    %v6461 = vpop.f32.mrf.mxu0
    %v6462 = vadd.f32 %v6409, %v6461
    %6463 = vmatprep.mubr.bf16.mxu0 %v4994
    %6464 = vmatmul.mubr.bf16.gmra.mxu0 %v4991
    %v6465 = vpop.f32.mrf.mxu0
    %v6466 = vadd.f32 %v6413, %v6465
    %v6467 = vpop.f32.mrf.mxu0
    %v6468 = vadd.f32 %v6415, %v6467
    %v6469 = vpop.f32.mrf.mxu0
    %v6470 = vadd.f32 %v6417, %v6469
    %v6471 = vpop.f32.mrf.mxu0
    %v6472 = vadd.f32 %v6419, %v6471
    %6473 = vdwg.mxu0
    %6474 = vmatprep.subr.bf16.mxu0 0
    %6475 = vmatpush1.bf16.msra.mxu0 %v5763
    %6476 = vmatprep.subr.bf16.mxu0 0
    %6477 = vmatpush1.bf16.msra.mxu0 %v5756
    %6478 = vmatprep.subr.bf16.mxu0 0
    %6479 = vmatpush1.bf16.msra.mxu0 %v5749
    %6480 = vmatprep.subr.bf16.mxu0 0
    %6481 = vmatpush1.bf16.msra.mxu0 %v5742
    %6482 = vmatprep.subr.bf16.mxu0 0
    %6483 = vmatpush1.bf16.msra.mxu0 %v5735
    %6484 = vmatprep.subr.bf16.mxu0 0
    %6485 = vmatpush1.bf16.msra.mxu0 %v5728
    %6486 = vmatprep.subr.bf16.mxu0 0
    %6487 = vmatpush1.bf16.msra.mxu0 %v5721
    %6488 = vmatprep.subr.bf16.mxu0 0
    %6489 = vmatpush1.bf16.msra.mxu0 %v5714
    %6490 = vmatprep.subr.bf16.mxu0 0
    %6491 = vmatpush2.bf16.msra.mxu0 %v5819
    %6492 = vmatprep.subr.bf16.mxu0 0
    %6493 = vmatpush2.bf16.msra.mxu0 %v5812
    %6494 = vmatprep.subr.bf16.mxu0 0
    %6495 = vmatpush2.bf16.msra.mxu0 %v5805
    %6496 = vmatprep.subr.bf16.mxu0 0
    %6497 = vmatpush2.bf16.msra.mxu0 %v5798
    %6498 = vmatprep.subr.bf16.mxu0 0
    %6499 = vmatpush2.bf16.msra.mxu0 %v5791
    %6500 = vmatprep.subr.bf16.mxu0 0
    %6501 = vmatpush2.bf16.msra.mxu0 %v5784
    %6502 = vmatprep.subr.bf16.mxu0 0
    %6503 = vmatpush2.bf16.msra.mxu0 %v5777
    %6504 = vmatprep.subr.bf16.mxu0 0
    %6505 = vmatpush2.bf16.msra.mxu0 %v5770
    %6506 = vmatprep.mubr.bf16.mxu0 %v4989
    %6507 = vmatmul.mubr.bf16.gmra.mxu0 %v4986
    %v6508 = vpop.f32.mrf.mxu0
    %v6509 = vadd.f32 0.0, %v6508
    %v6510 = vpop.f32.mrf.mxu0
    %v6511 = vpop.f32.mrf.mxu0
    %v6512 = vadd.f32 0.0, %v6511
    %v6513 = vpop.f32.mrf.mxu0
    %6514 = vmatprep.mubr.bf16.mxu0 %v4988
    %6515 = vmatmul.mubr.bf16.gmra.mxu0 %v4985
    %v6516 = vpop.f32.mrf.mxu0
    %v6517 = vadd.f32 0.0, %v6516
    %v6518 = vpop.f32.mrf.mxu0
    %v6519 = vpop.f32.mrf.mxu0
    %v6520 = vadd.f32 0.0, %v6519
    %v6521 = vpop.f32.mrf.mxu0
    %6522 = vdwg.mxu0
    %6523 = vmatprep.subr.bf16.mxu0 0
    %6524 = vmatpush1.bf16.msra.mxu0 %v5875
    %6525 = vmatprep.subr.bf16.mxu0 0
    %6526 = vmatpush1.bf16.msra.mxu0 %v5868
    %6527 = vmatprep.subr.bf16.mxu0 0
    %6528 = vmatpush1.bf16.msra.mxu0 %v5861
    %6529 = vmatprep.subr.bf16.mxu0 0
    %6530 = vmatpush1.bf16.msra.mxu0 %v5854
    %6531 = vmatprep.subr.bf16.mxu0 0
    %6532 = vmatpush1.bf16.msra.mxu0 %v5847
    %6533 = vmatprep.subr.bf16.mxu0 0
    %6534 = vmatpush1.bf16.msra.mxu0 %v5840
    %6535 = vmatprep.subr.bf16.mxu0 0
    %6536 = vmatpush1.bf16.msra.mxu0 %v5833
    %6537 = vmatprep.subr.bf16.mxu0 0
    %6538 = vmatpush1.bf16.msra.mxu0 %v5826
    %6539 = vmatprep.subr.bf16.mxu0 0
    %6540 = vmatpush2.bf16.msra.mxu0 %v5931
    %6541 = vmatprep.subr.bf16.mxu0 0
    %6542 = vmatpush2.bf16.msra.mxu0 %v5924
    %6543 = vmatprep.subr.bf16.mxu0 0
    %6544 = vmatpush2.bf16.msra.mxu0 %v5917
    %6545 = vmatprep.subr.bf16.mxu0 0
    %6546 = vmatpush2.bf16.msra.mxu0 %v5910
    %6547 = vmatprep.subr.bf16.mxu0 0
    %6548 = vmatpush2.bf16.msra.mxu0 %v5903
    %6549 = vmatprep.subr.bf16.mxu0 0
    %6550 = vmatpush2.bf16.msra.mxu0 %v5896
    %6551 = vmatprep.subr.bf16.mxu0 0
    %6552 = vmatpush2.bf16.msra.mxu0 %v5889
    %6553 = vmatprep.subr.bf16.mxu0 0
    %6554 = vmatpush2.bf16.msra.mxu0 %v5882
    %6555 = vmatprep.mubr.bf16.mxu0 %v4995
    %6556 = vmatmul.mubr.bf16.gmra.mxu0 %v4992
    %v6557 = vpop.f32.mrf.mxu0
    %v6558 = vadd.f32 %v6509, %v6557
    %v6559 = vpop.f32.mrf.mxu0
    %v6560 = vpop.f32.mrf.mxu0
    %v6561 = vadd.f32 %v6512, %v6560
    %v6562 = vpop.f32.mrf.mxu0
    %6563 = vmatprep.mubr.bf16.mxu0 %v4994
    %6564 = vmatmul.mubr.bf16.gmra.mxu0 %v4991
    %v6565 = vpop.f32.mrf.mxu0
    %v6566 = vadd.f32 %v6517, %v6565
    %v6567 = vpop.f32.mrf.mxu0
    %v6568 = vpop.f32.mrf.mxu0
    %v6569 = vadd.f32 %v6520, %v6568
    %v6570 = vpop.f32.mrf.mxu0
    %6571 = vdwg.mxu0
    %v6576 = vunpack.c.l.b16 %v4427
    %v6577 = vunpack.c.h.b16 %v4427
    %v6578 = vunpack.c.l.b16 %v4428
    %v6579 = vunpack.c.h.b16 %v4428
    %v6580 = vunpack.c.l.b16 %v4433
    %v6581 = vunpack.c.h.b16 %v4433
    %v6582 = vunpack.c.l.b16 %v4434
    %v6583 = vunpack.c.h.b16 %v4434
    %v6584 = vpack.c.b16 %v4964, %v6576
    %v6585 = vpack.c.b16 %v4965, %v6577
    %v6586 = vpack.c.b16 %v4966, %v6578
    %v6587 = vpack.c.b16 %v4967, %v6579
    %v6588 = vpack.c.b16 %v6580, %v4968
    %v6589 = vpack.c.b16 %v6581, %v4969
    %v6590 = vpack.c.b16 %v6582, %v4970
    %v6591 = vpack.c.b16 %v6583, %v4971
    %v6856 = vunpack.c.l.b16 %v4435
    %v6857 = vunpack.c.h.b16 %v4435
    %v6858 = vunpack.c.l.b16 %v4436
    %v6859 = vunpack.c.h.b16 %v4436
    %v6860 = vunpack.c.l.b16 %v4437
    %v6861 = vunpack.c.h.b16 %v4437
    %v6862 = vunpack.c.l.b16 %v4438
    %v6863 = vunpack.c.l.b16 %v4439
    %v6864 = vunpack.c.h.b16 %v4439
    %v6865 = vunpack.c.l.b16 %v4440
    %v6866 = vunpack.c.h.b16 %v4440
    %v6867 = vunpack.c.l.b16 %v4441
    %v6868 = vunpack.c.h.b16 %v4441
    %v6869 = vunpack.c.l.b16 %v4442
    %v6870 = vunpack.c.l.b16 %v4443
    %v6871 = vunpack.c.h.b16 %v4443
    %v6872 = vunpack.c.l.b16 %v4444
    %v6873 = vunpack.c.h.b16 %v4444
    %v6874 = vunpack.c.l.b16 %v4445
    %v6875 = vunpack.c.h.b16 %v4445
    %v6876 = vunpack.c.l.b16 %v4446
    %v6877 = vunpack.c.l.b16 %v4447
    %v6878 = vunpack.c.h.b16 %v4447
    %v6879 = vunpack.c.l.b16 %v4448
    %v6880 = vunpack.c.h.b16 %v4448
    %v6881 = vunpack.c.l.b16 %v4449
    %v6882 = vunpack.c.h.b16 %v4449
    %v6883 = vunpack.c.l.b16 %v4450
    %v6884 = vunpack.c.l.b16 %v4451
    %v6885 = vunpack.c.h.b16 %v4451
    %v6886 = vunpack.c.l.b16 %v4452
    %v6887 = vunpack.c.h.b16 %v4452
    %v6888 = vunpack.c.l.b16 %v4453
    %v6889 = vunpack.c.h.b16 %v4453
    %v6890 = vunpack.c.l.b16 %v4454
    %v6891 = vunpack.c.l.b16 %v4455
    %v6892 = vunpack.c.h.b16 %v4455
    %v6893 = vunpack.c.l.b16 %v4456
    %v6894 = vunpack.c.h.b16 %v4456
    %v6895 = vunpack.c.l.b16 %v4457
    %v6896 = vunpack.c.h.b16 %v4457
    %v6897 = vunpack.c.l.b16 %v4458
    %v6898 = vunpack.c.l.b16 %v4459
    %v6899 = vunpack.c.h.b16 %v4459
    %v6900 = vunpack.c.l.b16 %v4460
    %v6901 = vunpack.c.h.b16 %v4460
    %v6902 = vunpack.c.l.b16 %v4461
    %v6903 = vunpack.c.h.b16 %v4461
    %v6904 = vunpack.c.l.b16 %v4462
    %v6905 = vunpack.c.l.b16 %v4463
    %v6906 = vunpack.c.h.b16 %v4463
    %v6907 = vunpack.c.l.b16 %v4464
    %v6908 = vunpack.c.h.b16 %v4464
    %v6909 = vunpack.c.l.b16 %v4465
    %v6910 = vunpack.c.h.b16 %v4465
    %v6911 = vunpack.c.l.b16 %v4466
    %v6912 = vunpack.c.l.b16 %v4467
    %v6913 = vunpack.c.h.b16 %v4467
    %v6914 = vunpack.c.l.b16 %v4468
    %v6915 = vunpack.c.h.b16 %v4468
    %v6916 = vunpack.c.l.b16 %v4469
    %v6917 = vunpack.c.h.b16 %v4469
    %v6918 = vunpack.c.l.b16 %v4470
    %v6919 = vunpack.c.l.b16 %v4471
    %v6920 = vunpack.c.h.b16 %v4471
    %v6921 = vunpack.c.l.b16 %v4472
    %v6922 = vunpack.c.h.b16 %v4472
    %v6923 = vunpack.c.l.b16 %v4473
    %v6924 = vunpack.c.h.b16 %v4473
    %v6925 = vunpack.c.l.b16 %v4474
    %v6926 = vunpack.c.l.b16 %v4475
    %v6927 = vunpack.c.h.b16 %v4475
    %v6928 = vunpack.c.l.b16 %v4476
    %v6929 = vunpack.c.h.b16 %v4476
    %v6930 = vunpack.c.l.b16 %v4477
    %v6931 = vunpack.c.h.b16 %v4477
    %v6932 = vunpack.c.l.b16 %v4478
    %v6933 = vunpack.c.l.b16 %v4479
    %v6934 = vunpack.c.h.b16 %v4479
    %v6935 = vunpack.c.l.b16 %v4480
    %v6936 = vunpack.c.h.b16 %v4480
    %v6937 = vunpack.c.l.b16 %v4481
    %v6938 = vunpack.c.h.b16 %v4481
    %v6939 = vunpack.c.l.b16 %v4482
    %v6940 = vunpack.c.l.b16 %v4483
    %v6941 = vunpack.c.h.b16 %v4483
    %v6942 = vunpack.c.l.b16 %v4484
    %v6943 = vunpack.c.h.b16 %v4484
    %v6944 = vunpack.c.l.b16 %v4485
    %v6945 = vunpack.c.h.b16 %v4485
    %v6946 = vunpack.c.l.b16 %v4486
    %v6947 = vunpack.c.l.b16 %v4487
    %v6948 = vunpack.c.h.b16 %v4487
    %v6949 = vunpack.c.l.b16 %v4488
    %v6950 = vunpack.c.h.b16 %v4488
    %v6951 = vunpack.c.l.b16 %v4489
    %v6952 = vunpack.c.h.b16 %v4489
    %v6953 = vunpack.c.l.b16 %v4490
    %v6954 = vunpack.c.l.b16 %v4491
    %v6955 = vunpack.c.h.b16 %v4491
    %v6956 = vunpack.c.l.b16 %v4492
    %v6957 = vunpack.c.h.b16 %v4492
    %v6958 = vunpack.c.l.b16 %v4493
    %v6959 = vunpack.c.h.b16 %v4493
    %v6960 = vunpack.c.l.b16 %v4494
    %v6961 = vunpack.c.l.b16 %v4495
    %v6962 = vunpack.c.h.b16 %v4495
    %v6963 = vunpack.c.l.b16 %v4496
    %v6964 = vunpack.c.h.b16 %v4496
    %v6965 = vunpack.c.l.b16 %v4497
    %v6966 = vunpack.c.h.b16 %v4497
    %v6967 = vunpack.c.l.b16 %v4498
    %v6968 = vunpack.c.l.b16 %v4499
    %v6969 = vunpack.c.h.b16 %v4499
    %v6970 = vunpack.c.l.b16 %v4500
    %v6971 = vunpack.c.h.b16 %v4500
    %v6972 = vunpack.c.l.b16 %v4501
    %v6973 = vunpack.c.h.b16 %v4501
    %v6974 = vunpack.c.l.b16 %v4502
    %v6975 = vunpack.c.l.b16 %v4503
    %v6976 = vunpack.c.h.b16 %v4503
    %v6977 = vunpack.c.l.b16 %v4504
    %v6978 = vunpack.c.h.b16 %v4504
    %v6979 = vunpack.c.l.b16 %v4505
    %v6980 = vunpack.c.h.b16 %v4505
    %v6981 = vunpack.c.l.b16 %v4506
    %v6982 = vunpack.c.l.b16 %v4507
    %v6983 = vunpack.c.h.b16 %v4507
    %v6984 = vunpack.c.l.b16 %v4508
    %v6985 = vunpack.c.h.b16 %v4508
    %v6986 = vunpack.c.l.b16 %v4509
    %v6987 = vunpack.c.h.b16 %v4509
    %v6988 = vunpack.c.l.b16 %v4510
    %v6989 = vunpack.c.l.b16 %v4511
    %v6990 = vunpack.c.h.b16 %v4511
    %v6991 = vunpack.c.l.b16 %v4512
    %v6992 = vunpack.c.h.b16 %v4512
    %v6993 = vunpack.c.l.b16 %v4513
    %v6994 = vunpack.c.h.b16 %v4513
    %v6995 = vunpack.c.l.b16 %v4514
    %v6996 = vunpack.c.l.b16 %v4515
    %v6997 = vunpack.c.h.b16 %v4515
    %v6998 = vunpack.c.l.b16 %v4516
    %v6999 = vunpack.c.h.b16 %v4516
    %v7000 = vunpack.c.l.b16 %v4517
    %v7001 = vunpack.c.h.b16 %v4517
    %v7002 = vunpack.c.l.b16 %v4518
    %v7003 = vunpack.c.l.b16 %v4519
    %v7004 = vunpack.c.h.b16 %v4519
    %v7005 = vunpack.c.l.b16 %v4520
    %v7006 = vunpack.c.h.b16 %v4520
    %v7007 = vunpack.c.l.b16 %v4521
    %v7008 = vunpack.c.h.b16 %v4521
    %v7009 = vunpack.c.l.b16 %v4522
    %v7010 = vunpack.c.l.b16 %v4523
    %v7011 = vunpack.c.h.b16 %v4523
    %v7012 = vunpack.c.l.b16 %v4524
    %v7013 = vunpack.c.h.b16 %v4524
    %v7014 = vunpack.c.l.b16 %v4525
    %v7015 = vunpack.c.h.b16 %v4525
    %v7016 = vunpack.c.l.b16 %v4526
    %v7017 = vunpack.c.l.b16 %v4527
    %v7018 = vunpack.c.h.b16 %v4527
    %v7019 = vunpack.c.l.b16 %v4528
    %v7020 = vunpack.c.h.b16 %v4528
    %v7021 = vunpack.c.l.b16 %v4529
    %v7022 = vunpack.c.h.b16 %v4529
    %v7023 = vunpack.c.l.b16 %v4530
    %v7024 = vunpack.c.l.b16 %v4531
    %v7025 = vunpack.c.h.b16 %v4531
    %v7026 = vunpack.c.l.b16 %v4532
    %v7027 = vunpack.c.h.b16 %v4532
    %v7028 = vunpack.c.l.b16 %v4533
    %v7029 = vunpack.c.h.b16 %v4533
    %v7030 = vunpack.c.l.b16 %v4534
    %v7031 = vunpack.c.l.b16 %v4535
    %v7032 = vunpack.c.h.b16 %v4535
    %v7033 = vunpack.c.l.b16 %v4536
    %v7034 = vunpack.c.h.b16 %v4536
    %v7035 = vunpack.c.l.b16 %v4537
    %v7036 = vunpack.c.h.b16 %v4537
    %v7037 = vunpack.c.l.b16 %v4538
    %v7038 = vunpack.c.l.b16 %v4539
    %v7039 = vunpack.c.h.b16 %v4539
    %v7040 = vunpack.c.l.b16 %v4540
    %v7041 = vunpack.c.h.b16 %v4540
    %v7042 = vunpack.c.l.b16 %v4541
    %v7043 = vunpack.c.h.b16 %v4541
    %v7044 = vunpack.c.l.b16 %v4542
    %v7045 = vunpack.c.l.b16 %v4543
    %v7046 = vunpack.c.h.b16 %v4543
    %v7047 = vunpack.c.l.b16 %v4544
    %v7048 = vunpack.c.h.b16 %v4544
    %v7049 = vunpack.c.l.b16 %v4545
    %v7050 = vunpack.c.h.b16 %v4545
    %v7051 = vunpack.c.l.b16 %v4546
    %v7052 = vunpack.c.l.b16 %v4547
    %v7053 = vunpack.c.h.b16 %v4547
    %v7054 = vunpack.c.l.b16 %v4548
    %v7055 = vunpack.c.h.b16 %v4548
    %v7056 = vunpack.c.l.b16 %v4549
    %v7057 = vunpack.c.h.b16 %v4549
    %v7058 = vunpack.c.l.b16 %v4550
    %v7059 = vunpack.c.l.b16 %v4551
    %v7060 = vunpack.c.h.b16 %v4551
    %v7061 = vunpack.c.l.b16 %v4552
    %v7062 = vunpack.c.h.b16 %v4552
    %v7063 = vunpack.c.l.b16 %v4553
    %v7064 = vunpack.c.h.b16 %v4553
    %v7065 = vunpack.c.l.b16 %v4554
    %v7066 = vunpack.c.l.b16 %v4555
    %v7067 = vunpack.c.h.b16 %v4555
    %v7068 = vunpack.c.l.b16 %v4556
    %v7069 = vunpack.c.h.b16 %v4556
    %v7070 = vunpack.c.l.b16 %v4557
    %v7071 = vunpack.c.h.b16 %v4557
    %v7072 = vunpack.c.l.b16 %v4558
    %v7073 = vunpack.c.l.b16 %v4559
    %v7074 = vunpack.c.h.b16 %v4559
    %v7075 = vunpack.c.l.b16 %v4560
    %v7076 = vunpack.c.h.b16 %v4560
    %v7077 = vunpack.c.l.b16 %v4561
    %v7078 = vunpack.c.h.b16 %v4561
    %v7079 = vunpack.c.l.b16 %v4562
    %v7080 = vunpack.c.l.b16 %v4563
    %v7081 = vunpack.c.h.b16 %v4563
    %v7082 = vunpack.c.l.b16 %v4564
    %v7083 = vunpack.c.h.b16 %v4564
    %v7084 = vunpack.c.l.b16 %v4565
    %v7085 = vunpack.c.h.b16 %v4565
    %v7086 = vunpack.c.l.b16 %v4566
    %v7087 = vunpack.c.l.b16 %v4567
    %v7088 = vunpack.c.h.b16 %v4567
    %v7089 = vunpack.c.l.b16 %v4568
    %v7090 = vunpack.c.h.b16 %v4568
    %v7091 = vunpack.c.l.b16 %v4569
    %v7092 = vunpack.c.h.b16 %v4569
    %v7093 = vunpack.c.l.b16 %v4570
    %v7094 = vunpack.c.l.b16 %v4571
    %v7095 = vunpack.c.h.b16 %v4571
    %v7096 = vunpack.c.l.b16 %v4572
    %v7097 = vunpack.c.h.b16 %v4572
    %v7098 = vunpack.c.l.b16 %v4573
    %v7099 = vunpack.c.h.b16 %v4573
    %v7100 = vunpack.c.l.b16 %v4574
    %v7101 = vunpack.c.l.b16 %v4575
    %v7102 = vunpack.c.h.b16 %v4575
    %v7103 = vunpack.c.l.b16 %v4576
    %v7104 = vunpack.c.h.b16 %v4576
    %v7105 = vunpack.c.l.b16 %v4577
    %v7106 = vunpack.c.h.b16 %v4577
    %v7107 = vunpack.c.l.b16 %v4578
    %v7108 = vunpack.c.l.b16 %v4579
    %v7109 = vunpack.c.h.b16 %v4579
    %v7110 = vunpack.c.l.b16 %v4580
    %v7111 = vunpack.c.h.b16 %v4580
    %v7112 = vunpack.c.l.b16 %v4581
    %v7113 = vunpack.c.h.b16 %v4581
    %v7114 = vunpack.c.l.b16 %v4582
    %v7115 = vunpack.c.l.b16 %v4583
    %v7116 = vunpack.c.h.b16 %v4583
    %v7117 = vunpack.c.l.b16 %v4584
    %v7118 = vunpack.c.h.b16 %v4584
    %v7119 = vunpack.c.l.b16 %v4585
    %v7120 = vunpack.c.h.b16 %v4585
    %v7121 = vunpack.c.l.b16 %v4586
    %v7122 = vunpack.c.l.b16 %v4587
    %v7123 = vunpack.c.h.b16 %v4587
    %v7124 = vunpack.c.l.b16 %v4588
    %v7125 = vunpack.c.h.b16 %v4588
    %v7126 = vunpack.c.l.b16 %v4589
    %v7127 = vunpack.c.h.b16 %v4589
    %v7128 = vunpack.c.l.b16 %v4590
    %v7129 = vunpack.c.l.b16 %v4591
    %v7130 = vunpack.c.h.b16 %v4591
    %v7131 = vunpack.c.l.b16 %v4592
    %v7132 = vunpack.c.h.b16 %v4592
    %v7133 = vunpack.c.l.b16 %v4593
    %v7134 = vunpack.c.h.b16 %v4593
    %v7135 = vunpack.c.l.b16 %v4594
    %v7136 = vunpack.c.l.b16 %v4595
    %v7137 = vunpack.c.h.b16 %v4595
    %v7138 = vunpack.c.l.b16 %v4596
    %v7139 = vunpack.c.h.b16 %v4596
    %v7140 = vunpack.c.l.b16 %v4597
    %v7141 = vunpack.c.h.b16 %v4597
    %v7142 = vunpack.c.l.b16 %v4598
    %v7143 = vunpack.c.l.b16 %v4599
    %v7144 = vunpack.c.h.b16 %v4599
    %v7145 = vunpack.c.l.b16 %v4600
    %v7146 = vunpack.c.h.b16 %v4600
    %v7147 = vunpack.c.l.b16 %v4601
    %v7148 = vunpack.c.h.b16 %v4601
    %v7149 = vunpack.c.l.b16 %v4602
    %v7150 = vunpack.c.l.b16 %v4603
    %v7151 = vunpack.c.h.b16 %v4603
    %v7152 = vunpack.c.l.b16 %v4604
    %v7153 = vunpack.c.h.b16 %v4604
    %v7154 = vunpack.c.l.b16 %v4605
    %v7155 = vunpack.c.h.b16 %v4605
    %v7156 = vunpack.c.l.b16 %v4606
    %v7157 = vunpack.c.l.b16 %v4607
    %v7158 = vunpack.c.h.b16 %v4607
    %v7159 = vunpack.c.l.b16 %v4608
    %v7160 = vunpack.c.h.b16 %v4608
    %v7161 = vunpack.c.l.b16 %v4609
    %v7162 = vunpack.c.h.b16 %v4609
    %v7163 = vunpack.c.l.b16 %v4610
    %v7164 = vunpack.c.l.b16 %v4611
    %v7165 = vunpack.c.h.b16 %v4611
    %v7166 = vunpack.c.l.b16 %v4612
    %v7167 = vunpack.c.h.b16 %v4612
    %v7168 = vunpack.c.l.b16 %v4613
    %v7169 = vunpack.c.h.b16 %v4613
    %v7170 = vunpack.c.l.b16 %v4614
    %v7171 = vunpack.c.l.b16 %v4615
    %v7172 = vunpack.c.h.b16 %v4615
    %v7173 = vunpack.c.l.b16 %v4616
    %v7174 = vunpack.c.h.b16 %v4616
    %v7175 = vunpack.c.l.b16 %v4617
    %v7176 = vunpack.c.h.b16 %v4617
    %v7177 = vunpack.c.l.b16 %v4618
    %v7178 = vunpack.c.l.b16 %v4619
    %v7179 = vunpack.c.h.b16 %v4619
    %v7180 = vunpack.c.l.b16 %v4620
    %v7181 = vunpack.c.h.b16 %v4620
    %v7182 = vunpack.c.l.b16 %v4621
    %v7183 = vunpack.c.h.b16 %v4621
    %v7184 = vunpack.c.l.b16 %v4622
    %v7185 = vunpack.c.l.b16 %v4623
    %v7186 = vunpack.c.h.b16 %v4623
    %v7187 = vunpack.c.l.b16 %v4624
    %v7188 = vunpack.c.h.b16 %v4624
    %v7189 = vunpack.c.l.b16 %v4625
    %v7190 = vunpack.c.h.b16 %v4625
    %v7191 = vunpack.c.l.b16 %v4626
    %v7192 = vunpack.c.l.b16 %v4627
    %v7193 = vunpack.c.h.b16 %v4627
    %v7194 = vunpack.c.l.b16 %v4628
    %v7195 = vunpack.c.h.b16 %v4628
    %v7196 = vunpack.c.l.b16 %v4629
    %v7197 = vunpack.c.h.b16 %v4629
    %v7198 = vunpack.c.l.b16 %v4630
    %v7199 = vunpack.c.l.b16 %v4631
    %v7200 = vunpack.c.h.b16 %v4631
    %v7201 = vunpack.c.l.b16 %v4632
    %v7202 = vunpack.c.h.b16 %v4632
    %v7203 = vunpack.c.l.b16 %v4633
    %v7204 = vunpack.c.h.b16 %v4633
    %v7205 = vunpack.c.l.b16 %v4634
    %v7206 = vunpack.c.l.b16 %v4635
    %v7207 = vunpack.c.h.b16 %v4635
    %v7208 = vunpack.c.l.b16 %v4636
    %v7209 = vunpack.c.h.b16 %v4636
    %v7210 = vunpack.c.l.b16 %v4637
    %v7211 = vunpack.c.h.b16 %v4637
    %v7212 = vunpack.c.l.b16 %v4638
    %v7213 = vunpack.c.l.b16 %v4639
    %v7214 = vunpack.c.h.b16 %v4639
    %v7215 = vunpack.c.l.b16 %v4640
    %v7216 = vunpack.c.h.b16 %v4640
    %v7217 = vunpack.c.l.b16 %v4641
    %v7218 = vunpack.c.h.b16 %v4641
    %v7219 = vunpack.c.l.b16 %v4642
    %v7220 = vunpack.c.l.b16 %v4643
    %v7221 = vunpack.c.h.b16 %v4643
    %v7222 = vunpack.c.l.b16 %v4644
    %v7223 = vunpack.c.h.b16 %v4644
    %v7224 = vunpack.c.l.b16 %v4645
    %v7225 = vunpack.c.h.b16 %v4645
    %v7226 = vunpack.c.l.b16 %v4646
    %v7227 = vunpack.c.l.b16 %v4647
    %v7228 = vunpack.c.h.b16 %v4647
    %v7229 = vunpack.c.l.b16 %v4648
    %v7230 = vunpack.c.h.b16 %v4648
    %v7231 = vunpack.c.l.b16 %v4649
    %v7232 = vunpack.c.h.b16 %v4649
    %v7233 = vunpack.c.l.b16 %v4650
    %v7234 = vunpack.c.l.b16 %v4651
    %v7235 = vunpack.c.h.b16 %v4651
    %v7236 = vunpack.c.l.b16 %v4652
    %v7237 = vunpack.c.h.b16 %v4652
    %v7238 = vunpack.c.l.b16 %v4653
    %v7239 = vunpack.c.h.b16 %v4653
    %v7240 = vunpack.c.l.b16 %v4654
    %v7241 = vunpack.c.l.b16 %v4655
    %v7242 = vunpack.c.h.b16 %v4655
    %v7243 = vunpack.c.l.b16 %v4656
    %v7244 = vunpack.c.h.b16 %v4656
    %v7245 = vunpack.c.l.b16 %v4657
    %v7246 = vunpack.c.h.b16 %v4657
    %v7247 = vunpack.c.l.b16 %v4658
    %v7248 = vunpack.c.l.b16 %v4659
    %v7249 = vunpack.c.h.b16 %v4659
    %v7250 = vunpack.c.l.b16 %v4660
    %v7251 = vunpack.c.h.b16 %v4660
    %v7252 = vunpack.c.l.b16 %v4661
    %v7253 = vunpack.c.h.b16 %v4661
    %v7254 = vunpack.c.l.b16 %v4662
    %v7255 = vunpack.c.l.b16 %v4663
    %v7256 = vunpack.c.h.b16 %v4663
    %v7257 = vunpack.c.l.b16 %v4664
    %v7258 = vunpack.c.h.b16 %v4664
    %v7259 = vunpack.c.l.b16 %v4665
    %v7260 = vunpack.c.h.b16 %v4665
    %v7261 = vunpack.c.l.b16 %v4666
    %v7262 = vunpack.c.l.b16 %v4667
    %v7263 = vunpack.c.h.b16 %v4667
    %v7264 = vunpack.c.l.b16 %v4668
    %v7265 = vunpack.c.h.b16 %v4668
    %v7266 = vunpack.c.l.b16 %v4669
    %v7267 = vunpack.c.h.b16 %v4669
    %v7268 = vunpack.c.l.b16 %v4670
    %v7269 = vunpack.c.l.b16 %v4671
    %v7270 = vunpack.c.h.b16 %v4671
    %v7271 = vunpack.c.l.b16 %v4672
    %v7272 = vunpack.c.h.b16 %v4672
    %v7273 = vunpack.c.l.b16 %v4673
    %v7274 = vunpack.c.h.b16 %v4673
    %v7275 = vunpack.c.l.b16 %v4674
    %v7276 = vunpack.c.l.b16 %v4675
    %v7277 = vunpack.c.h.b16 %v4675
    %v7278 = vunpack.c.l.b16 %v4676
    %v7279 = vunpack.c.h.b16 %v4676
    %v7280 = vunpack.c.l.b16 %v4677
    %v7281 = vunpack.c.h.b16 %v4677
    %v7282 = vunpack.c.l.b16 %v4678
    %v7283 = vunpack.c.l.b16 %v4679
    %v7284 = vunpack.c.h.b16 %v4679
    %v7285 = vunpack.c.l.b16 %v4680
    %v7286 = vunpack.c.h.b16 %v4680
    %v7287 = vunpack.c.l.b16 %v4681
    %v7288 = vunpack.c.h.b16 %v4681
    %v7289 = vunpack.c.l.b16 %v4682
    %v7290 = vunpack.c.l.b16 %v4683
    %v7291 = vunpack.c.h.b16 %v4683
    %v7292 = vunpack.c.l.b16 %v4684
    %v7293 = vunpack.c.h.b16 %v4684
    %v7294 = vunpack.c.l.b16 %v4685
    %v7295 = vunpack.c.h.b16 %v4685
    %v7296 = vunpack.c.l.b16 %v4686
    %v7297 = vunpack.c.l.b16 %v4687
    %v7298 = vunpack.c.h.b16 %v4687
    %v7299 = vunpack.c.l.b16 %v4688
    %v7300 = vunpack.c.h.b16 %v4688
    %v7301 = vunpack.c.l.b16 %v4689
    %v7302 = vunpack.c.h.b16 %v4689
    %v7303 = vunpack.c.l.b16 %v4690
    %v7304 = vpack.c.b16 %v6863, %v6856
    %v7305 = vpack.c.b16 %v6864, %v6857
    %v7306 = vpack.c.b16 %v6865, %v6858
    %v7307 = vpack.c.b16 %v6866, %v6859
    %v7308 = vpack.c.b16 %v6867, %v6860
    %v7309 = vpack.c.b16 %v6868, %v6861
    %v7310 = vpack.c.b16 %v6869, %v6862
    %v7311 = vpack.c.b16 %v6877, %v6870
    %v7312 = vpack.c.b16 %v6878, %v6871
    %v7313 = vpack.c.b16 %v6879, %v6872
    %v7314 = vpack.c.b16 %v6880, %v6873
    %v7315 = vpack.c.b16 %v6881, %v6874
    %v7316 = vpack.c.b16 %v6882, %v6875
    %v7317 = vpack.c.b16 %v6883, %v6876
    %v7318 = vpack.c.b16 %v6891, %v6884
    %v7319 = vpack.c.b16 %v6892, %v6885
    %v7320 = vpack.c.b16 %v6893, %v6886
    %v7321 = vpack.c.b16 %v6894, %v6887
    %v7322 = vpack.c.b16 %v6895, %v6888
    %v7323 = vpack.c.b16 %v6896, %v6889
    %v7324 = vpack.c.b16 %v6897, %v6890
    %v7325 = vpack.c.b16 %v6905, %v6898
    %v7326 = vpack.c.b16 %v6906, %v6899
    %v7327 = vpack.c.b16 %v6907, %v6900
    %v7328 = vpack.c.b16 %v6908, %v6901
    %v7329 = vpack.c.b16 %v6909, %v6902
    %v7330 = vpack.c.b16 %v6910, %v6903
    %v7331 = vpack.c.b16 %v6911, %v6904
    %v7332 = vpack.c.b16 %v6919, %v6912
    %v7333 = vpack.c.b16 %v6920, %v6913
    %v7334 = vpack.c.b16 %v6921, %v6914
    %v7335 = vpack.c.b16 %v6922, %v6915
    %v7336 = vpack.c.b16 %v6923, %v6916
    %v7337 = vpack.c.b16 %v6924, %v6917
    %v7338 = vpack.c.b16 %v6925, %v6918
    %v7339 = vpack.c.b16 %v6933, %v6926
    %v7340 = vpack.c.b16 %v6934, %v6927
    %v7341 = vpack.c.b16 %v6935, %v6928
    %v7342 = vpack.c.b16 %v6936, %v6929
    %v7343 = vpack.c.b16 %v6937, %v6930
    %v7344 = vpack.c.b16 %v6938, %v6931
    %v7345 = vpack.c.b16 %v6939, %v6932
    %v7346 = vpack.c.b16 %v6947, %v6940
    %v7347 = vpack.c.b16 %v6948, %v6941
    %v7348 = vpack.c.b16 %v6949, %v6942
    %v7349 = vpack.c.b16 %v6950, %v6943
    %v7350 = vpack.c.b16 %v6951, %v6944
    %v7351 = vpack.c.b16 %v6952, %v6945
    %v7352 = vpack.c.b16 %v6953, %v6946
    %v7353 = vpack.c.b16 %v6961, %v6954
    %v7354 = vpack.c.b16 %v6962, %v6955
    %v7355 = vpack.c.b16 %v6963, %v6956
    %v7356 = vpack.c.b16 %v6964, %v6957
    %v7357 = vpack.c.b16 %v6965, %v6958
    %v7358 = vpack.c.b16 %v6966, %v6959
    %v7359 = vpack.c.b16 %v6967, %v6960
    %v7360 = vpack.c.b16 %v6975, %v6968
    %v7361 = vpack.c.b16 %v6976, %v6969
    %v7362 = vpack.c.b16 %v6977, %v6970
    %v7363 = vpack.c.b16 %v6978, %v6971
    %v7364 = vpack.c.b16 %v6979, %v6972
    %v7365 = vpack.c.b16 %v6980, %v6973
    %v7366 = vpack.c.b16 %v6981, %v6974
    %v7367 = vpack.c.b16 %v6989, %v6982
    %v7368 = vpack.c.b16 %v6990, %v6983
    %v7369 = vpack.c.b16 %v6991, %v6984
    %v7370 = vpack.c.b16 %v6992, %v6985
    %v7371 = vpack.c.b16 %v6993, %v6986
    %v7372 = vpack.c.b16 %v6994, %v6987
    %v7373 = vpack.c.b16 %v6995, %v6988
    %v7374 = vpack.c.b16 %v7003, %v6996
    %v7375 = vpack.c.b16 %v7004, %v6997
    %v7376 = vpack.c.b16 %v7005, %v6998
    %v7377 = vpack.c.b16 %v7006, %v6999
    %v7378 = vpack.c.b16 %v7007, %v7000
    %v7379 = vpack.c.b16 %v7008, %v7001
    %v7380 = vpack.c.b16 %v7009, %v7002
    %v7381 = vpack.c.b16 %v7017, %v7010
    %v7382 = vpack.c.b16 %v7018, %v7011
    %v7383 = vpack.c.b16 %v7019, %v7012
    %v7384 = vpack.c.b16 %v7020, %v7013
    %v7385 = vpack.c.b16 %v7021, %v7014
    %v7386 = vpack.c.b16 %v7022, %v7015
    %v7387 = vpack.c.b16 %v7023, %v7016
    %v7388 = vpack.c.b16 %v7031, %v7024
    %v7389 = vpack.c.b16 %v7032, %v7025
    %v7390 = vpack.c.b16 %v7033, %v7026
    %v7391 = vpack.c.b16 %v7034, %v7027
    %v7392 = vpack.c.b16 %v7035, %v7028
    %v7393 = vpack.c.b16 %v7036, %v7029
    %v7394 = vpack.c.b16 %v7037, %v7030
    %v7395 = vpack.c.b16 %v7045, %v7038
    %v7396 = vpack.c.b16 %v7046, %v7039
    %v7397 = vpack.c.b16 %v7047, %v7040
    %v7398 = vpack.c.b16 %v7048, %v7041
    %v7399 = vpack.c.b16 %v7049, %v7042
    %v7400 = vpack.c.b16 %v7050, %v7043
    %v7401 = vpack.c.b16 %v7051, %v7044
    %v7402 = vpack.c.b16 %v7059, %v7052
    %v7403 = vpack.c.b16 %v7060, %v7053
    %v7404 = vpack.c.b16 %v7061, %v7054
    %v7405 = vpack.c.b16 %v7062, %v7055
    %v7406 = vpack.c.b16 %v7063, %v7056
    %v7407 = vpack.c.b16 %v7064, %v7057
    %v7408 = vpack.c.b16 %v7065, %v7058
    %v7409 = vpack.c.b16 %v7073, %v7066
    %v7410 = vpack.c.b16 %v7074, %v7067
    %v7411 = vpack.c.b16 %v7075, %v7068
    %v7412 = vpack.c.b16 %v7076, %v7069
    %v7413 = vpack.c.b16 %v7077, %v7070
    %v7414 = vpack.c.b16 %v7078, %v7071
    %v7415 = vpack.c.b16 %v7079, %v7072
    %v7416 = vpack.c.b16 %v7087, %v7080
    %v7417 = vpack.c.b16 %v7088, %v7081
    %v7418 = vpack.c.b16 %v7089, %v7082
    %v7419 = vpack.c.b16 %v7090, %v7083
    %v7420 = vpack.c.b16 %v7091, %v7084
    %v7421 = vpack.c.b16 %v7092, %v7085
    %v7422 = vpack.c.b16 %v7093, %v7086
    %v7423 = vpack.c.b16 %v7101, %v7094
    %v7424 = vpack.c.b16 %v7102, %v7095
    %v7425 = vpack.c.b16 %v7103, %v7096
    %v7426 = vpack.c.b16 %v7104, %v7097
    %v7427 = vpack.c.b16 %v7105, %v7098
    %v7428 = vpack.c.b16 %v7106, %v7099
    %v7429 = vpack.c.b16 %v7107, %v7100
    %v7430 = vpack.c.b16 %v7115, %v7108
    %v7431 = vpack.c.b16 %v7116, %v7109
    %v7432 = vpack.c.b16 %v7117, %v7110
    %v7433 = vpack.c.b16 %v7118, %v7111
    %v7434 = vpack.c.b16 %v7119, %v7112
    %v7435 = vpack.c.b16 %v7120, %v7113
    %v7436 = vpack.c.b16 %v7121, %v7114
    %v7437 = vpack.c.b16 %v7129, %v7122
    %v7438 = vpack.c.b16 %v7130, %v7123
    %v7439 = vpack.c.b16 %v7131, %v7124
    %v7440 = vpack.c.b16 %v7132, %v7125
    %v7441 = vpack.c.b16 %v7133, %v7126
    %v7442 = vpack.c.b16 %v7134, %v7127
    %v7443 = vpack.c.b16 %v7135, %v7128
    %v7444 = vpack.c.b16 %v7143, %v7136
    %v7445 = vpack.c.b16 %v7144, %v7137
    %v7446 = vpack.c.b16 %v7145, %v7138
    %v7447 = vpack.c.b16 %v7146, %v7139
    %v7448 = vpack.c.b16 %v7147, %v7140
    %v7449 = vpack.c.b16 %v7148, %v7141
    %v7450 = vpack.c.b16 %v7149, %v7142
    %v7451 = vpack.c.b16 %v7157, %v7150
    %v7452 = vpack.c.b16 %v7158, %v7151
    %v7453 = vpack.c.b16 %v7159, %v7152
    %v7454 = vpack.c.b16 %v7160, %v7153
    %v7455 = vpack.c.b16 %v7161, %v7154
    %v7456 = vpack.c.b16 %v7162, %v7155
    %v7457 = vpack.c.b16 %v7163, %v7156
    %v7458 = vpack.c.b16 %v7171, %v7164
    %v7459 = vpack.c.b16 %v7172, %v7165
    %v7460 = vpack.c.b16 %v7173, %v7166
    %v7461 = vpack.c.b16 %v7174, %v7167
    %v7462 = vpack.c.b16 %v7175, %v7168
    %v7463 = vpack.c.b16 %v7176, %v7169
    %v7464 = vpack.c.b16 %v7177, %v7170
    %v7465 = vpack.c.b16 %v7185, %v7178
    %v7466 = vpack.c.b16 %v7186, %v7179
    %v7467 = vpack.c.b16 %v7187, %v7180
    %v7468 = vpack.c.b16 %v7188, %v7181
    %v7469 = vpack.c.b16 %v7189, %v7182
    %v7470 = vpack.c.b16 %v7190, %v7183
    %v7471 = vpack.c.b16 %v7191, %v7184
    %v7472 = vpack.c.b16 %v7199, %v7192
    %v7473 = vpack.c.b16 %v7200, %v7193
    %v7474 = vpack.c.b16 %v7201, %v7194
    %v7475 = vpack.c.b16 %v7202, %v7195
    %v7476 = vpack.c.b16 %v7203, %v7196
    %v7477 = vpack.c.b16 %v7204, %v7197
    %v7478 = vpack.c.b16 %v7205, %v7198
    %v7479 = vpack.c.b16 %v7213, %v7206
    %v7480 = vpack.c.b16 %v7214, %v7207
    %v7481 = vpack.c.b16 %v7215, %v7208
    %v7482 = vpack.c.b16 %v7216, %v7209
    %v7483 = vpack.c.b16 %v7217, %v7210
    %v7484 = vpack.c.b16 %v7218, %v7211
    %v7485 = vpack.c.b16 %v7219, %v7212
    %v7486 = vpack.c.b16 %v7227, %v7220
    %v7487 = vpack.c.b16 %v7228, %v7221
    %v7488 = vpack.c.b16 %v7229, %v7222
    %v7489 = vpack.c.b16 %v7230, %v7223
    %v7490 = vpack.c.b16 %v7231, %v7224
    %v7491 = vpack.c.b16 %v7232, %v7225
    %v7492 = vpack.c.b16 %v7233, %v7226
    %v7493 = vpack.c.b16 %v7241, %v7234
    %v7494 = vpack.c.b16 %v7242, %v7235
    %v7495 = vpack.c.b16 %v7243, %v7236
    %v7496 = vpack.c.b16 %v7244, %v7237
    %v7497 = vpack.c.b16 %v7245, %v7238
    %v7498 = vpack.c.b16 %v7246, %v7239
    %v7499 = vpack.c.b16 %v7247, %v7240
    %v7500 = vpack.c.b16 %v7255, %v7248
    %v7501 = vpack.c.b16 %v7256, %v7249
    %v7502 = vpack.c.b16 %v7257, %v7250
    %v7503 = vpack.c.b16 %v7258, %v7251
    %v7504 = vpack.c.b16 %v7259, %v7252
    %v7505 = vpack.c.b16 %v7260, %v7253
    %v7506 = vpack.c.b16 %v7261, %v7254
    %v7507 = vpack.c.b16 %v7269, %v7262
    %v7508 = vpack.c.b16 %v7270, %v7263
    %v7509 = vpack.c.b16 %v7271, %v7264
    %v7510 = vpack.c.b16 %v7272, %v7265
    %v7511 = vpack.c.b16 %v7273, %v7266
    %v7512 = vpack.c.b16 %v7274, %v7267
    %v7513 = vpack.c.b16 %v7275, %v7268
    %v7514 = vpack.c.b16 %v7283, %v7276
    %v7515 = vpack.c.b16 %v7284, %v7277
    %v7516 = vpack.c.b16 %v7285, %v7278
    %v7517 = vpack.c.b16 %v7286, %v7279
    %v7518 = vpack.c.b16 %v7287, %v7280
    %v7519 = vpack.c.b16 %v7288, %v7281
    %v7520 = vpack.c.b16 %v7289, %v7282
    %v7521 = vpack.c.b16 %v7297, %v7290
    %v7522 = vpack.c.b16 %v7298, %v7291
    %v7523 = vpack.c.b16 %v7299, %v7292
    %v7524 = vpack.c.b16 %v7300, %v7293
    %v7525 = vpack.c.b16 %v7301, %v7294
    %v7526 = vpack.c.b16 %v7302, %v7295
    %v7527 = vpack.c.b16 %v7303, %v7296
    %7752 = vmatprep.subr.bf16.mxu0 %v7354
    %7753 = vmatpush1.bf16.msra.mxu0 %v7353
    %7754 = vmatprep.subr.bf16.mxu0 %v7347
    %7755 = vmatpush1.bf16.msra.mxu0 %v7346
    %7756 = vmatprep.subr.bf16.mxu0 %v7340
    %7757 = vmatpush1.bf16.msra.mxu0 %v7339
    %7758 = vmatprep.subr.bf16.mxu0 %v7333
    %7759 = vmatpush1.bf16.msra.mxu0 %v7332
    %7760 = vmatprep.subr.bf16.mxu0 %v7326
    %7761 = vmatpush1.bf16.msra.mxu0 %v7325
    %7762 = vmatprep.subr.bf16.mxu0 %v7319
    %7763 = vmatpush1.bf16.msra.mxu0 %v7318
    %7764 = vmatprep.subr.bf16.mxu0 %v7312
    %7765 = vmatpush1.bf16.msra.mxu0 %v7311
    %7766 = vmatprep.subr.bf16.mxu0 %v7305
    %7767 = vmatpush1.bf16.msra.mxu0 %v7304
    %7768 = vmatprep.subr.bf16.mxu0 %v7410
    %7769 = vmatpush2.bf16.msra.mxu0 %v7409
    %7770 = vmatprep.subr.bf16.mxu0 %v7403
    %7771 = vmatpush2.bf16.msra.mxu0 %v7402
    %7772 = vmatprep.subr.bf16.mxu0 %v7396
    %7773 = vmatpush2.bf16.msra.mxu0 %v7395
    %7774 = vmatprep.subr.bf16.mxu0 %v7389
    %7775 = vmatpush2.bf16.msra.mxu0 %v7388
    %7776 = vmatprep.subr.bf16.mxu0 %v7382
    %7777 = vmatpush2.bf16.msra.mxu0 %v7381
    %7778 = vmatprep.subr.bf16.mxu0 %v7375
    %7779 = vmatpush2.bf16.msra.mxu0 %v7374
    %7780 = vmatprep.subr.bf16.mxu0 %v7368
    %7781 = vmatpush2.bf16.msra.mxu0 %v7367
    %7782 = vmatprep.subr.bf16.mxu0 %v7361
    %7783 = vmatpush2.bf16.msra.mxu0 %v7360
    %7784 = vmatprep.mubr.bf16.mxu0 %v6585
    %7785 = vmatmul.mubr.bf16.gmra.mxu0 %v6584
    %v7786 = vpop.f32.mrf.mxu0
    %v7787 = vadd.f32 %v6244, %v7786
    %v7788 = vpop.f32.mrf.mxu0
    %v7789 = vadd.f32 %v6246, %v7788
    %v7790 = vpop.f32.mrf.mxu0
    %v7791 = vadd.f32 %v6248, %v7790
    %v7792 = vpop.f32.mrf.mxu0
    %v7793 = vadd.f32 %v6250, %v7792
    %7794 = vmatprep.mubr.bf16.mxu0 %v6589
    %7795 = vmatmul.mubr.bf16.gmra.mxu0 %v6588
    %v7796 = vpop.f32.mrf.mxu0
    %v7797 = vadd.f32 %v6254, %v7796
    %v7798 = vpop.f32.mrf.mxu0
    %v7799 = vadd.f32 %v6256, %v7798
    %v7800 = vpop.f32.mrf.mxu0
    %v7801 = vadd.f32 %v6258, %v7800
    %v7802 = vpop.f32.mrf.mxu0
    %v7803 = vadd.f32 %v6260, %v7802
    %7804 = vdwg.mxu0
    %7805 = vmatprep.subr.bf16.mxu0 %v7466
    %7806 = vmatpush1.bf16.msra.mxu0 %v7465
    %7807 = vmatprep.subr.bf16.mxu0 %v7459
    %7808 = vmatpush1.bf16.msra.mxu0 %v7458
    %7809 = vmatprep.subr.bf16.mxu0 %v7452
    %7810 = vmatpush1.bf16.msra.mxu0 %v7451
    %7811 = vmatprep.subr.bf16.mxu0 %v7445
    %7812 = vmatpush1.bf16.msra.mxu0 %v7444
    %7813 = vmatprep.subr.bf16.mxu0 %v7438
    %7814 = vmatpush1.bf16.msra.mxu0 %v7437
    %7815 = vmatprep.subr.bf16.mxu0 %v7431
    %7816 = vmatpush1.bf16.msra.mxu0 %v7430
    %7817 = vmatprep.subr.bf16.mxu0 %v7424
    %7818 = vmatpush1.bf16.msra.mxu0 %v7423
    %7819 = vmatprep.subr.bf16.mxu0 %v7417
    %7820 = vmatpush1.bf16.msra.mxu0 %v7416
    %7821 = vmatprep.subr.bf16.mxu0 %v7522
    %7822 = vmatpush2.bf16.msra.mxu0 %v7521
    %7823 = vmatprep.subr.bf16.mxu0 %v7515
    %7824 = vmatpush2.bf16.msra.mxu0 %v7514
    %7825 = vmatprep.subr.bf16.mxu0 %v7508
    %7826 = vmatpush2.bf16.msra.mxu0 %v7507
    %7827 = vmatprep.subr.bf16.mxu0 %v7501
    %7828 = vmatpush2.bf16.msra.mxu0 %v7500
    %7829 = vmatprep.subr.bf16.mxu0 %v7494
    %7830 = vmatpush2.bf16.msra.mxu0 %v7493
    %7831 = vmatprep.subr.bf16.mxu0 %v7487
    %7832 = vmatpush2.bf16.msra.mxu0 %v7486
    %7833 = vmatprep.subr.bf16.mxu0 %v7480
    %7834 = vmatpush2.bf16.msra.mxu0 %v7479
    %7835 = vmatprep.subr.bf16.mxu0 %v7473
    %7836 = vmatpush2.bf16.msra.mxu0 %v7472
    %7837 = vmatprep.mubr.bf16.mxu0 %v6587
    %7838 = vmatmul.mubr.bf16.gmra.mxu0 %v6586
    %v7839 = vpop.f32.mrf.mxu0
    %v7840 = vadd.f32 %v7787, %v7839
    %v7841 = vpop.f32.mrf.mxu0
    %v7842 = vadd.f32 %v7789, %v7841
    %v7843 = vpop.f32.mrf.mxu0
    %v7844 = vadd.f32 %v7791, %v7843
    %v7845 = vpop.f32.mrf.mxu0
    %v7846 = vadd.f32 %v7793, %v7845
    %7847 = vmatprep.mubr.bf16.mxu0 %v6591
    %7848 = vmatmul.mubr.bf16.gmra.mxu0 %v6590
    %v7849 = vpop.f32.mrf.mxu0
    %v7850 = vadd.f32 %v7797, %v7849
    %v7851 = vpop.f32.mrf.mxu0
    %v7852 = vadd.f32 %v7799, %v7851
    %v7853 = vpop.f32.mrf.mxu0
    %v7854 = vadd.f32 %v7801, %v7853
    %v7855 = vpop.f32.mrf.mxu0
    %v7856 = vadd.f32 %v7803, %v7855
    %7857 = vdwg.mxu0
    %7858 = vmatprep.subr.bf16.mxu0 %v7356
    %7859 = vmatpush1.bf16.msra.mxu0 %v7355
    %7860 = vmatprep.subr.bf16.mxu0 %v7349
    %7861 = vmatpush1.bf16.msra.mxu0 %v7348
    %7862 = vmatprep.subr.bf16.mxu0 %v7342
    %7863 = vmatpush1.bf16.msra.mxu0 %v7341
    %7864 = vmatprep.subr.bf16.mxu0 %v7335
    %7865 = vmatpush1.bf16.msra.mxu0 %v7334
    %7866 = vmatprep.subr.bf16.mxu0 %v7328
    %7867 = vmatpush1.bf16.msra.mxu0 %v7327
    %7868 = vmatprep.subr.bf16.mxu0 %v7321
    %7869 = vmatpush1.bf16.msra.mxu0 %v7320
    %7870 = vmatprep.subr.bf16.mxu0 %v7314
    %7871 = vmatpush1.bf16.msra.mxu0 %v7313
    %7872 = vmatprep.subr.bf16.mxu0 %v7307
    %7873 = vmatpush1.bf16.msra.mxu0 %v7306
    %7874 = vmatprep.subr.bf16.mxu0 %v7412
    %7875 = vmatpush2.bf16.msra.mxu0 %v7411
    %7876 = vmatprep.subr.bf16.mxu0 %v7405
    %7877 = vmatpush2.bf16.msra.mxu0 %v7404
    %7878 = vmatprep.subr.bf16.mxu0 %v7398
    %7879 = vmatpush2.bf16.msra.mxu0 %v7397
    %7880 = vmatprep.subr.bf16.mxu0 %v7391
    %7881 = vmatpush2.bf16.msra.mxu0 %v7390
    %7882 = vmatprep.subr.bf16.mxu0 %v7384
    %7883 = vmatpush2.bf16.msra.mxu0 %v7383
    %7884 = vmatprep.subr.bf16.mxu0 %v7377
    %7885 = vmatpush2.bf16.msra.mxu0 %v7376
    %7886 = vmatprep.subr.bf16.mxu0 %v7370
    %7887 = vmatpush2.bf16.msra.mxu0 %v7369
    %7888 = vmatprep.subr.bf16.mxu0 %v7363
    %7889 = vmatpush2.bf16.msra.mxu0 %v7362
    %7890 = vmatprep.mubr.bf16.mxu0 %v6585
    %7891 = vmatmul.mubr.bf16.gmra.mxu0 %v6584
    %v7892 = vpop.f32.mrf.mxu0
    %v7893 = vadd.f32 %v6350, %v7892
    %v7894 = vpop.f32.mrf.mxu0
    %v7895 = vadd.f32 %v6352, %v7894
    %v7896 = vpop.f32.mrf.mxu0
    %v7897 = vadd.f32 %v6354, %v7896
    %v7898 = vpop.f32.mrf.mxu0
    %v7899 = vadd.f32 %v6356, %v7898
    %7900 = vmatprep.mubr.bf16.mxu0 %v6589
    %7901 = vmatmul.mubr.bf16.gmra.mxu0 %v6588
    %v7902 = vpop.f32.mrf.mxu0
    %v7903 = vadd.f32 %v6360, %v7902
    %v7904 = vpop.f32.mrf.mxu0
    %v7905 = vadd.f32 %v6362, %v7904
    %v7906 = vpop.f32.mrf.mxu0
    %v7907 = vadd.f32 %v6364, %v7906
    %v7908 = vpop.f32.mrf.mxu0
    %v7909 = vadd.f32 %v6366, %v7908
    %7910 = vdwg.mxu0
    %7911 = vmatprep.subr.bf16.mxu0 %v7468
    %7912 = vmatpush1.bf16.msra.mxu0 %v7467
    %7913 = vmatprep.subr.bf16.mxu0 %v7461
    %7914 = vmatpush1.bf16.msra.mxu0 %v7460
    %7915 = vmatprep.subr.bf16.mxu0 %v7454
    %7916 = vmatpush1.bf16.msra.mxu0 %v7453
    %7917 = vmatprep.subr.bf16.mxu0 %v7447
    %7918 = vmatpush1.bf16.msra.mxu0 %v7446
    %7919 = vmatprep.subr.bf16.mxu0 %v7440
    %7920 = vmatpush1.bf16.msra.mxu0 %v7439
    %7921 = vmatprep.subr.bf16.mxu0 %v7433
    %7922 = vmatpush1.bf16.msra.mxu0 %v7432
    %7923 = vmatprep.subr.bf16.mxu0 %v7426
    %7924 = vmatpush1.bf16.msra.mxu0 %v7425
    %7925 = vmatprep.subr.bf16.mxu0 %v7419
    %7926 = vmatpush1.bf16.msra.mxu0 %v7418
    %7927 = vmatprep.subr.bf16.mxu0 %v7524
    %7928 = vmatpush2.bf16.msra.mxu0 %v7523
    %7929 = vmatprep.subr.bf16.mxu0 %v7517
    %7930 = vmatpush2.bf16.msra.mxu0 %v7516
    %7931 = vmatprep.subr.bf16.mxu0 %v7510
    %7932 = vmatpush2.bf16.msra.mxu0 %v7509
    %7933 = vmatprep.subr.bf16.mxu0 %v7503
    %7934 = vmatpush2.bf16.msra.mxu0 %v7502
    %7935 = vmatprep.subr.bf16.mxu0 %v7496
    %7936 = vmatpush2.bf16.msra.mxu0 %v7495
    %7937 = vmatprep.subr.bf16.mxu0 %v7489
    %7938 = vmatpush2.bf16.msra.mxu0 %v7488
    %7939 = vmatprep.subr.bf16.mxu0 %v7482
    %7940 = vmatpush2.bf16.msra.mxu0 %v7481
    %7941 = vmatprep.subr.bf16.mxu0 %v7475
    %7942 = vmatpush2.bf16.msra.mxu0 %v7474
    %7943 = vmatprep.mubr.bf16.mxu0 %v6587
    %7944 = vmatmul.mubr.bf16.gmra.mxu0 %v6586
    %v7945 = vpop.f32.mrf.mxu0
    %v7946 = vadd.f32 %v7893, %v7945
    %v7947 = vpop.f32.mrf.mxu0
    %v7948 = vadd.f32 %v7895, %v7947
    %v7949 = vpop.f32.mrf.mxu0
    %v7950 = vadd.f32 %v7897, %v7949
    %v7951 = vpop.f32.mrf.mxu0
    %v7952 = vadd.f32 %v7899, %v7951
    %7953 = vmatprep.mubr.bf16.mxu0 %v6591
    %7954 = vmatmul.mubr.bf16.gmra.mxu0 %v6590
    %v7955 = vpop.f32.mrf.mxu0
    %v7956 = vadd.f32 %v7903, %v7955
    %v7957 = vpop.f32.mrf.mxu0
    %v7958 = vadd.f32 %v7905, %v7957
    %v7959 = vpop.f32.mrf.mxu0
    %v7960 = vadd.f32 %v7907, %v7959
    %v7961 = vpop.f32.mrf.mxu0
    %v7962 = vadd.f32 %v7909, %v7961
    %7963 = vdwg.mxu0
    %7964 = vmatprep.subr.bf16.mxu0 %v7358
    %7965 = vmatpush1.bf16.msra.mxu0 %v7357
    %7966 = vmatprep.subr.bf16.mxu0 %v7351
    %7967 = vmatpush1.bf16.msra.mxu0 %v7350
    %7968 = vmatprep.subr.bf16.mxu0 %v7344
    %7969 = vmatpush1.bf16.msra.mxu0 %v7343
    %7970 = vmatprep.subr.bf16.mxu0 %v7337
    %7971 = vmatpush1.bf16.msra.mxu0 %v7336
    %7972 = vmatprep.subr.bf16.mxu0 %v7330
    %7973 = vmatpush1.bf16.msra.mxu0 %v7329
    %7974 = vmatprep.subr.bf16.mxu0 %v7323
    %7975 = vmatpush1.bf16.msra.mxu0 %v7322
    %7976 = vmatprep.subr.bf16.mxu0 %v7316
    %7977 = vmatpush1.bf16.msra.mxu0 %v7315
    %7978 = vmatprep.subr.bf16.mxu0 %v7309
    %7979 = vmatpush1.bf16.msra.mxu0 %v7308
    %7980 = vmatprep.subr.bf16.mxu0 %v7414
    %7981 = vmatpush2.bf16.msra.mxu0 %v7413
    %7982 = vmatprep.subr.bf16.mxu0 %v7407
    %7983 = vmatpush2.bf16.msra.mxu0 %v7406
    %7984 = vmatprep.subr.bf16.mxu0 %v7400
    %7985 = vmatpush2.bf16.msra.mxu0 %v7399
    %7986 = vmatprep.subr.bf16.mxu0 %v7393
    %7987 = vmatpush2.bf16.msra.mxu0 %v7392
    %7988 = vmatprep.subr.bf16.mxu0 %v7386
    %7989 = vmatpush2.bf16.msra.mxu0 %v7385
    %7990 = vmatprep.subr.bf16.mxu0 %v7379
    %7991 = vmatpush2.bf16.msra.mxu0 %v7378
    %7992 = vmatprep.subr.bf16.mxu0 %v7372
    %7993 = vmatpush2.bf16.msra.mxu0 %v7371
    %7994 = vmatprep.subr.bf16.mxu0 %v7365
    %7995 = vmatpush2.bf16.msra.mxu0 %v7364
    %7996 = vmatprep.mubr.bf16.mxu0 %v6585
    %7997 = vmatmul.mubr.bf16.gmra.mxu0 %v6584
    %v7998 = vpop.f32.mrf.mxu0
    %v7999 = vadd.f32 %v6456, %v7998
    %v8000 = vpop.f32.mrf.mxu0
    %v8001 = vadd.f32 %v6458, %v8000
    %v8002 = vpop.f32.mrf.mxu0
    %v8003 = vadd.f32 %v6460, %v8002
    %v8004 = vpop.f32.mrf.mxu0
    %v8005 = vadd.f32 %v6462, %v8004
    %8006 = vmatprep.mubr.bf16.mxu0 %v6589
    %8007 = vmatmul.mubr.bf16.gmra.mxu0 %v6588
    %v8008 = vpop.f32.mrf.mxu0
    %v8009 = vadd.f32 %v6466, %v8008
    %v8010 = vpop.f32.mrf.mxu0
    %v8011 = vadd.f32 %v6468, %v8010
    %v8012 = vpop.f32.mrf.mxu0
    %v8013 = vadd.f32 %v6470, %v8012
    %v8014 = vpop.f32.mrf.mxu0
    %v8015 = vadd.f32 %v6472, %v8014
    %8016 = vdwg.mxu0
    %8017 = vmatprep.subr.bf16.mxu0 %v7470
    %8018 = vmatpush1.bf16.msra.mxu0 %v7469
    %8019 = vmatprep.subr.bf16.mxu0 %v7463
    %8020 = vmatpush1.bf16.msra.mxu0 %v7462
    %8021 = vmatprep.subr.bf16.mxu0 %v7456
    %8022 = vmatpush1.bf16.msra.mxu0 %v7455
    %8023 = vmatprep.subr.bf16.mxu0 %v7449
    %8024 = vmatpush1.bf16.msra.mxu0 %v7448
    %8025 = vmatprep.subr.bf16.mxu0 %v7442
    %8026 = vmatpush1.bf16.msra.mxu0 %v7441
    %8027 = vmatprep.subr.bf16.mxu0 %v7435
    %8028 = vmatpush1.bf16.msra.mxu0 %v7434
    %8029 = vmatprep.subr.bf16.mxu0 %v7428
    %8030 = vmatpush1.bf16.msra.mxu0 %v7427
    %8031 = vmatprep.subr.bf16.mxu0 %v7421
    %8032 = vmatpush1.bf16.msra.mxu0 %v7420
    %8033 = vmatprep.subr.bf16.mxu0 %v7526
    %8034 = vmatpush2.bf16.msra.mxu0 %v7525
    %8035 = vmatprep.subr.bf16.mxu0 %v7519
    %8036 = vmatpush2.bf16.msra.mxu0 %v7518
    %8037 = vmatprep.subr.bf16.mxu0 %v7512
    %8038 = vmatpush2.bf16.msra.mxu0 %v7511
    %8039 = vmatprep.subr.bf16.mxu0 %v7505
    %8040 = vmatpush2.bf16.msra.mxu0 %v7504
    %8041 = vmatprep.subr.bf16.mxu0 %v7498
    %8042 = vmatpush2.bf16.msra.mxu0 %v7497
    %8043 = vmatprep.subr.bf16.mxu0 %v7491
    %8044 = vmatpush2.bf16.msra.mxu0 %v7490
    %8045 = vmatprep.subr.bf16.mxu0 %v7484
    %8046 = vmatpush2.bf16.msra.mxu0 %v7483
    %8047 = vmatprep.subr.bf16.mxu0 %v7477
    %8048 = vmatpush2.bf16.msra.mxu0 %v7476
    %8049 = vmatprep.mubr.bf16.mxu0 %v6587
    %8050 = vmatmul.mubr.bf16.gmra.mxu0 %v6586
    %v8051 = vpop.f32.mrf.mxu0
    %v8052 = vadd.f32 %v7999, %v8051
    %v8053 = vpop.f32.mrf.mxu0
    %v8054 = vadd.f32 %v8001, %v8053
    %v8055 = vpop.f32.mrf.mxu0
    %v8056 = vadd.f32 %v8003, %v8055
    %v8057 = vpop.f32.mrf.mxu0
    %v8058 = vadd.f32 %v8005, %v8057
    %8059 = vmatprep.mubr.bf16.mxu0 %v6591
    %8060 = vmatmul.mubr.bf16.gmra.mxu0 %v6590
    %v8061 = vpop.f32.mrf.mxu0
    %v8062 = vadd.f32 %v8009, %v8061
    %v8063 = vpop.f32.mrf.mxu0
    %v8064 = vadd.f32 %v8011, %v8063
    %v8065 = vpop.f32.mrf.mxu0
    %v8066 = vadd.f32 %v8013, %v8065
    %v8067 = vpop.f32.mrf.mxu0
    %v8068 = vadd.f32 %v8015, %v8067
    %8069 = vdwg.mxu0
    %8070 = vmatprep.subr.bf16.mxu0 0
    %8071 = vmatpush1.bf16.msra.mxu0 %v7359
    %8072 = vmatprep.subr.bf16.mxu0 0
    %8073 = vmatpush1.bf16.msra.mxu0 %v7352
    %8074 = vmatprep.subr.bf16.mxu0 0
    %8075 = vmatpush1.bf16.msra.mxu0 %v7345
    %8076 = vmatprep.subr.bf16.mxu0 0
    %8077 = vmatpush1.bf16.msra.mxu0 %v7338
    %8078 = vmatprep.subr.bf16.mxu0 0
    %8079 = vmatpush1.bf16.msra.mxu0 %v7331
    %8080 = vmatprep.subr.bf16.mxu0 0
    %8081 = vmatpush1.bf16.msra.mxu0 %v7324
    %8082 = vmatprep.subr.bf16.mxu0 0
    %8083 = vmatpush1.bf16.msra.mxu0 %v7317
    %8084 = vmatprep.subr.bf16.mxu0 0
    %8085 = vmatpush1.bf16.msra.mxu0 %v7310
    %8086 = vmatprep.subr.bf16.mxu0 0
    %8087 = vmatpush2.bf16.msra.mxu0 %v7415
    %8088 = vmatprep.subr.bf16.mxu0 0
    %8089 = vmatpush2.bf16.msra.mxu0 %v7408
    %8090 = vmatprep.subr.bf16.mxu0 0
    %8091 = vmatpush2.bf16.msra.mxu0 %v7401
    %8092 = vmatprep.subr.bf16.mxu0 0
    %8093 = vmatpush2.bf16.msra.mxu0 %v7394
    %8094 = vmatprep.subr.bf16.mxu0 0
    %8095 = vmatpush2.bf16.msra.mxu0 %v7387
    %8096 = vmatprep.subr.bf16.mxu0 0
    %8097 = vmatpush2.bf16.msra.mxu0 %v7380
    %8098 = vmatprep.subr.bf16.mxu0 0
    %8099 = vmatpush2.bf16.msra.mxu0 %v7373
    %8100 = vmatprep.subr.bf16.mxu0 0
    %8101 = vmatpush2.bf16.msra.mxu0 %v7366
    %8102 = vmatprep.mubr.bf16.mxu0 %v6585
    %8103 = vmatmul.mubr.bf16.gmra.mxu0 %v6584
    %v8104 = vpop.f32.mrf.mxu0
    %v8105 = vadd.f32 %v6558, %v8104
    %v8106 = vpop.f32.mrf.mxu0
    %v8107 = vpop.f32.mrf.mxu0
    %v8108 = vadd.f32 %v6561, %v8107
    %v8109 = vpop.f32.mrf.mxu0
    %8110 = vmatprep.mubr.bf16.mxu0 %v6589
    %8111 = vmatmul.mubr.bf16.gmra.mxu0 %v6588
    %v8112 = vpop.f32.mrf.mxu0
    %v8113 = vadd.f32 %v6566, %v8112
    %v8114 = vpop.f32.mrf.mxu0
    %v8115 = vpop.f32.mrf.mxu0
    %v8116 = vadd.f32 %v6569, %v8115
    %v8117 = vpop.f32.mrf.mxu0
    %8118 = vdwg.mxu0
    %8119 = vmatprep.subr.bf16.mxu0 0
    %8120 = vmatpush1.bf16.msra.mxu0 %v7471
    %8121 = vmatprep.subr.bf16.mxu0 0
    %8122 = vmatpush1.bf16.msra.mxu0 %v7464
    %8123 = vmatprep.subr.bf16.mxu0 0
    %8124 = vmatpush1.bf16.msra.mxu0 %v7457
    %8125 = vmatprep.subr.bf16.mxu0 0
    %8126 = vmatpush1.bf16.msra.mxu0 %v7450
    %8127 = vmatprep.subr.bf16.mxu0 0
    %8128 = vmatpush1.bf16.msra.mxu0 %v7443
    %8129 = vmatprep.subr.bf16.mxu0 0
    %8130 = vmatpush1.bf16.msra.mxu0 %v7436
    %8131 = vmatprep.subr.bf16.mxu0 0
    %8132 = vmatpush1.bf16.msra.mxu0 %v7429
    %8133 = vmatprep.subr.bf16.mxu0 0
    %8134 = vmatpush1.bf16.msra.mxu0 %v7422
    %8135 = vmatprep.subr.bf16.mxu0 0
    %8136 = vmatpush2.bf16.msra.mxu0 %v7527
    %8137 = vmatprep.subr.bf16.mxu0 0
    %8138 = vmatpush2.bf16.msra.mxu0 %v7520
    %8139 = vmatprep.subr.bf16.mxu0 0
    %8140 = vmatpush2.bf16.msra.mxu0 %v7513
    %8141 = vmatprep.subr.bf16.mxu0 0
    %8142 = vmatpush2.bf16.msra.mxu0 %v7506
    %8143 = vmatprep.subr.bf16.mxu0 0
    %8144 = vmatpush2.bf16.msra.mxu0 %v7499
    %8145 = vmatprep.subr.bf16.mxu0 0
    %8146 = vmatpush2.bf16.msra.mxu0 %v7492
    %8147 = vmatprep.subr.bf16.mxu0 0
    %8148 = vmatpush2.bf16.msra.mxu0 %v7485
    %8149 = vmatprep.subr.bf16.mxu0 0
    %8150 = vmatpush2.bf16.msra.mxu0 %v7478
    %8151 = vmatprep.mubr.bf16.mxu0 %v6587
    %8152 = vmatmul.mubr.bf16.gmra.mxu0 %v6586
    %v8153 = vpop.f32.mrf.mxu0
    %v8154 = vadd.f32 %v8105, %v8153
    %v8155 = vpop.f32.mrf.mxu0
    %v8156 = vpop.f32.mrf.mxu0
    %v8157 = vadd.f32 %v8108, %v8156
    %v8158 = vpop.f32.mrf.mxu0
    %8159 = vmatprep.mubr.bf16.mxu0 %v6591
    %8160 = vmatmul.mubr.bf16.gmra.mxu0 %v6590
    %v8161 = vpop.f32.mrf.mxu0
    %v8162 = vadd.f32 %v8113, %v8161
    %v8163 = vpop.f32.mrf.mxu0
    %v8164 = vpop.f32.mrf.mxu0
    %v8165 = vadd.f32 %v8116, %v8164
    %v8166 = vpop.f32.mrf.mxu0
    %8167 = vdwg.mxu0
    %v8168 = vld [vmem:[#allocation2] sm:$0xcc]
    %v8169 = vld [vmem:[#allocation2 + $0x8] sm:$0xcc]
    %v8170 = vld [vmem:[#allocation2 + $0x30] sm:$0xff]
    %v8171 = vld [vmem:[#allocation2 + $0x38] sm:$0xff]
    %s8172 = scalar_lea.vmem %s4, 3584
    %v8173 = vld [vmem:[%s8172] sm:$0xff]
    %v8174 = vld [vmem:[%s8172 + $0x8] sm:$0xff]
    %v8175 = vld [vmem:[%s8172 + $0x10] sm:$0xff]
    %v8176 = vld [vmem:[%s8172 + $0x18] sm:$0xf]
    %v8177 = vld [vmem:[%s8172 + $0x1c] sm:$0xff]
    %v8178 = vld [vmem:[%s8172 + $0x24] sm:$0xff]
    %v8179 = vld [vmem:[%s8172 + $0x2c] sm:$0xff]
    %v8180 = vld [vmem:[%s8172 + $0x34] sm:$0xf]
    %v8181 = vld [vmem:[%s8172 + $0x38] sm:$0xff]
    %v8182 = vld [vmem:[%s8172 + $0x40] sm:$0xff]
    %v8183 = vld [vmem:[%s8172 + $0x48] sm:$0xff]
    %v8184 = vld [vmem:[%s8172 + $0x50] sm:$0xf]
    %v8185 = vld [vmem:[%s8172 + $0x54] sm:$0xff]
    %v8186 = vld [vmem:[%s8172 + $0x5c] sm:$0xff]
    %v8187 = vld [vmem:[%s8172 + $0x64] sm:$0xff]
    %v8188 = vld [vmem:[%s8172 + $0x6c] sm:$0xf]
    %v8189 = vld [vmem:[%s8172 + $0x70] sm:$0xff]
    %v8190 = vld [vmem:[%s8172 + $0x78] sm:$0xff]
    %v8191 = vld [vmem:[%s8172 + $0x80] sm:$0xff]
    %v8192 = vld [vmem:[%s8172 + $0x88] sm:$0xf]
    %v8193 = vld [vmem:[%s8172 + $0x8c] sm:$0xff]
    %v8194 = vld [vmem:[%s8172 + $0x94] sm:$0xff]
    %v8195 = vld [vmem:[%s8172 + $0x9c] sm:$0xff]
    %v8196 = vld [vmem:[%s8172 + $0xa4] sm:$0xf]
    %v8197 = vld [vmem:[%s8172 + $0xa8] sm:$0xff]
    %v8198 = vld [vmem:[%s8172 + $0xb0] sm:$0xff]
    %v8199 = vld [vmem:[%s8172 + $0xb8] sm:$0xff]
    %v8200 = vld [vmem:[%s8172 + $0xc0] sm:$0xf]
    %v8201 = vld [vmem:[%s8172 + $0xc4] sm:$0xff]
    %v8202 = vld [vmem:[%s8172 + $0xcc] sm:$0xff]
    %v8203 = vld [vmem:[%s8172 + $0xd4] sm:$0xff]
    %v8204 = vld [vmem:[%s8172 + $0xdc] sm:$0xf]
    %v8205 = vld [vmem:[%s8172 + $0xe0] sm:$0xff]
    %v8206 = vld [vmem:[%s8172 + $0xe8] sm:$0xff]
    %v8207 = vld [vmem:[%s8172 + $0xf0] sm:$0xff]
    %v8208 = vld [vmem:[%s8172 + $0xf8] sm:$0xf]
    %v8209 = vld [vmem:[%s8172 + $0xfc] sm:$0xff]
    %v8210 = vld [vmem:[%s8172 + $0x104] sm:$0xff]
    %v8211 = vld [vmem:[%s8172 + $0x10c] sm:$0xff]
    %v8212 = vld [vmem:[%s8172 + $0x114] sm:$0xf]
    %v8213 = vld [vmem:[%s8172 + $0x118] sm:$0xff]
    %v8214 = vld [vmem:[%s8172 + $0x120] sm:$0xff]
    %v8215 = vld [vmem:[%s8172 + $0x128] sm:$0xff]
    %v8216 = vld [vmem:[%s8172 + $0x130] sm:$0xf]
    %v8217 = vld [vmem:[%s8172 + $0x134] sm:$0xff]
    %v8218 = vld [vmem:[%s8172 + $0x13c] sm:$0xff]
    %v8219 = vld [vmem:[%s8172 + $0x144] sm:$0xff]
    %v8220 = vld [vmem:[%s8172 + $0x14c] sm:$0xf]
    %v8221 = vld [vmem:[%s8172 + $0x150] sm:$0xff]
    %v8222 = vld [vmem:[%s8172 + $0x158] sm:$0xff]
    %v8223 = vld [vmem:[%s8172 + $0x160] sm:$0xff]
    %v8224 = vld [vmem:[%s8172 + $0x168] sm:$0xf]
    %v8225 = vld [vmem:[%s8172 + $0x16c] sm:$0xff]
    %v8226 = vld [vmem:[%s8172 + $0x174] sm:$0xff]
    %v8227 = vld [vmem:[%s8172 + $0x17c] sm:$0xff]
    %v8228 = vld [vmem:[%s8172 + $0x184] sm:$0xf]
    %v8229 = vld [vmem:[%s8172 + $0x188] sm:$0xff]
    %v8230 = vld [vmem:[%s8172 + $0x190] sm:$0xff]
    %v8231 = vld [vmem:[%s8172 + $0x198] sm:$0xff]
    %v8232 = vld [vmem:[%s8172 + $0x1a0] sm:$0xf]
    %v8233 = vld [vmem:[%s8172 + $0x1a4] sm:$0xff]
    %v8234 = vld [vmem:[%s8172 + $0x1ac] sm:$0xff]
    %v8235 = vld [vmem:[%s8172 + $0x1b4] sm:$0xff]
    %v8236 = vld [vmem:[%s8172 + $0x1bc] sm:$0xf]
    %v8237 = vld [vmem:[%s8172 + $0x1c0] sm:$0xff]
    %v8238 = vld [vmem:[%s8172 + $0x1c8] sm:$0xff]
    %v8239 = vld [vmem:[%s8172 + $0x1d0] sm:$0xff]
    %v8240 = vld [vmem:[%s8172 + $0x1d8] sm:$0xf]
    %v8241 = vld [vmem:[%s8172 + $0x1dc] sm:$0xff]
    %v8242 = vld [vmem:[%s8172 + $0x1e4] sm:$0xff]
    %v8243 = vld [vmem:[%s8172 + $0x1ec] sm:$0xff]
    %v8244 = vld [vmem:[%s8172 + $0x1f4] sm:$0xf]
    %v8245 = vld [vmem:[%s8172 + $0x1f8] sm:$0xff]
    %v8246 = vld [vmem:[%s8172 + $0x200] sm:$0xff]
    %v8247 = vld [vmem:[%s8172 + $0x208] sm:$0xff]
    %v8248 = vld [vmem:[%s8172 + $0x210] sm:$0xf]
    %v8249 = vld [vmem:[%s8172 + $0x214] sm:$0xff]
    %v8250 = vld [vmem:[%s8172 + $0x21c] sm:$0xff]
    %v8251 = vld [vmem:[%s8172 + $0x224] sm:$0xff]
    %v8252 = vld [vmem:[%s8172 + $0x22c] sm:$0xf]
    %v8253 = vld [vmem:[%s8172 + $0x230] sm:$0xff]
    %v8254 = vld [vmem:[%s8172 + $0x238] sm:$0xff]
    %v8255 = vld [vmem:[%s8172 + $0x240] sm:$0xff]
    %v8256 = vld [vmem:[%s8172 + $0x248] sm:$0xf]
    %v8257 = vld [vmem:[%s8172 + $0x24c] sm:$0xff]
    %v8258 = vld [vmem:[%s8172 + $0x254] sm:$0xff]
    %v8259 = vld [vmem:[%s8172 + $0x25c] sm:$0xff]
    %v8260 = vld [vmem:[%s8172 + $0x264] sm:$0xf]
    %v8261 = vld [vmem:[%s8172 + $0x268] sm:$0xff]
    %v8262 = vld [vmem:[%s8172 + $0x270] sm:$0xff]
    %v8263 = vld [vmem:[%s8172 + $0x278] sm:$0xff]
    %v8264 = vld [vmem:[%s8172 + $0x280] sm:$0xf]
    %v8265 = vld [vmem:[%s8172 + $0x284] sm:$0xff]
    %v8266 = vld [vmem:[%s8172 + $0x28c] sm:$0xff]
    %v8267 = vld [vmem:[%s8172 + $0x294] sm:$0xff]
    %v8268 = vld [vmem:[%s8172 + $0x29c] sm:$0xf]
    %v8269 = vld [vmem:[%s8172 + $0x2a0] sm:$0xff]
    %v8270 = vld [vmem:[%s8172 + $0x2a8] sm:$0xff]
    %v8271 = vld [vmem:[%s8172 + $0x2b0] sm:$0xff]
    %v8272 = vld [vmem:[%s8172 + $0x2b8] sm:$0xf]
    %v8273 = vld [vmem:[%s8172 + $0x2bc] sm:$0xff]
    %v8274 = vld [vmem:[%s8172 + $0x2c4] sm:$0xff]
    %v8275 = vld [vmem:[%s8172 + $0x2cc] sm:$0xff]
    %v8276 = vld [vmem:[%s8172 + $0x2d4] sm:$0xf]
    %v8277 = vld [vmem:[%s8172 + $0x2d8] sm:$0xff]
    %v8278 = vld [vmem:[%s8172 + $0x2e0] sm:$0xff]
    %v8279 = vld [vmem:[%s8172 + $0x2e8] sm:$0xff]
    %v8280 = vld [vmem:[%s8172 + $0x2f0] sm:$0xf]
    %v8281 = vld [vmem:[%s8172 + $0x2f4] sm:$0xff]
    %v8282 = vld [vmem:[%s8172 + $0x2fc] sm:$0xff]
    %v8283 = vld [vmem:[%s8172 + $0x304] sm:$0xff]
    %v8284 = vld [vmem:[%s8172 + $0x30c] sm:$0xf]
    %v8285 = vld [vmem:[%s8172 + $0x310] sm:$0xff]
    %v8286 = vld [vmem:[%s8172 + $0x318] sm:$0xff]
    %v8287 = vld [vmem:[%s8172 + $0x320] sm:$0xff]
    %v8288 = vld [vmem:[%s8172 + $0x328] sm:$0xf]
    %v8289 = vld [vmem:[%s8172 + $0x32c] sm:$0xff]
    %v8290 = vld [vmem:[%s8172 + $0x334] sm:$0xff]
    %v8291 = vld [vmem:[%s8172 + $0x33c] sm:$0xff]
    %v8292 = vld [vmem:[%s8172 + $0x344] sm:$0xf]
    %v8293 = vld [vmem:[%s8172 + $0x348] sm:$0xff]
    %v8294 = vld [vmem:[%s8172 + $0x350] sm:$0xff]
    %v8295 = vld [vmem:[%s8172 + $0x358] sm:$0xff]
    %v8296 = vld [vmem:[%s8172 + $0x360] sm:$0xf]
    %v8297 = vld [vmem:[%s8172 + $0x364] sm:$0xff]
    %v8298 = vld [vmem:[%s8172 + $0x36c] sm:$0xff]
    %v8299 = vld [vmem:[%s8172 + $0x374] sm:$0xff]
    %v8300 = vld [vmem:[%s8172 + $0x37c] sm:$0xf]
    %v8301 = vld [vmem:[%s8172 + $0x380] sm:$0xff]
    %v8302 = vld [vmem:[%s8172 + $0x388] sm:$0xff]
    %v8303 = vld [vmem:[%s8172 + $0x390] sm:$0xff]
    %v8304 = vld [vmem:[%s8172 + $0x398] sm:$0xf]
    %v8305 = vld [vmem:[%s8172 + $0x39c] sm:$0xff]
    %v8306 = vld [vmem:[%s8172 + $0x3a4] sm:$0xff]
    %v8307 = vld [vmem:[%s8172 + $0x3ac] sm:$0xff]
    %v8308 = vld [vmem:[%s8172 + $0x3b4] sm:$0xf]
    %v8309 = vld [vmem:[%s8172 + $0x3b8] sm:$0xff]
    %v8310 = vld [vmem:[%s8172 + $0x3c0] sm:$0xff]
    %v8311 = vld [vmem:[%s8172 + $0x3c8] sm:$0xff]
    %v8312 = vld [vmem:[%s8172 + $0x3d0] sm:$0xf]
    %v8313 = vld [vmem:[%s8172 + $0x3d4] sm:$0xff]
    %v8314 = vld [vmem:[%s8172 + $0x3dc] sm:$0xff]
    %v8315 = vld [vmem:[%s8172 + $0x3e4] sm:$0xff]
    %v8316 = vld [vmem:[%s8172 + $0x3ec] sm:$0xf]
    %v8317 = vld [vmem:[%s8172 + $0x3f0] sm:$0xff]
    %v8318 = vld [vmem:[%s8172 + $0x3f8] sm:$0xff]
    %v8319 = vld [vmem:[%s8172 + $0x400] sm:$0xff]
    %v8320 = vld [vmem:[%s8172 + $0x408] sm:$0xf]
    %v8321 = vld [vmem:[%s8172 + $0x40c] sm:$0xff]
    %v8322 = vld [vmem:[%s8172 + $0x414] sm:$0xff]
    %v8323 = vld [vmem:[%s8172 + $0x41c] sm:$0xff]
    %v8324 = vld [vmem:[%s8172 + $0x424] sm:$0xf]
    %v8325 = vld [vmem:[%s8172 + $0x428] sm:$0xff]
    %v8326 = vld [vmem:[%s8172 + $0x430] sm:$0xff]
    %v8327 = vld [vmem:[%s8172 + $0x438] sm:$0xff]
    %v8328 = vld [vmem:[%s8172 + $0x440] sm:$0xf]
    %v8329 = vld [vmem:[%s8172 + $0x444] sm:$0xff]
    %v8330 = vld [vmem:[%s8172 + $0x44c] sm:$0xff]
    %v8331 = vld [vmem:[%s8172 + $0x454] sm:$0xff]
    %v8332 = vld [vmem:[%s8172 + $0x45c] sm:$0xf]
    %v8333 = vld [vmem:[%s8172 + $0x460] sm:$0xff]
    %v8334 = vld [vmem:[%s8172 + $0x468] sm:$0xff]
    %v8335 = vld [vmem:[%s8172 + $0x470] sm:$0xff]
    %v8336 = vld [vmem:[%s8172 + $0x478] sm:$0xf]
    %v8337 = vld [vmem:[%s8172 + $0x47c] sm:$0xff]
    %v8338 = vld [vmem:[%s8172 + $0x484] sm:$0xff]
    %v8339 = vld [vmem:[%s8172 + $0x48c] sm:$0xff]
    %v8340 = vld [vmem:[%s8172 + $0x494] sm:$0xf]
    %v8341 = vld [vmem:[%s8172 + $0x498] sm:$0xff]
    %v8342 = vld [vmem:[%s8172 + $0x4a0] sm:$0xff]
    %v8343 = vld [vmem:[%s8172 + $0x4a8] sm:$0xff]
    %v8344 = vld [vmem:[%s8172 + $0x4b0] sm:$0xf]
    %v8345 = vld [vmem:[%s8172 + $0x4b4] sm:$0xff]
    %v8346 = vld [vmem:[%s8172 + $0x4bc] sm:$0xff]
    %v8347 = vld [vmem:[%s8172 + $0x4c4] sm:$0xff]
    %v8348 = vld [vmem:[%s8172 + $0x4cc] sm:$0xf]
    %v8349 = vld [vmem:[%s8172 + $0x4d0] sm:$0xff]
    %v8350 = vld [vmem:[%s8172 + $0x4d8] sm:$0xff]
    %v8351 = vld [vmem:[%s8172 + $0x4e0] sm:$0xff]
    %v8352 = vld [vmem:[%s8172 + $0x4e8] sm:$0xf]
    %v8353 = vld [vmem:[%s8172 + $0x4ec] sm:$0xff]
    %v8354 = vld [vmem:[%s8172 + $0x4f4] sm:$0xff]
    %v8355 = vld [vmem:[%s8172 + $0x4fc] sm:$0xff]
    %v8356 = vld [vmem:[%s8172 + $0x504] sm:$0xf]
    %v8357 = vld [vmem:[%s8172 + $0x508] sm:$0xff]
    %v8358 = vld [vmem:[%s8172 + $0x510] sm:$0xff]
    %v8359 = vld [vmem:[%s8172 + $0x518] sm:$0xff]
    %v8360 = vld [vmem:[%s8172 + $0x520] sm:$0xf]
    %v8361 = vld [vmem:[%s8172 + $0x524] sm:$0xff]
    %v8362 = vld [vmem:[%s8172 + $0x52c] sm:$0xff]
    %v8363 = vld [vmem:[%s8172 + $0x534] sm:$0xff]
    %v8364 = vld [vmem:[%s8172 + $0x53c] sm:$0xf]
    %v8365 = vld [vmem:[%s8172 + $0x540] sm:$0xff]
    %v8366 = vld [vmem:[%s8172 + $0x548] sm:$0xff]
    %v8367 = vld [vmem:[%s8172 + $0x550] sm:$0xff]
    %v8368 = vld [vmem:[%s8172 + $0x558] sm:$0xf]
    %v8369 = vld [vmem:[%s8172 + $0x55c] sm:$0xff]
    %v8370 = vld [vmem:[%s8172 + $0x564] sm:$0xff]
    %v8371 = vld [vmem:[%s8172 + $0x56c] sm:$0xff]
    %v8372 = vld [vmem:[%s8172 + $0x574] sm:$0xf]
    %v8373 = vld [vmem:[%s8172 + $0x578] sm:$0xff]
    %v8374 = vld [vmem:[%s8172 + $0x580] sm:$0xff]
    %v8375 = vld [vmem:[%s8172 + $0x588] sm:$0xff]
    %v8376 = vld [vmem:[%s8172 + $0x590] sm:$0xf]
    %v8377 = vld [vmem:[%s8172 + $0x594] sm:$0xff]
    %v8378 = vld [vmem:[%s8172 + $0x59c] sm:$0xff]
    %v8379 = vld [vmem:[%s8172 + $0x5a4] sm:$0xff]
    %v8380 = vld [vmem:[%s8172 + $0x5ac] sm:$0xf]
    %v8381 = vld [vmem:[%s8172 + $0x5b0] sm:$0xff]
    %v8382 = vld [vmem:[%s8172 + $0x5b8] sm:$0xff]
    %v8383 = vld [vmem:[%s8172 + $0x5c0] sm:$0xff]
    %v8384 = vld [vmem:[%s8172 + $0x5c8] sm:$0xf]
    %v8385 = vld [vmem:[%s8172 + $0x5cc] sm:$0xff]
    %v8386 = vld [vmem:[%s8172 + $0x5d4] sm:$0xff]
    %v8387 = vld [vmem:[%s8172 + $0x5dc] sm:$0xff]
    %v8388 = vld [vmem:[%s8172 + $0x5e4] sm:$0xf]
    %v8389 = vld [vmem:[%s8172 + $0x5e8] sm:$0xff]
    %v8390 = vld [vmem:[%s8172 + $0x5f0] sm:$0xff]
    %v8391 = vld [vmem:[%s8172 + $0x5f8] sm:$0xff]
    %v8392 = vld [vmem:[%s8172 + $0x600] sm:$0xf]
    %v8393 = vld [vmem:[%s8172 + $0x604] sm:$0xff]
    %v8394 = vld [vmem:[%s8172 + $0x60c] sm:$0xff]
    %v8395 = vld [vmem:[%s8172 + $0x614] sm:$0xff]
    %v8396 = vld [vmem:[%s8172 + $0x61c] sm:$0xf]
    %v8397 = vld [vmem:[%s8172 + $0x620] sm:$0xff]
    %v8398 = vld [vmem:[%s8172 + $0x628] sm:$0xff]
    %v8399 = vld [vmem:[%s8172 + $0x630] sm:$0xff]
    %v8400 = vld [vmem:[%s8172 + $0x638] sm:$0xf]
    %v8401 = vld [vmem:[%s8172 + $0x63c] sm:$0xff]
    %v8402 = vld [vmem:[%s8172 + $0x644] sm:$0xff]
    %v8403 = vld [vmem:[%s8172 + $0x64c] sm:$0xff]
    %v8404 = vld [vmem:[%s8172 + $0x654] sm:$0xf]
    %v8405 = vld [vmem:[%s8172 + $0x658] sm:$0xff]
    %v8406 = vld [vmem:[%s8172 + $0x660] sm:$0xff]
    %v8407 = vld [vmem:[%s8172 + $0x668] sm:$0xff]
    %v8408 = vld [vmem:[%s8172 + $0x670] sm:$0xf]
    %v8409 = vld [vmem:[%s8172 + $0x674] sm:$0xff]
    %v8410 = vld [vmem:[%s8172 + $0x67c] sm:$0xff]
    %v8411 = vld [vmem:[%s8172 + $0x684] sm:$0xff]
    %v8412 = vld [vmem:[%s8172 + $0x68c] sm:$0xf]
    %v8413 = vld [vmem:[%s8172 + $0x690] sm:$0xff]
    %v8414 = vld [vmem:[%s8172 + $0x698] sm:$0xff]
    %v8415 = vld [vmem:[%s8172 + $0x6a0] sm:$0xff]
    %v8416 = vld [vmem:[%s8172 + $0x6a8] sm:$0xf]
    %v8417 = vld [vmem:[%s8172 + $0x6ac] sm:$0xff]
    %v8418 = vld [vmem:[%s8172 + $0x6b4] sm:$0xff]
    %v8419 = vld [vmem:[%s8172 + $0x6bc] sm:$0xff]
    %v8420 = vld [vmem:[%s8172 + $0x6c4] sm:$0xf]
    %v8421 = vld [vmem:[%s8172 + $0x6c8] sm:$0xff]
    %v8422 = vld [vmem:[%s8172 + $0x6d0] sm:$0xff]
    %v8423 = vld [vmem:[%s8172 + $0x6d8] sm:$0xff]
    %v8424 = vld [vmem:[%s8172 + $0x6e0] sm:$0xf]
    %v8425 = vld [vmem:[%s8172 + $0x6e4] sm:$0xff]
    %v8426 = vld [vmem:[%s8172 + $0x6ec] sm:$0xff]
    %v8427 = vld [vmem:[%s8172 + $0x6f4] sm:$0xff]
    %v8428 = vld [vmem:[%s8172 + $0x6fc] sm:$0xf]
    %v8433 = vunpack.c.l.b16 %v8168
    %v8434 = vunpack.c.h.b16 %v8168
    %v8435 = vunpack.c.l.b16 %v8169
    %v8436 = vunpack.c.h.b16 %v8169
    %v8437 = vunpack.c.l.b16 %v8170
    %v8438 = vunpack.c.h.b16 %v8170
    %v8439 = vunpack.c.l.b16 %v8171
    %v8440 = vunpack.c.h.b16 %v8171
    %v8441 = vpack.c.b16 %v4964, %v8433
    %v8442 = vpack.c.b16 %v4965, %v8434
    %v8443 = vpack.c.b16 %v4966, %v8435
    %v8444 = vpack.c.b16 %v4967, %v8436
    %v8445 = vpack.c.b16 %v8437, %v4968
    %v8446 = vpack.c.b16 %v8438, %v4969
    %v8447 = vpack.c.b16 %v8439, %v4970
    %v8448 = vpack.c.b16 %v8440, %v4971
    %v8449 = vrot.slane %v8441, 2
    %v8450 = vrot.slane %v8445, 2
    %v8451 = vsel %vm862, %v8449, %v8450
    %v8452 = vrot.slane %v8442, 2
    %v8453 = vrot.slane %v8446, 2
    %v8454 = vsel %vm862, %v8452, %v8453
    %v8455 = vrot.slane %v8443, 2
    %v8456 = vrot.slane %v8447, 2
    %v8457 = vsel %vm862, %v8455, %v8456
    %v8458 = vrot.slane %v8444, 2
    %v8459 = vrot.slane %v8448, 2
    %v8460 = vsel %vm862, %v8458, %v8459
    %v8725 = vunpack.c.l.b16 %v8173
    %v8726 = vunpack.c.h.b16 %v8173
    %v8727 = vunpack.c.l.b16 %v8174
    %v8728 = vunpack.c.h.b16 %v8174
    %v8729 = vunpack.c.l.b16 %v8175
    %v8730 = vunpack.c.h.b16 %v8175
    %v8731 = vunpack.c.l.b16 %v8176
    %v8732 = vunpack.c.l.b16 %v8177
    %v8733 = vunpack.c.h.b16 %v8177
    %v8734 = vunpack.c.l.b16 %v8178
    %v8735 = vunpack.c.h.b16 %v8178
    %v8736 = vunpack.c.l.b16 %v8179
    %v8737 = vunpack.c.h.b16 %v8179
    %v8738 = vunpack.c.l.b16 %v8180
    %v8739 = vunpack.c.l.b16 %v8181
    %v8740 = vunpack.c.h.b16 %v8181
    %v8741 = vunpack.c.l.b16 %v8182
    %v8742 = vunpack.c.h.b16 %v8182
    %v8743 = vunpack.c.l.b16 %v8183
    %v8744 = vunpack.c.h.b16 %v8183
    %v8745 = vunpack.c.l.b16 %v8184
    %v8746 = vunpack.c.l.b16 %v8185
    %v8747 = vunpack.c.h.b16 %v8185
    %v8748 = vunpack.c.l.b16 %v8186
    %v8749 = vunpack.c.h.b16 %v8186
    %v8750 = vunpack.c.l.b16 %v8187
    %v8751 = vunpack.c.h.b16 %v8187
    %v8752 = vunpack.c.l.b16 %v8188
    %v8753 = vunpack.c.l.b16 %v8189
    %v8754 = vunpack.c.h.b16 %v8189
    %v8755 = vunpack.c.l.b16 %v8190
    %v8756 = vunpack.c.h.b16 %v8190
    %v8757 = vunpack.c.l.b16 %v8191
    %v8758 = vunpack.c.h.b16 %v8191
    %v8759 = vunpack.c.l.b16 %v8192
    %v8760 = vunpack.c.l.b16 %v8193
    %v8761 = vunpack.c.h.b16 %v8193
    %v8762 = vunpack.c.l.b16 %v8194
    %v8763 = vunpack.c.h.b16 %v8194
    %v8764 = vunpack.c.l.b16 %v8195
    %v8765 = vunpack.c.h.b16 %v8195
    %v8766 = vunpack.c.l.b16 %v8196
    %v8767 = vunpack.c.l.b16 %v8197
    %v8768 = vunpack.c.h.b16 %v8197
    %v8769 = vunpack.c.l.b16 %v8198
    %v8770 = vunpack.c.h.b16 %v8198
    %v8771 = vunpack.c.l.b16 %v8199
    %v8772 = vunpack.c.h.b16 %v8199
    %v8773 = vunpack.c.l.b16 %v8200
    %v8774 = vunpack.c.l.b16 %v8201
    %v8775 = vunpack.c.h.b16 %v8201
    %v8776 = vunpack.c.l.b16 %v8202
    %v8777 = vunpack.c.h.b16 %v8202
    %v8778 = vunpack.c.l.b16 %v8203
    %v8779 = vunpack.c.h.b16 %v8203
    %v8780 = vunpack.c.l.b16 %v8204
    %v8781 = vunpack.c.l.b16 %v8205
    %v8782 = vunpack.c.h.b16 %v8205
    %v8783 = vunpack.c.l.b16 %v8206
    %v8784 = vunpack.c.h.b16 %v8206
    %v8785 = vunpack.c.l.b16 %v8207
    %v8786 = vunpack.c.h.b16 %v8207
    %v8787 = vunpack.c.l.b16 %v8208
    %v8788 = vunpack.c.l.b16 %v8209
    %v8789 = vunpack.c.h.b16 %v8209
    %v8790 = vunpack.c.l.b16 %v8210
    %v8791 = vunpack.c.h.b16 %v8210
    %v8792 = vunpack.c.l.b16 %v8211
    %v8793 = vunpack.c.h.b16 %v8211
    %v8794 = vunpack.c.l.b16 %v8212
    %v8795 = vunpack.c.l.b16 %v8213
    %v8796 = vunpack.c.h.b16 %v8213
    %v8797 = vunpack.c.l.b16 %v8214
    %v8798 = vunpack.c.h.b16 %v8214
    %v8799 = vunpack.c.l.b16 %v8215
    %v8800 = vunpack.c.h.b16 %v8215
    %v8801 = vunpack.c.l.b16 %v8216
    %v8802 = vunpack.c.l.b16 %v8217
    %v8803 = vunpack.c.h.b16 %v8217
    %v8804 = vunpack.c.l.b16 %v8218
    %v8805 = vunpack.c.h.b16 %v8218
    %v8806 = vunpack.c.l.b16 %v8219
    %v8807 = vunpack.c.h.b16 %v8219
    %v8808 = vunpack.c.l.b16 %v8220
    %v8809 = vunpack.c.l.b16 %v8221
    %v8810 = vunpack.c.h.b16 %v8221
    %v8811 = vunpack.c.l.b16 %v8222
    %v8812 = vunpack.c.h.b16 %v8222
    %v8813 = vunpack.c.l.b16 %v8223
    %v8814 = vunpack.c.h.b16 %v8223
    %v8815 = vunpack.c.l.b16 %v8224
    %v8816 = vunpack.c.l.b16 %v8225
    %v8817 = vunpack.c.h.b16 %v8225
    %v8818 = vunpack.c.l.b16 %v8226
    %v8819 = vunpack.c.h.b16 %v8226
    %v8820 = vunpack.c.l.b16 %v8227
    %v8821 = vunpack.c.h.b16 %v8227
    %v8822 = vunpack.c.l.b16 %v8228
    %v8823 = vunpack.c.l.b16 %v8229
    %v8824 = vunpack.c.h.b16 %v8229
    %v8825 = vunpack.c.l.b16 %v8230
    %v8826 = vunpack.c.h.b16 %v8230
    %v8827 = vunpack.c.l.b16 %v8231
    %v8828 = vunpack.c.h.b16 %v8231
    %v8829 = vunpack.c.l.b16 %v8232
    %v8830 = vunpack.c.l.b16 %v8233
    %v8831 = vunpack.c.h.b16 %v8233
    %v8832 = vunpack.c.l.b16 %v8234
    %v8833 = vunpack.c.h.b16 %v8234
    %v8834 = vunpack.c.l.b16 %v8235
    %v8835 = vunpack.c.h.b16 %v8235
    %v8836 = vunpack.c.l.b16 %v8236
    %v8837 = vunpack.c.l.b16 %v8237
    %v8838 = vunpack.c.h.b16 %v8237
    %v8839 = vunpack.c.l.b16 %v8238
    %v8840 = vunpack.c.h.b16 %v8238
    %v8841 = vunpack.c.l.b16 %v8239
    %v8842 = vunpack.c.h.b16 %v8239
    %v8843 = vunpack.c.l.b16 %v8240
    %v8844 = vunpack.c.l.b16 %v8241
    %v8845 = vunpack.c.h.b16 %v8241
    %v8846 = vunpack.c.l.b16 %v8242
    %v8847 = vunpack.c.h.b16 %v8242
    %v8848 = vunpack.c.l.b16 %v8243
    %v8849 = vunpack.c.h.b16 %v8243
    %v8850 = vunpack.c.l.b16 %v8244
    %v8851 = vunpack.c.l.b16 %v8245
    %v8852 = vunpack.c.h.b16 %v8245
    %v8853 = vunpack.c.l.b16 %v8246
    %v8854 = vunpack.c.h.b16 %v8246
    %v8855 = vunpack.c.l.b16 %v8247
    %v8856 = vunpack.c.h.b16 %v8247
    %v8857 = vunpack.c.l.b16 %v8248
    %v8858 = vunpack.c.l.b16 %v8249
    %v8859 = vunpack.c.h.b16 %v8249
    %v8860 = vunpack.c.l.b16 %v8250
    %v8861 = vunpack.c.h.b16 %v8250
    %v8862 = vunpack.c.l.b16 %v8251
    %v8863 = vunpack.c.h.b16 %v8251
    %v8864 = vunpack.c.l.b16 %v8252
    %v8865 = vunpack.c.l.b16 %v8253
    %v8866 = vunpack.c.h.b16 %v8253
    %v8867 = vunpack.c.l.b16 %v8254
    %v8868 = vunpack.c.h.b16 %v8254
    %v8869 = vunpack.c.l.b16 %v8255
    %v8870 = vunpack.c.h.b16 %v8255
    %v8871 = vunpack.c.l.b16 %v8256
    %v8872 = vunpack.c.l.b16 %v8257
    %v8873 = vunpack.c.h.b16 %v8257
    %v8874 = vunpack.c.l.b16 %v8258
    %v8875 = vunpack.c.h.b16 %v8258
    %v8876 = vunpack.c.l.b16 %v8259
    %v8877 = vunpack.c.h.b16 %v8259
    %v8878 = vunpack.c.l.b16 %v8260
    %v8879 = vunpack.c.l.b16 %v8261
    %v8880 = vunpack.c.h.b16 %v8261
    %v8881 = vunpack.c.l.b16 %v8262
    %v8882 = vunpack.c.h.b16 %v8262
    %v8883 = vunpack.c.l.b16 %v8263
    %v8884 = vunpack.c.h.b16 %v8263
    %v8885 = vunpack.c.l.b16 %v8264
    %v8886 = vunpack.c.l.b16 %v8265
    %v8887 = vunpack.c.h.b16 %v8265
    %v8888 = vunpack.c.l.b16 %v8266
    %v8889 = vunpack.c.h.b16 %v8266
    %v8890 = vunpack.c.l.b16 %v8267
    %v8891 = vunpack.c.h.b16 %v8267
    %v8892 = vunpack.c.l.b16 %v8268
    %v8893 = vunpack.c.l.b16 %v8269
    %v8894 = vunpack.c.h.b16 %v8269
    %v8895 = vunpack.c.l.b16 %v8270
    %v8896 = vunpack.c.h.b16 %v8270
    %v8897 = vunpack.c.l.b16 %v8271
    %v8898 = vunpack.c.h.b16 %v8271
    %v8899 = vunpack.c.l.b16 %v8272
    %v8900 = vunpack.c.l.b16 %v8273
    %v8901 = vunpack.c.h.b16 %v8273
    %v8902 = vunpack.c.l.b16 %v8274
    %v8903 = vunpack.c.h.b16 %v8274
    %v8904 = vunpack.c.l.b16 %v8275
    %v8905 = vunpack.c.h.b16 %v8275
    %v8906 = vunpack.c.l.b16 %v8276
    %v8907 = vunpack.c.l.b16 %v8277
    %v8908 = vunpack.c.h.b16 %v8277
    %v8909 = vunpack.c.l.b16 %v8278
    %v8910 = vunpack.c.h.b16 %v8278
    %v8911 = vunpack.c.l.b16 %v8279
    %v8912 = vunpack.c.h.b16 %v8279
    %v8913 = vunpack.c.l.b16 %v8280
    %v8914 = vunpack.c.l.b16 %v8281
    %v8915 = vunpack.c.h.b16 %v8281
    %v8916 = vunpack.c.l.b16 %v8282
    %v8917 = vunpack.c.h.b16 %v8282
    %v8918 = vunpack.c.l.b16 %v8283
    %v8919 = vunpack.c.h.b16 %v8283
    %v8920 = vunpack.c.l.b16 %v8284
    %v8921 = vunpack.c.l.b16 %v8285
    %v8922 = vunpack.c.h.b16 %v8285
    %v8923 = vunpack.c.l.b16 %v8286
    %v8924 = vunpack.c.h.b16 %v8286
    %v8925 = vunpack.c.l.b16 %v8287
    %v8926 = vunpack.c.h.b16 %v8287
    %v8927 = vunpack.c.l.b16 %v8288
    %v8928 = vunpack.c.l.b16 %v8289
    %v8929 = vunpack.c.h.b16 %v8289
    %v8930 = vunpack.c.l.b16 %v8290
    %v8931 = vunpack.c.h.b16 %v8290
    %v8932 = vunpack.c.l.b16 %v8291
    %v8933 = vunpack.c.h.b16 %v8291
    %v8934 = vunpack.c.l.b16 %v8292
    %v8935 = vunpack.c.l.b16 %v8293
    %v8936 = vunpack.c.h.b16 %v8293
    %v8937 = vunpack.c.l.b16 %v8294
    %v8938 = vunpack.c.h.b16 %v8294
    %v8939 = vunpack.c.l.b16 %v8295
    %v8940 = vunpack.c.h.b16 %v8295
    %v8941 = vunpack.c.l.b16 %v8296
    %v8942 = vunpack.c.l.b16 %v8297
    %v8943 = vunpack.c.h.b16 %v8297
    %v8944 = vunpack.c.l.b16 %v8298
    %v8945 = vunpack.c.h.b16 %v8298
    %v8946 = vunpack.c.l.b16 %v8299
    %v8947 = vunpack.c.h.b16 %v8299
    %v8948 = vunpack.c.l.b16 %v8300
    %v8949 = vunpack.c.l.b16 %v8301
    %v8950 = vunpack.c.h.b16 %v8301
    %v8951 = vunpack.c.l.b16 %v8302
    %v8952 = vunpack.c.h.b16 %v8302
    %v8953 = vunpack.c.l.b16 %v8303
    %v8954 = vunpack.c.h.b16 %v8303
    %v8955 = vunpack.c.l.b16 %v8304
    %v8956 = vunpack.c.l.b16 %v8305
    %v8957 = vunpack.c.h.b16 %v8305
    %v8958 = vunpack.c.l.b16 %v8306
    %v8959 = vunpack.c.h.b16 %v8306
    %v8960 = vunpack.c.l.b16 %v8307
    %v8961 = vunpack.c.h.b16 %v8307
    %v8962 = vunpack.c.l.b16 %v8308
    %v8963 = vunpack.c.l.b16 %v8309
    %v8964 = vunpack.c.h.b16 %v8309
    %v8965 = vunpack.c.l.b16 %v8310
    %v8966 = vunpack.c.h.b16 %v8310
    %v8967 = vunpack.c.l.b16 %v8311
    %v8968 = vunpack.c.h.b16 %v8311
    %v8969 = vunpack.c.l.b16 %v8312
    %v8970 = vunpack.c.l.b16 %v8313
    %v8971 = vunpack.c.h.b16 %v8313
    %v8972 = vunpack.c.l.b16 %v8314
    %v8973 = vunpack.c.h.b16 %v8314
    %v8974 = vunpack.c.l.b16 %v8315
    %v8975 = vunpack.c.h.b16 %v8315
    %v8976 = vunpack.c.l.b16 %v8316
    %v8977 = vunpack.c.l.b16 %v8317
    %v8978 = vunpack.c.h.b16 %v8317
    %v8979 = vunpack.c.l.b16 %v8318
    %v8980 = vunpack.c.h.b16 %v8318
    %v8981 = vunpack.c.l.b16 %v8319
    %v8982 = vunpack.c.h.b16 %v8319
    %v8983 = vunpack.c.l.b16 %v8320
    %v8984 = vunpack.c.l.b16 %v8321
    %v8985 = vunpack.c.h.b16 %v8321
    %v8986 = vunpack.c.l.b16 %v8322
    %v8987 = vunpack.c.h.b16 %v8322
    %v8988 = vunpack.c.l.b16 %v8323
    %v8989 = vunpack.c.h.b16 %v8323
    %v8990 = vunpack.c.l.b16 %v8324
    %v8991 = vunpack.c.l.b16 %v8325
    %v8992 = vunpack.c.h.b16 %v8325
    %v8993 = vunpack.c.l.b16 %v8326
    %v8994 = vunpack.c.h.b16 %v8326
    %v8995 = vunpack.c.l.b16 %v8327
    %v8996 = vunpack.c.h.b16 %v8327
    %v8997 = vunpack.c.l.b16 %v8328
    %v8998 = vunpack.c.l.b16 %v8329
    %v8999 = vunpack.c.h.b16 %v8329
    %v9000 = vunpack.c.l.b16 %v8330
    %v9001 = vunpack.c.h.b16 %v8330
    %v9002 = vunpack.c.l.b16 %v8331
    %v9003 = vunpack.c.h.b16 %v8331
    %v9004 = vunpack.c.l.b16 %v8332
    %v9005 = vunpack.c.l.b16 %v8333
    %v9006 = vunpack.c.h.b16 %v8333
    %v9007 = vunpack.c.l.b16 %v8334
    %v9008 = vunpack.c.h.b16 %v8334
    %v9009 = vunpack.c.l.b16 %v8335
    %v9010 = vunpack.c.h.b16 %v8335
    %v9011 = vunpack.c.l.b16 %v8336
    %v9012 = vunpack.c.l.b16 %v8337
    %v9013 = vunpack.c.h.b16 %v8337
    %v9014 = vunpack.c.l.b16 %v8338
    %v9015 = vunpack.c.h.b16 %v8338
    %v9016 = vunpack.c.l.b16 %v8339
    %v9017 = vunpack.c.h.b16 %v8339
    %v9018 = vunpack.c.l.b16 %v8340
    %v9019 = vunpack.c.l.b16 %v8341
    %v9020 = vunpack.c.h.b16 %v8341
    %v9021 = vunpack.c.l.b16 %v8342
    %v9022 = vunpack.c.h.b16 %v8342
    %v9023 = vunpack.c.l.b16 %v8343
    %v9024 = vunpack.c.h.b16 %v8343
    %v9025 = vunpack.c.l.b16 %v8344
    %v9026 = vunpack.c.l.b16 %v8345
    %v9027 = vunpack.c.h.b16 %v8345
    %v9028 = vunpack.c.l.b16 %v8346
    %v9029 = vunpack.c.h.b16 %v8346
    %v9030 = vunpack.c.l.b16 %v8347
    %v9031 = vunpack.c.h.b16 %v8347
    %v9032 = vunpack.c.l.b16 %v8348
    %v9033 = vunpack.c.l.b16 %v8349
    %v9034 = vunpack.c.h.b16 %v8349
    %v9035 = vunpack.c.l.b16 %v8350
    %v9036 = vunpack.c.h.b16 %v8350
    %v9037 = vunpack.c.l.b16 %v8351
    %v9038 = vunpack.c.h.b16 %v8351
    %v9039 = vunpack.c.l.b16 %v8352
    %v9040 = vunpack.c.l.b16 %v8353
    %v9041 = vunpack.c.h.b16 %v8353
    %v9042 = vunpack.c.l.b16 %v8354
    %v9043 = vunpack.c.h.b16 %v8354
    %v9044 = vunpack.c.l.b16 %v8355
    %v9045 = vunpack.c.h.b16 %v8355
    %v9046 = vunpack.c.l.b16 %v8356
    %v9047 = vunpack.c.l.b16 %v8357
    %v9048 = vunpack.c.h.b16 %v8357
    %v9049 = vunpack.c.l.b16 %v8358
    %v9050 = vunpack.c.h.b16 %v8358
    %v9051 = vunpack.c.l.b16 %v8359
    %v9052 = vunpack.c.h.b16 %v8359
    %v9053 = vunpack.c.l.b16 %v8360
    %v9054 = vunpack.c.l.b16 %v8361
    %v9055 = vunpack.c.h.b16 %v8361
    %v9056 = vunpack.c.l.b16 %v8362
    %v9057 = vunpack.c.h.b16 %v8362
    %v9058 = vunpack.c.l.b16 %v8363
    %v9059 = vunpack.c.h.b16 %v8363
    %v9060 = vunpack.c.l.b16 %v8364
    %v9061 = vunpack.c.l.b16 %v8365
    %v9062 = vunpack.c.h.b16 %v8365
    %v9063 = vunpack.c.l.b16 %v8366
    %v9064 = vunpack.c.h.b16 %v8366
    %v9065 = vunpack.c.l.b16 %v8367
    %v9066 = vunpack.c.h.b16 %v8367
    %v9067 = vunpack.c.l.b16 %v8368
    %v9068 = vunpack.c.l.b16 %v8369
    %v9069 = vunpack.c.h.b16 %v8369
    %v9070 = vunpack.c.l.b16 %v8370
    %v9071 = vunpack.c.h.b16 %v8370
    %v9072 = vunpack.c.l.b16 %v8371
    %v9073 = vunpack.c.h.b16 %v8371
    %v9074 = vunpack.c.l.b16 %v8372
    %v9075 = vunpack.c.l.b16 %v8373
    %v9076 = vunpack.c.h.b16 %v8373
    %v9077 = vunpack.c.l.b16 %v8374
    %v9078 = vunpack.c.h.b16 %v8374
    %v9079 = vunpack.c.l.b16 %v8375
    %v9080 = vunpack.c.h.b16 %v8375
    %v9081 = vunpack.c.l.b16 %v8376
    %v9082 = vunpack.c.l.b16 %v8377
    %v9083 = vunpack.c.h.b16 %v8377
    %v9084 = vunpack.c.l.b16 %v8378
    %v9085 = vunpack.c.h.b16 %v8378
    %v9086 = vunpack.c.l.b16 %v8379
    %v9087 = vunpack.c.h.b16 %v8379
    %v9088 = vunpack.c.l.b16 %v8380
    %v9089 = vunpack.c.l.b16 %v8381
    %v9090 = vunpack.c.h.b16 %v8381
    %v9091 = vunpack.c.l.b16 %v8382
    %v9092 = vunpack.c.h.b16 %v8382
    %v9093 = vunpack.c.l.b16 %v8383
    %v9094 = vunpack.c.h.b16 %v8383
    %v9095 = vunpack.c.l.b16 %v8384
    %v9096 = vunpack.c.l.b16 %v8385
    %v9097 = vunpack.c.h.b16 %v8385
    %v9098 = vunpack.c.l.b16 %v8386
    %v9099 = vunpack.c.h.b16 %v8386
    %v9100 = vunpack.c.l.b16 %v8387
    %v9101 = vunpack.c.h.b16 %v8387
    %v9102 = vunpack.c.l.b16 %v8388
    %v9103 = vunpack.c.l.b16 %v8389
    %v9104 = vunpack.c.h.b16 %v8389
    %v9105 = vunpack.c.l.b16 %v8390
    %v9106 = vunpack.c.h.b16 %v8390
    %v9107 = vunpack.c.l.b16 %v8391
    %v9108 = vunpack.c.h.b16 %v8391
    %v9109 = vunpack.c.l.b16 %v8392
    %v9110 = vunpack.c.l.b16 %v8393
    %v9111 = vunpack.c.h.b16 %v8393
    %v9112 = vunpack.c.l.b16 %v8394
    %v9113 = vunpack.c.h.b16 %v8394
    %v9114 = vunpack.c.l.b16 %v8395
    %v9115 = vunpack.c.h.b16 %v8395
    %v9116 = vunpack.c.l.b16 %v8396
    %v9117 = vunpack.c.l.b16 %v8397
    %v9118 = vunpack.c.h.b16 %v8397
    %v9119 = vunpack.c.l.b16 %v8398
    %v9120 = vunpack.c.h.b16 %v8398
    %v9121 = vunpack.c.l.b16 %v8399
    %v9122 = vunpack.c.h.b16 %v8399
    %v9123 = vunpack.c.l.b16 %v8400
    %v9124 = vunpack.c.l.b16 %v8401
    %v9125 = vunpack.c.h.b16 %v8401
    %v9126 = vunpack.c.l.b16 %v8402
    %v9127 = vunpack.c.h.b16 %v8402
    %v9128 = vunpack.c.l.b16 %v8403
    %v9129 = vunpack.c.h.b16 %v8403
    %v9130 = vunpack.c.l.b16 %v8404
    %v9131 = vunpack.c.l.b16 %v8405
    %v9132 = vunpack.c.h.b16 %v8405
    %v9133 = vunpack.c.l.b16 %v8406
    %v9134 = vunpack.c.h.b16 %v8406
    %v9135 = vunpack.c.l.b16 %v8407
    %v9136 = vunpack.c.h.b16 %v8407
    %v9137 = vunpack.c.l.b16 %v8408
    %v9138 = vunpack.c.l.b16 %v8409
    %v9139 = vunpack.c.h.b16 %v8409
    %v9140 = vunpack.c.l.b16 %v8410
    %v9141 = vunpack.c.h.b16 %v8410
    %v9142 = vunpack.c.l.b16 %v8411
    %v9143 = vunpack.c.h.b16 %v8411
    %v9144 = vunpack.c.l.b16 %v8412
    %v9145 = vunpack.c.l.b16 %v8413
    %v9146 = vunpack.c.h.b16 %v8413
    %v9147 = vunpack.c.l.b16 %v8414
    %v9148 = vunpack.c.h.b16 %v8414
    %v9149 = vunpack.c.l.b16 %v8415
    %v9150 = vunpack.c.h.b16 %v8415
    %v9151 = vunpack.c.l.b16 %v8416
    %v9152 = vunpack.c.l.b16 %v8417
    %v9153 = vunpack.c.h.b16 %v8417
    %v9154 = vunpack.c.l.b16 %v8418
    %v9155 = vunpack.c.h.b16 %v8418
    %v9156 = vunpack.c.l.b16 %v8419
    %v9157 = vunpack.c.h.b16 %v8419
    %v9158 = vunpack.c.l.b16 %v8420
    %v9159 = vunpack.c.l.b16 %v8421
    %v9160 = vunpack.c.h.b16 %v8421
    %v9161 = vunpack.c.l.b16 %v8422
    %v9162 = vunpack.c.h.b16 %v8422
    %v9163 = vunpack.c.l.b16 %v8423
    %v9164 = vunpack.c.h.b16 %v8423
    %v9165 = vunpack.c.l.b16 %v8424
    %v9166 = vunpack.c.l.b16 %v8425
    %v9167 = vunpack.c.h.b16 %v8425
    %v9168 = vunpack.c.l.b16 %v8426
    %v9169 = vunpack.c.h.b16 %v8426
    %v9170 = vunpack.c.l.b16 %v8427
    %v9171 = vunpack.c.h.b16 %v8427
    %v9172 = vunpack.c.l.b16 %v8428
    %v9173 = vpack.c.b16 %v8732, %v8725
    %v9174 = vpack.c.b16 %v8733, %v8726
    %v9175 = vpack.c.b16 %v8734, %v8727
    %v9176 = vpack.c.b16 %v8735, %v8728
    %v9177 = vpack.c.b16 %v8736, %v8729
    %v9178 = vpack.c.b16 %v8737, %v8730
    %v9179 = vpack.c.b16 %v8738, %v8731
    %v9180 = vpack.c.b16 %v8746, %v8739
    %v9181 = vpack.c.b16 %v8747, %v8740
    %v9182 = vpack.c.b16 %v8748, %v8741
    %v9183 = vpack.c.b16 %v8749, %v8742
    %v9184 = vpack.c.b16 %v8750, %v8743
    %v9185 = vpack.c.b16 %v8751, %v8744
    %v9186 = vpack.c.b16 %v8752, %v8745
    %v9187 = vpack.c.b16 %v8760, %v8753
    %v9188 = vpack.c.b16 %v8761, %v8754
    %v9189 = vpack.c.b16 %v8762, %v8755
    %v9190 = vpack.c.b16 %v8763, %v8756
    %v9191 = vpack.c.b16 %v8764, %v8757
    %v9192 = vpack.c.b16 %v8765, %v8758
    %v9193 = vpack.c.b16 %v8766, %v8759
    %v9194 = vpack.c.b16 %v8774, %v8767
    %v9195 = vpack.c.b16 %v8775, %v8768
    %v9196 = vpack.c.b16 %v8776, %v8769
    %v9197 = vpack.c.b16 %v8777, %v8770
    %v9198 = vpack.c.b16 %v8778, %v8771
    %v9199 = vpack.c.b16 %v8779, %v8772
    %v9200 = vpack.c.b16 %v8780, %v8773
    %v9201 = vpack.c.b16 %v8788, %v8781
    %v9202 = vpack.c.b16 %v8789, %v8782
    %v9203 = vpack.c.b16 %v8790, %v8783
    %v9204 = vpack.c.b16 %v8791, %v8784
    %v9205 = vpack.c.b16 %v8792, %v8785
    %v9206 = vpack.c.b16 %v8793, %v8786
    %v9207 = vpack.c.b16 %v8794, %v8787
    %v9208 = vpack.c.b16 %v8802, %v8795
    %v9209 = vpack.c.b16 %v8803, %v8796
    %v9210 = vpack.c.b16 %v8804, %v8797
    %v9211 = vpack.c.b16 %v8805, %v8798
    %v9212 = vpack.c.b16 %v8806, %v8799
    %v9213 = vpack.c.b16 %v8807, %v8800
    %v9214 = vpack.c.b16 %v8808, %v8801
    %v9215 = vpack.c.b16 %v8816, %v8809
    %v9216 = vpack.c.b16 %v8817, %v8810
    %v9217 = vpack.c.b16 %v8818, %v8811
    %v9218 = vpack.c.b16 %v8819, %v8812
    %v9219 = vpack.c.b16 %v8820, %v8813
    %v9220 = vpack.c.b16 %v8821, %v8814
    %v9221 = vpack.c.b16 %v8822, %v8815
    %v9222 = vpack.c.b16 %v8830, %v8823
    %v9223 = vpack.c.b16 %v8831, %v8824
    %v9224 = vpack.c.b16 %v8832, %v8825
    %v9225 = vpack.c.b16 %v8833, %v8826
    %v9226 = vpack.c.b16 %v8834, %v8827
    %v9227 = vpack.c.b16 %v8835, %v8828
    %v9228 = vpack.c.b16 %v8836, %v8829
    %v9229 = vpack.c.b16 %v8844, %v8837
    %v9230 = vpack.c.b16 %v8845, %v8838
    %v9231 = vpack.c.b16 %v8846, %v8839
    %v9232 = vpack.c.b16 %v8847, %v8840
    %v9233 = vpack.c.b16 %v8848, %v8841
    %v9234 = vpack.c.b16 %v8849, %v8842
    %v9235 = vpack.c.b16 %v8850, %v8843
    %v9236 = vpack.c.b16 %v8858, %v8851
    %v9237 = vpack.c.b16 %v8859, %v8852
    %v9238 = vpack.c.b16 %v8860, %v8853
    %v9239 = vpack.c.b16 %v8861, %v8854
    %v9240 = vpack.c.b16 %v8862, %v8855
    %v9241 = vpack.c.b16 %v8863, %v8856
    %v9242 = vpack.c.b16 %v8864, %v8857
    %v9243 = vpack.c.b16 %v8872, %v8865
    %v9244 = vpack.c.b16 %v8873, %v8866
    %v9245 = vpack.c.b16 %v8874, %v8867
    %v9246 = vpack.c.b16 %v8875, %v8868
    %v9247 = vpack.c.b16 %v8876, %v8869
    %v9248 = vpack.c.b16 %v8877, %v8870
    %v9249 = vpack.c.b16 %v8878, %v8871
    %v9250 = vpack.c.b16 %v8886, %v8879
    %v9251 = vpack.c.b16 %v8887, %v8880
    %v9252 = vpack.c.b16 %v8888, %v8881
    %v9253 = vpack.c.b16 %v8889, %v8882
    %v9254 = vpack.c.b16 %v8890, %v8883
    %v9255 = vpack.c.b16 %v8891, %v8884
    %v9256 = vpack.c.b16 %v8892, %v8885
    %v9257 = vpack.c.b16 %v8900, %v8893
    %v9258 = vpack.c.b16 %v8901, %v8894
    %v9259 = vpack.c.b16 %v8902, %v8895
    %v9260 = vpack.c.b16 %v8903, %v8896
    %v9261 = vpack.c.b16 %v8904, %v8897
    %v9262 = vpack.c.b16 %v8905, %v8898
    %v9263 = vpack.c.b16 %v8906, %v8899
    %v9264 = vpack.c.b16 %v8914, %v8907
    %v9265 = vpack.c.b16 %v8915, %v8908
    %v9266 = vpack.c.b16 %v8916, %v8909
    %v9267 = vpack.c.b16 %v8917, %v8910
    %v9268 = vpack.c.b16 %v8918, %v8911
    %v9269 = vpack.c.b16 %v8919, %v8912
    %v9270 = vpack.c.b16 %v8920, %v8913
    %v9271 = vpack.c.b16 %v8928, %v8921
    %v9272 = vpack.c.b16 %v8929, %v8922
    %v9273 = vpack.c.b16 %v8930, %v8923
    %v9274 = vpack.c.b16 %v8931, %v8924
    %v9275 = vpack.c.b16 %v8932, %v8925
    %v9276 = vpack.c.b16 %v8933, %v8926
    %v9277 = vpack.c.b16 %v8934, %v8927
    %v9278 = vpack.c.b16 %v8942, %v8935
    %v9279 = vpack.c.b16 %v8943, %v8936
    %v9280 = vpack.c.b16 %v8944, %v8937
    %v9281 = vpack.c.b16 %v8945, %v8938
    %v9282 = vpack.c.b16 %v8946, %v8939
    %v9283 = vpack.c.b16 %v8947, %v8940
    %v9284 = vpack.c.b16 %v8948, %v8941
    %v9285 = vpack.c.b16 %v8956, %v8949
    %v9286 = vpack.c.b16 %v8957, %v8950
    %v9287 = vpack.c.b16 %v8958, %v8951
    %v9288 = vpack.c.b16 %v8959, %v8952
    %v9289 = vpack.c.b16 %v8960, %v8953
    %v9290 = vpack.c.b16 %v8961, %v8954
    %v9291 = vpack.c.b16 %v8962, %v8955
    %v9292 = vpack.c.b16 %v8970, %v8963
    %v9293 = vpack.c.b16 %v8971, %v8964
    %v9294 = vpack.c.b16 %v8972, %v8965
    %v9295 = vpack.c.b16 %v8973, %v8966
    %v9296 = vpack.c.b16 %v8974, %v8967
    %v9297 = vpack.c.b16 %v8975, %v8968
    %v9298 = vpack.c.b16 %v8976, %v8969
    %v9299 = vpack.c.b16 %v8984, %v8977
    %v9300 = vpack.c.b16 %v8985, %v8978
    %v9301 = vpack.c.b16 %v8986, %v8979
    %v9302 = vpack.c.b16 %v8987, %v8980
    %v9303 = vpack.c.b16 %v8988, %v8981
    %v9304 = vpack.c.b16 %v8989, %v8982
    %v9305 = vpack.c.b16 %v8990, %v8983
    %v9306 = vpack.c.b16 %v8998, %v8991
    %v9307 = vpack.c.b16 %v8999, %v8992
    %v9308 = vpack.c.b16 %v9000, %v8993
    %v9309 = vpack.c.b16 %v9001, %v8994
    %v9310 = vpack.c.b16 %v9002, %v8995
    %v9311 = vpack.c.b16 %v9003, %v8996
    %v9312 = vpack.c.b16 %v9004, %v8997
    %v9313 = vpack.c.b16 %v9012, %v9005
    %v9314 = vpack.c.b16 %v9013, %v9006
    %v9315 = vpack.c.b16 %v9014, %v9007
    %v9316 = vpack.c.b16 %v9015, %v9008
    %v9317 = vpack.c.b16 %v9016, %v9009
    %v9318 = vpack.c.b16 %v9017, %v9010
    %v9319 = vpack.c.b16 %v9018, %v9011
    %v9320 = vpack.c.b16 %v9026, %v9019
    %v9321 = vpack.c.b16 %v9027, %v9020
    %v9322 = vpack.c.b16 %v9028, %v9021
    %v9323 = vpack.c.b16 %v9029, %v9022
    %v9324 = vpack.c.b16 %v9030, %v9023
    %v9325 = vpack.c.b16 %v9031, %v9024
    %v9326 = vpack.c.b16 %v9032, %v9025
    %v9327 = vpack.c.b16 %v9040, %v9033
    %v9328 = vpack.c.b16 %v9041, %v9034
    %v9329 = vpack.c.b16 %v9042, %v9035
    %v9330 = vpack.c.b16 %v9043, %v9036
    %v9331 = vpack.c.b16 %v9044, %v9037
    %v9332 = vpack.c.b16 %v9045, %v9038
    %v9333 = vpack.c.b16 %v9046, %v9039
    %v9334 = vpack.c.b16 %v9054, %v9047
    %v9335 = vpack.c.b16 %v9055, %v9048
    %v9336 = vpack.c.b16 %v9056, %v9049
    %v9337 = vpack.c.b16 %v9057, %v9050
    %v9338 = vpack.c.b16 %v9058, %v9051
    %v9339 = vpack.c.b16 %v9059, %v9052
    %v9340 = vpack.c.b16 %v9060, %v9053
    %v9341 = vpack.c.b16 %v9068, %v9061
    %v9342 = vpack.c.b16 %v9069, %v9062
    %v9343 = vpack.c.b16 %v9070, %v9063
    %v9344 = vpack.c.b16 %v9071, %v9064
    %v9345 = vpack.c.b16 %v9072, %v9065
    %v9346 = vpack.c.b16 %v9073, %v9066
    %v9347 = vpack.c.b16 %v9074, %v9067
    %v9348 = vpack.c.b16 %v9082, %v9075
    %v9349 = vpack.c.b16 %v9083, %v9076
    %v9350 = vpack.c.b16 %v9084, %v9077
    %v9351 = vpack.c.b16 %v9085, %v9078
    %v9352 = vpack.c.b16 %v9086, %v9079
    %v9353 = vpack.c.b16 %v9087, %v9080
    %v9354 = vpack.c.b16 %v9088, %v9081
    %v9355 = vpack.c.b16 %v9096, %v9089
    %v9356 = vpack.c.b16 %v9097, %v9090
    %v9357 = vpack.c.b16 %v9098, %v9091
    %v9358 = vpack.c.b16 %v9099, %v9092
    %v9359 = vpack.c.b16 %v9100, %v9093
    %v9360 = vpack.c.b16 %v9101, %v9094
    %v9361 = vpack.c.b16 %v9102, %v9095
    %v9362 = vpack.c.b16 %v9110, %v9103
    %v9363 = vpack.c.b16 %v9111, %v9104
    %v9364 = vpack.c.b16 %v9112, %v9105
    %v9365 = vpack.c.b16 %v9113, %v9106
    %v9366 = vpack.c.b16 %v9114, %v9107
    %v9367 = vpack.c.b16 %v9115, %v9108
    %v9368 = vpack.c.b16 %v9116, %v9109
    %v9369 = vpack.c.b16 %v9124, %v9117
    %v9370 = vpack.c.b16 %v9125, %v9118
    %v9371 = vpack.c.b16 %v9126, %v9119
    %v9372 = vpack.c.b16 %v9127, %v9120
    %v9373 = vpack.c.b16 %v9128, %v9121
    %v9374 = vpack.c.b16 %v9129, %v9122
    %v9375 = vpack.c.b16 %v9130, %v9123
    %v9376 = vpack.c.b16 %v9138, %v9131
    %v9377 = vpack.c.b16 %v9139, %v9132
    %v9378 = vpack.c.b16 %v9140, %v9133
    %v9379 = vpack.c.b16 %v9141, %v9134
    %v9380 = vpack.c.b16 %v9142, %v9135
    %v9381 = vpack.c.b16 %v9143, %v9136
    %v9382 = vpack.c.b16 %v9144, %v9137
    %v9383 = vpack.c.b16 %v9152, %v9145
    %v9384 = vpack.c.b16 %v9153, %v9146
    %v9385 = vpack.c.b16 %v9154, %v9147
    %v9386 = vpack.c.b16 %v9155, %v9148
    %v9387 = vpack.c.b16 %v9156, %v9149
    %v9388 = vpack.c.b16 %v9157, %v9150
    %v9389 = vpack.c.b16 %v9158, %v9151
    %v9390 = vpack.c.b16 %v9166, %v9159
    %v9391 = vpack.c.b16 %v9167, %v9160
    %v9392 = vpack.c.b16 %v9168, %v9161
    %v9393 = vpack.c.b16 %v9169, %v9162
    %v9394 = vpack.c.b16 %v9170, %v9163
    %v9395 = vpack.c.b16 %v9171, %v9164
    %v9396 = vpack.c.b16 %v9172, %v9165
    %9621 = vmatprep.subr.bf16.mxu0 %v9223
    %9622 = vmatpush1.bf16.msra.mxu0 %v9222
    %9623 = vmatprep.subr.bf16.mxu0 %v9216
    %9624 = vmatpush1.bf16.msra.mxu0 %v9215
    %9625 = vmatprep.subr.bf16.mxu0 %v9209
    %9626 = vmatpush1.bf16.msra.mxu0 %v9208
    %9627 = vmatprep.subr.bf16.mxu0 %v9202
    %9628 = vmatpush1.bf16.msra.mxu0 %v9201
    %9629 = vmatprep.subr.bf16.mxu0 %v9195
    %9630 = vmatpush1.bf16.msra.mxu0 %v9194
    %9631 = vmatprep.subr.bf16.mxu0 %v9188
    %9632 = vmatpush1.bf16.msra.mxu0 %v9187
    %9633 = vmatprep.subr.bf16.mxu0 %v9181
    %9634 = vmatpush1.bf16.msra.mxu0 %v9180
    %9635 = vmatprep.subr.bf16.mxu0 %v9174
    %9636 = vmatpush1.bf16.msra.mxu0 %v9173
    %9637 = vmatprep.subr.bf16.mxu0 %v9279
    %9638 = vmatpush2.bf16.msra.mxu0 %v9278
    %9639 = vmatprep.subr.bf16.mxu0 %v9272
    %9640 = vmatpush2.bf16.msra.mxu0 %v9271
    %9641 = vmatprep.subr.bf16.mxu0 %v9265
    %9642 = vmatpush2.bf16.msra.mxu0 %v9264
    %9643 = vmatprep.subr.bf16.mxu0 %v9258
    %9644 = vmatpush2.bf16.msra.mxu0 %v9257
    %9645 = vmatprep.subr.bf16.mxu0 %v9251
    %9646 = vmatpush2.bf16.msra.mxu0 %v9250
    %9647 = vmatprep.subr.bf16.mxu0 %v9244
    %9648 = vmatpush2.bf16.msra.mxu0 %v9243
    %9649 = vmatprep.subr.bf16.mxu0 %v9237
    %9650 = vmatpush2.bf16.msra.mxu0 %v9236
    %9651 = vmatprep.subr.bf16.mxu0 %v9230
    %9652 = vmatpush2.bf16.msra.mxu0 %v9229
    %9653 = vmatprep.mubr.bf16.mxu0 %v8454
    %9654 = vmatmul.mubr.bf16.gmra.mxu0 %v8451
    %v9655 = vpop.f32.mrf.mxu0
    %v9656 = vadd.f32 0.0, %v9655
    %v9657 = vpop.f32.mrf.mxu0
    %v9658 = vadd.f32 0.0, %v9657
    %v9659 = vpop.f32.mrf.mxu0
    %v9660 = vadd.f32 0.0, %v9659
    %v9661 = vpop.f32.mrf.mxu0
    %v9662 = vadd.f32 0.0, %v9661
    %9663 = vmatprep.mubr.bf16.mxu0 %v8453
    %9664 = vmatmul.mubr.bf16.gmra.mxu0 %v8450
    %v9665 = vpop.f32.mrf.mxu0
    %v9666 = vadd.f32 0.0, %v9665
    %v9667 = vpop.f32.mrf.mxu0
    %v9668 = vadd.f32 0.0, %v9667
    %v9669 = vpop.f32.mrf.mxu0
    %v9670 = vadd.f32 0.0, %v9669
    %v9671 = vpop.f32.mrf.mxu0
    %v9672 = vadd.f32 0.0, %v9671
    %9673 = vdwg.mxu0
    %9674 = vmatprep.subr.bf16.mxu0 %v9335
    %9675 = vmatpush1.bf16.msra.mxu0 %v9334
    %9676 = vmatprep.subr.bf16.mxu0 %v9328
    %9677 = vmatpush1.bf16.msra.mxu0 %v9327
    %9678 = vmatprep.subr.bf16.mxu0 %v9321
    %9679 = vmatpush1.bf16.msra.mxu0 %v9320
    %9680 = vmatprep.subr.bf16.mxu0 %v9314
    %9681 = vmatpush1.bf16.msra.mxu0 %v9313
    %9682 = vmatprep.subr.bf16.mxu0 %v9307
    %9683 = vmatpush1.bf16.msra.mxu0 %v9306
    %9684 = vmatprep.subr.bf16.mxu0 %v9300
    %9685 = vmatpush1.bf16.msra.mxu0 %v9299
    %9686 = vmatprep.subr.bf16.mxu0 %v9293
    %9687 = vmatpush1.bf16.msra.mxu0 %v9292
    %9688 = vmatprep.subr.bf16.mxu0 %v9286
    %9689 = vmatpush1.bf16.msra.mxu0 %v9285
    %9690 = vmatprep.subr.bf16.mxu0 %v9391
    %9691 = vmatpush2.bf16.msra.mxu0 %v9390
    %9692 = vmatprep.subr.bf16.mxu0 %v9384
    %9693 = vmatpush2.bf16.msra.mxu0 %v9383
    %9694 = vmatprep.subr.bf16.mxu0 %v9377
    %9695 = vmatpush2.bf16.msra.mxu0 %v9376
    %9696 = vmatprep.subr.bf16.mxu0 %v9370
    %9697 = vmatpush2.bf16.msra.mxu0 %v9369
    %9698 = vmatprep.subr.bf16.mxu0 %v9363
    %9699 = vmatpush2.bf16.msra.mxu0 %v9362
    %9700 = vmatprep.subr.bf16.mxu0 %v9356
    %9701 = vmatpush2.bf16.msra.mxu0 %v9355
    %9702 = vmatprep.subr.bf16.mxu0 %v9349
    %9703 = vmatpush2.bf16.msra.mxu0 %v9348
    %9704 = vmatprep.subr.bf16.mxu0 %v9342
    %9705 = vmatpush2.bf16.msra.mxu0 %v9341
    %9706 = vmatprep.mubr.bf16.mxu0 %v8460
    %9707 = vmatmul.mubr.bf16.gmra.mxu0 %v8457
    %v9708 = vpop.f32.mrf.mxu0
    %v9709 = vadd.f32 %v9656, %v9708
    %v9710 = vpop.f32.mrf.mxu0
    %v9711 = vadd.f32 %v9658, %v9710
    %v9712 = vpop.f32.mrf.mxu0
    %v9713 = vadd.f32 %v9660, %v9712
    %v9714 = vpop.f32.mrf.mxu0
    %v9715 = vadd.f32 %v9662, %v9714
    %9716 = vmatprep.mubr.bf16.mxu0 %v8459
    %9717 = vmatmul.mubr.bf16.gmra.mxu0 %v8456
    %v9718 = vpop.f32.mrf.mxu0
    %v9719 = vadd.f32 %v9666, %v9718
    %v9720 = vpop.f32.mrf.mxu0
    %v9721 = vadd.f32 %v9668, %v9720
    %v9722 = vpop.f32.mrf.mxu0
    %v9723 = vadd.f32 %v9670, %v9722
    %v9724 = vpop.f32.mrf.mxu0
    %v9725 = vadd.f32 %v9672, %v9724
    %9726 = vdwg.mxu0
    %9727 = vmatprep.subr.bf16.mxu0 %v9225
    %9728 = vmatpush1.bf16.msra.mxu0 %v9224
    %9729 = vmatprep.subr.bf16.mxu0 %v9218
    %9730 = vmatpush1.bf16.msra.mxu0 %v9217
    %9731 = vmatprep.subr.bf16.mxu0 %v9211
    %9732 = vmatpush1.bf16.msra.mxu0 %v9210
    %9733 = vmatprep.subr.bf16.mxu0 %v9204
    %9734 = vmatpush1.bf16.msra.mxu0 %v9203
    %9735 = vmatprep.subr.bf16.mxu0 %v9197
    %9736 = vmatpush1.bf16.msra.mxu0 %v9196
    %9737 = vmatprep.subr.bf16.mxu0 %v9190
    %9738 = vmatpush1.bf16.msra.mxu0 %v9189
    %9739 = vmatprep.subr.bf16.mxu0 %v9183
    %9740 = vmatpush1.bf16.msra.mxu0 %v9182
    %9741 = vmatprep.subr.bf16.mxu0 %v9176
    %9742 = vmatpush1.bf16.msra.mxu0 %v9175
    %9743 = vmatprep.subr.bf16.mxu0 %v9281
    %9744 = vmatpush2.bf16.msra.mxu0 %v9280
    %9745 = vmatprep.subr.bf16.mxu0 %v9274
    %9746 = vmatpush2.bf16.msra.mxu0 %v9273
    %9747 = vmatprep.subr.bf16.mxu0 %v9267
    %9748 = vmatpush2.bf16.msra.mxu0 %v9266
    %9749 = vmatprep.subr.bf16.mxu0 %v9260
    %9750 = vmatpush2.bf16.msra.mxu0 %v9259
    %9751 = vmatprep.subr.bf16.mxu0 %v9253
    %9752 = vmatpush2.bf16.msra.mxu0 %v9252
    %9753 = vmatprep.subr.bf16.mxu0 %v9246
    %9754 = vmatpush2.bf16.msra.mxu0 %v9245
    %9755 = vmatprep.subr.bf16.mxu0 %v9239
    %9756 = vmatpush2.bf16.msra.mxu0 %v9238
    %9757 = vmatprep.subr.bf16.mxu0 %v9232
    %9758 = vmatpush2.bf16.msra.mxu0 %v9231
    %9759 = vmatprep.mubr.bf16.mxu0 %v8454
    %9760 = vmatmul.mubr.bf16.gmra.mxu0 %v8451
    %v9761 = vpop.f32.mrf.mxu0
    %v9762 = vadd.f32 0.0, %v9761
    %v9763 = vpop.f32.mrf.mxu0
    %v9764 = vadd.f32 0.0, %v9763
    %v9765 = vpop.f32.mrf.mxu0
    %v9766 = vadd.f32 0.0, %v9765
    %v9767 = vpop.f32.mrf.mxu0
    %v9768 = vadd.f32 0.0, %v9767
    %9769 = vmatprep.mubr.bf16.mxu0 %v8453
    %9770 = vmatmul.mubr.bf16.gmra.mxu0 %v8450
    %v9771 = vpop.f32.mrf.mxu0
    %v9772 = vadd.f32 0.0, %v9771
    %v9773 = vpop.f32.mrf.mxu0
    %v9774 = vadd.f32 0.0, %v9773
    %v9775 = vpop.f32.mrf.mxu0
    %v9776 = vadd.f32 0.0, %v9775
    %v9777 = vpop.f32.mrf.mxu0
    %v9778 = vadd.f32 0.0, %v9777
    %9779 = vdwg.mxu0
    %9780 = vmatprep.subr.bf16.mxu0 %v9337
    %9781 = vmatpush1.bf16.msra.mxu0 %v9336
    %9782 = vmatprep.subr.bf16.mxu0 %v9330
    %9783 = vmatpush1.bf16.msra.mxu0 %v9329
    %9784 = vmatprep.subr.bf16.mxu0 %v9323
    %9785 = vmatpush1.bf16.msra.mxu0 %v9322
    %9786 = vmatprep.subr.bf16.mxu0 %v9316
    %9787 = vmatpush1.bf16.msra.mxu0 %v9315
    %9788 = vmatprep.subr.bf16.mxu0 %v9309
    %9789 = vmatpush1.bf16.msra.mxu0 %v9308
    %9790 = vmatprep.subr.bf16.mxu0 %v9302
    %9791 = vmatpush1.bf16.msra.mxu0 %v9301
    %9792 = vmatprep.subr.bf16.mxu0 %v9295
    %9793 = vmatpush1.bf16.msra.mxu0 %v9294
    %9794 = vmatprep.subr.bf16.mxu0 %v9288
    %9795 = vmatpush1.bf16.msra.mxu0 %v9287
    %9796 = vmatprep.subr.bf16.mxu0 %v9393
    %9797 = vmatpush2.bf16.msra.mxu0 %v9392
    %9798 = vmatprep.subr.bf16.mxu0 %v9386
    %9799 = vmatpush2.bf16.msra.mxu0 %v9385
    %9800 = vmatprep.subr.bf16.mxu0 %v9379
    %9801 = vmatpush2.bf16.msra.mxu0 %v9378
    %9802 = vmatprep.subr.bf16.mxu0 %v9372
    %9803 = vmatpush2.bf16.msra.mxu0 %v9371
    %9804 = vmatprep.subr.bf16.mxu0 %v9365
    %9805 = vmatpush2.bf16.msra.mxu0 %v9364
    %9806 = vmatprep.subr.bf16.mxu0 %v9358
    %9807 = vmatpush2.bf16.msra.mxu0 %v9357
    %9808 = vmatprep.subr.bf16.mxu0 %v9351
    %9809 = vmatpush2.bf16.msra.mxu0 %v9350
    %9810 = vmatprep.subr.bf16.mxu0 %v9344
    %9811 = vmatpush2.bf16.msra.mxu0 %v9343
    %9812 = vmatprep.mubr.bf16.mxu0 %v8460
    %9813 = vmatmul.mubr.bf16.gmra.mxu0 %v8457
    %v9814 = vpop.f32.mrf.mxu0
    %v9815 = vadd.f32 %v9762, %v9814
    %v9816 = vpop.f32.mrf.mxu0
    %v9817 = vadd.f32 %v9764, %v9816
    %v9818 = vpop.f32.mrf.mxu0
    %v9819 = vadd.f32 %v9766, %v9818
    %v9820 = vpop.f32.mrf.mxu0
    %v9821 = vadd.f32 %v9768, %v9820
    %9822 = vmatprep.mubr.bf16.mxu0 %v8459
    %9823 = vmatmul.mubr.bf16.gmra.mxu0 %v8456
    %v9824 = vpop.f32.mrf.mxu0
    %v9825 = vadd.f32 %v9772, %v9824
    %v9826 = vpop.f32.mrf.mxu0
    %v9827 = vadd.f32 %v9774, %v9826
    %v9828 = vpop.f32.mrf.mxu0
    %v9829 = vadd.f32 %v9776, %v9828
    %v9830 = vpop.f32.mrf.mxu0
    %v9831 = vadd.f32 %v9778, %v9830
    %9832 = vdwg.mxu0
    %9833 = vmatprep.subr.bf16.mxu0 %v9227
    %9834 = vmatpush1.bf16.msra.mxu0 %v9226
    %9835 = vmatprep.subr.bf16.mxu0 %v9220
    %9836 = vmatpush1.bf16.msra.mxu0 %v9219
    %9837 = vmatprep.subr.bf16.mxu0 %v9213
    %9838 = vmatpush1.bf16.msra.mxu0 %v9212
    %9839 = vmatprep.subr.bf16.mxu0 %v9206
    %9840 = vmatpush1.bf16.msra.mxu0 %v9205
    %9841 = vmatprep.subr.bf16.mxu0 %v9199
    %9842 = vmatpush1.bf16.msra.mxu0 %v9198
    %9843 = vmatprep.subr.bf16.mxu0 %v9192
    %9844 = vmatpush1.bf16.msra.mxu0 %v9191
    %9845 = vmatprep.subr.bf16.mxu0 %v9185
    %9846 = vmatpush1.bf16.msra.mxu0 %v9184
    %9847 = vmatprep.subr.bf16.mxu0 %v9178
    %9848 = vmatpush1.bf16.msra.mxu0 %v9177
    %9849 = vmatprep.subr.bf16.mxu0 %v9283
    %9850 = vmatpush2.bf16.msra.mxu0 %v9282
    %9851 = vmatprep.subr.bf16.mxu0 %v9276
    %9852 = vmatpush2.bf16.msra.mxu0 %v9275
    %9853 = vmatprep.subr.bf16.mxu0 %v9269
    %9854 = vmatpush2.bf16.msra.mxu0 %v9268
    %9855 = vmatprep.subr.bf16.mxu0 %v9262
    %9856 = vmatpush2.bf16.msra.mxu0 %v9261
    %9857 = vmatprep.subr.bf16.mxu0 %v9255
    %9858 = vmatpush2.bf16.msra.mxu0 %v9254
    %9859 = vmatprep.subr.bf16.mxu0 %v9248
    %9860 = vmatpush2.bf16.msra.mxu0 %v9247
    %9861 = vmatprep.subr.bf16.mxu0 %v9241
    %9862 = vmatpush2.bf16.msra.mxu0 %v9240
    %9863 = vmatprep.subr.bf16.mxu0 %v9234
    %9864 = vmatpush2.bf16.msra.mxu0 %v9233
    %9865 = vmatprep.mubr.bf16.mxu0 %v8454
    %9866 = vmatmul.mubr.bf16.gmra.mxu0 %v8451
    %v9867 = vpop.f32.mrf.mxu0
    %v9868 = vadd.f32 0.0, %v9867
    %v9869 = vpop.f32.mrf.mxu0
    %v9870 = vadd.f32 0.0, %v9869
    %v9871 = vpop.f32.mrf.mxu0
    %v9872 = vadd.f32 0.0, %v9871
    %v9873 = vpop.f32.mrf.mxu0
    %v9874 = vadd.f32 0.0, %v9873
    %9875 = vmatprep.mubr.bf16.mxu0 %v8453
    %9876 = vmatmul.mubr.bf16.gmra.mxu0 %v8450
    %v9877 = vpop.f32.mrf.mxu0
    %v9878 = vadd.f32 0.0, %v9877
    %v9879 = vpop.f32.mrf.mxu0
    %v9880 = vadd.f32 0.0, %v9879
    %v9881 = vpop.f32.mrf.mxu0
    %v9882 = vadd.f32 0.0, %v9881
    %v9883 = vpop.f32.mrf.mxu0
    %v9884 = vadd.f32 0.0, %v9883
    %9885 = vdwg.mxu0
    %9886 = vmatprep.subr.bf16.mxu0 %v9339
    %9887 = vmatpush1.bf16.msra.mxu0 %v9338
    %9888 = vmatprep.subr.bf16.mxu0 %v9332
    %9889 = vmatpush1.bf16.msra.mxu0 %v9331
    %9890 = vmatprep.subr.bf16.mxu0 %v9325
    %9891 = vmatpush1.bf16.msra.mxu0 %v9324
    %9892 = vmatprep.subr.bf16.mxu0 %v9318
    %9893 = vmatpush1.bf16.msra.mxu0 %v9317
    %9894 = vmatprep.subr.bf16.mxu0 %v9311
    %9895 = vmatpush1.bf16.msra.mxu0 %v9310
    %9896 = vmatprep.subr.bf16.mxu0 %v9304
    %9897 = vmatpush1.bf16.msra.mxu0 %v9303
    %9898 = vmatprep.subr.bf16.mxu0 %v9297
    %9899 = vmatpush1.bf16.msra.mxu0 %v9296
    %9900 = vmatprep.subr.bf16.mxu0 %v9290
    %9901 = vmatpush1.bf16.msra.mxu0 %v9289
    %9902 = vmatprep.subr.bf16.mxu0 %v9395
    %9903 = vmatpush2.bf16.msra.mxu0 %v9394
    %9904 = vmatprep.subr.bf16.mxu0 %v9388
    %9905 = vmatpush2.bf16.msra.mxu0 %v9387
    %9906 = vmatprep.subr.bf16.mxu0 %v9381
    %9907 = vmatpush2.bf16.msra.mxu0 %v9380
    %9908 = vmatprep.subr.bf16.mxu0 %v9374
    %9909 = vmatpush2.bf16.msra.mxu0 %v9373
    %9910 = vmatprep.subr.bf16.mxu0 %v9367
    %9911 = vmatpush2.bf16.msra.mxu0 %v9366
    %9912 = vmatprep.subr.bf16.mxu0 %v9360
    %9913 = vmatpush2.bf16.msra.mxu0 %v9359
    %9914 = vmatprep.subr.bf16.mxu0 %v9353
    %9915 = vmatpush2.bf16.msra.mxu0 %v9352
    %9916 = vmatprep.subr.bf16.mxu0 %v9346
    %9917 = vmatpush2.bf16.msra.mxu0 %v9345
    %9918 = vmatprep.mubr.bf16.mxu0 %v8460
    %9919 = vmatmul.mubr.bf16.gmra.mxu0 %v8457
    %v9920 = vpop.f32.mrf.mxu0
    %v9921 = vadd.f32 %v9868, %v9920
    %v9922 = vpop.f32.mrf.mxu0
    %v9923 = vadd.f32 %v9870, %v9922
    %v9924 = vpop.f32.mrf.mxu0
    %v9925 = vadd.f32 %v9872, %v9924
    %v9926 = vpop.f32.mrf.mxu0
    %v9927 = vadd.f32 %v9874, %v9926
    %9928 = vmatprep.mubr.bf16.mxu0 %v8459
    %9929 = vmatmul.mubr.bf16.gmra.mxu0 %v8456
    %v9930 = vpop.f32.mrf.mxu0
    %v9931 = vadd.f32 %v9878, %v9930
    %v9932 = vpop.f32.mrf.mxu0
    %v9933 = vadd.f32 %v9880, %v9932
    %v9934 = vpop.f32.mrf.mxu0
    %v9935 = vadd.f32 %v9882, %v9934
    %v9936 = vpop.f32.mrf.mxu0
    %v9937 = vadd.f32 %v9884, %v9936
    %9938 = vdwg.mxu0
    %9939 = vmatprep.subr.bf16.mxu0 0
    %9940 = vmatpush1.bf16.msra.mxu0 %v9228
    %9941 = vmatprep.subr.bf16.mxu0 0
    %9942 = vmatpush1.bf16.msra.mxu0 %v9221
    %9943 = vmatprep.subr.bf16.mxu0 0
    %9944 = vmatpush1.bf16.msra.mxu0 %v9214
    %9945 = vmatprep.subr.bf16.mxu0 0
    %9946 = vmatpush1.bf16.msra.mxu0 %v9207
    %9947 = vmatprep.subr.bf16.mxu0 0
    %9948 = vmatpush1.bf16.msra.mxu0 %v9200
    %9949 = vmatprep.subr.bf16.mxu0 0
    %9950 = vmatpush1.bf16.msra.mxu0 %v9193
    %9951 = vmatprep.subr.bf16.mxu0 0
    %9952 = vmatpush1.bf16.msra.mxu0 %v9186
    %9953 = vmatprep.subr.bf16.mxu0 0
    %9954 = vmatpush1.bf16.msra.mxu0 %v9179
    %9955 = vmatprep.subr.bf16.mxu0 0
    %9956 = vmatpush2.bf16.msra.mxu0 %v9284
    %9957 = vmatprep.subr.bf16.mxu0 0
    %9958 = vmatpush2.bf16.msra.mxu0 %v9277
    %9959 = vmatprep.subr.bf16.mxu0 0
    %9960 = vmatpush2.bf16.msra.mxu0 %v9270
    %9961 = vmatprep.subr.bf16.mxu0 0
    %9962 = vmatpush2.bf16.msra.mxu0 %v9263
    %9963 = vmatprep.subr.bf16.mxu0 0
    %9964 = vmatpush2.bf16.msra.mxu0 %v9256
    %9965 = vmatprep.subr.bf16.mxu0 0
    %9966 = vmatpush2.bf16.msra.mxu0 %v9249
    %9967 = vmatprep.subr.bf16.mxu0 0
    %9968 = vmatpush2.bf16.msra.mxu0 %v9242
    %9969 = vmatprep.subr.bf16.mxu0 0
    %9970 = vmatpush2.bf16.msra.mxu0 %v9235
    %9971 = vmatprep.mubr.bf16.mxu0 %v8454
    %9972 = vmatmul.mubr.bf16.gmra.mxu0 %v8451
    %v9973 = vpop.f32.mrf.mxu0
    %v9974 = vadd.f32 0.0, %v9973
    %v9975 = vpop.f32.mrf.mxu0
    %v9976 = vpop.f32.mrf.mxu0
    %v9977 = vadd.f32 0.0, %v9976
    %v9978 = vpop.f32.mrf.mxu0
    %9979 = vmatprep.mubr.bf16.mxu0 %v8453
    %9980 = vmatmul.mubr.bf16.gmra.mxu0 %v8450
    %v9981 = vpop.f32.mrf.mxu0
    %v9982 = vadd.f32 0.0, %v9981
    %v9983 = vpop.f32.mrf.mxu0
    %v9984 = vpop.f32.mrf.mxu0
    %v9985 = vadd.f32 0.0, %v9984
    %v9986 = vpop.f32.mrf.mxu0
    %9987 = vdwg.mxu0
    %9988 = vmatprep.subr.bf16.mxu0 0
    %9989 = vmatpush1.bf16.msra.mxu0 %v9340
    %9990 = vmatprep.subr.bf16.mxu0 0
    %9991 = vmatpush1.bf16.msra.mxu0 %v9333
    %9992 = vmatprep.subr.bf16.mxu0 0
    %9993 = vmatpush1.bf16.msra.mxu0 %v9326
    %9994 = vmatprep.subr.bf16.mxu0 0
    %9995 = vmatpush1.bf16.msra.mxu0 %v9319
    %9996 = vmatprep.subr.bf16.mxu0 0
    %9997 = vmatpush1.bf16.msra.mxu0 %v9312
    %9998 = vmatprep.subr.bf16.mxu0 0
    %9999 = vmatpush1.bf16.msra.mxu0 %v9305
    %10000 = vmatprep.subr.bf16.mxu0 0
    %10001 = vmatpush1.bf16.msra.mxu0 %v9298
    %10002 = vmatprep.subr.bf16.mxu0 0
    %10003 = vmatpush1.bf16.msra.mxu0 %v9291
    %10004 = vmatprep.subr.bf16.mxu0 0
    %10005 = vmatpush2.bf16.msra.mxu0 %v9396
    %10006 = vmatprep.subr.bf16.mxu0 0
    %10007 = vmatpush2.bf16.msra.mxu0 %v9389
    %10008 = vmatprep.subr.bf16.mxu0 0
    %10009 = vmatpush2.bf16.msra.mxu0 %v9382
    %10010 = vmatprep.subr.bf16.mxu0 0
    %10011 = vmatpush2.bf16.msra.mxu0 %v9375
    %10012 = vmatprep.subr.bf16.mxu0 0
    %10013 = vmatpush2.bf16.msra.mxu0 %v9368
    %10014 = vmatprep.subr.bf16.mxu0 0
    %10015 = vmatpush2.bf16.msra.mxu0 %v9361
    %10016 = vmatprep.subr.bf16.mxu0 0
    %10017 = vmatpush2.bf16.msra.mxu0 %v9354
    %10018 = vmatprep.subr.bf16.mxu0 0
    %10019 = vmatpush2.bf16.msra.mxu0 %v9347
    %10020 = vmatprep.mubr.bf16.mxu0 %v8460
    %10021 = vmatmul.mubr.bf16.gmra.mxu0 %v8457
    %v10022 = vpop.f32.mrf.mxu0
    %v10023 = vadd.f32 %v9974, %v10022
    %v10024 = vpop.f32.mrf.mxu0
    %v10025 = vpop.f32.mrf.mxu0
    %v10026 = vadd.f32 %v9977, %v10025
    %v10027 = vpop.f32.mrf.mxu0
    %10028 = vmatprep.mubr.bf16.mxu0 %v8459
    %10029 = vmatmul.mubr.bf16.gmra.mxu0 %v8456
    %v10030 = vpop.f32.mrf.mxu0
    %v10031 = vadd.f32 %v9982, %v10030
    %v10032 = vpop.f32.mrf.mxu0
    %v10033 = vpop.f32.mrf.mxu0
    %v10034 = vadd.f32 %v9985, %v10033
    %v10035 = vpop.f32.mrf.mxu0
    %10036 = vdwg.mxu0
    %v10037 = vadd.f32 %v7840, %v9709
    %v10038 = vadd.f32 %v7842, %v9711
    %v10039 = vadd.f32 %v7946, %v9815
    %v10040 = vadd.f32 %v7948, %v9817
    %v10041 = vadd.f32 %v8052, %v9921
    %v10042 = vadd.f32 %v8054, %v9923
    %v10043 = vadd.f32 %v8154, %v10023
    %v10044 = vadd.f32 %v7844, %v9713
    %v10045 = vadd.f32 %v7846, %v9715
    %v10046 = vadd.f32 %v7950, %v9819
    %v10047 = vadd.f32 %v7952, %v9821
    %v10048 = vadd.f32 %v8056, %v9925
    %v10049 = vadd.f32 %v8058, %v9927
    %v10050 = vadd.f32 %v8157, %v10026
    %v10051 = vadd.f32 %v7850, %v9719
    %v10052 = vadd.f32 %v7852, %v9721
    %v10053 = vadd.f32 %v7956, %v9825
    %v10054 = vadd.f32 %v7958, %v9827
    %v10055 = vadd.f32 %v8062, %v9931
    %v10056 = vadd.f32 %v8064, %v9933
    %v10057 = vadd.f32 %v8162, %v10031
    %v10058 = vadd.f32 %v7854, %v9723
    %v10059 = vadd.f32 %v7856, %v9725
    %v10060 = vadd.f32 %v7960, %v9829
    %v10061 = vadd.f32 %v7962, %v9831
    %v10062 = vadd.f32 %v8066, %v9935
    %v10063 = vadd.f32 %v8068, %v9937
    %v10064 = vadd.f32 %v8165, %v10034
    %v10065 = vadd.f32 %v10037, %v10044
    %v10066 = vadd.f32 %v10065, %v10051
    %v10067 = vsel %vm4416, %v10058, 0.0
    %v10068 = vadd.f32 %v10066, %v10067
    %v10069 = vrot.slane %v10068, 4
    %v10070 = vadd.f32 %v10068, %v10069
    %v10071 = vrot.slane %v10070, 2
    %v10072 = vadd.f32 %v10070, %v10071
    %v10073 = vrot.slane %v10072, 1
    %v10074 = vadd.f32 %v10072, %v10073
    %v10075 = vadd.f32 %v10038, %v10045
    %v10076 = vadd.f32 %v10075, %v10052
    %v10077 = vsel %vm4416, %v10059, 0.0
    %v10078 = vadd.f32 %v10076, %v10077
    %v10079 = vrot.slane %v10078, 4
    %v10080 = vadd.f32 %v10078, %v10079
    %v10081 = vrot.slane %v10080, 2
    %v10082 = vadd.f32 %v10080, %v10081
    %v10083 = vrot.slane %v10082, 1
    %v10084 = vadd.f32 %v10082, %v10083
    %v10085 = vadd.f32 %v10039, %v10046
    %v10086 = vadd.f32 %v10085, %v10053
    %v10087 = vsel %vm4416, %v10060, 0.0
    %v10088 = vadd.f32 %v10086, %v10087
    %v10089 = vrot.slane %v10088, 4
    %v10090 = vadd.f32 %v10088, %v10089
    %v10091 = vrot.slane %v10090, 2
    %v10092 = vadd.f32 %v10090, %v10091
    %v10093 = vrot.slane %v10092, 1
    %v10094 = vadd.f32 %v10092, %v10093
    %v10095 = vadd.f32 %v10040, %v10047
    %v10096 = vadd.f32 %v10095, %v10054
    %v10097 = vsel %vm4416, %v10061, 0.0
    %v10098 = vadd.f32 %v10096, %v10097
    %v10099 = vrot.slane %v10098, 4
    %v10100 = vadd.f32 %v10098, %v10099
    %v10101 = vrot.slane %v10100, 2
    %v10102 = vadd.f32 %v10100, %v10101
    %v10103 = vrot.slane %v10102, 1
    %v10104 = vadd.f32 %v10102, %v10103
    %v10105 = vadd.f32 %v10041, %v10048
    %v10106 = vadd.f32 %v10105, %v10055
    %v10107 = vsel %vm4416, %v10062, 0.0
    %v10108 = vadd.f32 %v10106, %v10107
    %v10109 = vrot.slane %v10108, 4
    %v10110 = vadd.f32 %v10108, %v10109
    %v10111 = vrot.slane %v10110, 2
    %v10112 = vadd.f32 %v10110, %v10111
    %v10113 = vrot.slane %v10112, 1
    %v10114 = vadd.f32 %v10112, %v10113
    %v10115 = vadd.f32 %v10042, %v10049
    %v10116 = vadd.f32 %v10115, %v10056
    %v10117 = vsel %vm4416, %v10063, 0.0
    %v10118 = vadd.f32 %v10116, %v10117
    %v10119 = vrot.slane %v10118, 4
    %v10120 = vadd.f32 %v10118, %v10119
    %v10121 = vrot.slane %v10120, 2
    %v10122 = vadd.f32 %v10120, %v10121
    %v10123 = vrot.slane %v10122, 1
    %v10124 = vadd.f32 %v10122, %v10123
    %v10125 = vadd.f32 %v10043, %v10050
    %v10126 = vadd.f32 %v10125, %v10057
    %v10127 = vsel %vm4416, %v10064, 0.0
    %v10128 = vadd.f32 %v10126, %v10127
    %v10129 = vrot.slane %v10128, 4
    %v10130 = vadd.f32 %v10128, %v10129
    %v10131 = vrot.slane %v10130, 2
    %v10132 = vadd.f32 %v10130, %v10131
    %v10133 = vrot.slane %v10132, 1
    %v10134 = vadd.f32 %v10132, %v10133
    %10136 = vrot.lane.b32.xlu0 %v10074, 64
    %v10137 = vpop.permute.xlu0 %10136
    %v10139 = vadd.f32 %v10074, %v10137
    %v10140 = vadd.f32 %v10139, %v10084
    %10142 = vrot.lane.b32.xlu0 %v10084, 64
    %v10143 = vpop.permute.xlu0 %10142
    %v10145 = vadd.f32 %v10140, %v10143
    %v10146 = vadd.f32 %v10145, %v10094
    %10148 = vrot.lane.b32.xlu0 %v10094, 64
    %v10149 = vpop.permute.xlu0 %10148
    %v10151 = vadd.f32 %v10146, %v10149
    %v10152 = vadd.f32 %v10151, %v10104
    %10154 = vrot.lane.b32.xlu0 %v10104, 64
    %v10155 = vpop.permute.xlu0 %10154
    %v10157 = vadd.f32 %v10152, %v10155
    %v10158 = vadd.f32 %v10157, %v10114
    %10160 = vrot.lane.b32.xlu0 %v10114, 64
    %v10161 = vpop.permute.xlu0 %10160
    %v10163 = vadd.f32 %v10158, %v10161
    %v10164 = vadd.f32 %v10163, %v10124
    %10166 = vrot.lane.b32.xlu0 %v10124, 64
    %v10167 = vpop.permute.xlu0 %10166
    %v10169 = vadd.f32 %v10164, %v10167
    %v10170 = vadd.f32 %v10169, %v10134
    %10172 = vrot.lane.b32.xlu0 %v10134, 64
    %v10173 = vpop.permute.xlu0 %10172
    %v10175 = vadd.f32 %v10170, %v10173
    %v10176 = vrcp.pop 392.0
    %v10177 = vmul.f32 %v10175, %v10176
    %10179 = vrot.lane.b32.xlu0 %v10177, 64
    %v10180 = vpop.permute.xlu0 %10179
    %v10182 = vsel %vm1474, %v10177, %v10180
    %v10183 = vlaneseq
    %v10184 = vshrl.u32 %v10183, 7
    %v10185 = vsub.s32 0, %v10184
    %v10186 = vrot.slane %v10182, %v10185
    %v10187 = vsub.f32 %v10037, %v10186
    %v10188 = vsub.f32 %v10038, %v10186
    %v10189 = vsub.f32 %v10039, %v10186
    %v10190 = vsub.f32 %v10040, %v10186
    %v10191 = vsub.f32 %v10041, %v10186
    %v10192 = vsub.f32 %v10042, %v10186
    %v10193 = vsub.f32 %v10043, %v10186
    %v10194 = vsub.f32 %v10044, %v10186
    %v10195 = vsub.f32 %v10045, %v10186
    %v10196 = vsub.f32 %v10046, %v10186
    %v10197 = vsub.f32 %v10047, %v10186
    %v10198 = vsub.f32 %v10048, %v10186
    %v10199 = vsub.f32 %v10049, %v10186
    %v10200 = vsub.f32 %v10050, %v10186
    %v10201 = vsub.f32 %v10051, %v10186
    %v10202 = vsub.f32 %v10052, %v10186
    %v10203 = vsub.f32 %v10053, %v10186
    %v10204 = vsub.f32 %v10054, %v10186
    %v10205 = vsub.f32 %v10055, %v10186
    %v10206 = vsub.f32 %v10056, %v10186
    %v10207 = vsub.f32 %v10057, %v10186
    %v10208 = vsub.f32 %v10058, %v10186
    %v10209 = vsub.f32 %v10059, %v10186
    %v10210 = vsub.f32 %v10060, %v10186
    %v10211 = vsub.f32 %v10061, %v10186
    %v10212 = vsub.f32 %v10062, %v10186
    %v10213 = vsub.f32 %v10063, %v10186
    %v10214 = vsub.f32 %v10064, %v10186
    %v10215 = vmul.f32 %v10187, %v10187
    %v10216 = vmul.f32 %v10188, %v10188
    %v10217 = vmul.f32 %v10189, %v10189
    %v10218 = vmul.f32 %v10190, %v10190
    %v10219 = vmul.f32 %v10191, %v10191
    %v10220 = vmul.f32 %v10192, %v10192
    %v10221 = vmul.f32 %v10193, %v10193
    %v10222 = vmul.f32 %v10194, %v10194
    %v10223 = vmul.f32 %v10195, %v10195
    %v10224 = vmul.f32 %v10196, %v10196
    %v10225 = vmul.f32 %v10197, %v10197
    %v10226 = vmul.f32 %v10198, %v10198
    %v10227 = vmul.f32 %v10199, %v10199
    %v10228 = vmul.f32 %v10200, %v10200
    %v10229 = vmul.f32 %v10201, %v10201
    %v10230 = vmul.f32 %v10202, %v10202
    %v10231 = vmul.f32 %v10203, %v10203
    %v10232 = vmul.f32 %v10204, %v10204
    %v10233 = vmul.f32 %v10205, %v10205
    %v10234 = vmul.f32 %v10206, %v10206
    %v10235 = vmul.f32 %v10207, %v10207
    %v10236 = vmul.f32 %v10208, %v10208
    %v10237 = vmul.f32 %v10209, %v10209
    %v10238 = vmul.f32 %v10210, %v10210
    %v10239 = vmul.f32 %v10211, %v10211
    %v10240 = vmul.f32 %v10212, %v10212
    %v10241 = vmul.f32 %v10213, %v10213
    %v10242 = vmul.f32 %v10214, %v10214
    %v10243 = vadd.f32 %v10215, %v10222
    %v10244 = vadd.f32 %v10243, %v10229
    %v10245 = vsel %vm4416, %v10236, 0.0
    %v10246 = vadd.f32 %v10244, %v10245
    %v10247 = vrot.slane %v10246, 4
    %v10248 = vadd.f32 %v10246, %v10247
    %v10249 = vrot.slane %v10248, 2
    %v10250 = vadd.f32 %v10248, %v10249
    %v10251 = vrot.slane %v10250, 1
    %v10252 = vadd.f32 %v10250, %v10251
    %v10253 = vadd.f32 %v10216, %v10223
    %v10254 = vadd.f32 %v10253, %v10230
    %v10255 = vsel %vm4416, %v10237, 0.0
    %v10256 = vadd.f32 %v10254, %v10255
    %v10257 = vrot.slane %v10256, 4
    %v10258 = vadd.f32 %v10256, %v10257
    %v10259 = vrot.slane %v10258, 2
    %v10260 = vadd.f32 %v10258, %v10259
    %v10261 = vrot.slane %v10260, 1
    %v10262 = vadd.f32 %v10260, %v10261
    %v10263 = vadd.f32 %v10217, %v10224
    %v10264 = vadd.f32 %v10263, %v10231
    %v10265 = vsel %vm4416, %v10238, 0.0
    %v10266 = vadd.f32 %v10264, %v10265
    %v10267 = vrot.slane %v10266, 4
    %v10268 = vadd.f32 %v10266, %v10267
    %v10269 = vrot.slane %v10268, 2
    %v10270 = vadd.f32 %v10268, %v10269
    %v10271 = vrot.slane %v10270, 1
    %v10272 = vadd.f32 %v10270, %v10271
    %v10273 = vadd.f32 %v10218, %v10225
    %v10274 = vadd.f32 %v10273, %v10232
    %v10275 = vsel %vm4416, %v10239, 0.0
    %v10276 = vadd.f32 %v10274, %v10275
    %v10277 = vrot.slane %v10276, 4
    %v10278 = vadd.f32 %v10276, %v10277
    %v10279 = vrot.slane %v10278, 2
    %v10280 = vadd.f32 %v10278, %v10279
    %v10281 = vrot.slane %v10280, 1
    %v10282 = vadd.f32 %v10280, %v10281
    %v10283 = vadd.f32 %v10219, %v10226
    %v10284 = vadd.f32 %v10283, %v10233
    %v10285 = vsel %vm4416, %v10240, 0.0
    %v10286 = vadd.f32 %v10284, %v10285
    %v10287 = vrot.slane %v10286, 4
    %v10288 = vadd.f32 %v10286, %v10287
    %v10289 = vrot.slane %v10288, 2
    %v10290 = vadd.f32 %v10288, %v10289
    %v10291 = vrot.slane %v10290, 1
    %v10292 = vadd.f32 %v10290, %v10291
    %v10293 = vadd.f32 %v10220, %v10227
    %v10294 = vadd.f32 %v10293, %v10234
    %v10295 = vsel %vm4416, %v10241, 0.0
    %v10296 = vadd.f32 %v10294, %v10295
    %v10297 = vrot.slane %v10296, 4
    %v10298 = vadd.f32 %v10296, %v10297
    %v10299 = vrot.slane %v10298, 2
    %v10300 = vadd.f32 %v10298, %v10299
    %v10301 = vrot.slane %v10300, 1
    %v10302 = vadd.f32 %v10300, %v10301
    %v10303 = vadd.f32 %v10221, %v10228
    %v10304 = vadd.f32 %v10303, %v10235
    %v10305 = vsel %vm4416, %v10242, 0.0
    %v10306 = vadd.f32 %v10304, %v10305
    %v10307 = vrot.slane %v10306, 4
    %v10308 = vadd.f32 %v10306, %v10307
    %v10309 = vrot.slane %v10308, 2
    %v10310 = vadd.f32 %v10308, %v10309
    %v10311 = vrot.slane %v10310, 1
    %v10312 = vadd.f32 %v10310, %v10311
    %10314 = vrot.lane.b32.xlu0 %v10252, 64
    %v10315 = vpop.permute.xlu0 %10314
    %v10317 = vadd.f32 %v10252, %v10315
    %v10318 = vadd.f32 %v10317, %v10262
    %10320 = vrot.lane.b32.xlu0 %v10262, 64
    %v10321 = vpop.permute.xlu0 %10320
    %v10323 = vadd.f32 %v10318, %v10321
    %v10324 = vadd.f32 %v10323, %v10272
    %10326 = vrot.lane.b32.xlu0 %v10272, 64
    %v10327 = vpop.permute.xlu0 %10326
    %v10329 = vadd.f32 %v10324, %v10327
    %v10330 = vadd.f32 %v10329, %v10282
    %10332 = vrot.lane.b32.xlu0 %v10282, 64
    %v10333 = vpop.permute.xlu0 %10332
    %v10335 = vadd.f32 %v10330, %v10333
    %v10336 = vadd.f32 %v10335, %v10292
    %10338 = vrot.lane.b32.xlu0 %v10292, 64
    %v10339 = vpop.permute.xlu0 %10338
    %v10341 = vadd.f32 %v10336, %v10339
    %v10342 = vadd.f32 %v10341, %v10302
    %10344 = vrot.lane.b32.xlu0 %v10302, 64
    %v10345 = vpop.permute.xlu0 %10344
    %v10347 = vadd.f32 %v10342, %v10345
    %v10348 = vadd.f32 %v10347, %v10312
    %10350 = vrot.lane.b32.xlu0 %v10312, 64
    %v10351 = vpop.permute.xlu0 %10350
    %v10353 = vadd.f32 %v10348, %v10351
    %v10354 = vmul.f32 %v10353, %v10176
    %v10355 = vld [vmem:[%s5] sm:$0x1]
    %v10356 = vadd.f32 %v10354, 1e-05
    %v10357 = vrsqrt.pop %v10356
    %v10358 = vmul.f32 %v10355, %v10357
    %v10360 = vlaneseq
    %v10361 = vshrl.u32 %v10360, 7
    %v10362 = vsub.s32 0, %v10361
    %v10363 = vrot.slane %v10358, %v10362
    %10364 = vrot.lane.b32.xlu0 %v10363, 64
    %v10365 = vpop.permute.xlu0 %10364
    %v10367 = vsel %vm1474, %v10358, %v10365
    %v10368 = vlaneseq
    %v10369 = vshrl.u32 %v10368, 7
    %v10370 = vsub.s32 0, %v10369
    %v10371 = vrot.slane %v10367, %v10370
    %v10372 = vmul.f32 %v10187, %v10371
    %v10373 = vmul.f32 %v10188, %v10371
    %v10374 = vmul.f32 %v10189, %v10371
    %v10375 = vmul.f32 %v10190, %v10371
    %v10376 = vmul.f32 %v10191, %v10371
    %v10377 = vmul.f32 %v10192, %v10371
    %v10378 = vmul.f32 %v10193, %v10371
    %v10379 = vmul.f32 %v10194, %v10371
    %v10380 = vmul.f32 %v10195, %v10371
    %v10381 = vmul.f32 %v10196, %v10371
    %v10382 = vmul.f32 %v10197, %v10371
    %v10383 = vmul.f32 %v10198, %v10371
    %v10384 = vmul.f32 %v10199, %v10371
    %v10385 = vmul.f32 %v10200, %v10371
    %v10386 = vmul.f32 %v10201, %v10371
    %v10387 = vmul.f32 %v10202, %v10371
    %v10388 = vmul.f32 %v10203, %v10371
    %v10389 = vmul.f32 %v10204, %v10371
    %v10390 = vmul.f32 %v10205, %v10371
    %v10391 = vmul.f32 %v10206, %v10371
    %v10392 = vmul.f32 %v10207, %v10371
    %v10393 = vmul.f32 %v10208, %v10371
    %v10394 = vmul.f32 %v10209, %v10371
    %v10395 = vmul.f32 %v10210, %v10371
    %v10396 = vmul.f32 %v10211, %v10371
    %v10397 = vmul.f32 %v10212, %v10371
    %v10398 = vmul.f32 %v10213, %v10371
    %v10399 = vmul.f32 %v10214, %v10371
    %v10400 = vld [vmem:[%s6] sm:$0x1]
    %v10402 = vlaneseq
    %v10403 = vshrl.u32 %v10402, 7
    %v10404 = vsub.s32 0, %v10403
    %v10405 = vrot.slane %v10400, %v10404
    %10406 = vrot.lane.b32.xlu0 %v10405, 64
    %v10407 = vpop.permute.xlu0 %10406
    %v10409 = vsel %vm1474, %v10400, %v10407
    %v10410 = vlaneseq
    %v10411 = vshrl.u32 %v10410, 7
    %v10412 = vsub.s32 0, %v10411
    %v10413 = vrot.slane %v10409, %v10412
    %v10414 = vadd.f32 %v10372, %v10413
    %v10415 = vadd.f32 %v10373, %v10413
    %v10416 = vadd.f32 %v10374, %v10413
    %v10417 = vadd.f32 %v10375, %v10413
    %v10418 = vadd.f32 %v10376, %v10413
    %v10419 = vadd.f32 %v10377, %v10413
    %v10420 = vadd.f32 %v10378, %v10413
    %v10421 = vadd.f32 %v10379, %v10413
    %v10422 = vadd.f32 %v10380, %v10413
    %v10423 = vadd.f32 %v10381, %v10413
    %v10424 = vadd.f32 %v10382, %v10413
    %v10425 = vadd.f32 %v10383, %v10413
    %v10426 = vadd.f32 %v10384, %v10413
    %v10427 = vadd.f32 %v10385, %v10413
    %v10428 = vadd.f32 %v10386, %v10413
    %v10429 = vadd.f32 %v10387, %v10413
    %v10430 = vadd.f32 %v10388, %v10413
    %v10431 = vadd.f32 %v10389, %v10413
    %v10432 = vadd.f32 %v10390, %v10413
    %v10433 = vadd.f32 %v10391, %v10413
    %v10434 = vadd.f32 %v10392, %v10413
    %v10435 = vadd.f32 %v10393, %v10413
    %v10436 = vadd.f32 %v10394, %v10413
    %v10437 = vadd.f32 %v10395, %v10413
    %v10438 = vadd.f32 %v10396, %v10413
    %v10439 = vadd.f32 %v10397, %v10413
    %v10440 = vadd.f32 %v10398, %v10413
    %v10441 = vadd.f32 %v10399, %v10413
    %v10442 = vmax.f32 %v10414, 0.0
    %v10443 = vmax.f32 %v10415, 0.0
    %v10444 = vmax.f32 %v10416, 0.0
    %v10445 = vmax.f32 %v10417, 0.0
    %v10446 = vmax.f32 %v10418, 0.0
    %v10447 = vmax.f32 %v10419, 0.0
    %v10448 = vmax.f32 %v10420, 0.0
    %v10449 = vmax.f32 %v10421, 0.0
    %v10450 = vmax.f32 %v10422, 0.0
    %v10451 = vmax.f32 %v10423, 0.0
    %v10452 = vmax.f32 %v10424, 0.0
    %v10453 = vmax.f32 %v10425, 0.0
    %v10454 = vmax.f32 %v10426, 0.0
    %v10455 = vmax.f32 %v10427, 0.0
    %v10456 = vmax.f32 %v10428, 0.0
    %v10457 = vmax.f32 %v10429, 0.0
    %v10458 = vmax.f32 %v10430, 0.0
    %v10459 = vmax.f32 %v10431, 0.0
    %v10460 = vmax.f32 %v10432, 0.0
    %v10461 = vmax.f32 %v10433, 0.0
    %v10462 = vmax.f32 %v10434, 0.0
    %v10463 = vmax.f32 %v10435, 0.0
    %v10464 = vmax.f32 %v10436, 0.0
    %v10465 = vmax.f32 %v10437, 0.0
    %v10466 = vmax.f32 %v10438, 0.0
    %v10467 = vmax.f32 %v10439, 0.0
    %v10468 = vmax.f32 %v10440, 0.0
    %v10469 = vmax.f32 %v10441, 0.0
    %v10498 = vcombine.low %v10442, %v10443
    %v10499 = vcombine.high %v10442, %v10443
    %v10500 = vcombine.low %v10444, %v10445
    %v10501 = vcombine.high %v10444, %v10445
    %v10502 = vcombine.low %v10446, %v10447
    %v10503 = vcombine.high %v10446, %v10447
    %v10504 = vcombine.high %v10448, %v10448
    %v10505 = vcombine.low %v10449, %v10450
    %v10506 = vcombine.high %v10449, %v10450
    %v10507 = vcombine.low %v10451, %v10452
    %v10508 = vcombine.high %v10451, %v10452
    %v10509 = vcombine.low %v10453, %v10454
    %v10510 = vcombine.high %v10453, %v10454
    %v10511 = vcombine.high %v10455, %v10455
    %v10512 = vcombine.low %v10456, %v10457
    %v10513 = vcombine.high %v10456, %v10457
    %v10514 = vcombine.low %v10458, %v10459
    %v10515 = vcombine.high %v10458, %v10459
    %v10516 = vcombine.low %v10460, %v10461
    %v10517 = vcombine.high %v10460, %v10461
    %v10518 = vcombine.high %v10462, %v10462
    %v10519 = vcombine.low %v10463, %v10464
    %v10520 = vcombine.low %v10465, %v10466
    %v10521 = vcombine.low %v10467, %v10468
    %v10546 = vrot.slane %v10498, 6
    %v10547 = vrot.slane %v10546, 4
    %v10548 = vrot.slane %v10500, 6
    %v10549 = vrot.slane %v10548, 4
    %v10550 = vrot.slane %v10502, 6
    %v10551 = vrot.slane %v10550, 4
    %v10552 = vrot.slane %v10448, 6
    %v10553 = vrot.slane %v10552, 4
    %v10554 = vrot.slane %v10499, 6
    %v10555 = vrot.slane %v10554, 4
    %v10556 = vrot.slane %v10501, 6
    %v10557 = vrot.slane %v10556, 4
    %v10558 = vrot.slane %v10503, 6
    %v10559 = vrot.slane %v10558, 4
    %v10560 = vrot.slane %v10504, 6
    %v10561 = vrot.slane %v10560, 4
    %v10562 = vrot.slane %v10505, 6
    %v10563 = vrot.slane %v10562, 4
    %v10564 = vrot.slane %v10507, 6
    %v10565 = vrot.slane %v10564, 4
    %v10566 = vrot.slane %v10509, 6
    %v10567 = vrot.slane %v10566, 4
    %v10568 = vrot.slane %v10455, 6
    %v10569 = vrot.slane %v10568, 4
    %v10570 = vrot.slane %v10506, 6
    %v10571 = vrot.slane %v10570, 4
    %v10572 = vrot.slane %v10508, 6
    %v10573 = vrot.slane %v10572, 4
    %v10574 = vrot.slane %v10510, 6
    %v10575 = vrot.slane %v10574, 4
    %v10576 = vrot.slane %v10511, 6
    %v10577 = vrot.slane %v10576, 4
    %v10578 = vrot.slane %v10512, 6
    %v10579 = vrot.slane %v10578, 4
    %v10580 = vrot.slane %v10514, 6
    %v10581 = vrot.slane %v10580, 4
    %v10582 = vrot.slane %v10516, 6
    %v10583 = vrot.slane %v10582, 4
    %v10584 = vrot.slane %v10462, 6
    %v10585 = vrot.slane %v10584, 4
    %v10586 = vrot.slane %v10513, 6
    %v10587 = vrot.slane %v10586, 4
    %v10588 = vrot.slane %v10515, 6
    %v10589 = vrot.slane %v10588, 4
    %v10590 = vrot.slane %v10517, 6
    %v10591 = vrot.slane %v10590, 4
    %v10592 = vrot.slane %v10518, 6
    %v10593 = vrot.slane %v10592, 4
    %v10594 = vrot.slane %v10519, 6
    %v10595 = vrot.slane %v10594, 4
    %v10596 = vrot.slane %v10520, 6
    %v10597 = vrot.slane %v10596, 4
    %v10598 = vrot.slane %v10521, 6
    %v10599 = vrot.slane %v10598, 4
    %v10600 = vrot.slane %v10469, 6
    %v10601 = vrot.slane %v10600, 4
    %v10630 = vmax.f32 %v10498, %v10547
    %v10631 = vmax.f32 %v10500, %v10549
    %v10632 = vmax.f32 %v10502, %v10551
    %v10633 = vmax.f32 %v10448, %v10553
    %v10634 = vmax.f32 %v10499, %v10555
    %v10635 = vmax.f32 %v10501, %v10557
    %v10636 = vmax.f32 %v10503, %v10559
    %v10637 = vmax.f32 %v10504, %v10561
    %v10638 = vmax.f32 %v10505, %v10563
    %v10639 = vmax.f32 %v10507, %v10565
    %v10640 = vmax.f32 %v10509, %v10567
    %v10641 = vmax.f32 %v10455, %v10569
    %v10642 = vmax.f32 %v10506, %v10571
    %v10643 = vmax.f32 %v10508, %v10573
    %v10644 = vmax.f32 %v10510, %v10575
    %v10645 = vmax.f32 %v10511, %v10577
    %v10646 = vmax.f32 %v10512, %v10579
    %v10647 = vmax.f32 %v10514, %v10581
    %v10648 = vmax.f32 %v10516, %v10583
    %v10649 = vmax.f32 %v10462, %v10585
    %v10650 = vmax.f32 %v10513, %v10587
    %v10651 = vmax.f32 %v10515, %v10589
    %v10652 = vmax.f32 %v10517, %v10591
    %v10653 = vmax.f32 %v10518, %v10593
    %v10654 = vmax.f32 %v10519, %v10595
    %v10655 = vmax.f32 %v10520, %v10597
    %v10656 = vmax.f32 %v10521, %v10599
    %v10657 = vmax.f32 %v10469, %v10601
    %10665 = vrot.lane.b32.xlu0 %v10630, 64
    %v10666 = vpop.permute.xlu0 %10665
    %10667 = vrot.lane.b32.xlu0 %v10634, 64
    %v10668 = vpop.permute.xlu0 %10667
    %10669 = vrot.lane.b32.xlu0 %v10638, 64
    %v10670 = vpop.permute.xlu0 %10669
    %10671 = vrot.lane.b32.xlu0 %v10642, 64
    %v10672 = vpop.permute.xlu0 %10671
    %10673 = vrot.lane.b32.xlu0 %v10646, 64
    %v10674 = vpop.permute.xlu0 %10673
    %10675 = vrot.lane.b32.xlu0 %v10650, 64
    %v10676 = vpop.permute.xlu0 %10675
    %10677 = vrot.lane.b32.xlu0 %v10654, 64
    %v10678 = vpop.permute.xlu0 %10677
    %v10686 = vmax.f32 %v10630, %v10666
    %v10687 = vmax.f32 %v10634, %v10668
    %v10688 = vmax.f32 %v10638, %v10670
    %v10689 = vmax.f32 %v10642, %v10672
    %v10690 = vmax.f32 %v10646, %v10674
    %v10691 = vmax.f32 %v10650, %v10676
    %v10692 = vmax.f32 %v10654, %v10678
    %v10693 = vrot.slane %v10630, 4
    %v10694 = vrot.slane %v10634, 4
    %v10695 = vrot.slane %v10638, 4
    %v10696 = vrot.slane %v10642, 4
    %v10697 = vrot.slane %v10646, 4
    %v10698 = vrot.slane %v10650, 4
    %v10699 = vrot.slane %v10654, 4
    %v10707 = vrot.slane %v10666, 4
    %v10708 = vrot.slane %v10668, 4
    %v10709 = vrot.slane %v10670, 4
    %v10710 = vrot.slane %v10672, 4
    %v10711 = vrot.slane %v10674, 4
    %v10712 = vrot.slane %v10676, 4
    %v10713 = vrot.slane %v10678, 4
    %v10721 = vmax.f32 %v10693, %v10707
    %v10722 = vmax.f32 %v10694, %v10708
    %v10723 = vmax.f32 %v10695, %v10709
    %v10724 = vmax.f32 %v10696, %v10710
    %v10725 = vmax.f32 %v10697, %v10711
    %v10726 = vmax.f32 %v10698, %v10712
    %v10727 = vmax.f32 %v10699, %v10713
    %10735 = vrot.lane.b32.xlu0 %v10631, 64
    %v10736 = vpop.permute.xlu0 %10735
    %10737 = vrot.lane.b32.xlu0 %v10635, 64
    %v10738 = vpop.permute.xlu0 %10737
    %10739 = vrot.lane.b32.xlu0 %v10639, 64
    %v10740 = vpop.permute.xlu0 %10739
    %10741 = vrot.lane.b32.xlu0 %v10643, 64
    %v10742 = vpop.permute.xlu0 %10741
    %10743 = vrot.lane.b32.xlu0 %v10647, 64
    %v10744 = vpop.permute.xlu0 %10743
    %10745 = vrot.lane.b32.xlu0 %v10651, 64
    %v10746 = vpop.permute.xlu0 %10745
    %10747 = vrot.lane.b32.xlu0 %v10655, 64
    %v10748 = vpop.permute.xlu0 %10747
    %v10756 = vmax.f32 %v10631, %v10736
    %v10757 = vmax.f32 %v10635, %v10738
    %v10758 = vmax.f32 %v10639, %v10740
    %v10759 = vmax.f32 %v10643, %v10742
    %v10760 = vmax.f32 %v10647, %v10744
    %v10761 = vmax.f32 %v10651, %v10746
    %v10762 = vmax.f32 %v10655, %v10748
    %v10763 = vrot.slane %v10631, 4
    %v10764 = vrot.slane %v10635, 4
    %v10765 = vrot.slane %v10639, 4
    %v10766 = vrot.slane %v10643, 4
    %v10767 = vrot.slane %v10647, 4
    %v10768 = vrot.slane %v10651, 4
    %v10769 = vrot.slane %v10655, 4
    %v10777 = vrot.slane %v10736, 4
    %v10778 = vrot.slane %v10738, 4
    %v10779 = vrot.slane %v10740, 4
    %v10780 = vrot.slane %v10742, 4
    %v10781 = vrot.slane %v10744, 4
    %v10782 = vrot.slane %v10746, 4
    %v10783 = vrot.slane %v10748, 4
    %v10791 = vmax.f32 %v10763, %v10777
    %v10792 = vmax.f32 %v10764, %v10778
    %v10793 = vmax.f32 %v10765, %v10779
    %v10794 = vmax.f32 %v10766, %v10780
    %v10795 = vmax.f32 %v10767, %v10781
    %v10796 = vmax.f32 %v10768, %v10782
    %v10797 = vmax.f32 %v10769, %v10783
    %10805 = vrot.lane.b32.xlu0 %v10632, 64
    %v10806 = vpop.permute.xlu0 %10805
    %10807 = vrot.lane.b32.xlu0 %v10636, 64
    %v10808 = vpop.permute.xlu0 %10807
    %10809 = vrot.lane.b32.xlu0 %v10640, 64
    %v10810 = vpop.permute.xlu0 %10809
    %10811 = vrot.lane.b32.xlu0 %v10644, 64
    %v10812 = vpop.permute.xlu0 %10811
    %10813 = vrot.lane.b32.xlu0 %v10648, 64
    %v10814 = vpop.permute.xlu0 %10813
    %10815 = vrot.lane.b32.xlu0 %v10652, 64
    %v10816 = vpop.permute.xlu0 %10815
    %10817 = vrot.lane.b32.xlu0 %v10656, 64
    %v10818 = vpop.permute.xlu0 %10817
    %v10826 = vmax.f32 %v10632, %v10806
    %v10827 = vmax.f32 %v10636, %v10808
    %v10828 = vmax.f32 %v10640, %v10810
    %v10829 = vmax.f32 %v10644, %v10812
    %v10830 = vmax.f32 %v10648, %v10814
    %v10831 = vmax.f32 %v10652, %v10816
    %v10832 = vmax.f32 %v10656, %v10818
    %v10833 = vrot.slane %v10632, 4
    %v10834 = vrot.slane %v10636, 4
    %v10835 = vrot.slane %v10640, 4
    %v10836 = vrot.slane %v10644, 4
    %v10837 = vrot.slane %v10648, 4
    %v10838 = vrot.slane %v10652, 4
    %v10839 = vrot.slane %v10656, 4
    %v10847 = vrot.slane %v10806, 4
    %v10848 = vrot.slane %v10808, 4
    %v10849 = vrot.slane %v10810, 4
    %v10850 = vrot.slane %v10812, 4
    %v10851 = vrot.slane %v10814, 4
    %v10852 = vrot.slane %v10816, 4
    %v10853 = vrot.slane %v10818, 4
    %v10861 = vmax.f32 %v10833, %v10847
    %v10862 = vmax.f32 %v10834, %v10848
    %v10863 = vmax.f32 %v10835, %v10849
    %v10864 = vmax.f32 %v10836, %v10850
    %v10865 = vmax.f32 %v10837, %v10851
    %v10866 = vmax.f32 %v10838, %v10852
    %v10867 = vmax.f32 %v10839, %v10853
    %10875 = vrot.lane.b32.xlu0 %v10633, 64
    %v10876 = vpop.permute.xlu0 %10875
    %10877 = vrot.lane.b32.xlu0 %v10637, 64
    %v10878 = vpop.permute.xlu0 %10877
    %10879 = vrot.lane.b32.xlu0 %v10641, 64
    %v10880 = vpop.permute.xlu0 %10879
    %10881 = vrot.lane.b32.xlu0 %v10645, 64
    %v10882 = vpop.permute.xlu0 %10881
    %10883 = vrot.lane.b32.xlu0 %v10649, 64
    %v10884 = vpop.permute.xlu0 %10883
    %10885 = vrot.lane.b32.xlu0 %v10653, 64
    %v10886 = vpop.permute.xlu0 %10885
    %10887 = vrot.lane.b32.xlu0 %v10657, 64
    %v10888 = vpop.permute.xlu0 %10887
    %v10896 = vmax.f32 %v10633, %v10876
    %v10897 = vmax.f32 %v10637, %v10878
    %v10898 = vmax.f32 %v10641, %v10880
    %v10899 = vmax.f32 %v10645, %v10882
    %v10900 = vmax.f32 %v10649, %v10884
    %v10901 = vmax.f32 %v10653, %v10886
    %v10902 = vmax.f32 %v10657, %v10888
    %10910 = vrot.lane.b32.xlu0 %v10721, 64
    %v10911 = vpop.permute.xlu0 %10910
    %10912 = vrot.lane.b32.xlu0 %v10722, 64
    %v10913 = vpop.permute.xlu0 %10912
    %10914 = vrot.lane.b32.xlu0 %v10723, 64
    %v10915 = vpop.permute.xlu0 %10914
    %10916 = vrot.lane.b32.xlu0 %v10724, 64
    %v10917 = vpop.permute.xlu0 %10916
    %10918 = vrot.lane.b32.xlu0 %v10725, 64
    %v10919 = vpop.permute.xlu0 %10918
    %10920 = vrot.lane.b32.xlu0 %v10726, 64
    %v10921 = vpop.permute.xlu0 %10920
    %10922 = vrot.lane.b32.xlu0 %v10727, 64
    %v10923 = vpop.permute.xlu0 %10922
    %10938 = vrot.lane.b32.xlu0 %v10791, 64
    %v10939 = vpop.permute.xlu0 %10938
    %10940 = vrot.lane.b32.xlu0 %v10792, 64
    %v10941 = vpop.permute.xlu0 %10940
    %10942 = vrot.lane.b32.xlu0 %v10793, 64
    %v10943 = vpop.permute.xlu0 %10942
    %10944 = vrot.lane.b32.xlu0 %v10794, 64
    %v10945 = vpop.permute.xlu0 %10944
    %10946 = vrot.lane.b32.xlu0 %v10795, 64
    %v10947 = vpop.permute.xlu0 %10946
    %10948 = vrot.lane.b32.xlu0 %v10796, 64
    %v10949 = vpop.permute.xlu0 %10948
    %10950 = vrot.lane.b32.xlu0 %v10797, 64
    %v10951 = vpop.permute.xlu0 %10950
    %10966 = vrot.lane.b32.xlu0 %v10861, 64
    %v10967 = vpop.permute.xlu0 %10966
    %10968 = vrot.lane.b32.xlu0 %v10862, 64
    %v10969 = vpop.permute.xlu0 %10968
    %10970 = vrot.lane.b32.xlu0 %v10863, 64
    %v10971 = vpop.permute.xlu0 %10970
    %10972 = vrot.lane.b32.xlu0 %v10864, 64
    %v10973 = vpop.permute.xlu0 %10972
    %10974 = vrot.lane.b32.xlu0 %v10865, 64
    %v10975 = vpop.permute.xlu0 %10974
    %10976 = vrot.lane.b32.xlu0 %v10866, 64
    %v10977 = vpop.permute.xlu0 %10976
    %10978 = vrot.lane.b32.xlu0 %v10867, 64
    %v10979 = vpop.permute.xlu0 %10978
    %v10987 = vsel %vm1474, %v10686, %v10911
    %v10988 = vsel %vm1474, %v10687, %v10913
    %v10989 = vsel %vm1474, %v10688, %v10915
    %v10990 = vsel %vm1474, %v10689, %v10917
    %v10991 = vsel %vm1474, %v10690, %v10919
    %v10992 = vsel %vm1474, %v10691, %v10921
    %v10993 = vsel %vm1474, %v10692, %v10923
    %v10994 = vsel %vm1474, %v10756, %v10939
    %v10995 = vsel %vm1474, %v10757, %v10941
    %v10996 = vsel %vm1474, %v10758, %v10943
    %v10997 = vsel %vm1474, %v10759, %v10945
    %v10998 = vsel %vm1474, %v10760, %v10947
    %v10999 = vsel %vm1474, %v10761, %v10949
    %v11000 = vsel %vm1474, %v10762, %v10951
    %v11001 = vsel %vm1474, %v10826, %v10967
    %v11002 = vsel %vm1474, %v10827, %v10969
    %v11003 = vsel %vm1474, %v10828, %v10971
    %v11004 = vsel %vm1474, %v10829, %v10973
    %v11005 = vsel %vm1474, %v10830, %v10975
    %v11006 = vsel %vm1474, %v10831, %v10977
    %v11007 = vsel %vm1474, %v10832, %v10979
    %v11008 = vpack.c.bf16 %v10987, %v10987
    %v11009 = vpack.c.bf16 %v10994, %v10994
    %v11010 = vpack.c.bf16 %v11001, %v11001
    %v11011 = vpack.c.bf16 %v10896, %v10896
    %v11012 = vpack.c.bf16 %v10988, %v10988
    %v11013 = vpack.c.bf16 %v10995, %v10995
    %v11014 = vpack.c.bf16 %v11002, %v11002
    %v11015 = vpack.c.bf16 %v10897, %v10897
    %v11016 = vpack.c.bf16 %v10989, %v10989
    %v11017 = vpack.c.bf16 %v10996, %v10996
    %v11018 = vpack.c.bf16 %v11003, %v11003
    %v11019 = vpack.c.bf16 %v10898, %v10898
    %v11020 = vpack.c.bf16 %v10990, %v10990
    %v11021 = vpack.c.bf16 %v10997, %v10997
    %v11022 = vpack.c.bf16 %v11004, %v11004
    %v11023 = vpack.c.bf16 %v10899, %v10899
    %v11024 = vpack.c.bf16 %v10991, %v10991
    %v11025 = vpack.c.bf16 %v10998, %v10998
    %v11026 = vpack.c.bf16 %v11005, %v11005
    %v11027 = vpack.c.bf16 %v10900, %v10900
    %v11028 = vpack.c.bf16 %v10992, %v10992
    %v11029 = vpack.c.bf16 %v10999, %v10999
    %v11030 = vpack.c.bf16 %v11006, %v11006
    %v11031 = vpack.c.bf16 %v10901, %v10901
    %v11032 = vpack.c.bf16 %v10993, %v10993
    %v11033 = vpack.c.bf16 %v11000, %v11000
    %v11034 = vpack.c.bf16 %v11007, %v11007
    %v11035 = vpack.c.bf16 %v10902, %v10902
    %v11036 = vld [vmem:[%s7] sm:$0xf]
    %v11037 = vld [vmem:[%s7 + $0x4] sm:$0xf]
    %v11038 = vld [vmem:[%s7 + $0x8] sm:$0xf]
    %v11039 = vld [vmem:[%s7 + $0xc] sm:$0xf]
    %v11040 = vld [vmem:[%s7 + $0x10] sm:$0xf]
    %v11041 = vld [vmem:[%s7 + $0x14] sm:$0xf]
    %v11042 = vld [vmem:[%s7 + $0x18] sm:$0xf]
    %v11043 = vld [vmem:[%s7 + $0x1c] sm:$0xf]
    %v11044 = vld [vmem:[%s7 + $0x20] sm:$0xf]
    %v11045 = vld [vmem:[%s7 + $0x24] sm:$0xf]
    %v11046 = vld [vmem:[%s7 + $0x28] sm:$0xf]
    %v11047 = vld [vmem:[%s7 + $0x2c] sm:$0xf]
    %v11048 = vld [vmem:[%s7 + $0x30] sm:$0xf]
    %v11049 = vld [vmem:[%s7 + $0x34] sm:$0xf]
    %v11050 = vld [vmem:[%s7 + $0x38] sm:$0xf]
    %v11051 = vld [vmem:[%s7 + $0x3c] sm:$0xf]
    %v11052 = vld [vmem:[%s7 + $0x40] sm:$0xf]
    %v11053 = vld [vmem:[%s7 + $0x44] sm:$0xf]
    %v11054 = vld [vmem:[%s7 + $0x48] sm:$0xf]
    %v11055 = vld [vmem:[%s7 + $0x4c] sm:$0xf]
    %v11056 = vld [vmem:[%s7 + $0x50] sm:$0xf]
    %v11057 = vld [vmem:[%s7 + $0x54] sm:$0xf]
    %v11058 = vld [vmem:[%s7 + $0x58] sm:$0xf]
    %v11059 = vld [vmem:[%s7 + $0x5c] sm:$0xf]
    %v11060 = vld [vmem:[%s7 + $0x60] sm:$0xf]
    %v11061 = vld [vmem:[%s7 + $0x64] sm:$0xf]
    %v11062 = vld [vmem:[%s7 + $0x68] sm:$0xf]
    %v11063 = vld [vmem:[%s7 + $0x6c] sm:$0xf]
    %v11064 = vld [vmem:[%s7 + $0x70] sm:$0xf]
    %v11065 = vld [vmem:[%s7 + $0x74] sm:$0xf]
    %v11066 = vld [vmem:[%s7 + $0x78] sm:$0xf]
    %v11067 = vld [vmem:[%s7 + $0x7c] sm:$0xf]
    %v11068 = vld [vmem:[%s7 + $0x80] sm:$0xf]
    %v11069 = vld [vmem:[%s7 + $0x84] sm:$0xf]
    %v11070 = vld [vmem:[%s7 + $0x88] sm:$0xf]
    %v11071 = vld [vmem:[%s7 + $0x8c] sm:$0xf]
    %v11072 = vld [vmem:[%s7 + $0x90] sm:$0xf]
    %v11073 = vld [vmem:[%s7 + $0x94] sm:$0xf]
    %v11074 = vld [vmem:[%s7 + $0x98] sm:$0xf]
    %v11075 = vld [vmem:[%s7 + $0x9c] sm:$0xf]
    %v11076 = vld [vmem:[%s7 + $0xa0] sm:$0xf]
    %v11077 = vld [vmem:[%s7 + $0xa4] sm:$0xf]
    %v11078 = vld [vmem:[%s7 + $0xa8] sm:$0xf]
    %v11079 = vld [vmem:[%s7 + $0xac] sm:$0xf]
    %v11080 = vld [vmem:[%s7 + $0xb0] sm:$0xf]
    %v11081 = vld [vmem:[%s7 + $0xb4] sm:$0xf]
    %v11082 = vld [vmem:[%s7 + $0xb8] sm:$0xf]
    %v11083 = vld [vmem:[%s7 + $0xbc] sm:$0xf]
    %v11084 = vld [vmem:[%s7 + $0xc0] sm:$0xf]
    %v11085 = vld [vmem:[%s7 + $0xc4] sm:$0xf]
    %v11086 = vld [vmem:[%s7 + $0xc8] sm:$0xf]
    %v11087 = vld [vmem:[%s7 + $0xcc] sm:$0xf]
    %v11088 = vld [vmem:[%s7 + $0xd0] sm:$0xf]
    %v11089 = vld [vmem:[%s7 + $0xd4] sm:$0xf]
    %v11090 = vld [vmem:[%s7 + $0xd8] sm:$0xf]
    %v11091 = vld [vmem:[%s7 + $0xdc] sm:$0xf]
    %s11092 = scalar_lea.vmem %s7, 224
    %v11093 = vld [vmem:[%s11092] sm:$0xf]
    %v11094 = vld [vmem:[%s11092 + $0x4] sm:$0xf]
    %v11095 = vld [vmem:[%s11092 + $0x8] sm:$0xf]
    %v11096 = vld [vmem:[%s11092 + $0xc] sm:$0xf]
    %v11097 = vld [vmem:[%s11092 + $0x10] sm:$0xf]
    %v11098 = vld [vmem:[%s11092 + $0x14] sm:$0xf]
    %v11099 = vld [vmem:[%s11092 + $0x18] sm:$0xf]
    %v11100 = vld [vmem:[%s11092 + $0x1c] sm:$0xf]
    %v11101 = vld [vmem:[%s11092 + $0x20] sm:$0xf]
    %v11102 = vld [vmem:[%s11092 + $0x24] sm:$0xf]
    %v11103 = vld [vmem:[%s11092 + $0x28] sm:$0xf]
    %v11104 = vld [vmem:[%s11092 + $0x2c] sm:$0xf]
    %v11105 = vld [vmem:[%s11092 + $0x30] sm:$0xf]
    %v11106 = vld [vmem:[%s11092 + $0x34] sm:$0xf]
    %v11107 = vld [vmem:[%s11092 + $0x38] sm:$0xf]
    %v11108 = vld [vmem:[%s11092 + $0x3c] sm:$0xf]
    %v11109 = vld [vmem:[%s11092 + $0x40] sm:$0xf]
    %v11110 = vld [vmem:[%s11092 + $0x44] sm:$0xf]
    %v11111 = vld [vmem:[%s11092 + $0x48] sm:$0xf]
    %v11112 = vld [vmem:[%s11092 + $0x4c] sm:$0xf]
    %v11113 = vld [vmem:[%s11092 + $0x50] sm:$0xf]
    %v11114 = vld [vmem:[%s11092 + $0x54] sm:$0xf]
    %v11115 = vld [vmem:[%s11092 + $0x58] sm:$0xf]
    %v11116 = vld [vmem:[%s11092 + $0x5c] sm:$0xf]
    %v11117 = vld [vmem:[%s11092 + $0x60] sm:$0xf]
    %v11118 = vld [vmem:[%s11092 + $0x64] sm:$0xf]
    %v11119 = vld [vmem:[%s11092 + $0x68] sm:$0xf]
    %v11120 = vld [vmem:[%s11092 + $0x6c] sm:$0xf]
    %v11121 = vld [vmem:[%s11092 + $0x70] sm:$0xf]
    %v11122 = vld [vmem:[%s11092 + $0x74] sm:$0xf]
    %v11123 = vld [vmem:[%s11092 + $0x78] sm:$0xf]
    %v11124 = vld [vmem:[%s11092 + $0x7c] sm:$0xf]
    %v11125 = vld [vmem:[%s11092 + $0x80] sm:$0xf]
    %v11126 = vld [vmem:[%s11092 + $0x84] sm:$0xf]
    %v11127 = vld [vmem:[%s11092 + $0x88] sm:$0xf]
    %v11128 = vld [vmem:[%s11092 + $0x8c] sm:$0xf]
    %v11129 = vld [vmem:[%s11092 + $0x90] sm:$0xf]
    %v11130 = vld [vmem:[%s11092 + $0x94] sm:$0xf]
    %v11131 = vld [vmem:[%s11092 + $0x98] sm:$0xf]
    %v11132 = vld [vmem:[%s11092 + $0x9c] sm:$0xf]
    %v11133 = vld [vmem:[%s11092 + $0xa0] sm:$0xf]
    %v11134 = vld [vmem:[%s11092 + $0xa4] sm:$0xf]
    %v11135 = vld [vmem:[%s11092 + $0xa8] sm:$0xf]
    %v11136 = vld [vmem:[%s11092 + $0xac] sm:$0xf]
    %v11137 = vld [vmem:[%s11092 + $0xb0] sm:$0xf]
    %v11138 = vld [vmem:[%s11092 + $0xb4] sm:$0xf]
    %v11139 = vld [vmem:[%s11092 + $0xb8] sm:$0xf]
    %v11140 = vld [vmem:[%s11092 + $0xbc] sm:$0xf]
    %v11141 = vld [vmem:[%s11092 + $0xc0] sm:$0xf]
    %v11142 = vld [vmem:[%s11092 + $0xc4] sm:$0xf]
    %v11143 = vld [vmem:[%s11092 + $0xc8] sm:$0xf]
    %v11144 = vld [vmem:[%s11092 + $0xcc] sm:$0xf]
    %v11145 = vld [vmem:[%s11092 + $0xd0] sm:$0xf]
    %v11146 = vld [vmem:[%s11092 + $0xd4] sm:$0xf]
    %v11147 = vld [vmem:[%s11092 + $0xd8] sm:$0xf]
    %v11148 = vld [vmem:[%s11092 + $0xdc] sm:$0xf]
    %v11205 = vunpack.c.l.b16 %v11093
    %v11206 = vunpack.c.l.b16 %v11094
    %v11207 = vunpack.c.l.b16 %v11095
    %v11208 = vunpack.c.l.b16 %v11096
    %v11209 = vunpack.c.l.b16 %v11097
    %v11210 = vunpack.c.l.b16 %v11098
    %v11211 = vunpack.c.l.b16 %v11099
    %v11212 = vunpack.c.l.b16 %v11100
    %v11213 = vunpack.c.l.b16 %v11101
    %v11214 = vunpack.c.l.b16 %v11102
    %v11215 = vunpack.c.l.b16 %v11103
    %v11216 = vunpack.c.l.b16 %v11104
    %v11217 = vunpack.c.l.b16 %v11105
    %v11218 = vunpack.c.l.b16 %v11106
    %v11219 = vunpack.c.l.b16 %v11107
    %v11220 = vunpack.c.l.b16 %v11108
    %v11221 = vunpack.c.l.b16 %v11109
    %v11222 = vunpack.c.l.b16 %v11110
    %v11223 = vunpack.c.l.b16 %v11111
    %v11224 = vunpack.c.l.b16 %v11112
    %v11225 = vunpack.c.l.b16 %v11113
    %v11226 = vunpack.c.l.b16 %v11114
    %v11227 = vunpack.c.l.b16 %v11115
    %v11228 = vunpack.c.l.b16 %v11116
    %v11229 = vunpack.c.l.b16 %v11117
    %v11230 = vunpack.c.l.b16 %v11118
    %v11231 = vunpack.c.l.b16 %v11119
    %v11232 = vunpack.c.l.b16 %v11120
    %v11233 = vunpack.c.l.b16 %v11121
    %v11234 = vunpack.c.l.b16 %v11122
    %v11235 = vunpack.c.l.b16 %v11123
    %v11236 = vunpack.c.l.b16 %v11124
    %v11237 = vunpack.c.l.b16 %v11125
    %v11238 = vunpack.c.l.b16 %v11126
    %v11239 = vunpack.c.l.b16 %v11127
    %v11240 = vunpack.c.l.b16 %v11128
    %v11241 = vunpack.c.l.b16 %v11129
    %v11242 = vunpack.c.l.b16 %v11130
    %v11243 = vunpack.c.l.b16 %v11131
    %v11244 = vunpack.c.l.b16 %v11132
    %v11245 = vunpack.c.l.b16 %v11133
    %v11246 = vunpack.c.l.b16 %v11134
    %v11247 = vunpack.c.l.b16 %v11135
    %v11248 = vunpack.c.l.b16 %v11136
    %v11249 = vunpack.c.l.b16 %v11137
    %v11250 = vunpack.c.l.b16 %v11138
    %v11251 = vunpack.c.l.b16 %v11139
    %v11252 = vunpack.c.l.b16 %v11140
    %v11253 = vunpack.c.l.b16 %v11141
    %v11254 = vunpack.c.l.b16 %v11142
    %v11255 = vunpack.c.l.b16 %v11143
    %v11256 = vunpack.c.l.b16 %v11144
    %v11257 = vunpack.c.l.b16 %v11145
    %v11258 = vunpack.c.l.b16 %v11146
    %v11259 = vunpack.c.l.b16 %v11147
    %v11260 = vunpack.c.l.b16 %v11148
    %v11261 = vpack.c.b16 %v11206, %v11205
    %v11262 = vpack.c.b16 %v11208, %v11207
    %v11263 = vpack.c.b16 %v11210, %v11209
    %v11264 = vpack.c.b16 %v11212, %v11211
    %v11265 = vpack.c.b16 %v11214, %v11213
    %v11266 = vpack.c.b16 %v11216, %v11215
    %v11267 = vpack.c.b16 %v11218, %v11217
    %v11268 = vpack.c.b16 %v11220, %v11219
    %v11269 = vpack.c.b16 %v11222, %v11221
    %v11270 = vpack.c.b16 %v11224, %v11223
    %v11271 = vpack.c.b16 %v11226, %v11225
    %v11272 = vpack.c.b16 %v11228, %v11227
    %v11273 = vpack.c.b16 %v11230, %v11229
    %v11274 = vpack.c.b16 %v11232, %v11231
    %v11275 = vpack.c.b16 %v11234, %v11233
    %v11276 = vpack.c.b16 %v11236, %v11235
    %v11277 = vpack.c.b16 %v11238, %v11237
    %v11278 = vpack.c.b16 %v11240, %v11239
    %v11279 = vpack.c.b16 %v11242, %v11241
    %v11280 = vpack.c.b16 %v11244, %v11243
    %v11281 = vpack.c.b16 %v11246, %v11245
    %v11282 = vpack.c.b16 %v11248, %v11247
    %v11283 = vpack.c.b16 %v11250, %v11249
    %v11284 = vpack.c.b16 %v11252, %v11251
    %v11285 = vpack.c.b16 %v11254, %v11253
    %v11286 = vpack.c.b16 %v11256, %v11255
    %v11287 = vpack.c.b16 %v11258, %v11257
    %v11288 = vpack.c.b16 %v11260, %v11259
    %v11318 = vsel %vm1474, %v11015, 0
    %11320 = vmatprep.subr.bf16.mxu0 0
    %11321 = vmatpush1.bf16.msra.mxu0 %v11268
    %11322 = vmatprep.subr.bf16.mxu0 0
    %11323 = vmatpush1.bf16.msra.mxu0 %v11267
    %11324 = vmatprep.subr.bf16.mxu0 0
    %11325 = vmatpush1.bf16.msra.mxu0 %v11266
    %11326 = vmatprep.subr.bf16.mxu0 0
    %11327 = vmatpush1.bf16.msra.mxu0 %v11265
    %11328 = vmatprep.subr.bf16.mxu0 0
    %11329 = vmatpush1.bf16.msra.mxu0 %v11264
    %11330 = vmatprep.subr.bf16.mxu0 0
    %11331 = vmatpush1.bf16.msra.mxu0 %v11263
    %11332 = vmatprep.subr.bf16.mxu0 0
    %11333 = vmatpush1.bf16.msra.mxu0 %v11262
    %11334 = vmatprep.subr.bf16.mxu0 0
    %11335 = vmatpush1.bf16.msra.mxu0 %v11261
    %11336 = vmatprep.subr.bf16.mxu0 0
    %11337 = vmatpush2.bf16.msra.mxu0 %v11276
    %11338 = vmatprep.subr.bf16.mxu0 0
    %11339 = vmatpush2.bf16.msra.mxu0 %v11275
    %11340 = vmatprep.subr.bf16.mxu0 0
    %11341 = vmatpush2.bf16.msra.mxu0 %v11274
    %11342 = vmatprep.subr.bf16.mxu0 0
    %11343 = vmatpush2.bf16.msra.mxu0 %v11273
    %11344 = vmatprep.subr.bf16.mxu0 0
    %11345 = vmatpush2.bf16.msra.mxu0 %v11272
    %11346 = vmatprep.subr.bf16.mxu0 0
    %11347 = vmatpush2.bf16.msra.mxu0 %v11271
    %11348 = vmatprep.subr.bf16.mxu0 0
    %11349 = vmatpush2.bf16.msra.mxu0 %v11270
    %11350 = vmatprep.subr.bf16.mxu0 0
    %11351 = vmatpush2.bf16.msra.mxu0 %v11269
    %11352 = vmatprep.mubr.bf16.mxu0 %v11013
    %11353 = vmatmul.mubr.bf16.gmra.mxu0 %v11012
    %v11354 = vpop.f32.mrf.mxu0
    %v11355 = vadd.f32 0.0, %v11354
    %v11356 = vpop.f32.mrf.mxu0
    %v11357 = vpop.f32.mrf.mxu0
    %v11358 = vpop.f32.mrf.mxu0
    %11359 = vdwg.mxu0
    %11360 = vmatprep.subr.bf16.mxu0 0
    %11361 = vmatpush1.bf16.msra.mxu0 %v11284
    %11362 = vmatprep.subr.bf16.mxu0 0
    %11363 = vmatpush1.bf16.msra.mxu0 %v11283
    %11364 = vmatprep.subr.bf16.mxu0 0
    %11365 = vmatpush1.bf16.msra.mxu0 %v11282
    %11366 = vmatprep.subr.bf16.mxu0 0
    %11367 = vmatpush1.bf16.msra.mxu0 %v11281
    %11368 = vmatprep.subr.bf16.mxu0 0
    %11369 = vmatpush1.bf16.msra.mxu0 %v11280
    %11370 = vmatprep.subr.bf16.mxu0 0
    %11371 = vmatpush1.bf16.msra.mxu0 %v11279
    %11372 = vmatprep.subr.bf16.mxu0 0
    %11373 = vmatpush1.bf16.msra.mxu0 %v11278
    %11374 = vmatprep.subr.bf16.mxu0 0
    %11375 = vmatpush1.bf16.msra.mxu0 %v11277
    %11376 = vmatprep.subr.bf16.mxu0 0
    %11377 = vmatpush2.bf16.msra.mxu0 0
    %11378 = vmatprep.subr.bf16.mxu0 0
    %11379 = vmatpush2.bf16.msra.mxu0 0
    %11380 = vmatprep.subr.bf16.mxu0 0
    %11381 = vmatpush2.bf16.msra.mxu0 0
    %11382 = vmatprep.subr.bf16.mxu0 0
    %11383 = vmatpush2.bf16.msra.mxu0 0
    %11384 = vmatprep.subr.bf16.mxu0 0
    %11385 = vmatpush2.bf16.msra.mxu0 %v11288
    %11386 = vmatprep.subr.bf16.mxu0 0
    %11387 = vmatpush2.bf16.msra.mxu0 %v11287
    %11388 = vmatprep.subr.bf16.mxu0 0
    %11389 = vmatpush2.bf16.msra.mxu0 %v11286
    %11390 = vmatprep.subr.bf16.mxu0 0
    %11391 = vmatpush2.bf16.msra.mxu0 %v11285
    %11392 = vmatprep.mubr.bf16.mxu0 %v11318
    %11393 = vmatmul.mubr.bf16.gmra.mxu0 %v11014
    %v11394 = vpop.f32.mrf.mxu0
    %v11395 = vadd.f32 %v11355, %v11394
    %v11396 = vpop.f32.mrf.mxu0
    %v11397 = vpop.f32.mrf.mxu0
    %v11398 = vpop.f32.mrf.mxu0
    %11399 = vdwg.mxu0
    %v11456 = vunpack.c.l.b16 %v11036
    %v11457 = vunpack.c.l.b16 %v11037
    %v11458 = vunpack.c.l.b16 %v11038
    %v11459 = vunpack.c.l.b16 %v11039
    %v11460 = vunpack.c.l.b16 %v11040
    %v11461 = vunpack.c.l.b16 %v11041
    %v11462 = vunpack.c.l.b16 %v11042
    %v11463 = vunpack.c.l.b16 %v11043
    %v11464 = vunpack.c.l.b16 %v11044
    %v11465 = vunpack.c.l.b16 %v11045
    %v11466 = vunpack.c.l.b16 %v11046
    %v11467 = vunpack.c.l.b16 %v11047
    %v11468 = vunpack.c.l.b16 %v11048
    %v11469 = vunpack.c.l.b16 %v11049
    %v11470 = vunpack.c.l.b16 %v11050
    %v11471 = vunpack.c.l.b16 %v11051
    %v11472 = vunpack.c.l.b16 %v11052
    %v11473 = vunpack.c.l.b16 %v11053
    %v11474 = vunpack.c.l.b16 %v11054
    %v11475 = vunpack.c.l.b16 %v11055
    %v11476 = vunpack.c.l.b16 %v11056
    %v11477 = vunpack.c.l.b16 %v11057
    %v11478 = vunpack.c.l.b16 %v11058
    %v11479 = vunpack.c.l.b16 %v11059
    %v11480 = vunpack.c.l.b16 %v11060
    %v11481 = vunpack.c.l.b16 %v11061
    %v11482 = vunpack.c.l.b16 %v11062
    %v11483 = vunpack.c.l.b16 %v11063
    %v11484 = vunpack.c.l.b16 %v11064
    %v11485 = vunpack.c.l.b16 %v11065
    %v11486 = vunpack.c.l.b16 %v11066
    %v11487 = vunpack.c.l.b16 %v11067
    %v11488 = vunpack.c.l.b16 %v11068
    %v11489 = vunpack.c.l.b16 %v11069
    %v11490 = vunpack.c.l.b16 %v11070
    %v11491 = vunpack.c.l.b16 %v11071
    %v11492 = vunpack.c.l.b16 %v11072
    %v11493 = vunpack.c.l.b16 %v11073
    %v11494 = vunpack.c.l.b16 %v11074
    %v11495 = vunpack.c.l.b16 %v11075
    %v11496 = vunpack.c.l.b16 %v11076
    %v11497 = vunpack.c.l.b16 %v11077
    %v11498 = vunpack.c.l.b16 %v11078
    %v11499 = vunpack.c.l.b16 %v11079
    %v11500 = vunpack.c.l.b16 %v11080
    %v11501 = vunpack.c.l.b16 %v11081
    %v11502 = vunpack.c.l.b16 %v11082
    %v11503 = vunpack.c.l.b16 %v11083
    %v11504 = vunpack.c.l.b16 %v11084
    %v11505 = vunpack.c.l.b16 %v11085
    %v11506 = vunpack.c.l.b16 %v11086
    %v11507 = vunpack.c.l.b16 %v11087
    %v11508 = vunpack.c.l.b16 %v11088
    %v11509 = vunpack.c.l.b16 %v11089
    %v11510 = vunpack.c.l.b16 %v11090
    %v11511 = vunpack.c.l.b16 %v11091
    %v11512 = vpack.c.b16 %v11457, %v11456
    %v11513 = vpack.c.b16 %v11459, %v11458
    %v11514 = vpack.c.b16 %v11461, %v11460
    %v11515 = vpack.c.b16 %v11463, %v11462
    %v11516 = vpack.c.b16 %v11465, %v11464
    %v11517 = vpack.c.b16 %v11467, %v11466
    %v11518 = vpack.c.b16 %v11469, %v11468
    %v11519 = vpack.c.b16 %v11471, %v11470
    %v11520 = vpack.c.b16 %v11473, %v11472
    %v11521 = vpack.c.b16 %v11475, %v11474
    %v11522 = vpack.c.b16 %v11477, %v11476
    %v11523 = vpack.c.b16 %v11479, %v11478
    %v11524 = vpack.c.b16 %v11481, %v11480
    %v11525 = vpack.c.b16 %v11483, %v11482
    %v11526 = vpack.c.b16 %v11485, %v11484
    %v11527 = vpack.c.b16 %v11487, %v11486
    %v11528 = vpack.c.b16 %v11489, %v11488
    %v11529 = vpack.c.b16 %v11491, %v11490
    %v11530 = vpack.c.b16 %v11493, %v11492
    %v11531 = vpack.c.b16 %v11495, %v11494
    %v11532 = vpack.c.b16 %v11497, %v11496
    %v11533 = vpack.c.b16 %v11499, %v11498
    %v11534 = vpack.c.b16 %v11501, %v11500
    %v11535 = vpack.c.b16 %v11503, %v11502
    %v11536 = vpack.c.b16 %v11505, %v11504
    %v11537 = vpack.c.b16 %v11507, %v11506
    %v11538 = vpack.c.b16 %v11509, %v11508
    %v11539 = vpack.c.b16 %v11511, %v11510
    %v11569 = vsel %vm1474, %v11011, 0
    %11571 = vmatprep.subr.bf16.mxu0 0
    %11572 = vmatpush1.bf16.msra.mxu0 %v11519
    %11573 = vmatprep.subr.bf16.mxu0 0
    %11574 = vmatpush1.bf16.msra.mxu0 %v11518
    %11575 = vmatprep.subr.bf16.mxu0 0
    %11576 = vmatpush1.bf16.msra.mxu0 %v11517
    %11577 = vmatprep.subr.bf16.mxu0 0
    %11578 = vmatpush1.bf16.msra.mxu0 %v11516
    %11579 = vmatprep.subr.bf16.mxu0 0
    %11580 = vmatpush1.bf16.msra.mxu0 %v11515
    %11581 = vmatprep.subr.bf16.mxu0 0
    %11582 = vmatpush1.bf16.msra.mxu0 %v11514
    %11583 = vmatprep.subr.bf16.mxu0 0
    %11584 = vmatpush1.bf16.msra.mxu0 %v11513
    %11585 = vmatprep.subr.bf16.mxu0 0
    %11586 = vmatpush1.bf16.msra.mxu0 %v11512
    %11587 = vmatprep.subr.bf16.mxu0 0
    %11588 = vmatpush2.bf16.msra.mxu0 %v11527
    %11589 = vmatprep.subr.bf16.mxu0 0
    %11590 = vmatpush2.bf16.msra.mxu0 %v11526
    %11591 = vmatprep.subr.bf16.mxu0 0
    %11592 = vmatpush2.bf16.msra.mxu0 %v11525
    %11593 = vmatprep.subr.bf16.mxu0 0
    %11594 = vmatpush2.bf16.msra.mxu0 %v11524
    %11595 = vmatprep.subr.bf16.mxu0 0
    %11596 = vmatpush2.bf16.msra.mxu0 %v11523
    %11597 = vmatprep.subr.bf16.mxu0 0
    %11598 = vmatpush2.bf16.msra.mxu0 %v11522
    %11599 = vmatprep.subr.bf16.mxu0 0
    %11600 = vmatpush2.bf16.msra.mxu0 %v11521
    %11601 = vmatprep.subr.bf16.mxu0 0
    %11602 = vmatpush2.bf16.msra.mxu0 %v11520
    %11603 = vmatprep.mubr.bf16.mxu0 %v11009
    %11604 = vmatmul.mubr.bf16.gmra.mxu0 %v11008
    %v11605 = vpop.f32.mrf.mxu0
    %v11606 = vadd.f32 %v11395, %v11605
    %v11607 = vpop.f32.mrf.mxu0
    %v11608 = vpop.f32.mrf.mxu0
    %v11609 = vpop.f32.mrf.mxu0
    %11610 = vdwg.mxu0
    %11611 = vmatprep.subr.bf16.mxu0 0
    %11612 = vmatpush1.bf16.msra.mxu0 %v11535
    %11613 = vmatprep.subr.bf16.mxu0 0
    %11614 = vmatpush1.bf16.msra.mxu0 %v11534
    %11615 = vmatprep.subr.bf16.mxu0 0
    %11616 = vmatpush1.bf16.msra.mxu0 %v11533
    %11617 = vmatprep.subr.bf16.mxu0 0
    %11618 = vmatpush1.bf16.msra.mxu0 %v11532
    %11619 = vmatprep.subr.bf16.mxu0 0
    %11620 = vmatpush1.bf16.msra.mxu0 %v11531
    %11621 = vmatprep.subr.bf16.mxu0 0
    %11622 = vmatpush1.bf16.msra.mxu0 %v11530
    %11623 = vmatprep.subr.bf16.mxu0 0
    %11624 = vmatpush1.bf16.msra.mxu0 %v11529
    %11625 = vmatprep.subr.bf16.mxu0 0
    %11626 = vmatpush1.bf16.msra.mxu0 %v11528
    %11627 = vmatprep.subr.bf16.mxu0 0
    %11628 = vmatpush2.bf16.msra.mxu0 0
    %11629 = vmatprep.subr.bf16.mxu0 0
    %11630 = vmatpush2.bf16.msra.mxu0 0
    %11631 = vmatprep.subr.bf16.mxu0 0
    %11632 = vmatpush2.bf16.msra.mxu0 0
    %11633 = vmatprep.subr.bf16.mxu0 0
    %11634 = vmatpush2.bf16.msra.mxu0 0
    %11635 = vmatprep.subr.bf16.mxu0 0
    %11636 = vmatpush2.bf16.msra.mxu0 %v11539
    %11637 = vmatprep.subr.bf16.mxu0 0
    %11638 = vmatpush2.bf16.msra.mxu0 %v11538
    %11639 = vmatprep.subr.bf16.mxu0 0
    %11640 = vmatpush2.bf16.msra.mxu0 %v11537
    %11641 = vmatprep.subr.bf16.mxu0 0
    %11642 = vmatpush2.bf16.msra.mxu0 %v11536
    %11643 = vmatprep.mubr.bf16.mxu0 %v11569
    %11644 = vmatmul.mubr.bf16.gmra.mxu0 %v11010
    %v11645 = vpop.f32.mrf.mxu0
    %v11646 = vadd.f32 %v11606, %v11645
    %v11647 = vpop.f32.mrf.mxu0
    %v11648 = vpop.f32.mrf.mxu0
    %v11649 = vpop.f32.mrf.mxu0
    %11650 = vdwg.mxu0
    %s11651 = scalar_lea.vmem %s7, 448
    %v11652 = vld [vmem:[%s11651] sm:$0xf]
    %v11653 = vld [vmem:[%s11651 + $0x4] sm:$0xf]
    %v11654 = vld [vmem:[%s11651 + $0x8] sm:$0xf]
    %v11655 = vld [vmem:[%s11651 + $0xc] sm:$0xf]
    %v11656 = vld [vmem:[%s11651 + $0x10] sm:$0xf]
    %v11657 = vld [vmem:[%s11651 + $0x14] sm:$0xf]
    %v11658 = vld [vmem:[%s11651 + $0x18] sm:$0xf]
    %v11659 = vld [vmem:[%s11651 + $0x1c] sm:$0xf]
    %v11660 = vld [vmem:[%s11651 + $0x20] sm:$0xf]
    %v11661 = vld [vmem:[%s11651 + $0x24] sm:$0xf]
    %v11662 = vld [vmem:[%s11651 + $0x28] sm:$0xf]
    %v11663 = vld [vmem:[%s11651 + $0x2c] sm:$0xf]
    %v11664 = vld [vmem:[%s11651 + $0x30] sm:$0xf]
    %v11665 = vld [vmem:[%s11651 + $0x34] sm:$0xf]
    %v11666 = vld [vmem:[%s11651 + $0x38] sm:$0xf]
    %v11667 = vld [vmem:[%s11651 + $0x3c] sm:$0xf]
    %v11668 = vld [vmem:[%s11651 + $0x40] sm:$0xf]
    %v11669 = vld [vmem:[%s11651 + $0x44] sm:$0xf]
    %v11670 = vld [vmem:[%s11651 + $0x48] sm:$0xf]
    %v11671 = vld [vmem:[%s11651 + $0x4c] sm:$0xf]
    %v11672 = vld [vmem:[%s11651 + $0x50] sm:$0xf]
    %v11673 = vld [vmem:[%s11651 + $0x54] sm:$0xf]
    %v11674 = vld [vmem:[%s11651 + $0x58] sm:$0xf]
    %v11675 = vld [vmem:[%s11651 + $0x5c] sm:$0xf]
    %v11676 = vld [vmem:[%s11651 + $0x60] sm:$0xf]
    %v11677 = vld [vmem:[%s11651 + $0x64] sm:$0xf]
    %v11678 = vld [vmem:[%s11651 + $0x68] sm:$0xf]
    %v11679 = vld [vmem:[%s11651 + $0x6c] sm:$0xf]
    %v11680 = vld [vmem:[%s11651 + $0x70] sm:$0xf]
    %v11681 = vld [vmem:[%s11651 + $0x74] sm:$0xf]
    %v11682 = vld [vmem:[%s11651 + $0x78] sm:$0xf]
    %v11683 = vld [vmem:[%s11651 + $0x7c] sm:$0xf]
    %v11684 = vld [vmem:[%s11651 + $0x80] sm:$0xf]
    %v11685 = vld [vmem:[%s11651 + $0x84] sm:$0xf]
    %v11686 = vld [vmem:[%s11651 + $0x88] sm:$0xf]
    %v11687 = vld [vmem:[%s11651 + $0x8c] sm:$0xf]
    %v11688 = vld [vmem:[%s11651 + $0x90] sm:$0xf]
    %v11689 = vld [vmem:[%s11651 + $0x94] sm:$0xf]
    %v11690 = vld [vmem:[%s11651 + $0x98] sm:$0xf]
    %v11691 = vld [vmem:[%s11651 + $0x9c] sm:$0xf]
    %v11692 = vld [vmem:[%s11651 + $0xa0] sm:$0xf]
    %v11693 = vld [vmem:[%s11651 + $0xa4] sm:$0xf]
    %v11694 = vld [vmem:[%s11651 + $0xa8] sm:$0xf]
    %v11695 = vld [vmem:[%s11651 + $0xac] sm:$0xf]
    %v11696 = vld [vmem:[%s11651 + $0xb0] sm:$0xf]
    %v11697 = vld [vmem:[%s11651 + $0xb4] sm:$0xf]
    %v11698 = vld [vmem:[%s11651 + $0xb8] sm:$0xf]
    %v11699 = vld [vmem:[%s11651 + $0xbc] sm:$0xf]
    %v11700 = vld [vmem:[%s11651 + $0xc0] sm:$0xf]
    %v11701 = vld [vmem:[%s11651 + $0xc4] sm:$0xf]
    %v11702 = vld [vmem:[%s11651 + $0xc8] sm:$0xf]
    %v11703 = vld [vmem:[%s11651 + $0xcc] sm:$0xf]
    %v11704 = vld [vmem:[%s11651 + $0xd0] sm:$0xf]
    %v11705 = vld [vmem:[%s11651 + $0xd4] sm:$0xf]
    %v11706 = vld [vmem:[%s11651 + $0xd8] sm:$0xf]
    %v11707 = vld [vmem:[%s11651 + $0xdc] sm:$0xf]
    %v11764 = vunpack.c.l.b16 %v11652
    %v11765 = vunpack.c.l.b16 %v11653
    %v11766 = vunpack.c.l.b16 %v11654
    %v11767 = vunpack.c.l.b16 %v11655
    %v11768 = vunpack.c.l.b16 %v11656
    %v11769 = vunpack.c.l.b16 %v11657
    %v11770 = vunpack.c.l.b16 %v11658
    %v11771 = vunpack.c.l.b16 %v11659
    %v11772 = vunpack.c.l.b16 %v11660
    %v11773 = vunpack.c.l.b16 %v11661
    %v11774 = vunpack.c.l.b16 %v11662
    %v11775 = vunpack.c.l.b16 %v11663
    %v11776 = vunpack.c.l.b16 %v11664
    %v11777 = vunpack.c.l.b16 %v11665
    %v11778 = vunpack.c.l.b16 %v11666
    %v11779 = vunpack.c.l.b16 %v11667
    %v11780 = vunpack.c.l.b16 %v11668
    %v11781 = vunpack.c.l.b16 %v11669
    %v11782 = vunpack.c.l.b16 %v11670
    %v11783 = vunpack.c.l.b16 %v11671
    %v11784 = vunpack.c.l.b16 %v11672
    %v11785 = vunpack.c.l.b16 %v11673
    %v11786 = vunpack.c.l.b16 %v11674
    %v11787 = vunpack.c.l.b16 %v11675
    %v11788 = vunpack.c.l.b16 %v11676
    %v11789 = vunpack.c.l.b16 %v11677
    %v11790 = vunpack.c.l.b16 %v11678
    %v11791 = vunpack.c.l.b16 %v11679
    %v11792 = vunpack.c.l.b16 %v11680
    %v11793 = vunpack.c.l.b16 %v11681
    %v11794 = vunpack.c.l.b16 %v11682
    %v11795 = vunpack.c.l.b16 %v11683
    %v11796 = vunpack.c.l.b16 %v11684
    %v11797 = vunpack.c.l.b16 %v11685
    %v11798 = vunpack.c.l.b16 %v11686
    %v11799 = vunpack.c.l.b16 %v11687
    %v11800 = vunpack.c.l.b16 %v11688
    %v11801 = vunpack.c.l.b16 %v11689
    %v11802 = vunpack.c.l.b16 %v11690
    %v11803 = vunpack.c.l.b16 %v11691
    %v11804 = vunpack.c.l.b16 %v11692
    %v11805 = vunpack.c.l.b16 %v11693
    %v11806 = vunpack.c.l.b16 %v11694
    %v11807 = vunpack.c.l.b16 %v11695
    %v11808 = vunpack.c.l.b16 %v11696
    %v11809 = vunpack.c.l.b16 %v11697
    %v11810 = vunpack.c.l.b16 %v11698
    %v11811 = vunpack.c.l.b16 %v11699
    %v11812 = vunpack.c.l.b16 %v11700
    %v11813 = vunpack.c.l.b16 %v11701
    %v11814 = vunpack.c.l.b16 %v11702
    %v11815 = vunpack.c.l.b16 %v11703
    %v11816 = vunpack.c.l.b16 %v11704
    %v11817 = vunpack.c.l.b16 %v11705
    %v11818 = vunpack.c.l.b16 %v11706
    %v11819 = vunpack.c.l.b16 %v11707
    %v11820 = vpack.c.b16 %v11765, %v11764
    %v11821 = vpack.c.b16 %v11767, %v11766
    %v11822 = vpack.c.b16 %v11769, %v11768
    %v11823 = vpack.c.b16 %v11771, %v11770
    %v11824 = vpack.c.b16 %v11773, %v11772
    %v11825 = vpack.c.b16 %v11775, %v11774
    %v11826 = vpack.c.b16 %v11777, %v11776
    %v11827 = vpack.c.b16 %v11779, %v11778
    %v11828 = vpack.c.b16 %v11781, %v11780
    %v11829 = vpack.c.b16 %v11783, %v11782
    %v11830 = vpack.c.b16 %v11785, %v11784
    %v11831 = vpack.c.b16 %v11787, %v11786
    %v11832 = vpack.c.b16 %v11789, %v11788
    %v11833 = vpack.c.b16 %v11791, %v11790
    %v11834 = vpack.c.b16 %v11793, %v11792
    %v11835 = vpack.c.b16 %v11795, %v11794
    %v11836 = vpack.c.b16 %v11797, %v11796
    %v11837 = vpack.c.b16 %v11799, %v11798
    %v11838 = vpack.c.b16 %v11801, %v11800
    %v11839 = vpack.c.b16 %v11803, %v11802
    %v11840 = vpack.c.b16 %v11805, %v11804
    %v11841 = vpack.c.b16 %v11807, %v11806
    %v11842 = vpack.c.b16 %v11809, %v11808
    %v11843 = vpack.c.b16 %v11811, %v11810
    %v11844 = vpack.c.b16 %v11813, %v11812
    %v11845 = vpack.c.b16 %v11815, %v11814
    %v11846 = vpack.c.b16 %v11817, %v11816
    %v11847 = vpack.c.b16 %v11819, %v11818
    %v11877 = vsel %vm1474, %v11019, 0
    %11879 = vmatprep.subr.bf16.mxu0 0
    %11880 = vmatpush1.bf16.msra.mxu0 %v11827
    %11881 = vmatprep.subr.bf16.mxu0 0
    %11882 = vmatpush1.bf16.msra.mxu0 %v11826
    %11883 = vmatprep.subr.bf16.mxu0 0
    %11884 = vmatpush1.bf16.msra.mxu0 %v11825
    %11885 = vmatprep.subr.bf16.mxu0 0
    %11886 = vmatpush1.bf16.msra.mxu0 %v11824
    %11887 = vmatprep.subr.bf16.mxu0 0
    %11888 = vmatpush1.bf16.msra.mxu0 %v11823
    %11889 = vmatprep.subr.bf16.mxu0 0
    %11890 = vmatpush1.bf16.msra.mxu0 %v11822
    %11891 = vmatprep.subr.bf16.mxu0 0
    %11892 = vmatpush1.bf16.msra.mxu0 %v11821
    %11893 = vmatprep.subr.bf16.mxu0 0
    %11894 = vmatpush1.bf16.msra.mxu0 %v11820
    %11895 = vmatprep.subr.bf16.mxu0 0
    %11896 = vmatpush2.bf16.msra.mxu0 %v11835
    %11897 = vmatprep.subr.bf16.mxu0 0
    %11898 = vmatpush2.bf16.msra.mxu0 %v11834
    %11899 = vmatprep.subr.bf16.mxu0 0
    %11900 = vmatpush2.bf16.msra.mxu0 %v11833
    %11901 = vmatprep.subr.bf16.mxu0 0
    %11902 = vmatpush2.bf16.msra.mxu0 %v11832
    %11903 = vmatprep.subr.bf16.mxu0 0
    %11904 = vmatpush2.bf16.msra.mxu0 %v11831
    %11905 = vmatprep.subr.bf16.mxu0 0
    %11906 = vmatpush2.bf16.msra.mxu0 %v11830
    %11907 = vmatprep.subr.bf16.mxu0 0
    %11908 = vmatpush2.bf16.msra.mxu0 %v11829
    %11909 = vmatprep.subr.bf16.mxu0 0
    %11910 = vmatpush2.bf16.msra.mxu0 %v11828
    %11911 = vmatprep.mubr.bf16.mxu0 %v11017
    %11912 = vmatmul.mubr.bf16.gmra.mxu0 %v11016
    %v11913 = vpop.f32.mrf.mxu0
    %v11914 = vadd.f32 0.0, %v11913
    %v11915 = vpop.f32.mrf.mxu0
    %v11916 = vpop.f32.mrf.mxu0
    %v11917 = vpop.f32.mrf.mxu0
    %11918 = vdwg.mxu0
    %11919 = vmatprep.subr.bf16.mxu0 0
    %11920 = vmatpush1.bf16.msra.mxu0 %v11843
    %11921 = vmatprep.subr.bf16.mxu0 0
    %11922 = vmatpush1.bf16.msra.mxu0 %v11842
    %11923 = vmatprep.subr.bf16.mxu0 0
    %11924 = vmatpush1.bf16.msra.mxu0 %v11841
    %11925 = vmatprep.subr.bf16.mxu0 0
    %11926 = vmatpush1.bf16.msra.mxu0 %v11840
    %11927 = vmatprep.subr.bf16.mxu0 0
    %11928 = vmatpush1.bf16.msra.mxu0 %v11839
    %11929 = vmatprep.subr.bf16.mxu0 0
    %11930 = vmatpush1.bf16.msra.mxu0 %v11838
    %11931 = vmatprep.subr.bf16.mxu0 0
    %11932 = vmatpush1.bf16.msra.mxu0 %v11837
    %11933 = vmatprep.subr.bf16.mxu0 0
    %11934 = vmatpush1.bf16.msra.mxu0 %v11836
    %11935 = vmatprep.subr.bf16.mxu0 0
    %11936 = vmatpush2.bf16.msra.mxu0 0
    %11937 = vmatprep.subr.bf16.mxu0 0
    %11938 = vmatpush2.bf16.msra.mxu0 0
    %11939 = vmatprep.subr.bf16.mxu0 0
    %11940 = vmatpush2.bf16.msra.mxu0 0
    %11941 = vmatprep.subr.bf16.mxu0 0
    %11942 = vmatpush2.bf16.msra.mxu0 0
    %11943 = vmatprep.subr.bf16.mxu0 0
    %11944 = vmatpush2.bf16.msra.mxu0 %v11847
    %11945 = vmatprep.subr.bf16.mxu0 0
    %11946 = vmatpush2.bf16.msra.mxu0 %v11846
    %11947 = vmatprep.subr.bf16.mxu0 0
    %11948 = vmatpush2.bf16.msra.mxu0 %v11845
    %11949 = vmatprep.subr.bf16.mxu0 0
    %11950 = vmatpush2.bf16.msra.mxu0 %v11844
    %11951 = vmatprep.mubr.bf16.mxu0 %v11877
    %11952 = vmatmul.mubr.bf16.gmra.mxu0 %v11018
    %v11953 = vpop.f32.mrf.mxu0
    %v11954 = vadd.f32 %v11914, %v11953
    %v11955 = vpop.f32.mrf.mxu0
    %v11956 = vpop.f32.mrf.mxu0
    %v11957 = vpop.f32.mrf.mxu0
    %11958 = vdwg.mxu0
    %v11959 = vadd.f32 %v11646, %v11954
    %s11960 = scalar_lea.vmem %s7, 672
    %v11961 = vld [vmem:[%s11960] sm:$0xf]
    %v11962 = vld [vmem:[%s11960 + $0x4] sm:$0xf]
    %v11963 = vld [vmem:[%s11960 + $0x8] sm:$0xf]
    %v11964 = vld [vmem:[%s11960 + $0xc] sm:$0xf]
    %v11965 = vld [vmem:[%s11960 + $0x10] sm:$0xf]
    %v11966 = vld [vmem:[%s11960 + $0x14] sm:$0xf]
    %v11967 = vld [vmem:[%s11960 + $0x18] sm:$0xf]
    %v11968 = vld [vmem:[%s11960 + $0x1c] sm:$0xf]
    %v11969 = vld [vmem:[%s11960 + $0x20] sm:$0xf]
    %v11970 = vld [vmem:[%s11960 + $0x24] sm:$0xf]
    %v11971 = vld [vmem:[%s11960 + $0x28] sm:$0xf]
    %v11972 = vld [vmem:[%s11960 + $0x2c] sm:$0xf]
    %v11973 = vld [vmem:[%s11960 + $0x30] sm:$0xf]
    %v11974 = vld [vmem:[%s11960 + $0x34] sm:$0xf]
    %v11975 = vld [vmem:[%s11960 + $0x38] sm:$0xf]
    %v11976 = vld [vmem:[%s11960 + $0x3c] sm:$0xf]
    %v11977 = vld [vmem:[%s11960 + $0x40] sm:$0xf]
    %v11978 = vld [vmem:[%s11960 + $0x44] sm:$0xf]
    %v11979 = vld [vmem:[%s11960 + $0x48] sm:$0xf]
    %v11980 = vld [vmem:[%s11960 + $0x4c] sm:$0xf]
    %v11981 = vld [vmem:[%s11960 + $0x50] sm:$0xf]
    %v11982 = vld [vmem:[%s11960 + $0x54] sm:$0xf]
    %v11983 = vld [vmem:[%s11960 + $0x58] sm:$0xf]
    %v11984 = vld [vmem:[%s11960 + $0x5c] sm:$0xf]
    %v11985 = vld [vmem:[%s11960 + $0x60] sm:$0xf]
    %v11986 = vld [vmem:[%s11960 + $0x64] sm:$0xf]
    %v11987 = vld [vmem:[%s11960 + $0x68] sm:$0xf]
    %v11988 = vld [vmem:[%s11960 + $0x6c] sm:$0xf]
    %v11989 = vld [vmem:[%s11960 + $0x70] sm:$0xf]
    %v11990 = vld [vmem:[%s11960 + $0x74] sm:$0xf]
    %v11991 = vld [vmem:[%s11960 + $0x78] sm:$0xf]
    %v11992 = vld [vmem:[%s11960 + $0x7c] sm:$0xf]
    %v11993 = vld [vmem:[%s11960 + $0x80] sm:$0xf]
    %v11994 = vld [vmem:[%s11960 + $0x84] sm:$0xf]
    %v11995 = vld [vmem:[%s11960 + $0x88] sm:$0xf]
    %v11996 = vld [vmem:[%s11960 + $0x8c] sm:$0xf]
    %v11997 = vld [vmem:[%s11960 + $0x90] sm:$0xf]
    %v11998 = vld [vmem:[%s11960 + $0x94] sm:$0xf]
    %v11999 = vld [vmem:[%s11960 + $0x98] sm:$0xf]
    %v12000 = vld [vmem:[%s11960 + $0x9c] sm:$0xf]
    %v12001 = vld [vmem:[%s11960 + $0xa0] sm:$0xf]
    %v12002 = vld [vmem:[%s11960 + $0xa4] sm:$0xf]
    %v12003 = vld [vmem:[%s11960 + $0xa8] sm:$0xf]
    %v12004 = vld [vmem:[%s11960 + $0xac] sm:$0xf]
    %v12005 = vld [vmem:[%s11960 + $0xb0] sm:$0xf]
    %v12006 = vld [vmem:[%s11960 + $0xb4] sm:$0xf]
    %v12007 = vld [vmem:[%s11960 + $0xb8] sm:$0xf]
    %v12008 = vld [vmem:[%s11960 + $0xbc] sm:$0xf]
    %v12009 = vld [vmem:[%s11960 + $0xc0] sm:$0xf]
    %v12010 = vld [vmem:[%s11960 + $0xc4] sm:$0xf]
    %v12011 = vld [vmem:[%s11960 + $0xc8] sm:$0xf]
    %v12012 = vld [vmem:[%s11960 + $0xcc] sm:$0xf]
    %v12013 = vld [vmem:[%s11960 + $0xd0] sm:$0xf]
    %v12014 = vld [vmem:[%s11960 + $0xd4] sm:$0xf]
    %v12015 = vld [vmem:[%s11960 + $0xd8] sm:$0xf]
    %v12016 = vld [vmem:[%s11960 + $0xdc] sm:$0xf]
    %v12073 = vunpack.c.l.b16 %v11961
    %v12074 = vunpack.c.l.b16 %v11962
    %v12075 = vunpack.c.l.b16 %v11963
    %v12076 = vunpack.c.l.b16 %v11964
    %v12077 = vunpack.c.l.b16 %v11965
    %v12078 = vunpack.c.l.b16 %v11966
    %v12079 = vunpack.c.l.b16 %v11967
    %v12080 = vunpack.c.l.b16 %v11968
    %v12081 = vunpack.c.l.b16 %v11969
    %v12082 = vunpack.c.l.b16 %v11970
    %v12083 = vunpack.c.l.b16 %v11971
    %v12084 = vunpack.c.l.b16 %v11972
    %v12085 = vunpack.c.l.b16 %v11973
    %v12086 = vunpack.c.l.b16 %v11974
    %v12087 = vunpack.c.l.b16 %v11975
    %v12088 = vunpack.c.l.b16 %v11976
    %v12089 = vunpack.c.l.b16 %v11977
    %v12090 = vunpack.c.l.b16 %v11978
    %v12091 = vunpack.c.l.b16 %v11979
    %v12092 = vunpack.c.l.b16 %v11980
    %v12093 = vunpack.c.l.b16 %v11981
    %v12094 = vunpack.c.l.b16 %v11982
    %v12095 = vunpack.c.l.b16 %v11983
    %v12096 = vunpack.c.l.b16 %v11984
    %v12097 = vunpack.c.l.b16 %v11985
    %v12098 = vunpack.c.l.b16 %v11986
    %v12099 = vunpack.c.l.b16 %v11987
    %v12100 = vunpack.c.l.b16 %v11988
    %v12101 = vunpack.c.l.b16 %v11989
    %v12102 = vunpack.c.l.b16 %v11990
    %v12103 = vunpack.c.l.b16 %v11991
    %v12104 = vunpack.c.l.b16 %v11992
    %v12105 = vunpack.c.l.b16 %v11993
    %v12106 = vunpack.c.l.b16 %v11994
    %v12107 = vunpack.c.l.b16 %v11995
    %v12108 = vunpack.c.l.b16 %v11996
    %v12109 = vunpack.c.l.b16 %v11997
    %v12110 = vunpack.c.l.b16 %v11998
    %v12111 = vunpack.c.l.b16 %v11999
    %v12112 = vunpack.c.l.b16 %v12000
    %v12113 = vunpack.c.l.b16 %v12001
    %v12114 = vunpack.c.l.b16 %v12002
    %v12115 = vunpack.c.l.b16 %v12003
    %v12116 = vunpack.c.l.b16 %v12004
    %v12117 = vunpack.c.l.b16 %v12005
    %v12118 = vunpack.c.l.b16 %v12006
    %v12119 = vunpack.c.l.b16 %v12007
    %v12120 = vunpack.c.l.b16 %v12008
    %v12121 = vunpack.c.l.b16 %v12009
    %v12122 = vunpack.c.l.b16 %v12010
    %v12123 = vunpack.c.l.b16 %v12011
    %v12124 = vunpack.c.l.b16 %v12012
    %v12125 = vunpack.c.l.b16 %v12013
    %v12126 = vunpack.c.l.b16 %v12014
    %v12127 = vunpack.c.l.b16 %v12015
    %v12128 = vunpack.c.l.b16 %v12016
    %v12129 = vpack.c.b16 %v12074, %v12073
    %v12130 = vpack.c.b16 %v12076, %v12075
    %v12131 = vpack.c.b16 %v12078, %v12077
    %v12132 = vpack.c.b16 %v12080, %v12079
    %v12133 = vpack.c.b16 %v12082, %v12081
    %v12134 = vpack.c.b16 %v12084, %v12083
    %v12135 = vpack.c.b16 %v12086, %v12085
    %v12136 = vpack.c.b16 %v12088, %v12087
    %v12137 = vpack.c.b16 %v12090, %v12089
    %v12138 = vpack.c.b16 %v12092, %v12091
    %v12139 = vpack.c.b16 %v12094, %v12093
    %v12140 = vpack.c.b16 %v12096, %v12095
    %v12141 = vpack.c.b16 %v12098, %v12097
    %v12142 = vpack.c.b16 %v12100, %v12099
    %v12143 = vpack.c.b16 %v12102, %v12101
    %v12144 = vpack.c.b16 %v12104, %v12103
    %v12145 = vpack.c.b16 %v12106, %v12105
    %v12146 = vpack.c.b16 %v12108, %v12107
    %v12147 = vpack.c.b16 %v12110, %v12109
    %v12148 = vpack.c.b16 %v12112, %v12111
    %v12149 = vpack.c.b16 %v12114, %v12113
    %v12150 = vpack.c.b16 %v12116, %v12115
    %v12151 = vpack.c.b16 %v12118, %v12117
    %v12152 = vpack.c.b16 %v12120, %v12119
    %v12153 = vpack.c.b16 %v12122, %v12121
    %v12154 = vpack.c.b16 %v12124, %v12123
    %v12155 = vpack.c.b16 %v12126, %v12125
    %v12156 = vpack.c.b16 %v12128, %v12127
    %v12186 = vsel %vm1474, %v11023, 0
    %12188 = vmatprep.subr.bf16.mxu0 0
    %12189 = vmatpush1.bf16.msra.mxu0 %v12136
    %12190 = vmatprep.subr.bf16.mxu0 0
    %12191 = vmatpush1.bf16.msra.mxu0 %v12135
    %12192 = vmatprep.subr.bf16.mxu0 0
    %12193 = vmatpush1.bf16.msra.mxu0 %v12134
    %12194 = vmatprep.subr.bf16.mxu0 0
    %12195 = vmatpush1.bf16.msra.mxu0 %v12133
    %12196 = vmatprep.subr.bf16.mxu0 0
    %12197 = vmatpush1.bf16.msra.mxu0 %v12132
    %12198 = vmatprep.subr.bf16.mxu0 0
    %12199 = vmatpush1.bf16.msra.mxu0 %v12131
    %12200 = vmatprep.subr.bf16.mxu0 0
    %12201 = vmatpush1.bf16.msra.mxu0 %v12130
    %12202 = vmatprep.subr.bf16.mxu0 0
    %12203 = vmatpush1.bf16.msra.mxu0 %v12129
    %12204 = vmatprep.subr.bf16.mxu0 0
    %12205 = vmatpush2.bf16.msra.mxu0 %v12144
    %12206 = vmatprep.subr.bf16.mxu0 0
    %12207 = vmatpush2.bf16.msra.mxu0 %v12143
    %12208 = vmatprep.subr.bf16.mxu0 0
    %12209 = vmatpush2.bf16.msra.mxu0 %v12142
    %12210 = vmatprep.subr.bf16.mxu0 0
    %12211 = vmatpush2.bf16.msra.mxu0 %v12141
    %12212 = vmatprep.subr.bf16.mxu0 0
    %12213 = vmatpush2.bf16.msra.mxu0 %v12140
    %12214 = vmatprep.subr.bf16.mxu0 0
    %12215 = vmatpush2.bf16.msra.mxu0 %v12139
    %12216 = vmatprep.subr.bf16.mxu0 0
    %12217 = vmatpush2.bf16.msra.mxu0 %v12138
    %12218 = vmatprep.subr.bf16.mxu0 0
    %12219 = vmatpush2.bf16.msra.mxu0 %v12137
    %12220 = vmatprep.mubr.bf16.mxu0 %v11021
    %12221 = vmatmul.mubr.bf16.gmra.mxu0 %v11020
    %v12222 = vpop.f32.mrf.mxu0
    %v12223 = vadd.f32 0.0, %v12222
    %v12224 = vpop.f32.mrf.mxu0
    %v12225 = vpop.f32.mrf.mxu0
    %v12226 = vpop.f32.mrf.mxu0
    %12227 = vdwg.mxu0
    %12228 = vmatprep.subr.bf16.mxu0 0
    %12229 = vmatpush1.bf16.msra.mxu0 %v12152
    %12230 = vmatprep.subr.bf16.mxu0 0
    %12231 = vmatpush1.bf16.msra.mxu0 %v12151
    %12232 = vmatprep.subr.bf16.mxu0 0
    %12233 = vmatpush1.bf16.msra.mxu0 %v12150
    %12234 = vmatprep.subr.bf16.mxu0 0
    %12235 = vmatpush1.bf16.msra.mxu0 %v12149
    %12236 = vmatprep.subr.bf16.mxu0 0
    %12237 = vmatpush1.bf16.msra.mxu0 %v12148
    %12238 = vmatprep.subr.bf16.mxu0 0
    %12239 = vmatpush1.bf16.msra.mxu0 %v12147
    %12240 = vmatprep.subr.bf16.mxu0 0
    %12241 = vmatpush1.bf16.msra.mxu0 %v12146
    %12242 = vmatprep.subr.bf16.mxu0 0
    %12243 = vmatpush1.bf16.msra.mxu0 %v12145
    %12244 = vmatprep.subr.bf16.mxu0 0
    %12245 = vmatpush2.bf16.msra.mxu0 0
    %12246 = vmatprep.subr.bf16.mxu0 0
    %12247 = vmatpush2.bf16.msra.mxu0 0
    %12248 = vmatprep.subr.bf16.mxu0 0
    %12249 = vmatpush2.bf16.msra.mxu0 0
    %12250 = vmatprep.subr.bf16.mxu0 0
    %12251 = vmatpush2.bf16.msra.mxu0 0
    %12252 = vmatprep.subr.bf16.mxu0 0
    %12253 = vmatpush2.bf16.msra.mxu0 %v12156
    %12254 = vmatprep.subr.bf16.mxu0 0
    %12255 = vmatpush2.bf16.msra.mxu0 %v12155
    %12256 = vmatprep.subr.bf16.mxu0 0
    %12257 = vmatpush2.bf16.msra.mxu0 %v12154
    %12258 = vmatprep.subr.bf16.mxu0 0
    %12259 = vmatpush2.bf16.msra.mxu0 %v12153
    %12260 = vmatprep.mubr.bf16.mxu0 %v12186
    %12261 = vmatmul.mubr.bf16.gmra.mxu0 %v11022
    %v12262 = vpop.f32.mrf.mxu0
    %v12263 = vadd.f32 %v12223, %v12262
    %v12264 = vpop.f32.mrf.mxu0
    %v12265 = vpop.f32.mrf.mxu0
    %v12266 = vpop.f32.mrf.mxu0
    %12267 = vdwg.mxu0
    %v12268 = vadd.f32 %v11959, %v12263
    %s12269 = scalar_lea.vmem %s7, 896
    %v12270 = vld [vmem:[%s12269] sm:$0xf]
    %v12271 = vld [vmem:[%s12269 + $0x4] sm:$0xf]
    %v12272 = vld [vmem:[%s12269 + $0x8] sm:$0xf]
    %v12273 = vld [vmem:[%s12269 + $0xc] sm:$0xf]
    %v12274 = vld [vmem:[%s12269 + $0x10] sm:$0xf]
    %v12275 = vld [vmem:[%s12269 + $0x14] sm:$0xf]
    %v12276 = vld [vmem:[%s12269 + $0x18] sm:$0xf]
    %v12277 = vld [vmem:[%s12269 + $0x1c] sm:$0xf]
    %v12278 = vld [vmem:[%s12269 + $0x20] sm:$0xf]
    %v12279 = vld [vmem:[%s12269 + $0x24] sm:$0xf]
    %v12280 = vld [vmem:[%s12269 + $0x28] sm:$0xf]
    %v12281 = vld [vmem:[%s12269 + $0x2c] sm:$0xf]
    %v12282 = vld [vmem:[%s12269 + $0x30] sm:$0xf]
    %v12283 = vld [vmem:[%s12269 + $0x34] sm:$0xf]
    %v12284 = vld [vmem:[%s12269 + $0x38] sm:$0xf]
    %v12285 = vld [vmem:[%s12269 + $0x3c] sm:$0xf]
    %v12286 = vld [vmem:[%s12269 + $0x40] sm:$0xf]
    %v12287 = vld [vmem:[%s12269 + $0x44] sm:$0xf]
    %v12288 = vld [vmem:[%s12269 + $0x48] sm:$0xf]
    %v12289 = vld [vmem:[%s12269 + $0x4c] sm:$0xf]
    %v12290 = vld [vmem:[%s12269 + $0x50] sm:$0xf]
    %v12291 = vld [vmem:[%s12269 + $0x54] sm:$0xf]
    %v12292 = vld [vmem:[%s12269 + $0x58] sm:$0xf]
    %v12293 = vld [vmem:[%s12269 + $0x5c] sm:$0xf]
    %v12294 = vld [vmem:[%s12269 + $0x60] sm:$0xf]
    %v12295 = vld [vmem:[%s12269 + $0x64] sm:$0xf]
    %v12296 = vld [vmem:[%s12269 + $0x68] sm:$0xf]
    %v12297 = vld [vmem:[%s12269 + $0x6c] sm:$0xf]
    %v12298 = vld [vmem:[%s12269 + $0x70] sm:$0xf]
    %v12299 = vld [vmem:[%s12269 + $0x74] sm:$0xf]
    %v12300 = vld [vmem:[%s12269 + $0x78] sm:$0xf]
    %v12301 = vld [vmem:[%s12269 + $0x7c] sm:$0xf]
    %v12302 = vld [vmem:[%s12269 + $0x80] sm:$0xf]
    %v12303 = vld [vmem:[%s12269 + $0x84] sm:$0xf]
    %v12304 = vld [vmem:[%s12269 + $0x88] sm:$0xf]
    %v12305 = vld [vmem:[%s12269 + $0x8c] sm:$0xf]
    %v12306 = vld [vmem:[%s12269 + $0x90] sm:$0xf]
    %v12307 = vld [vmem:[%s12269 + $0x94] sm:$0xf]
    %v12308 = vld [vmem:[%s12269 + $0x98] sm:$0xf]
    %v12309 = vld [vmem:[%s12269 + $0x9c] sm:$0xf]
    %v12310 = vld [vmem:[%s12269 + $0xa0] sm:$0xf]
    %v12311 = vld [vmem:[%s12269 + $0xa4] sm:$0xf]
    %v12312 = vld [vmem:[%s12269 + $0xa8] sm:$0xf]
    %v12313 = vld [vmem:[%s12269 + $0xac] sm:$0xf]
    %v12314 = vld [vmem:[%s12269 + $0xb0] sm:$0xf]
    %v12315 = vld [vmem:[%s12269 + $0xb4] sm:$0xf]
    %v12316 = vld [vmem:[%s12269 + $0xb8] sm:$0xf]
    %v12317 = vld [vmem:[%s12269 + $0xbc] sm:$0xf]
    %v12318 = vld [vmem:[%s12269 + $0xc0] sm:$0xf]
    %v12319 = vld [vmem:[%s12269 + $0xc4] sm:$0xf]
    %v12320 = vld [vmem:[%s12269 + $0xc8] sm:$0xf]
    %v12321 = vld [vmem:[%s12269 + $0xcc] sm:$0xf]
    %v12322 = vld [vmem:[%s12269 + $0xd0] sm:$0xf]
    %v12323 = vld [vmem:[%s12269 + $0xd4] sm:$0xf]
    %v12324 = vld [vmem:[%s12269 + $0xd8] sm:$0xf]
    %v12325 = vld [vmem:[%s12269 + $0xdc] sm:$0xf]
    %v12382 = vunpack.c.l.b16 %v12270
    %v12383 = vunpack.c.l.b16 %v12271
    %v12384 = vunpack.c.l.b16 %v12272
    %v12385 = vunpack.c.l.b16 %v12273
    %v12386 = vunpack.c.l.b16 %v12274
    %v12387 = vunpack.c.l.b16 %v12275
    %v12388 = vunpack.c.l.b16 %v12276
    %v12389 = vunpack.c.l.b16 %v12277
    %v12390 = vunpack.c.l.b16 %v12278
    %v12391 = vunpack.c.l.b16 %v12279
    %v12392 = vunpack.c.l.b16 %v12280
    %v12393 = vunpack.c.l.b16 %v12281
    %v12394 = vunpack.c.l.b16 %v12282
    %v12395 = vunpack.c.l.b16 %v12283
    %v12396 = vunpack.c.l.b16 %v12284
    %v12397 = vunpack.c.l.b16 %v12285
    %v12398 = vunpack.c.l.b16 %v12286
    %v12399 = vunpack.c.l.b16 %v12287
    %v12400 = vunpack.c.l.b16 %v12288
    %v12401 = vunpack.c.l.b16 %v12289
    %v12402 = vunpack.c.l.b16 %v12290
    %v12403 = vunpack.c.l.b16 %v12291
    %v12404 = vunpack.c.l.b16 %v12292
    %v12405 = vunpack.c.l.b16 %v12293
    %v12406 = vunpack.c.l.b16 %v12294
    %v12407 = vunpack.c.l.b16 %v12295
    %v12408 = vunpack.c.l.b16 %v12296
    %v12409 = vunpack.c.l.b16 %v12297
    %v12410 = vunpack.c.l.b16 %v12298
    %v12411 = vunpack.c.l.b16 %v12299
    %v12412 = vunpack.c.l.b16 %v12300
    %v12413 = vunpack.c.l.b16 %v12301
    %v12414 = vunpack.c.l.b16 %v12302
    %v12415 = vunpack.c.l.b16 %v12303
    %v12416 = vunpack.c.l.b16 %v12304
    %v12417 = vunpack.c.l.b16 %v12305
    %v12418 = vunpack.c.l.b16 %v12306
    %v12419 = vunpack.c.l.b16 %v12307
    %v12420 = vunpack.c.l.b16 %v12308
    %v12421 = vunpack.c.l.b16 %v12309
    %v12422 = vunpack.c.l.b16 %v12310
    %v12423 = vunpack.c.l.b16 %v12311
    %v12424 = vunpack.c.l.b16 %v12312
    %v12425 = vunpack.c.l.b16 %v12313
    %v12426 = vunpack.c.l.b16 %v12314
    %v12427 = vunpack.c.l.b16 %v12315
    %v12428 = vunpack.c.l.b16 %v12316
    %v12429 = vunpack.c.l.b16 %v12317
    %v12430 = vunpack.c.l.b16 %v12318
    %v12431 = vunpack.c.l.b16 %v12319
    %v12432 = vunpack.c.l.b16 %v12320
    %v12433 = vunpack.c.l.b16 %v12321
    %v12434 = vunpack.c.l.b16 %v12322
    %v12435 = vunpack.c.l.b16 %v12323
    %v12436 = vunpack.c.l.b16 %v12324
    %v12437 = vunpack.c.l.b16 %v12325
    %v12438 = vpack.c.b16 %v12383, %v12382
    %v12439 = vpack.c.b16 %v12385, %v12384
    %v12440 = vpack.c.b16 %v12387, %v12386
    %v12441 = vpack.c.b16 %v12389, %v12388
    %v12442 = vpack.c.b16 %v12391, %v12390
    %v12443 = vpack.c.b16 %v12393, %v12392
    %v12444 = vpack.c.b16 %v12395, %v12394
    %v12445 = vpack.c.b16 %v12397, %v12396
    %v12446 = vpack.c.b16 %v12399, %v12398
    %v12447 = vpack.c.b16 %v12401, %v12400
    %v12448 = vpack.c.b16 %v12403, %v12402
    %v12449 = vpack.c.b16 %v12405, %v12404
    %v12450 = vpack.c.b16 %v12407, %v12406
    %v12451 = vpack.c.b16 %v12409, %v12408
    %v12452 = vpack.c.b16 %v12411, %v12410
    %v12453 = vpack.c.b16 %v12413, %v12412
    %v12454 = vpack.c.b16 %v12415, %v12414
    %v12455 = vpack.c.b16 %v12417, %v12416
    %v12456 = vpack.c.b16 %v12419, %v12418
    %v12457 = vpack.c.b16 %v12421, %v12420
    %v12458 = vpack.c.b16 %v12423, %v12422
    %v12459 = vpack.c.b16 %v12425, %v12424
    %v12460 = vpack.c.b16 %v12427, %v12426
    %v12461 = vpack.c.b16 %v12429, %v12428
    %v12462 = vpack.c.b16 %v12431, %v12430
    %v12463 = vpack.c.b16 %v12433, %v12432
    %v12464 = vpack.c.b16 %v12435, %v12434
    %v12465 = vpack.c.b16 %v12437, %v12436
    %v12495 = vsel %vm1474, %v11027, 0
    %12497 = vmatprep.subr.bf16.mxu0 0
    %12498 = vmatpush1.bf16.msra.mxu0 %v12445
    %12499 = vmatprep.subr.bf16.mxu0 0
    %12500 = vmatpush1.bf16.msra.mxu0 %v12444
    %12501 = vmatprep.subr.bf16.mxu0 0
    %12502 = vmatpush1.bf16.msra.mxu0 %v12443
    %12503 = vmatprep.subr.bf16.mxu0 0
    %12504 = vmatpush1.bf16.msra.mxu0 %v12442
    %12505 = vmatprep.subr.bf16.mxu0 0
    %12506 = vmatpush1.bf16.msra.mxu0 %v12441
    %12507 = vmatprep.subr.bf16.mxu0 0
    %12508 = vmatpush1.bf16.msra.mxu0 %v12440
    %12509 = vmatprep.subr.bf16.mxu0 0
    %12510 = vmatpush1.bf16.msra.mxu0 %v12439
    %12511 = vmatprep.subr.bf16.mxu0 0
    %12512 = vmatpush1.bf16.msra.mxu0 %v12438
    %12513 = vmatprep.subr.bf16.mxu0 0
    %12514 = vmatpush2.bf16.msra.mxu0 %v12453
    %12515 = vmatprep.subr.bf16.mxu0 0
    %12516 = vmatpush2.bf16.msra.mxu0 %v12452
    %12517 = vmatprep.subr.bf16.mxu0 0
    %12518 = vmatpush2.bf16.msra.mxu0 %v12451
    %12519 = vmatprep.subr.bf16.mxu0 0
    %12520 = vmatpush2.bf16.msra.mxu0 %v12450
    %12521 = vmatprep.subr.bf16.mxu0 0
    %12522 = vmatpush2.bf16.msra.mxu0 %v12449
    %12523 = vmatprep.subr.bf16.mxu0 0
    %12524 = vmatpush2.bf16.msra.mxu0 %v12448
    %12525 = vmatprep.subr.bf16.mxu0 0
    %12526 = vmatpush2.bf16.msra.mxu0 %v12447
    %12527 = vmatprep.subr.bf16.mxu0 0
    %12528 = vmatpush2.bf16.msra.mxu0 %v12446
    %12529 = vmatprep.mubr.bf16.mxu0 %v11025
    %12530 = vmatmul.mubr.bf16.gmra.mxu0 %v11024
    %v12531 = vpop.f32.mrf.mxu0
    %v12532 = vadd.f32 0.0, %v12531
    %v12533 = vpop.f32.mrf.mxu0
    %v12534 = vpop.f32.mrf.mxu0
    %v12535 = vpop.f32.mrf.mxu0
    %12536 = vdwg.mxu0
    %12537 = vmatprep.subr.bf16.mxu0 0
    %12538 = vmatpush1.bf16.msra.mxu0 %v12461
    %12539 = vmatprep.subr.bf16.mxu0 0
    %12540 = vmatpush1.bf16.msra.mxu0 %v12460
    %12541 = vmatprep.subr.bf16.mxu0 0
    %12542 = vmatpush1.bf16.msra.mxu0 %v12459
    %12543 = vmatprep.subr.bf16.mxu0 0
    %12544 = vmatpush1.bf16.msra.mxu0 %v12458
    %12545 = vmatprep.subr.bf16.mxu0 0
    %12546 = vmatpush1.bf16.msra.mxu0 %v12457
    %12547 = vmatprep.subr.bf16.mxu0 0
    %12548 = vmatpush1.bf16.msra.mxu0 %v12456
    %12549 = vmatprep.subr.bf16.mxu0 0
    %12550 = vmatpush1.bf16.msra.mxu0 %v12455
    %12551 = vmatprep.subr.bf16.mxu0 0
    %12552 = vmatpush1.bf16.msra.mxu0 %v12454
    %12553 = vmatprep.subr.bf16.mxu0 0
    %12554 = vmatpush2.bf16.msra.mxu0 0
    %12555 = vmatprep.subr.bf16.mxu0 0
    %12556 = vmatpush2.bf16.msra.mxu0 0
    %12557 = vmatprep.subr.bf16.mxu0 0
    %12558 = vmatpush2.bf16.msra.mxu0 0
    %12559 = vmatprep.subr.bf16.mxu0 0
    %12560 = vmatpush2.bf16.msra.mxu0 0
    %12561 = vmatprep.subr.bf16.mxu0 0
    %12562 = vmatpush2.bf16.msra.mxu0 %v12465
    %12563 = vmatprep.subr.bf16.mxu0 0
    %12564 = vmatpush2.bf16.msra.mxu0 %v12464
    %12565 = vmatprep.subr.bf16.mxu0 0
    %12566 = vmatpush2.bf16.msra.mxu0 %v12463
    %12567 = vmatprep.subr.bf16.mxu0 0
    %12568 = vmatpush2.bf16.msra.mxu0 %v12462
    %12569 = vmatprep.mubr.bf16.mxu0 %v12495
    %12570 = vmatmul.mubr.bf16.gmra.mxu0 %v11026
    %v12571 = vpop.f32.mrf.mxu0
    %v12572 = vadd.f32 %v12532, %v12571
    %v12573 = vpop.f32.mrf.mxu0
    %v12574 = vpop.f32.mrf.mxu0
    %v12575 = vpop.f32.mrf.mxu0
    %12576 = vdwg.mxu0
    %v12577 = vadd.f32 %v12268, %v12572
    %s12578 = scalar_lea.vmem %s7, 1120
    %v12579 = vld [vmem:[%s12578] sm:$0xf]
    %v12580 = vld [vmem:[%s12578 + $0x4] sm:$0xf]
    %v12581 = vld [vmem:[%s12578 + $0x8] sm:$0xf]
    %v12582 = vld [vmem:[%s12578 + $0xc] sm:$0xf]
    %v12583 = vld [vmem:[%s12578 + $0x10] sm:$0xf]
    %v12584 = vld [vmem:[%s12578 + $0x14] sm:$0xf]
    %v12585 = vld [vmem:[%s12578 + $0x18] sm:$0xf]
    %v12586 = vld [vmem:[%s12578 + $0x1c] sm:$0xf]
    %v12587 = vld [vmem:[%s12578 + $0x20] sm:$0xf]
    %v12588 = vld [vmem:[%s12578 + $0x24] sm:$0xf]
    %v12589 = vld [vmem:[%s12578 + $0x28] sm:$0xf]
    %v12590 = vld [vmem:[%s12578 + $0x2c] sm:$0xf]
    %v12591 = vld [vmem:[%s12578 + $0x30] sm:$0xf]
    %v12592 = vld [vmem:[%s12578 + $0x34] sm:$0xf]
    %v12593 = vld [vmem:[%s12578 + $0x38] sm:$0xf]
    %v12594 = vld [vmem:[%s12578 + $0x3c] sm:$0xf]
    %v12595 = vld [vmem:[%s12578 + $0x40] sm:$0xf]
    %v12596 = vld [vmem:[%s12578 + $0x44] sm:$0xf]
    %v12597 = vld [vmem:[%s12578 + $0x48] sm:$0xf]
    %v12598 = vld [vmem:[%s12578 + $0x4c] sm:$0xf]
    %v12599 = vld [vmem:[%s12578 + $0x50] sm:$0xf]
    %v12600 = vld [vmem:[%s12578 + $0x54] sm:$0xf]
    %v12601 = vld [vmem:[%s12578 + $0x58] sm:$0xf]
    %v12602 = vld [vmem:[%s12578 + $0x5c] sm:$0xf]
    %v12603 = vld [vmem:[%s12578 + $0x60] sm:$0xf]
    %v12604 = vld [vmem:[%s12578 + $0x64] sm:$0xf]
    %v12605 = vld [vmem:[%s12578 + $0x68] sm:$0xf]
    %v12606 = vld [vmem:[%s12578 + $0x6c] sm:$0xf]
    %v12607 = vld [vmem:[%s12578 + $0x70] sm:$0xf]
    %v12608 = vld [vmem:[%s12578 + $0x74] sm:$0xf]
    %v12609 = vld [vmem:[%s12578 + $0x78] sm:$0xf]
    %v12610 = vld [vmem:[%s12578 + $0x7c] sm:$0xf]
    %v12611 = vld [vmem:[%s12578 + $0x80] sm:$0xf]
    %v12612 = vld [vmem:[%s12578 + $0x84] sm:$0xf]
    %v12613 = vld [vmem:[%s12578 + $0x88] sm:$0xf]
    %v12614 = vld [vmem:[%s12578 + $0x8c] sm:$0xf]
    %v12615 = vld [vmem:[%s12578 + $0x90] sm:$0xf]
    %v12616 = vld [vmem:[%s12578 + $0x94] sm:$0xf]
    %v12617 = vld [vmem:[%s12578 + $0x98] sm:$0xf]
    %v12618 = vld [vmem:[%s12578 + $0x9c] sm:$0xf]
    %v12619 = vld [vmem:[%s12578 + $0xa0] sm:$0xf]
    %v12620 = vld [vmem:[%s12578 + $0xa4] sm:$0xf]
    %v12621 = vld [vmem:[%s12578 + $0xa8] sm:$0xf]
    %v12622 = vld [vmem:[%s12578 + $0xac] sm:$0xf]
    %v12623 = vld [vmem:[%s12578 + $0xb0] sm:$0xf]
    %v12624 = vld [vmem:[%s12578 + $0xb4] sm:$0xf]
    %v12625 = vld [vmem:[%s12578 + $0xb8] sm:$0xf]
    %v12626 = vld [vmem:[%s12578 + $0xbc] sm:$0xf]
    %v12627 = vld [vmem:[%s12578 + $0xc0] sm:$0xf]
    %v12628 = vld [vmem:[%s12578 + $0xc4] sm:$0xf]
    %v12629 = vld [vmem:[%s12578 + $0xc8] sm:$0xf]
    %v12630 = vld [vmem:[%s12578 + $0xcc] sm:$0xf]
    %v12631 = vld [vmem:[%s12578 + $0xd0] sm:$0xf]
    %v12632 = vld [vmem:[%s12578 + $0xd4] sm:$0xf]
    %v12633 = vld [vmem:[%s12578 + $0xd8] sm:$0xf]
    %v12634 = vld [vmem:[%s12578 + $0xdc] sm:$0xf]
    %v12691 = vunpack.c.l.b16 %v12579
    %v12692 = vunpack.c.l.b16 %v12580
    %v12693 = vunpack.c.l.b16 %v12581
    %v12694 = vunpack.c.l.b16 %v12582
    %v12695 = vunpack.c.l.b16 %v12583
    %v12696 = vunpack.c.l.b16 %v12584
    %v12697 = vunpack.c.l.b16 %v12585
    %v12698 = vunpack.c.l.b16 %v12586
    %v12699 = vunpack.c.l.b16 %v12587
    %v12700 = vunpack.c.l.b16 %v12588
    %v12701 = vunpack.c.l.b16 %v12589
    %v12702 = vunpack.c.l.b16 %v12590
    %v12703 = vunpack.c.l.b16 %v12591
    %v12704 = vunpack.c.l.b16 %v12592
    %v12705 = vunpack.c.l.b16 %v12593
    %v12706 = vunpack.c.l.b16 %v12594
    %v12707 = vunpack.c.l.b16 %v12595
    %v12708 = vunpack.c.l.b16 %v12596
    %v12709 = vunpack.c.l.b16 %v12597
    %v12710 = vunpack.c.l.b16 %v12598
    %v12711 = vunpack.c.l.b16 %v12599
    %v12712 = vunpack.c.l.b16 %v12600
    %v12713 = vunpack.c.l.b16 %v12601
    %v12714 = vunpack.c.l.b16 %v12602
    %v12715 = vunpack.c.l.b16 %v12603
    %v12716 = vunpack.c.l.b16 %v12604
    %v12717 = vunpack.c.l.b16 %v12605
    %v12718 = vunpack.c.l.b16 %v12606
    %v12719 = vunpack.c.l.b16 %v12607
    %v12720 = vunpack.c.l.b16 %v12608
    %v12721 = vunpack.c.l.b16 %v12609
    %v12722 = vunpack.c.l.b16 %v12610
    %v12723 = vunpack.c.l.b16 %v12611
    %v12724 = vunpack.c.l.b16 %v12612
    %v12725 = vunpack.c.l.b16 %v12613
    %v12726 = vunpack.c.l.b16 %v12614
    %v12727 = vunpack.c.l.b16 %v12615
    %v12728 = vunpack.c.l.b16 %v12616
    %v12729 = vunpack.c.l.b16 %v12617
    %v12730 = vunpack.c.l.b16 %v12618
    %v12731 = vunpack.c.l.b16 %v12619
    %v12732 = vunpack.c.l.b16 %v12620
    %v12733 = vunpack.c.l.b16 %v12621
    %v12734 = vunpack.c.l.b16 %v12622
    %v12735 = vunpack.c.l.b16 %v12623
    %v12736 = vunpack.c.l.b16 %v12624
    %v12737 = vunpack.c.l.b16 %v12625
    %v12738 = vunpack.c.l.b16 %v12626
    %v12739 = vunpack.c.l.b16 %v12627
    %v12740 = vunpack.c.l.b16 %v12628
    %v12741 = vunpack.c.l.b16 %v12629
    %v12742 = vunpack.c.l.b16 %v12630
    %v12743 = vunpack.c.l.b16 %v12631
    %v12744 = vunpack.c.l.b16 %v12632
    %v12745 = vunpack.c.l.b16 %v12633
    %v12746 = vunpack.c.l.b16 %v12634
    %v12747 = vpack.c.b16 %v12692, %v12691
    %v12748 = vpack.c.b16 %v12694, %v12693
    %v12749 = vpack.c.b16 %v12696, %v12695
    %v12750 = vpack.c.b16 %v12698, %v12697
    %v12751 = vpack.c.b16 %v12700, %v12699
    %v12752 = vpack.c.b16 %v12702, %v12701
    %v12753 = vpack.c.b16 %v12704, %v12703
    %v12754 = vpack.c.b16 %v12706, %v12705
    %v12755 = vpack.c.b16 %v12708, %v12707
    %v12756 = vpack.c.b16 %v12710, %v12709
    %v12757 = vpack.c.b16 %v12712, %v12711
    %v12758 = vpack.c.b16 %v12714, %v12713
    %v12759 = vpack.c.b16 %v12716, %v12715
    %v12760 = vpack.c.b16 %v12718, %v12717
    %v12761 = vpack.c.b16 %v12720, %v12719
    %v12762 = vpack.c.b16 %v12722, %v12721
    %v12763 = vpack.c.b16 %v12724, %v12723
    %v12764 = vpack.c.b16 %v12726, %v12725
    %v12765 = vpack.c.b16 %v12728, %v12727
    %v12766 = vpack.c.b16 %v12730, %v12729
    %v12767 = vpack.c.b16 %v12732, %v12731
    %v12768 = vpack.c.b16 %v12734, %v12733
    %v12769 = vpack.c.b16 %v12736, %v12735
    %v12770 = vpack.c.b16 %v12738, %v12737
    %v12771 = vpack.c.b16 %v12740, %v12739
    %v12772 = vpack.c.b16 %v12742, %v12741
    %v12773 = vpack.c.b16 %v12744, %v12743
    %v12774 = vpack.c.b16 %v12746, %v12745
    %v12804 = vsel %vm1474, %v11031, 0
    %12806 = vmatprep.subr.bf16.mxu0 0
    %12807 = vmatpush1.bf16.msra.mxu0 %v12754
    %12808 = vmatprep.subr.bf16.mxu0 0
    %12809 = vmatpush1.bf16.msra.mxu0 %v12753
    %12810 = vmatprep.subr.bf16.mxu0 0
    %12811 = vmatpush1.bf16.msra.mxu0 %v12752
    %12812 = vmatprep.subr.bf16.mxu0 0
    %12813 = vmatpush1.bf16.msra.mxu0 %v12751
    %12814 = vmatprep.subr.bf16.mxu0 0
    %12815 = vmatpush1.bf16.msra.mxu0 %v12750
    %12816 = vmatprep.subr.bf16.mxu0 0
    %12817 = vmatpush1.bf16.msra.mxu0 %v12749
    %12818 = vmatprep.subr.bf16.mxu0 0
    %12819 = vmatpush1.bf16.msra.mxu0 %v12748
    %12820 = vmatprep.subr.bf16.mxu0 0
    %12821 = vmatpush1.bf16.msra.mxu0 %v12747
    %12822 = vmatprep.subr.bf16.mxu0 0
    %12823 = vmatpush2.bf16.msra.mxu0 %v12762
    %12824 = vmatprep.subr.bf16.mxu0 0
    %12825 = vmatpush2.bf16.msra.mxu0 %v12761
    %12826 = vmatprep.subr.bf16.mxu0 0
    %12827 = vmatpush2.bf16.msra.mxu0 %v12760
    %12828 = vmatprep.subr.bf16.mxu0 0
    %12829 = vmatpush2.bf16.msra.mxu0 %v12759
    %12830 = vmatprep.subr.bf16.mxu0 0
    %12831 = vmatpush2.bf16.msra.mxu0 %v12758
    %12832 = vmatprep.subr.bf16.mxu0 0
    %12833 = vmatpush2.bf16.msra.mxu0 %v12757
    %12834 = vmatprep.subr.bf16.mxu0 0
    %12835 = vmatpush2.bf16.msra.mxu0 %v12756
    %12836 = vmatprep.subr.bf16.mxu0 0
    %12837 = vmatpush2.bf16.msra.mxu0 %v12755
    %12838 = vmatprep.mubr.bf16.mxu0 %v11029
    %12839 = vmatmul.mubr.bf16.gmra.mxu0 %v11028
    %v12840 = vpop.f32.mrf.mxu0
    %v12841 = vadd.f32 0.0, %v12840
    %v12842 = vpop.f32.mrf.mxu0
    %v12843 = vpop.f32.mrf.mxu0
    %v12844 = vpop.f32.mrf.mxu0
    %12845 = vdwg.mxu0
    %12846 = vmatprep.subr.bf16.mxu0 0
    %12847 = vmatpush1.bf16.msra.mxu0 %v12770
    %12848 = vmatprep.subr.bf16.mxu0 0
    %12849 = vmatpush1.bf16.msra.mxu0 %v12769
    %12850 = vmatprep.subr.bf16.mxu0 0
    %12851 = vmatpush1.bf16.msra.mxu0 %v12768
    %12852 = vmatprep.subr.bf16.mxu0 0
    %12853 = vmatpush1.bf16.msra.mxu0 %v12767
    %12854 = vmatprep.subr.bf16.mxu0 0
    %12855 = vmatpush1.bf16.msra.mxu0 %v12766
    %12856 = vmatprep.subr.bf16.mxu0 0
    %12857 = vmatpush1.bf16.msra.mxu0 %v12765
    %12858 = vmatprep.subr.bf16.mxu0 0
    %12859 = vmatpush1.bf16.msra.mxu0 %v12764
    %12860 = vmatprep.subr.bf16.mxu0 0
    %12861 = vmatpush1.bf16.msra.mxu0 %v12763
    %12862 = vmatprep.subr.bf16.mxu0 0
    %12863 = vmatpush2.bf16.msra.mxu0 0
    %12864 = vmatprep.subr.bf16.mxu0 0
    %12865 = vmatpush2.bf16.msra.mxu0 0
    %12866 = vmatprep.subr.bf16.mxu0 0
    %12867 = vmatpush2.bf16.msra.mxu0 0
    %12868 = vmatprep.subr.bf16.mxu0 0
    %12869 = vmatpush2.bf16.msra.mxu0 0
    %12870 = vmatprep.subr.bf16.mxu0 0
    %12871 = vmatpush2.bf16.msra.mxu0 %v12774
    %12872 = vmatprep.subr.bf16.mxu0 0
    %12873 = vmatpush2.bf16.msra.mxu0 %v12773
    %12874 = vmatprep.subr.bf16.mxu0 0
    %12875 = vmatpush2.bf16.msra.mxu0 %v12772
    %12876 = vmatprep.subr.bf16.mxu0 0
    %12877 = vmatpush2.bf16.msra.mxu0 %v12771
    %12878 = vmatprep.mubr.bf16.mxu0 %v12804
    %12879 = vmatmul.mubr.bf16.gmra.mxu0 %v11030
    %v12880 = vpop.f32.mrf.mxu0
    %v12881 = vadd.f32 %v12841, %v12880
    %v12882 = vpop.f32.mrf.mxu0
    %v12883 = vpop.f32.mrf.mxu0
    %v12884 = vpop.f32.mrf.mxu0
    %12885 = vdwg.mxu0
    %v12886 = vadd.f32 %v12577, %v12881
    %s12887 = scalar_lea.vmem %s7, 1344
    %v12888 = vld [vmem:[%s12887] sm:$0xf]
    %v12889 = vld [vmem:[%s12887 + $0x4] sm:$0xf]
    %v12890 = vld [vmem:[%s12887 + $0x8] sm:$0xf]
    %v12891 = vld [vmem:[%s12887 + $0xc] sm:$0xf]
    %v12892 = vld [vmem:[%s12887 + $0x10] sm:$0xf]
    %v12893 = vld [vmem:[%s12887 + $0x14] sm:$0xf]
    %v12894 = vld [vmem:[%s12887 + $0x18] sm:$0xf]
    %v12895 = vld [vmem:[%s12887 + $0x1c] sm:$0xf]
    %v12896 = vld [vmem:[%s12887 + $0x20] sm:$0xf]
    %v12897 = vld [vmem:[%s12887 + $0x24] sm:$0xf]
    %v12898 = vld [vmem:[%s12887 + $0x28] sm:$0xf]
    %v12899 = vld [vmem:[%s12887 + $0x2c] sm:$0xf]
    %v12900 = vld [vmem:[%s12887 + $0x30] sm:$0xf]
    %v12901 = vld [vmem:[%s12887 + $0x34] sm:$0xf]
    %v12902 = vld [vmem:[%s12887 + $0x38] sm:$0xf]
    %v12903 = vld [vmem:[%s12887 + $0x3c] sm:$0xf]
    %v12904 = vld [vmem:[%s12887 + $0x40] sm:$0xf]
    %v12905 = vld [vmem:[%s12887 + $0x44] sm:$0xf]
    %v12906 = vld [vmem:[%s12887 + $0x48] sm:$0xf]
    %v12907 = vld [vmem:[%s12887 + $0x4c] sm:$0xf]
    %v12908 = vld [vmem:[%s12887 + $0x50] sm:$0xf]
    %v12909 = vld [vmem:[%s12887 + $0x54] sm:$0xf]
    %v12910 = vld [vmem:[%s12887 + $0x58] sm:$0xf]
    %v12911 = vld [vmem:[%s12887 + $0x5c] sm:$0xf]
    %v12912 = vld [vmem:[%s12887 + $0x60] sm:$0xf]
    %v12913 = vld [vmem:[%s12887 + $0x64] sm:$0xf]
    %v12914 = vld [vmem:[%s12887 + $0x68] sm:$0xf]
    %v12915 = vld [vmem:[%s12887 + $0x6c] sm:$0xf]
    %v12916 = vld [vmem:[%s12887 + $0x70] sm:$0xf]
    %v12917 = vld [vmem:[%s12887 + $0x74] sm:$0xf]
    %v12918 = vld [vmem:[%s12887 + $0x78] sm:$0xf]
    %v12919 = vld [vmem:[%s12887 + $0x7c] sm:$0xf]
    %v12920 = vld [vmem:[%s12887 + $0x80] sm:$0xf]
    %v12921 = vld [vmem:[%s12887 + $0x84] sm:$0xf]
    %v12922 = vld [vmem:[%s12887 + $0x88] sm:$0xf]
    %v12923 = vld [vmem:[%s12887 + $0x8c] sm:$0xf]
    %v12924 = vld [vmem:[%s12887 + $0x90] sm:$0xf]
    %v12925 = vld [vmem:[%s12887 + $0x94] sm:$0xf]
    %v12926 = vld [vmem:[%s12887 + $0x98] sm:$0xf]
    %v12927 = vld [vmem:[%s12887 + $0x9c] sm:$0xf]
    %v12928 = vld [vmem:[%s12887 + $0xa0] sm:$0xf]
    %v12929 = vld [vmem:[%s12887 + $0xa4] sm:$0xf]
    %v12930 = vld [vmem:[%s12887 + $0xa8] sm:$0xf]
    %v12931 = vld [vmem:[%s12887 + $0xac] sm:$0xf]
    %v12932 = vld [vmem:[%s12887 + $0xb0] sm:$0xf]
    %v12933 = vld [vmem:[%s12887 + $0xb4] sm:$0xf]
    %v12934 = vld [vmem:[%s12887 + $0xb8] sm:$0xf]
    %v12935 = vld [vmem:[%s12887 + $0xbc] sm:$0xf]
    %v12936 = vld [vmem:[%s12887 + $0xc0] sm:$0xf]
    %v12937 = vld [vmem:[%s12887 + $0xc4] sm:$0xf]
    %v12938 = vld [vmem:[%s12887 + $0xc8] sm:$0xf]
    %v12939 = vld [vmem:[%s12887 + $0xcc] sm:$0xf]
    %v12940 = vld [vmem:[%s12887 + $0xd0] sm:$0xf]
    %v12941 = vld [vmem:[%s12887 + $0xd4] sm:$0xf]
    %v12942 = vld [vmem:[%s12887 + $0xd8] sm:$0xf]
    %v12943 = vld [vmem:[%s12887 + $0xdc] sm:$0xf]
    %v13000 = vunpack.c.l.b16 %v12888
    %v13001 = vunpack.c.l.b16 %v12889
    %v13002 = vunpack.c.l.b16 %v12890
    %v13003 = vunpack.c.l.b16 %v12891
    %v13004 = vunpack.c.l.b16 %v12892
    %v13005 = vunpack.c.l.b16 %v12893
    %v13006 = vunpack.c.l.b16 %v12894
    %v13007 = vunpack.c.l.b16 %v12895
    %v13008 = vunpack.c.l.b16 %v12896
    %v13009 = vunpack.c.l.b16 %v12897
    %v13010 = vunpack.c.l.b16 %v12898
    %v13011 = vunpack.c.l.b16 %v12899
    %v13012 = vunpack.c.l.b16 %v12900
    %v13013 = vunpack.c.l.b16 %v12901
    %v13014 = vunpack.c.l.b16 %v12902
    %v13015 = vunpack.c.l.b16 %v12903
    %v13016 = vunpack.c.l.b16 %v12904
    %v13017 = vunpack.c.l.b16 %v12905
    %v13018 = vunpack.c.l.b16 %v12906
    %v13019 = vunpack.c.l.b16 %v12907
    %v13020 = vunpack.c.l.b16 %v12908
    %v13021 = vunpack.c.l.b16 %v12909
    %v13022 = vunpack.c.l.b16 %v12910
    %v13023 = vunpack.c.l.b16 %v12911
    %v13024 = vunpack.c.l.b16 %v12912
    %v13025 = vunpack.c.l.b16 %v12913
    %v13026 = vunpack.c.l.b16 %v12914
    %v13027 = vunpack.c.l.b16 %v12915
    %v13028 = vunpack.c.l.b16 %v12916
    %v13029 = vunpack.c.l.b16 %v12917
    %v13030 = vunpack.c.l.b16 %v12918
    %v13031 = vunpack.c.l.b16 %v12919
    %v13032 = vunpack.c.l.b16 %v12920
    %v13033 = vunpack.c.l.b16 %v12921
    %v13034 = vunpack.c.l.b16 %v12922
    %v13035 = vunpack.c.l.b16 %v12923
    %v13036 = vunpack.c.l.b16 %v12924
    %v13037 = vunpack.c.l.b16 %v12925
    %v13038 = vunpack.c.l.b16 %v12926
    %v13039 = vunpack.c.l.b16 %v12927
    %v13040 = vunpack.c.l.b16 %v12928
    %v13041 = vunpack.c.l.b16 %v12929
    %v13042 = vunpack.c.l.b16 %v12930
    %v13043 = vunpack.c.l.b16 %v12931
    %v13044 = vunpack.c.l.b16 %v12932
    %v13045 = vunpack.c.l.b16 %v12933
    %v13046 = vunpack.c.l.b16 %v12934
    %v13047 = vunpack.c.l.b16 %v12935
    %v13048 = vunpack.c.l.b16 %v12936
    %v13049 = vunpack.c.l.b16 %v12937
    %v13050 = vunpack.c.l.b16 %v12938
    %v13051 = vunpack.c.l.b16 %v12939
    %v13052 = vunpack.c.l.b16 %v12940
    %v13053 = vunpack.c.l.b16 %v12941
    %v13054 = vunpack.c.l.b16 %v12942
    %v13055 = vunpack.c.l.b16 %v12943
    %v13056 = vpack.c.b16 %v13001, %v13000
    %v13057 = vpack.c.b16 %v13003, %v13002
    %v13058 = vpack.c.b16 %v13005, %v13004
    %v13059 = vpack.c.b16 %v13007, %v13006
    %v13060 = vpack.c.b16 %v13009, %v13008
    %v13061 = vpack.c.b16 %v13011, %v13010
    %v13062 = vpack.c.b16 %v13013, %v13012
    %v13063 = vpack.c.b16 %v13015, %v13014
    %v13064 = vpack.c.b16 %v13017, %v13016
    %v13065 = vpack.c.b16 %v13019, %v13018
    %v13066 = vpack.c.b16 %v13021, %v13020
    %v13067 = vpack.c.b16 %v13023, %v13022
    %v13068 = vpack.c.b16 %v13025, %v13024
    %v13069 = vpack.c.b16 %v13027, %v13026
    %v13070 = vpack.c.b16 %v13029, %v13028
    %v13071 = vpack.c.b16 %v13031, %v13030
    %v13072 = vpack.c.b16 %v13033, %v13032
    %v13073 = vpack.c.b16 %v13035, %v13034
    %v13074 = vpack.c.b16 %v13037, %v13036
    %v13075 = vpack.c.b16 %v13039, %v13038
    %v13076 = vpack.c.b16 %v13041, %v13040
    %v13077 = vpack.c.b16 %v13043, %v13042
    %v13078 = vpack.c.b16 %v13045, %v13044
    %v13079 = vpack.c.b16 %v13047, %v13046
    %v13080 = vpack.c.b16 %v13049, %v13048
    %v13081 = vpack.c.b16 %v13051, %v13050
    %v13082 = vpack.c.b16 %v13053, %v13052
    %v13083 = vpack.c.b16 %v13055, %v13054
    %v13113 = vsel %vm1474, %v11035, 0
    %13115 = vmatprep.subr.bf16.mxu0 0
    %13116 = vmatpush1.bf16.msra.mxu0 %v13063
    %13117 = vmatprep.subr.bf16.mxu0 0
    %13118 = vmatpush1.bf16.msra.mxu0 %v13062
    %13119 = vmatprep.subr.bf16.mxu0 0
    %13120 = vmatpush1.bf16.msra.mxu0 %v13061
    %13121 = vmatprep.subr.bf16.mxu0 0
    %13122 = vmatpush1.bf16.msra.mxu0 %v13060
    %13123 = vmatprep.subr.bf16.mxu0 0
    %13124 = vmatpush1.bf16.msra.mxu0 %v13059
    %13125 = vmatprep.subr.bf16.mxu0 0
    %13126 = vmatpush1.bf16.msra.mxu0 %v13058
    %13127 = vmatprep.subr.bf16.mxu0 0
    %13128 = vmatpush1.bf16.msra.mxu0 %v13057
    %13129 = vmatprep.subr.bf16.mxu0 0
    %13130 = vmatpush1.bf16.msra.mxu0 %v13056
    %13131 = vmatprep.subr.bf16.mxu0 0
    %13132 = vmatpush2.bf16.msra.mxu0 %v13071
    %13133 = vmatprep.subr.bf16.mxu0 0
    %13134 = vmatpush2.bf16.msra.mxu0 %v13070
    %13135 = vmatprep.subr.bf16.mxu0 0
    %13136 = vmatpush2.bf16.msra.mxu0 %v13069
    %13137 = vmatprep.subr.bf16.mxu0 0
    %13138 = vmatpush2.bf16.msra.mxu0 %v13068
    %13139 = vmatprep.subr.bf16.mxu0 0
    %13140 = vmatpush2.bf16.msra.mxu0 %v13067
    %13141 = vmatprep.subr.bf16.mxu0 0
    %13142 = vmatpush2.bf16.msra.mxu0 %v13066
    %13143 = vmatprep.subr.bf16.mxu0 0
    %13144 = vmatpush2.bf16.msra.mxu0 %v13065
    %13145 = vmatprep.subr.bf16.mxu0 0
    %13146 = vmatpush2.bf16.msra.mxu0 %v13064
    %13147 = vmatprep.mubr.bf16.mxu0 %v11033
    %13148 = vmatmul.mubr.bf16.gmra.mxu0 %v11032
    %v13149 = vpop.f32.mrf.mxu0
    %v13150 = vadd.f32 0.0, %v13149
    %v13151 = vpop.f32.mrf.mxu0
    %v13152 = vpop.f32.mrf.mxu0
    %v13153 = vpop.f32.mrf.mxu0
    %13154 = vdwg.mxu0
    %13155 = vmatprep.subr.bf16.mxu0 0
    %13156 = vmatpush1.bf16.msra.mxu0 %v13079
    %13157 = vmatprep.subr.bf16.mxu0 0
    %13158 = vmatpush1.bf16.msra.mxu0 %v13078
    %13159 = vmatprep.subr.bf16.mxu0 0
    %13160 = vmatpush1.bf16.msra.mxu0 %v13077
    %13161 = vmatprep.subr.bf16.mxu0 0
    %13162 = vmatpush1.bf16.msra.mxu0 %v13076
    %13163 = vmatprep.subr.bf16.mxu0 0
    %13164 = vmatpush1.bf16.msra.mxu0 %v13075
    %13165 = vmatprep.subr.bf16.mxu0 0
    %13166 = vmatpush1.bf16.msra.mxu0 %v13074
    %13167 = vmatprep.subr.bf16.mxu0 0
    %13168 = vmatpush1.bf16.msra.mxu0 %v13073
    %13169 = vmatprep.subr.bf16.mxu0 0
    %13170 = vmatpush1.bf16.msra.mxu0 %v13072
    %13171 = vmatprep.subr.bf16.mxu0 0
    %13172 = vmatpush2.bf16.msra.mxu0 0
    %13173 = vmatprep.subr.bf16.mxu0 0
    %13174 = vmatpush2.bf16.msra.mxu0 0
    %13175 = vmatprep.subr.bf16.mxu0 0
    %13176 = vmatpush2.bf16.msra.mxu0 0
    %13177 = vmatprep.subr.bf16.mxu0 0
    %13178 = vmatpush2.bf16.msra.mxu0 0
    %13179 = vmatprep.subr.bf16.mxu0 0
    %13180 = vmatpush2.bf16.msra.mxu0 %v13083
    %13181 = vmatprep.subr.bf16.mxu0 0
    %13182 = vmatpush2.bf16.msra.mxu0 %v13082
    %13183 = vmatprep.subr.bf16.mxu0 0
    %13184 = vmatpush2.bf16.msra.mxu0 %v13081
    %13185 = vmatprep.subr.bf16.mxu0 0
    %13186 = vmatpush2.bf16.msra.mxu0 %v13080
    %13187 = vmatprep.mubr.bf16.mxu0 %v13113
    %13188 = vmatmul.mubr.bf16.gmra.mxu0 %v11034
    %v13189 = vpop.f32.mrf.mxu0
    %v13190 = vadd.f32 %v13150, %v13189
    %v13191 = vpop.f32.mrf.mxu0
    %v13192 = vpop.f32.mrf.mxu0
    %v13193 = vpop.f32.mrf.mxu0
    %13194 = vdwg.mxu0
    %v13195 = vadd.f32 %v12886, %v13190
    %v13196 = vld [vmem:[%s8] sm:$0x1]
    %v13198 = vlaneseq
    %v13199 = vshrl.u32 %v13198, 7
    %v13200 = vsub.s32 0, %v13199
    %v13201 = vrot.slane %v13196, %v13200
    %v13203 = vadd.f32 %v13195, %v13201
    %v13204 = vmax.f32 %v13203, 0.0
    %v13205 = vpack.c.bf16 %v13204, %v13204
    %v13206 = vld [vmem:[%s9] sm:$0xf]
    %v13207 = vld [vmem:[%s9 + $0x4] sm:$0xf]
    %v13208 = vld [vmem:[%s9 + $0x8] sm:$0xf]
    %v13209 = vld [vmem:[%s9 + $0xc] sm:$0xf]
    %v13210 = vld [vmem:[%s9 + $0x10] sm:$0xf]
    %v13211 = vld [vmem:[%s9 + $0x14] sm:$0xf]
    %v13212 = vld [vmem:[%s9 + $0x18] sm:$0xf]
    %v13213 = vld [vmem:[%s9 + $0x1c] sm:$0xf]
    %v13214 = vld [vmem:[%s9 + $0x20] sm:$0xf]
    %v13215 = vld [vmem:[%s9 + $0x24] sm:$0xf]
    %v13216 = vld [vmem:[%s9 + $0x28] sm:$0xf]
    %v13217 = vld [vmem:[%s9 + $0x2c] sm:$0xf]
    %v13218 = vld [vmem:[%s9 + $0x30] sm:$0xf]
    %v13219 = vld [vmem:[%s9 + $0x34] sm:$0xf]
    %v13220 = vld [vmem:[%s9 + $0x38] sm:$0xf]
    %v13221 = vld [vmem:[%s9 + $0x3c] sm:$0xf]
    %v13222 = vld [vmem:[%s10] sm:$0x1]
    %v13224 = vlaneseq
    %v13225 = vshrl.u32 %v13224, 7
    %v13226 = vsub.s32 0, %v13225
    %v13227 = vrot.slane %v13222, %v13226
    %v13245 = vunpack.c.l.b16 %v13206
    %v13246 = vunpack.c.l.b16 %v13207
    %v13247 = vunpack.c.l.b16 %v13208
    %v13248 = vunpack.c.l.b16 %v13209
    %v13249 = vunpack.c.l.b16 %v13210
    %v13250 = vunpack.c.l.b16 %v13211
    %v13251 = vunpack.c.l.b16 %v13212
    %v13252 = vunpack.c.l.b16 %v13213
    %v13253 = vunpack.c.l.b16 %v13214
    %v13254 = vunpack.c.l.b16 %v13215
    %v13255 = vunpack.c.l.b16 %v13216
    %v13256 = vunpack.c.l.b16 %v13217
    %v13257 = vunpack.c.l.b16 %v13218
    %v13258 = vunpack.c.l.b16 %v13219
    %v13259 = vunpack.c.l.b16 %v13220
    %v13260 = vunpack.c.l.b16 %v13221
    %v13261 = vpack.c.b16 %v13246, %v13245
    %v13262 = vpack.c.b16 %v13248, %v13247
    %v13263 = vpack.c.b16 %v13250, %v13249
    %v13264 = vpack.c.b16 %v13252, %v13251
    %v13265 = vpack.c.b16 %v13254, %v13253
    %v13266 = vpack.c.b16 %v13256, %v13255
    %v13267 = vpack.c.b16 %v13258, %v13257
    %v13268 = vpack.c.b16 %v13260, %v13259
    %13277 = vmatprep.subr.bf16.mxu0 0
    %13278 = vmatpush1.bf16.msra.mxu0 %v13268
    %13279 = vmatprep.subr.bf16.mxu0 0
    %13280 = vmatpush1.bf16.msra.mxu0 %v13267
    %13281 = vmatprep.subr.bf16.mxu0 0
    %13282 = vmatpush1.bf16.msra.mxu0 %v13266
    %13283 = vmatprep.subr.bf16.mxu0 0
    %13284 = vmatpush1.bf16.msra.mxu0 %v13265
    %13285 = vmatprep.subr.bf16.mxu0 0
    %13286 = vmatpush1.bf16.msra.mxu0 %v13264
    %13287 = vmatprep.subr.bf16.mxu0 0
    %13288 = vmatpush1.bf16.msra.mxu0 %v13263
    %13289 = vmatprep.subr.bf16.mxu0 0
    %13290 = vmatpush1.bf16.msra.mxu0 %v13262
    %13291 = vmatprep.subr.bf16.mxu0 0
    %13292 = vmatpush1.bf16.msra.mxu0 %v13261
    %13293 = vmatprep.subr.bf16.mxu0 0
    %13294 = vmatpush2.bf16.msra.mxu0 0
    %13295 = vmatprep.subr.bf16.mxu0 0
    %13296 = vmatpush2.bf16.msra.mxu0 0
    %13297 = vmatprep.subr.bf16.mxu0 0
    %13298 = vmatpush2.bf16.msra.mxu0 0
    %13299 = vmatprep.subr.bf16.mxu0 0
    %13300 = vmatpush2.bf16.msra.mxu0 0
    %13301 = vmatprep.subr.bf16.mxu0 0
    %13302 = vmatpush2.bf16.msra.mxu0 0
    %13303 = vmatprep.subr.bf16.mxu0 0
    %13304 = vmatpush2.bf16.msra.mxu0 0
    %13305 = vmatprep.subr.bf16.mxu0 0
    %13306 = vmatpush2.bf16.msra.mxu0 0
    %13307 = vmatprep.subr.bf16.mxu0 0
    %13308 = vmatpush2.bf16.msra.mxu0 0
    %13309 = vmatprep.mubr.bf16.mxu0 0
    %13310 = vmatmul.mubr.bf16.gmra.mxu0 %v13205
    %v13311 = vpop.f32.mrf.mxu0
    %v13312 = vadd.f32 %v13227, %v13311
    %v13313 = vpop.f32.mrf.mxu0
    %v13314 = vpop.f32.mrf.mxu0
    %v13315 = vpop.f32.mrf.mxu0
    %13316 = vdwg.mxu0
    %13317 = vst [vmem:[#allocation3] sm:$0x3] %v13312
    // Predicated region
    $region46: #{improved_cnn_forward.1} parent=1 // pred_check
      _
    $region47: #{improved_cnn_forward.1} parent=1 // pred_check_branch
      %13319 = sbr.rel (0) target = $region49
    $region48: #{improved_cnn_forward.1} parent=1 // pred_region
      %s13321 = ssub.s32 32, 32
      %13322 = vsyncadd [#allocation4], %s13321
      %s13324 = sshll.u32 [#allocation3], 4
      %s13325 = int_to_ptr.vmem [resolvable:$true] %s13324
      %13327 = dma.vmem_to_hbm [thread:$0]  %s13325, 32, %s11, [#allocation4]
    $region49: #{improved_cnn_forward.1} parent=1 // pred_fallthru
      _
    // Predicated region
    $region50: #{improved_cnn_forward.1} parent=1 // pred_check
      _
    $region51: #{improved_cnn_forward.1} parent=1 // pred_check_branch
      %13329 = sbr.rel (0) target = $region53
    $region52: #{improved_cnn_forward.1} parent=1 // pred_region
      %13330 = dma.done [#allocation4], 32
    $region53: #{improved_cnn_forward.1} parent=1 // pred_fallthru
      _
    %13331 = vsyncpa [#allocation4], 1

</llo_original>
